<compile_context>
chip_gen: v7x
topology: tpu7x:2x2x1
jax: 0.10.0
libtpu: 0.0.40
codegen_flags: <defaults>
</compile_context>

<pallas_src>
import math

import jax
import jax.numpy as jnp
import numpy as np
from jax.experimental import pallas as pl
from jax.experimental.pallas import tpu as pltpu

_NEG_BIAS = -1e9  # masks padded key columns in the softmax

_ROW_ALIGN = {"v5e": 128, "v6e": 256, "v7x": 256, "unknown": 256}
# Conservative scoped-VMEM ceilings (physical: 128 / 128 / 64 MiB).
_VMEM_CAP = {"v5e": 100 << 20, "v6e": 100 << 20, "v7x": 48 << 20,
             "unknown": 48 << 20}


def _rel_pos_indices(window_size: int) -> np.ndarray:
    """Reproduces the buffer computed in Attention.__init__ (numpy, static)."""
    pos = np.arange(window_size)
    gi, gj = np.meshgrid(pos, pos, indexing="ij")
    grid = np.stack([gi, gj], axis=0)                      # (2, w, w)
    grid = grid.reshape(2, -1).T                           # (w*w, 2)
    rel = grid[:, None, :] - grid[None, :, :]              # (n, n, 2)
    rel = rel + (window_size - 1)
    idx = rel[..., 0] * (2 * window_size - 1) + rel[..., 1]
    return idx.astype(np.int32)                            # (n, n)


def _tpu_generation() -> str:
    try:
        kind = jax.devices()[0].device_kind.lower()
    except Exception:
        return "unknown"
    if "v5 lite" in kind or "v5lite" in kind or "v5e" in kind:
        return "v5e"
    if "v6" in kind:
        return "v6e"
    if "v7" in kind:
        return "v7x"
    return "unknown"


def _vmem_bytes_per_step(w, n_pad, dim, heads, num_input_streams):
    """Rough per-grid-step VMEM footprint estimate (bytes)."""
    rows = w * n_pad
    act_bf16 = rows * dim * 2
    # Double-buffered grid-varying blocks (bf16 inputs, f32 output tile).
    pipeline = num_input_streams * 2 * act_bf16 + 2 * rows * dim * 4
    # Single-buffered invariants (bf16 weights, f32 bias).
    invariants = 4 * dim * dim * 2 + heads * n_pad * n_pad * 4
    # Live body intermediates: q/k/v bf16, one head's f32 scores, head
    # outputs + concat bf16, f32 output accumulator; 2x slack for compiler
    # temporaries / relayouts.
    body = 3 * act_bf16 + w * n_pad * n_pad * 4 + 2 * act_bf16 + rows * dim * 4
    return pipeline + invariants + 2 * body


def _choose_window_batch(num_windows, n_pad, dim, heads, gen, num_input_streams):
    """Pick W so W*n_pad is MXU-tile aligned and the step fits scoped VMEM."""
    row_align = _ROW_ALIGN[gen]
    budget = _VMEM_CAP[gen]
    # Smallest W whose row count W*n_pad is a multiple of the MXU tile height
    # (128 on v5e, 256 on v6e/v7x).
    w = row_align // math.gcd(n_pad, row_align)
    # Grow W while it fits VMEM and keeps >= 2 grid steps (amortizes the
    # ~0.35us per-step overhead); cap rows so the per-head score tile stays sane.
    while (2 * w * n_pad <= 4096
           and _vmem_bytes_per_step(2 * w, n_pad, dim, heads,
                                    num_input_streams) <= budget
           and math.ceil(num_windows / (2 * w)) >= 2):
        w *= 2
    # Shrink if even the aligned minimum does not fit the VMEM budget
    # (loses MXU row alignment but keeps the kernel within scoped VMEM).
    while w > 1 and _vmem_bytes_per_step(w, n_pad, dim, heads,
                                         num_input_streams) > budget:
        w //= 2
    # Avoid padding the window axis by more than ~2x on tiny inputs.
    while w > 1 and w > 2 * num_windows:
        w //= 2
    return max(w, 1)


def _invariant_spec(shape, single_buffer):
    """BlockSpec for a grid-invariant operand; single-buffered when possible."""
    index_map = lambda i: (0,) * len(shape)
    if single_buffer:
        try:
            return pl.BlockSpec(shape, index_map, pipeline_mode=pl.Buffered(1))
        except TypeError:  # older Pallas without BlockSpec.pipeline_mode
            pass
    return pl.BlockSpec(shape, index_map)


def _make_kernel(heads: int, dim_head: int, self_attn: bool):
    """Kernel processing W windows per grid step."""

    def kernel(*refs):
        if self_attn:
            x_ref, wq_ref, wk_ref, wv_ref, wo_ref, bias_ref, o_ref = refs
        else:
            x_ref, c_ref, wq_ref, wk_ref, wv_ref, wo_ref, bias_ref, o_ref = refs

        wb, n, dim = x_ref.shape                           # n is padded (mult of 8)
        dh = dim_head

        # Flatten the window batch so projections run as one big MXU matmul.
        # Inputs are already bf16 (cast in the wrapper).
        x = x_ref[...].reshape(wb * n, dim)
        c = x if self_attn else c_ref[...].reshape(wb * n, dim)

        # Scale is pre-folded into Wq on the wrapper side.
        q = jnp.dot(x, wq_ref[...], preferred_element_type=jnp.float32).astype(jnp.bfloat16)
        k = jnp.dot(c, wk_ref[...], preferred_element_type=jnp.float32).astype(jnp.bfloat16)
        v = jnp.dot(c, wv_ref[...], preferred_element_type=jnp.float32).astype(jnp.bfloat16)

        # Per-head attention (heads is small/static).  Head outputs are
        # concatenated once along lanes so the output projection below is a
        # single full-k MXU matmul instead of `heads` k=dim_head matmuls.
        head_outs = []
        for h in range(heads):
            sl = slice(h * dh, (h + 1) * dh)
            qh = q[:, sl].reshape(wb, n, dh)               # (W, n, dh)
            kh = k[:, sl].reshape(wb, n, dh)
            vh = v[:, sl].reshape(wb, n, dh)

            # Batched q.k^T over all W windows (leading-batch einsum).
            sim = jnp.einsum("wid,wjd->wij", qh, kh,
                             preferred_element_type=jnp.float32)   # (W, n, n) f32
            sim = sim + bias_ref[h][None]                  # rel-pos bias (+ key mask)
            sim = sim - jnp.max(sim, axis=-1, keepdims=True)
            p = jnp.exp(sim)
            inv = pl.reciprocal(jnp.sum(p, axis=-1, keepdims=True), approx=True)
            attn = (p * inv).astype(jnp.bfloat16)

            oh = jnp.einsum("wij,wjd->wid", attn, vh,
                            preferred_element_type=jnp.float32)    # (W, n, dh)
            head_outs.append(oh.reshape(wb * n, dh).astype(jnp.bfloat16))

        o_all = head_outs[0] if heads == 1 else jnp.concatenate(head_outs, axis=-1)
        o = jnp.dot(o_all, wo_ref[...], preferred_element_type=jnp.float32)
        o_ref[...] = o.reshape(wb, n, dim).astype(o_ref.dtype)

    return kernel


def maxvit_attention(x, params, *, dim_head=32, window_size=7, c=None):
    """Pallas implementation of Attention.forward (dropout = eval mode / identity)."""
    self_attn = c is None
    b, gx, gy, w1, w2, dim = x.shape
    assert w1 == window_size and w2 == window_size
    assert dim % dim_head == 0
    heads = dim // dim_head
    scale = dim_head ** (-0.5)
    n = w1 * w2
    B = b * gx * gy

    # TODO(synk): for dim < 128 the output lane width is below one vreg, so
    # stores are masked and the MXU runs partially filled; such MaxViT stages
    # are better left to XLA.  Kept functional here so the small demo runs.

    gen = _tpu_generation()
    num_input_streams = 1 if self_attn else 2

    # Pad the token axis to a sublane multiple; padded keys get a large
    # negative bias below so softmax ignores them.  Padded query rows /
    # windows compute garbage that is sliced off at the end.
    n_pad = ((n + 7) // 8) * 8

    x2 = x.reshape(B, n, dim).astype(jnp.bfloat16)
    c2 = None if self_attn else c.reshape(B, n, dim).astype(jnp.bfloat16)
    if n_pad != n:
        tok_pad = [(0, 0), (0, n_pad - n), (0, 0)]
        x2 = jnp.pad(x2, tok_pad)
        if c2 is not None:
            c2 = jnp.pad(c2, tok_pad)

    # Window batching (generation-aware), with even grid steps on v7x so the
    # "parallel" axis splits evenly across its two TensorCores.
    W = _choose_window_batch(B, n_pad, dim, heads, gen, num_input_streams)
    steps = max(1, math.ceil(B / W))
    if gen == "v7x" and steps > 1 and steps % 2 == 1:
        steps += 1
    Bp = steps * W
    if Bp != B:
        win_pad = [(0, Bp - B), (0, 0), (0, 0)]
        x2 = jnp.pad(x2, win_pad)
        if c2 is not None:
            c2 = jnp.pad(c2, win_pad)

    # Relative position bias gather (glue, outside the kernel).
    idx = jnp.asarray(_rel_pos_indices(window_size))        # (n, n) int32
    bias = params["rel_pos_emb"][idx]                       # (n, n, heads)
    bias = jnp.transpose(bias, (2, 0, 1)).astype(jnp.float32)  # (heads, n, n)
    if n_pad != n:
        bias = jnp.pad(bias, [(0, 0), (0, n_pad - n), (0, n_pad - n)])
        key_pad_mask = (jnp.arange(n_pad) >= n)[None, None, :]
        bias = jnp.where(key_pad_mask, _NEG_BIAS, bias)

    # nn.Linear(bias=False): y = x @ W.T; weights passed transposed, bf16 for
    # the MXU.  Attention scale folded into Wq.  Wo stays a full (dim, dim)
    # matrix so the output projection is one full-k matmul.
    wq_t = (params["wq"].T * scale).astype(jnp.bfloat16)
    wk_t = params["wk"].T.astype(jnp.bfloat16)
    wv_t = params["wv"].T.astype(jnp.bfloat16)
    wo_t = params["wo"].T.astype(jnp.bfloat16)

    kernel = _make_kernel(heads, dim_head, self_attn)
    win_spec = pl.BlockSpec((W, n_pad, dim), lambda i: (i, 0, 0))

    inputs = [x2] + ([] if self_attn else [c2]) + [wq_t, wk_t, wv_t, wo_t, bias]

    out_dtype = x.dtype
    out_bytes = jnp.dtype(out_dtype).itemsize
    flops = (4 * 2 * Bp * n_pad * dim * dim                      # q/k/v/out proj
             + 2 * 2 * Bp * heads * n_pad * n_pad * dim_head)    # scores + PV
    cost = pl.CostEstimate(
        flops=int(flops),
        transcendentals=int(Bp * heads * n_pad * n_pad),
        bytes_accessed=int(num_input_streams * Bp * n_pad * dim * 2
                           + 4 * dim * dim * 2
                           + heads * n_pad * n_pad * 4
                           + Bp * n_pad * dim * out_bytes))

    def run(single_buffer):
        in_specs = [win_spec]
        if not self_attn:
            in_specs.append(win_spec)
        in_specs += [
            _invariant_spec((dim, dim), single_buffer),                 # Wq^T (scaled)
            _invariant_spec((dim, dim), single_buffer),                 # Wk^T
            _invariant_spec((dim, dim), single_buffer),                 # Wv^T
            _invariant_spec((dim, dim), single_buffer),                 # Wo^T
            _invariant_spec((heads, n_pad, n_pad), single_buffer),      # rel-pos bias
        ]
        return pl.pallas_call(
            kernel,
            out_shape=jax.ShapeDtypeStruct((Bp, n_pad, dim), out_dtype),
            grid_spec=pltpu.PrefetchScalarGridSpec(
                num_scalar_prefetch=0,
                grid=(Bp // W,),
                in_specs=in_specs,
                out_specs=pl.BlockSpec((W, n_pad, dim), lambda i: (i, 0, 0)),
            ),
            compiler_params=pltpu.CompilerParams(
                dimension_semantics=("parallel",),
                vmem_limit_bytes=_VMEM_CAP[gen],
            ),
            cost_estimate=cost,
        )(*inputs)

    try:
        out = run(True)
    except Exception:
        # Fallback: double-buffer the invariant operands (older Pallas that
        # does not honour pipeline_mode on a BlockSpec).
        out = run(False)

    out = out[:B, :n]
    return out.reshape(b, gx, gy, w1, w2, dim)


def _reference(x, params, *, dim_head, window_size, c=None):
    """Plain-JAX reference mirroring the PyTorch forward (eval mode)."""
    if c is None:
        c = x
    b, gx, gy, w1, w2, dim = x.shape
    heads = dim // dim_head
    scale = dim_head ** (-0.5)
    n = w1 * w2
    B = b * gx * gy
    x2 = x.reshape(B, n, dim)
    c2 = c.reshape(B, n, dim)
    q = x2 @ params["wq"].T
    k = c2 @ params["wk"].T
    v = c2 @ params["wv"].T

    def split(t):
        return jnp.transpose(t.reshape(B, n, heads, dim_head), (0, 2, 1, 3))

    q, k, v = split(q) * scale, split(k), split(v)
    sim = jnp.einsum("bhid,bhjd->bhij", q, k)
    idx = jnp.asarray(_rel_pos_indices(window_size))
    bias = jnp.transpose(params["rel_pos_emb"][idx], (2, 0, 1))
    sim = sim + bias[None]
    attn = jax.nn.softmax(sim, axis=-1)
    out = jnp.einsum("bhij,bhjd->bhid", attn, v)
    out = jnp.transpose(out, (0, 2, 1, 3)).reshape(B, n, dim)
    out = out @ params["wo"].T
    return out.reshape(b, gx, gy, w1, w2, dim)


if __name__ == "__main__":
    # Small, consistent shapes: dim=32, dim_head=16 -> heads=2, window_size=4.
    batch, grid_h, grid_w = 2, 2, 2
    window_size = 4
    dim, dim_head = 32, 16
    heads = dim // dim_head

    key = jax.random.PRNGKey(0)
    kx, kc, kq, kk, kv, ko, ke = jax.random.split(key, 7)

    x = jax.random.normal(
        kx, (batch, grid_h, grid_w, window_size, window_size, dim), jnp.float32)
    c_in = jax.random.normal(
        kc, (batch, grid_h, grid_w, window_size, window_size, dim), jnp.float32)

    params = {
        "wq": jax.random.normal(kq, (dim, dim), jnp.float32) * 0.1,
        "wk": jax.random.normal(kk, (dim, dim), jnp.float32) * 0.1,
        "wv": jax.random.normal(kv, (dim, dim), jnp.float32) * 0.1,
        "wo": jax.random.normal(ko, (dim, dim), jnp.float32) * 0.1,
        "rel_pos_emb": jax.random.normal(
            ke, ((2 * window_size - 1) ** 2, heads), jnp.float32) * 0.1,
    }

    # Self-attention path (c = x, single input stream).
    out = maxvit_attention(x, params, dim_head=dim_head, window_size=window_size)
    out = jax.block_until_ready(out)
    ref = _reference(x, params, dim_head=dim_head, window_size=window_size)
    assert out.shape == ref.shape
    np.testing.assert_allclose(np.asarray(out), np.asarray(ref), rtol=2e-2, atol=2e-2)

    # Cross-attention path (explicit c).
    out_c = maxvit_attention(x, params, dim_head=dim_head,
                             window_size=window_size, c=c_in)
    out_c = jax.block_until_ready(out_c)
    ref_c = _reference(x, params, dim_head=dim_head,
                       window_size=window_size, c=c_in)
    np.testing.assert_allclose(np.asarray(out_c), np.asarray(ref_c),
                               rtol=2e-2, atol=2e-2)

    print("KERNEL_OK")
</pallas_src>

<mosaic_0001>
module attributes {stable_mosaic.version = 11 : i64} {
  func.func @kernel(%arg0: i32, %arg1: memref<16x16x32xbf16, #tpu.memory_space<vmem>>, %arg2: memref<32x32xbf16, #tpu.memory_space<vmem>>, %arg3: memref<32x32xbf16, #tpu.memory_space<vmem>>, %arg4: memref<32x32xbf16, #tpu.memory_space<vmem>>, %arg5: memref<32x32xbf16, #tpu.memory_space<vmem>>, %arg6: memref<2x16x16xf32, #tpu.memory_space<vmem>>, %arg7: memref<16x16x32xf32, #tpu.memory_space<vmem>>) attributes {dimension_semantics = [#tpu.dimension_semantics<parallel>], iteration_bounds = array<i64: 1>, scalar_prefetch = 0 : i64, scratch_operands = 0 : i64, tpu.core_type = #tpu.core_type<tc>, window_params = [{transform_indices = @transform_0, window_bounds = array<i64: 16, 16, 32>}, {pipeline_mode = #tpu.pipeline_mode<synchronous>, transform_indices = @transform_1, window_bounds = array<i64: 32, 32>}, {pipeline_mode = #tpu.pipeline_mode<synchronous>, transform_indices = @transform_2, window_bounds = array<i64: 32, 32>}, {pipeline_mode = #tpu.pipeline_mode<synchronous>, transform_indices = @transform_3, window_bounds = array<i64: 32, 32>}, {pipeline_mode = #tpu.pipeline_mode<synchronous>, transform_indices = @transform_4, window_bounds = array<i64: 32, 32>}, {pipeline_mode = #tpu.pipeline_mode<synchronous>, transform_indices = @transform_5, window_bounds = array<i64: 2, 16, 16>}, {transform_indices = @transform_6, window_bounds = array<i64: 16, 16, 32>}]} {
    %c0 = arith.constant 0 : index
    %c0_0 = arith.constant 0 : index
    %c0_1 = arith.constant 0 : index
    %0 = vector.load %arg1[%c0, %c0_0, %c0_1] : memref<16x16x32xbf16, #tpu.memory_space<vmem>>, vector<16x16x32xbf16>
    %1 = vector.shape_cast %0 : vector<16x16x32xbf16> to vector<256x32xbf16>
    %c0_2 = arith.constant 0 : index
    %c0_3 = arith.constant 0 : index
    %2 = vector.load %arg2[%c0_2, %c0_3] : memref<32x32xbf16, #tpu.memory_space<vmem>>, vector<32x32xbf16>
    %cst = arith.constant dense<0.000000e+00> : vector<256x32xf32>
    %3 = tpu.matmul %1, %2, %cst {dimension_numbers = #tpu.dot_dimension_numbers<[1], [0], [0], [1], [0, 0, 1, 1], [], []>} : vector<256x32xbf16>, vector<32x32xbf16>, vector<256x32xf32> -> vector<256x32xf32>
    %4 = arith.truncf %3 : vector<256x32xf32> to vector<256x32xbf16>
    %c0_4 = arith.constant 0 : index
    %c0_5 = arith.constant 0 : index
    %5 = vector.load %arg3[%c0_4, %c0_5] : memref<32x32xbf16, #tpu.memory_space<vmem>>, vector<32x32xbf16>
    %cst_6 = arith.constant dense<0.000000e+00> : vector<256x32xf32>
    %6 = tpu.matmul %1, %5, %cst_6 {dimension_numbers = #tpu.dot_dimension_numbers<[1], [0], [0], [1], [0, 0, 1, 1], [], []>} : vector<256x32xbf16>, vector<32x32xbf16>, vector<256x32xf32> -> vector<256x32xf32>
    %7 = arith.truncf %6 : vector<256x32xf32> to vector<256x32xbf16>
    %c0_7 = arith.constant 0 : index
    %c0_8 = arith.constant 0 : index
    %8 = vector.load %arg4[%c0_7, %c0_8] : memref<32x32xbf16, #tpu.memory_space<vmem>>, vector<32x32xbf16>
    %cst_9 = arith.constant dense<0.000000e+00> : vector<256x32xf32>
    %9 = tpu.matmul %1, %8, %cst_9 {dimension_numbers = #tpu.dot_dimension_numbers<[1], [0], [0], [1], [0, 0, 1, 1], [], []>} : vector<256x32xbf16>, vector<32x32xbf16>, vector<256x32xf32> -> vector<256x32xf32>
    %10 = arith.truncf %9 : vector<256x32xf32> to vector<256x32xbf16>
    %11 = vector.extract_strided_slice %4 {offsets = [0, 0], sizes = [256, 16], strides = [1, 1]} : vector<256x32xbf16> to vector<256x16xbf16>
    %12 = vector.shape_cast %11 : vector<256x16xbf16> to vector<16x16x16xbf16>
    %13 = vector.extract_strided_slice %7 {offsets = [0, 0], sizes = [256, 16], strides = [1, 1]} : vector<256x32xbf16> to vector<256x16xbf16>
    %14 = vector.shape_cast %13 : vector<256x16xbf16> to vector<16x16x16xbf16>
    %15 = vector.extract_strided_slice %10 {offsets = [0, 0], sizes = [256, 16], strides = [1, 1]} : vector<256x32xbf16> to vector<256x16xbf16>
    %16 = vector.shape_cast %15 : vector<256x16xbf16> to vector<16x16x16xbf16>
    "tpu.trace_start"() <{level = 10 : i32, message = "wid,wjd->wij"}> : () -> ()
    %cst_10 = arith.constant dense<0.000000e+00> : vector<16x16x16xf32>
    %17 = tpu.matmul %12, %14, %cst_10 {dimension_numbers = #tpu.dot_dimension_numbers<[2], [2], [1], [1], [0, 0, 0, 1, 1, 1], [0], [0]>} : vector<16x16x16xbf16>, vector<16x16x16xbf16>, vector<16x16x16xf32> -> vector<16x16x16xf32>
    "tpu.trace_stop"() : () -> ()
    %c0_11 = arith.constant 0 : index
    %c0_12 = arith.constant 0 : index
    %c0_13 = arith.constant 0 : index
    %18 = vector.load %arg6[%c0_11, %c0_12, %c0_13] : memref<2x16x16xf32, #tpu.memory_space<vmem>>, vector<1x16x16xf32>
    %19 = vector.shape_cast %18 : vector<1x16x16xf32> to vector<16x16xf32>
    %20 = vector.shape_cast %19 : vector<16x16xf32> to vector<1x16x16xf32>
    %21 = vector.broadcast %20 : vector<1x16x16xf32> to vector<16x16x16xf32>
    %22 = arith.addf %17, %21 : vector<16x16x16xf32>
    %cst_14 = arith.constant dense<0xFF800000> : vector<16x16xf32>
    %23 = vector.multi_reduction <maximumf>, %22, %cst_14 [2] : vector<16x16x16xf32> to vector<16x16xf32>
    %24 = vector.shape_cast %23 : vector<16x16xf32> to vector<16x16x1xf32>
    %25 = vector.broadcast %24 : vector<16x16x1xf32> to vector<16x16x16xf32>
    %26 = arith.subf %22, %25 : vector<16x16x16xf32>
    %27 = math.exp %26 : vector<16x16x16xf32>
    %cst_15 = arith.constant dense<0.000000e+00> : vector<16x16xf32>
    %28 = vector.multi_reduction <add>, %27, %cst_15 [2] : vector<16x16x16xf32> to vector<16x16xf32>
    %29 = vector.shape_cast %28 : vector<16x16xf32> to vector<16x16x1xf32>
    %30 = tpu.reciprocal %29 {approx = true} : vector<16x16x1xf32> -> vector<16x16x1xf32>
    %31 = vector.broadcast %30 : vector<16x16x1xf32> to vector<16x16x16xf32>
    %32 = arith.mulf %27, %31 : vector<16x16x16xf32>
    %33 = arith.truncf %32 : vector<16x16x16xf32> to vector<16x16x16xbf16>
    "tpu.trace_start"() <{level = 10 : i32, message = "wij,wjd->wid"}> : () -> ()
    %cst_16 = arith.constant dense<0.000000e+00> : vector<16x16x16xf32>
    %34 = tpu.matmul %33, %16, %cst_16 {dimension_numbers = #tpu.dot_dimension_numbers<[2], [1], [1], [2], [0, 0, 0, 1, 1, 2], [0], [0]>} : vector<16x16x16xbf16>, vector<16x16x16xbf16>, vector<16x16x16xf32> -> vector<16x16x16xf32>
    "tpu.trace_stop"() : () -> ()
    %35 = vector.shape_cast %34 : vector<16x16x16xf32> to vector<256x16xf32>
    %36 = arith.truncf %35 : vector<256x16xf32> to vector<256x16xbf16>
    %37 = vector.extract_strided_slice %4 {offsets = [0, 16], sizes = [256, 16], strides = [1, 1]} : vector<256x32xbf16> to vector<256x16xbf16>
    %38 = vector.shape_cast %37 : vector<256x16xbf16> to vector<16x16x16xbf16>
    %39 = vector.extract_strided_slice %7 {offsets = [0, 16], sizes = [256, 16], strides = [1, 1]} : vector<256x32xbf16> to vector<256x16xbf16>
    %40 = vector.shape_cast %39 : vector<256x16xbf16> to vector<16x16x16xbf16>
    %41 = vector.extract_strided_slice %10 {offsets = [0, 16], sizes = [256, 16], strides = [1, 1]} : vector<256x32xbf16> to vector<256x16xbf16>
    %42 = vector.shape_cast %41 : vector<256x16xbf16> to vector<16x16x16xbf16>
    "tpu.trace_start"() <{level = 10 : i32, message = "wid,wjd->wij"}> : () -> ()
    %cst_17 = arith.constant dense<0.000000e+00> : vector<16x16x16xf32>
    %43 = tpu.matmul %38, %40, %cst_17 {dimension_numbers = #tpu.dot_dimension_numbers<[2], [2], [1], [1], [0, 0, 0, 1, 1, 1], [0], [0]>} : vector<16x16x16xbf16>, vector<16x16x16xbf16>, vector<16x16x16xf32> -> vector<16x16x16xf32>
    "tpu.trace_stop"() : () -> ()
    %c1 = arith.constant 1 : index
    %c0_18 = arith.constant 0 : index
    %c0_19 = arith.constant 0 : index
    %44 = vector.load %arg6[%c1, %c0_18, %c0_19] : memref<2x16x16xf32, #tpu.memory_space<vmem>>, vector<1x16x16xf32>
    %45 = vector.shape_cast %44 : vector<1x16x16xf32> to vector<16x16xf32>
    %46 = vector.shape_cast %45 : vector<16x16xf32> to vector<1x16x16xf32>
    %47 = vector.broadcast %46 : vector<1x16x16xf32> to vector<16x16x16xf32>
    %48 = arith.addf %43, %47 : vector<16x16x16xf32>
    %cst_20 = arith.constant dense<0xFF800000> : vector<16x16xf32>
    %49 = vector.multi_reduction <maximumf>, %48, %cst_20 [2] : vector<16x16x16xf32> to vector<16x16xf32>
    %50 = vector.shape_cast %49 : vector<16x16xf32> to vector<16x16x1xf32>
    %51 = vector.broadcast %50 : vector<16x16x1xf32> to vector<16x16x16xf32>
    %52 = arith.subf %48, %51 : vector<16x16x16xf32>
    %53 = math.exp %52 : vector<16x16x16xf32>
    %cst_21 = arith.constant dense<0.000000e+00> : vector<16x16xf32>
    %54 = vector.multi_reduction <add>, %53, %cst_21 [2] : vector<16x16x16xf32> to vector<16x16xf32>
    %55 = vector.shape_cast %54 : vector<16x16xf32> to vector<16x16x1xf32>
    %56 = tpu.reciprocal %55 {approx = true} : vector<16x16x1xf32> -> vector<16x16x1xf32>
    %57 = vector.broadcast %56 : vector<16x16x1xf32> to vector<16x16x16xf32>
    %58 = arith.mulf %53, %57 : vector<16x16x16xf32>
    %59 = arith.truncf %58 : vector<16x16x16xf32> to vector<16x16x16xbf16>
    "tpu.trace_start"() <{level = 10 : i32, message = "wij,wjd->wid"}> : () -> ()
    %cst_22 = arith.constant dense<0.000000e+00> : vector<16x16x16xf32>
    %60 = tpu.matmul %59, %42, %cst_22 {dimension_numbers = #tpu.dot_dimension_numbers<[2], [1], [1], [2], [0, 0, 0, 1, 1, 2], [0], [0]>} : vector<16x16x16xbf16>, vector<16x16x16xbf16>, vector<16x16x16xf32> -> vector<16x16x16xf32>
    "tpu.trace_stop"() : () -> ()
    %61 = vector.shape_cast %60 : vector<16x16x16xf32> to vector<256x16xf32>
    %62 = arith.truncf %61 : vector<256x16xf32> to vector<256x16xbf16>
    %63 = tpu.concatenate %36, %62 in 1 : vector<256x16xbf16>, vector<256x16xbf16> -> vector<256x32xbf16>
    %c0_23 = arith.constant 0 : index
    %c0_24 = arith.constant 0 : index
    %64 = vector.load %arg5[%c0_23, %c0_24] : memref<32x32xbf16, #tpu.memory_space<vmem>>, vector<32x32xbf16>
    %cst_25 = arith.constant dense<0.000000e+00> : vector<256x32xf32>
    %65 = tpu.matmul %63, %64, %cst_25 {dimension_numbers = #tpu.dot_dimension_numbers<[1], [0], [0], [1], [0, 0, 1, 1], [], []>} : vector<256x32xbf16>, vector<32x32xbf16>, vector<256x32xf32> -> vector<256x32xf32>
    %66 = vector.shape_cast %65 : vector<256x32xf32> to vector<16x16x32xf32>
    %c0_26 = arith.constant 0 : index
    %c0_27 = arith.constant 0 : index
    %c0_28 = arith.constant 0 : index
    %67 = vector.load %arg7[%c0_26, %c0_27, %c0_28] : memref<16x16x32xf32, #tpu.memory_space<vmem>>, vector<16x16x32xf32>
    tpu.vector_store %arg7[%c0_26, %c0_27, %c0_28], %66 {strides = array<i32>} : memref<16x16x32xf32, #tpu.memory_space<vmem>>, vector<16x16x32xf32>,
    return
  }
  func.func @transform_0(%arg0: i32) -> (i32, i32, i32) {
    %c0_i32 = arith.constant 0 : i32
    %c0_i32_0 = arith.constant 0 : i32
    %c0_i32_1 = arith.constant 0 : i32
    return %arg0, %c0_i32, %c0_i32_0 : i32, i32, i32
  }
  func.func @transform_1(%arg0: i32) -> (i32, i32) {
    %c0_i32 = arith.constant 0 : i32
    %c0_i32_0 = arith.constant 0 : i32
    %c0_i32_1 = arith.constant 0 : i32
    return %c0_i32, %c0_i32_0 : i32, i32
  }
  func.func @transform_2(%arg0: i32) -> (i32, i32) {
    %c0_i32 = arith.constant 0 : i32
    %c0_i32_0 = arith.constant 0 : i32
    %c0_i32_1 = arith.constant 0 : i32
    return %c0_i32, %c0_i32_0 : i32, i32
  }
  func.func @transform_3(%arg0: i32) -> (i32, i32) {
    %c0_i32 = arith.constant 0 : i32
    %c0_i32_0 = arith.constant 0 : i32
    %c0_i32_1 = arith.constant 0 : i32
    return %c0_i32, %c0_i32_0 : i32, i32
  }
  func.func @transform_4(%arg0: i32) -> (i32, i32) {
    %c0_i32 = arith.constant 0 : i32
    %c0_i32_0 = arith.constant 0 : i32
    %c0_i32_1 = arith.constant 0 : i32
    return %c0_i32, %c0_i32_0 : i32, i32
  }
  func.func @transform_5(%arg0: i32) -> (i32, i32, i32) {
    %c0_i32 = arith.constant 0 : i32
    %c0_i32_0 = arith.constant 0 : i32
    %c0_i32_1 = arith.constant 0 : i32
    %c0_i32_2 = arith.constant 0 : i32
    return %c0_i32, %c0_i32_0, %c0_i32_1 : i32, i32, i32
  }
  func.func @transform_6(%arg0: i32) -> (i32, i32, i32) {
    %c0_i32 = arith.constant 0 : i32
    %c0_i32_0 = arith.constant 0 : i32
    %c0_i32_1 = arith.constant 0 : i32
    return %arg0, %c0_i32, %c0_i32_0 : i32, i32, i32
  }
}

module attributes {stable_mosaic.version = 11 : i64} {
  func.func @kernel(%arg0: i32, %arg1: memref<16x16x32xbf16, #tpu.memory_space<vmem>>, %arg2: memref<32x32xbf16, #tpu.memory_space<vmem>>, %arg3: memref<32x32xbf16, #tpu.memory_space<vmem>>, %arg4: memref<32x32xbf16, #tpu.memory_space<vmem>>, %arg5: memref<32x32xbf16, #tpu.memory_space<vmem>>, %arg6: memref<2x16x16xf32, #tpu.memory_space<vmem>>, %arg7: memref<16x16x32xf32, #tpu.memory_space<vmem>>) attributes {dimension_semantics = [#tpu.dimension_semantics<parallel>], iteration_bounds = array<i64: 1>, scalar_prefetch = 0 : i64, scratch_operands = 0 : i64, tpu.core_type = #tpu.core_type<tc>, window_params = [{transform_indices = @transform_0, window_bounds = array<i64: 16, 16, 32>}, {pipeline_mode = #tpu.pipeline_mode<synchronous>, transform_indices = @transform_1, window_bounds = array<i64: 32, 32>}, {pipeline_mode = #tpu.pipeline_mode<synchronous>, transform_indices = @transform_2, window_bounds = array<i64: 32, 32>}, {pipeline_mode = #tpu.pipeline_mode<synchronous>, transform_indices = @transform_3, window_bounds = array<i64: 32, 32>}, {pipeline_mode = #tpu.pipeline_mode<synchronous>, transform_indices = @transform_4, window_bounds = array<i64: 32, 32>}, {pipeline_mode = #tpu.pipeline_mode<synchronous>, transform_indices = @transform_5, window_bounds = array<i64: 2, 16, 16>}, {transform_indices = @transform_6, window_bounds = array<i64: 16, 16, 32>}]} {
    %c0 = arith.constant 0 : index
    %c0_0 = arith.constant 0 : index
    %c0_1 = arith.constant 0 : index
    %0 = vector.load %arg1[%c0, %c0_0, %c0_1] : memref<16x16x32xbf16, #tpu.memory_space<vmem>>, vector<16x16x32xbf16>
    %1 = vector.shape_cast %0 : vector<16x16x32xbf16> to vector<256x32xbf16>
    %c0_2 = arith.constant 0 : index
    %c0_3 = arith.constant 0 : index
    %2 = vector.load %arg2[%c0_2, %c0_3] : memref<32x32xbf16, #tpu.memory_space<vmem>>, vector<32x32xbf16>
    %cst = arith.constant dense<0.000000e+00> : vector<256x32xf32>
    %3 = tpu.matmul %1, %2, %cst {dimension_numbers = #tpu.dot_dimension_numbers<[1], [0], [0], [1], [0, 0, 1, 1], [], []>} : vector<256x32xbf16>, vector<32x32xbf16>, vector<256x32xf32> -> vector<256x32xf32>
    %4 = arith.truncf %3 : vector<256x32xf32> to vector<256x32xbf16>
    %c0_4 = arith.constant 0 : index
    %c0_5 = arith.constant 0 : index
    %5 = vector.load %arg3[%c0_4, %c0_5] : memref<32x32xbf16, #tpu.memory_space<vmem>>, vector<32x32xbf16>
    %cst_6 = arith.constant dense<0.000000e+00> : vector<256x32xf32>
    %6 = tpu.matmul %1, %5, %cst_6 {dimension_numbers = #tpu.dot_dimension_numbers<[1], [0], [0], [1], [0, 0, 1, 1], [], []>} : vector<256x32xbf16>, vector<32x32xbf16>, vector<256x32xf32> -> vector<256x32xf32>
    %7 = arith.truncf %6 : vector<256x32xf32> to vector<256x32xbf16>
    %c0_7 = arith.constant 0 : index
    %c0_8 = arith.constant 0 : index
    %8 = vector.load %arg4[%c0_7, %c0_8] : memref<32x32xbf16, #tpu.memory_space<vmem>>, vector<32x32xbf16>
    %cst_9 = arith.constant dense<0.000000e+00> : vector<256x32xf32>
    %9 = tpu.matmul %1, %8, %cst_9 {dimension_numbers = #tpu.dot_dimension_numbers<[1], [0], [0], [1], [0, 0, 1, 1], [], []>} : vector<256x32xbf16>, vector<32x32xbf16>, vector<256x32xf32> -> vector<256x32xf32>
    %10 = arith.truncf %9 : vector<256x32xf32> to vector<256x32xbf16>
    %11 = vector.extract_strided_slice %4 {offsets = [0, 0], sizes = [256, 16], strides = [1, 1]} : vector<256x32xbf16> to vector<256x16xbf16>
    %12 = vector.shape_cast %11 : vector<256x16xbf16> to vector<16x16x16xbf16>
    %13 = vector.extract_strided_slice %7 {offsets = [0, 0], sizes = [256, 16], strides = [1, 1]} : vector<256x32xbf16> to vector<256x16xbf16>
    %14 = vector.shape_cast %13 : vector<256x16xbf16> to vector<16x16x16xbf16>
    %15 = vector.extract_strided_slice %10 {offsets = [0, 0], sizes = [256, 16], strides = [1, 1]} : vector<256x32xbf16> to vector<256x16xbf16>
    %16 = vector.shape_cast %15 : vector<256x16xbf16> to vector<16x16x16xbf16>
    "tpu.trace_start"() <{level = 10 : i32, message = "wid,wjd->wij"}> : () -> ()
    %cst_10 = arith.constant dense<0.000000e+00> : vector<16x16x16xf32>
    %17 = tpu.matmul %12, %14, %cst_10 {dimension_numbers = #tpu.dot_dimension_numbers<[2], [2], [1], [1], [0, 0, 0, 1, 1, 1], [0], [0]>} : vector<16x16x16xbf16>, vector<16x16x16xbf16>, vector<16x16x16xf32> -> vector<16x16x16xf32>
    "tpu.trace_stop"() : () -> ()
    %c0_11 = arith.constant 0 : index
    %c0_12 = arith.constant 0 : index
    %c0_13 = arith.constant 0 : index
    %18 = vector.load %arg6[%c0_11, %c0_12, %c0_13] : memref<2x16x16xf32, #tpu.memory_space<vmem>>, vector<1x16x16xf32>
    %19 = vector.shape_cast %18 : vector<1x16x16xf32> to vector<16x16xf32>
    %20 = vector.shape_cast %19 : vector<16x16xf32> to vector<1x16x16xf32>
    %21 = vector.broadcast %20 : vector<1x16x16xf32> to vector<16x16x16xf32>
    %22 = arith.addf %17, %21 : vector<16x16x16xf32>
    %cst_14 = arith.constant dense<0xFF800000> : vector<16x16xf32>
    %23 = vector.multi_reduction <maximumf>, %22, %cst_14 [2] : vector<16x16x16xf32> to vector<16x16xf32>
    %24 = vector.shape_cast %23 : vector<16x16xf32> to vector<16x16x1xf32>
    %25 = vector.broadcast %24 : vector<16x16x1xf32> to vector<16x16x16xf32>
    %26 = arith.subf %22, %25 : vector<16x16x16xf32>
    %27 = math.exp %26 : vector<16x16x16xf32>
    %cst_15 = arith.constant dense<0.000000e+00> : vector<16x16xf32>
    %28 = vector.multi_reduction <add>, %27, %cst_15 [2] : vector<16x16x16xf32> to vector<16x16xf32>
    %29 = vector.shape_cast %28 : vector<16x16xf32> to vector<16x16x1xf32>
    %30 = tpu.reciprocal %29 {approx = true} : vector<16x16x1xf32> -> vector<16x16x1xf32>
    %31 = vector.broadcast %30 : vector<16x16x1xf32> to vector<16x16x16xf32>
    %32 = arith.mulf %27, %31 : vector<16x16x16xf32>
    %33 = arith.truncf %32 : vector<16x16x16xf32> to vector<16x16x16xbf16>
    "tpu.trace_start"() <{level = 10 : i32, message = "wij,wjd->wid"}> : () -> ()
    %cst_16 = arith.constant dense<0.000000e+00> : vector<16x16x16xf32>
    %34 = tpu.matmul %33, %16, %cst_16 {dimension_numbers = #tpu.dot_dimension_numbers<[2], [1], [1], [2], [0, 0, 0, 1, 1, 2], [0], [0]>} : vector<16x16x16xbf16>, vector<16x16x16xbf16>, vector<16x16x16xf32> -> vector<16x16x16xf32>
    "tpu.trace_stop"() : () -> ()
    %35 = vector.shape_cast %34 : vector<16x16x16xf32> to vector<256x16xf32>
    %36 = arith.truncf %35 : vector<256x16xf32> to vector<256x16xbf16>
    %37 = vector.extract_strided_slice %4 {offsets = [0, 16], sizes = [256, 16], strides = [1, 1]} : vector<256x32xbf16> to vector<256x16xbf16>
    %38 = vector.shape_cast %37 : vector<256x16xbf16> to vector<16x16x16xbf16>
    %39 = vector.extract_strided_slice %7 {offsets = [0, 16], sizes = [256, 16], strides = [1, 1]} : vector<256x32xbf16> to vector<256x16xbf16>
    %40 = vector.shape_cast %39 : vector<256x16xbf16> to vector<16x16x16xbf16>
    %41 = vector.extract_strided_slice %10 {offsets = [0, 16], sizes = [256, 16], strides = [1, 1]} : vector<256x32xbf16> to vector<256x16xbf16>
    %42 = vector.shape_cast %41 : vector<256x16xbf16> to vector<16x16x16xbf16>
    "tpu.trace_start"() <{level = 10 : i32, message = "wid,wjd->wij"}> : () -> ()
    %cst_17 = arith.constant dense<0.000000e+00> : vector<16x16x16xf32>
    %43 = tpu.matmul %38, %40, %cst_17 {dimension_numbers = #tpu.dot_dimension_numbers<[2], [2], [1], [1], [0, 0, 0, 1, 1, 1], [0], [0]>} : vector<16x16x16xbf16>, vector<16x16x16xbf16>, vector<16x16x16xf32> -> vector<16x16x16xf32>
    "tpu.trace_stop"() : () -> ()
    %c1 = arith.constant 1 : index
    %c0_18 = arith.constant 0 : index
    %c0_19 = arith.constant 0 : index
    %44 = vector.load %arg6[%c1, %c0_18, %c0_19] : memref<2x16x16xf32, #tpu.memory_space<vmem>>, vector<1x16x16xf32>
    %45 = vector.shape_cast %44 : vector<1x16x16xf32> to vector<16x16xf32>
    %46 = vector.shape_cast %45 : vector<16x16xf32> to vector<1x16x16xf32>
    %47 = vector.broadcast %46 : vector<1x16x16xf32> to vector<16x16x16xf32>
    %48 = arith.addf %43, %47 : vector<16x16x16xf32>
    %cst_20 = arith.constant dense<0xFF800000> : vector<16x16xf32>
    %49 = vector.multi_reduction <maximumf>, %48, %cst_20 [2] : vector<16x16x16xf32> to vector<16x16xf32>
    %50 = vector.shape_cast %49 : vector<16x16xf32> to vector<16x16x1xf32>
    %51 = vector.broadcast %50 : vector<16x16x1xf32> to vector<16x16x16xf32>
    %52 = arith.subf %48, %51 : vector<16x16x16xf32>
    %53 = math.exp %52 : vector<16x16x16xf32>
    %cst_21 = arith.constant dense<0.000000e+00> : vector<16x16xf32>
    %54 = vector.multi_reduction <add>, %53, %cst_21 [2] : vector<16x16x16xf32> to vector<16x16xf32>
    %55 = vector.shape_cast %54 : vector<16x16xf32> to vector<16x16x1xf32>
    %56 = tpu.reciprocal %55 {approx = true} : vector<16x16x1xf32> -> vector<16x16x1xf32>
    %57 = vector.broadcast %56 : vector<16x16x1xf32> to vector<16x16x16xf32>
    %58 = arith.mulf %53, %57 : vector<16x16x16xf32>
    %59 = arith.truncf %58 : vector<16x16x16xf32> to vector<16x16x16xbf16>
    "tpu.trace_start"() <{level = 10 : i32, message = "wij,wjd->wid"}> : () -> ()
    %cst_22 = arith.constant dense<0.000000e+00> : vector<16x16x16xf32>
    %60 = tpu.matmul %59, %42, %cst_22 {dimension_numbers = #tpu.dot_dimension_numbers<[2], [1], [1], [2], [0, 0, 0, 1, 1, 2], [0], [0]>} : vector<16x16x16xbf16>, vector<16x16x16xbf16>, vector<16x16x16xf32> -> vector<16x16x16xf32>
    "tpu.trace_stop"() : () -> ()
    %61 = vector.shape_cast %60 : vector<16x16x16xf32> to vector<256x16xf32>
    %62 = arith.truncf %61 : vector<256x16xf32> to vector<256x16xbf16>
    %63 = tpu.concatenate %36, %62 in 1 : vector<256x16xbf16>, vector<256x16xbf16> -> vector<256x32xbf16>
    %c0_23 = arith.constant 0 : index
    %c0_24 = arith.constant 0 : index
    %64 = vector.load %arg5[%c0_23, %c0_24] : memref<32x32xbf16, #tpu.memory_space<vmem>>, vector<32x32xbf16>
    %cst_25 = arith.constant dense<0.000000e+00> : vector<256x32xf32>
    %65 = tpu.matmul %63, %64, %cst_25 {dimension_numbers = #tpu.dot_dimension_numbers<[1], [0], [0], [1], [0, 0, 1, 1], [], []>} : vector<256x32xbf16>, vector<32x32xbf16>, vector<256x32xf32> -> vector<256x32xf32>
    %66 = vector.shape_cast %65 : vector<256x32xf32> to vector<16x16x32xf32>
    %c0_26 = arith.constant 0 : index
    %c0_27 = arith.constant 0 : index
    %c0_28 = arith.constant 0 : index
    %67 = vector.load %arg7[%c0_26, %c0_27, %c0_28] : memref<16x16x32xf32, #tpu.memory_space<vmem>>, vector<16x16x32xf32>
    tpu.vector_store %arg7[%c0_26, %c0_27, %c0_28], %66 {strides = array<i32>} : memref<16x16x32xf32, #tpu.memory_space<vmem>>, vector<16x16x32xf32>,
    return
  }
  func.func @transform_0(%arg0: i32) -> (i32, i32, i32) {
    %c0_i32 = arith.constant 0 : i32
    %c0_i32_0 = arith.constant 0 : i32
    %c0_i32_1 = arith.constant 0 : i32
    return %arg0, %c0_i32, %c0_i32_0 : i32, i32, i32
  }
  func.func @transform_1(%arg0: i32) -> (i32, i32) {
    %c0_i32 = arith.constant 0 : i32
    %c0_i32_0 = arith.constant 0 : i32
    %c0_i32_1 = arith.constant 0 : i32
    return %c0_i32, %c0_i32_0 : i32, i32
  }
  func.func @transform_2(%arg0: i32) -> (i32, i32) {
    %c0_i32 = arith.constant 0 : i32
    %c0_i32_0 = arith.constant 0 : i32
    %c0_i32_1 = arith.constant 0 : i32
    return %c0_i32, %c0_i32_0 : i32, i32
  }
  func.func @transform_3(%arg0: i32) -> (i32, i32) {
    %c0_i32 = arith.constant 0 : i32
    %c0_i32_0 = arith.constant 0 : i32
    %c0_i32_1 = arith.constant 0 : i32
    return %c0_i32, %c0_i32_0 : i32, i32
  }
  func.func @transform_4(%arg0: i32) -> (i32, i32) {
    %c0_i32 = arith.constant 0 : i32
    %c0_i32_0 = arith.constant 0 : i32
    %c0_i32_1 = arith.constant 0 : i32
    return %c0_i32, %c0_i32_0 : i32, i32
  }
  func.func @transform_5(%arg0: i32) -> (i32, i32, i32) {
    %c0_i32 = arith.constant 0 : i32
    %c0_i32_0 = arith.constant 0 : i32
    %c0_i32_1 = arith.constant 0 : i32
    %c0_i32_2 = arith.constant 0 : i32
    return %c0_i32, %c0_i32_0, %c0_i32_1 : i32, i32, i32
  }
  func.func @transform_6(%arg0: i32) -> (i32, i32, i32) {
    %c0_i32 = arith.constant 0 : i32
    %c0_i32_0 = arith.constant 0 : i32
    %c0_i32_1 = arith.constant 0 : i32
    return %arg0, %c0_i32, %c0_i32_0 : i32, i32, i32
  }
}

</mosaic_0001>

<llo_original>
// kernel: tpu_custom_call.1
$region0: #{tpu_custom_call.1}
  #allocation0 [shape = 'u32[]', space=smem, size = 0x4, offset = 0x4, fixed_abs, tag = 'smem constant byte address 0x4 - core index']
  #allocation1 [shape = 'u32[144,128]{1,0:T(1,128)}', space=vmem, size = 0x12000, scoped, tag = 'internal scratch']
  %s0 = inlined_call_operand.hbm [shape: bf16[16,16,32], index: 0, kind: input, shape index: {}]
  %s1 = inlined_call_operand.hbm [shape: bf16[32,32], index: 1, kind: input, shape index: {}]
  %s2 = inlined_call_operand.hbm [shape: bf16[32,32], index: 2, kind: input, shape index: {}]
  %s3 = inlined_call_operand.hbm [shape: bf16[32,32], index: 3, kind: input, shape index: {}]
  %s4 = inlined_call_operand.hbm [shape: bf16[32,32], index: 4, kind: input, shape index: {}]
  %s5 = inlined_call_operand.hbm [shape: f32[2,16,16], index: 5, kind: input, shape index: {}]
  %s6 = inlined_call_operand.hbm [shape: f32[16,16,32], index: 6, kind: output, shape index: {}]
  %s7 = sld [smem:[#allocation0]]
  $region58: #{tpu_custom_call.1} parent=0
    _
  %s9 = ssub.s32 1, %s7
  %s10 = scalar_select 0, %s9, %s7
  $region1: #{tpu_custom_call.1} parent=0
    #allocation2 [shape = 'u8[65536]{0}', space=vmem, size = 0x10000, scoped, tag = 'input window, operand 0, single buffered']
    #allocation3 [shape = 's32[1]{0}', space=sflag, size = 0x4, scoped, tag = 'scoped memory for tpu_custom_call.1']
    #allocation4 [shape = 's32[1]{0}', space=sflag, size = 0x4, scoped, tag = 'scoped memory for tpu_custom_call.1']
    #allocation5 [shape = 'u8[8192]{0}', space=vmem, size = 0x2000, scoped, tag = 'input window, operand 1, single buffered']
    #allocation6 [shape = 's32[1]{0}', space=sflag, size = 0x4, scoped, tag = 'scoped memory for tpu_custom_call.1']
    #allocation7 [shape = 'u8[8192]{0}', space=vmem, size = 0x2000, scoped, tag = 'input window, operand 2, single buffered']
    #allocation8 [shape = 'u8[8192]{0}', space=vmem, size = 0x2000, scoped, tag = 'input window, operand 3, single buffered']
    #allocation9 [shape = 's32[1]{0}', space=sflag, size = 0x4, scoped, tag = 'scoped memory for tpu_custom_call.1']
    #allocation10 [shape = 'u8[8192]{0}', space=vmem, size = 0x2000, scoped, tag = 'input window, operand 4, single buffered']
    #allocation11 [shape = 'u8[16384]{0}', space=vmem, size = 0x4000, scoped, tag = 'input window, operand 5, single buffered']
    #allocation12 [shape = 's32[1]{0}', space=sflag, size = 0x4, scoped, tag = 'scoped memory for tpu_custom_call.1']
    #allocation13 [shape = 'u8[131072]{0}', space=vmem, size = 0x20000, scoped, tag = 'output window, operand 0, single buffered']
    %11 = vsyncpa [#allocation3], 0
    %12 = vsyncpa [#allocation6], 0
    %13 = vsyncpa [#allocation9], 0
    %14 = vsyncpa [#allocation12], 0
    %15 = vsyncpa [#allocation4], 0
    // Predicated region
    $region2: #{tpu_custom_call.1} parent=1 // pred_check
      _
    $region3: #{tpu_custom_call.1} parent=1 // pred_check_branch
      %17 = sbr.rel (0) target = $region5
    $region4: #{tpu_custom_call.1} parent=1 // pred_region
      %s19 = ssub.s32 2048, 2048
      %20 = vsyncadd [#allocation3], %s19
      %s21 = sshll.u32 [#allocation2], 4
      %s22 = int_to_ptr.vmem [resolvable:$true] %s21
      %27 = dma.hbm_to_vmem [thread:$0]  %s0, 2048, %s22, [#allocation3], 64, 64, 4
    $region5: #{tpu_custom_call.1} parent=1 // pred_fallthru
      _
    // Predicated region
    $region6: #{tpu_custom_call.1} parent=1 // pred_check
      _
    $region7: #{tpu_custom_call.1} parent=1 // pred_check_branch
      %29 = sbr.rel (0) target = $region9
    $region8: #{tpu_custom_call.1} parent=1 // pred_region
      %s31 = ssub.s32 256, 256
      %32 = vsyncadd [#allocation6], %s31
      %s33 = sshll.u32 [#allocation5], 4
      %s34 = int_to_ptr.vmem [resolvable:$true] %s33
      %39 = dma.hbm_to_vmem [thread:$0]  %s1, 256, %s34, [#allocation6], 64, 64, 4
    $region9: #{tpu_custom_call.1} parent=1 // pred_fallthru
      _
    // Predicated region
    $region10: #{tpu_custom_call.1} parent=1 // pred_check
      _
    $region11: #{tpu_custom_call.1} parent=1 // pred_check_branch
      %41 = sbr.rel (0) target = $region13
    $region12: #{tpu_custom_call.1} parent=1 // pred_region
      %s43 = ssub.s32 256, 256
      %44 = vsyncadd [#allocation6], %s43
      %s45 = sshll.u32 [#allocation7], 4
      %s46 = int_to_ptr.vmem [resolvable:$true] %s45
      %51 = dma.hbm_to_vmem [thread:$0]  %s2, 256, %s46, [#allocation6], 64, 64, 4
    $region13: #{tpu_custom_call.1} parent=1 // pred_fallthru
      _
    // Predicated region
    $region14: #{tpu_custom_call.1} parent=1 // pred_check
      _
    $region15: #{tpu_custom_call.1} parent=1 // pred_check_branch
      %53 = sbr.rel (0) target = $region17
    $region16: #{tpu_custom_call.1} parent=1 // pred_region
      %s55 = ssub.s32 256, 256
      %56 = vsyncadd [#allocation9], %s55
      %s57 = sshll.u32 [#allocation8], 4
      %s58 = int_to_ptr.vmem [resolvable:$true] %s57
      %63 = dma.hbm_to_vmem [thread:$0]  %s3, 256, %s58, [#allocation9], 64, 64, 4
    $region17: #{tpu_custom_call.1} parent=1 // pred_fallthru
      _
    // Predicated region
    $region18: #{tpu_custom_call.1} parent=1 // pred_check
      _
    $region19: #{tpu_custom_call.1} parent=1 // pred_check_branch
      %65 = sbr.rel (0) target = $region21
    $region20: #{tpu_custom_call.1} parent=1 // pred_region
      %s67 = ssub.s32 256, 256
      %68 = vsyncadd [#allocation9], %s67
      %s69 = sshll.u32 [#allocation10], 4
      %s70 = int_to_ptr.vmem [resolvable:$true] %s69
      %75 = dma.hbm_to_vmem [thread:$0]  %s4, 256, %s70, [#allocation9], 64, 64, 4
    $region21: #{tpu_custom_call.1} parent=1 // pred_fallthru
      _
    // Predicated region
    $region22: #{tpu_custom_call.1} parent=1 // pred_check
      _
    $region23: #{tpu_custom_call.1} parent=1 // pred_check_branch
      %77 = sbr.rel (0) target = $region25
    $region24: #{tpu_custom_call.1} parent=1 // pred_region
      %s79 = ssub.s32 512, 512
      %80 = vsyncadd [#allocation12], %s79
      %s81 = sshll.u32 [#allocation11], 4
      %s82 = int_to_ptr.vmem [resolvable:$true] %s81
      %87 = dma.hbm_to_vmem [thread:$0]  %s5, 512, %s82, [#allocation12], 128, 128, 8
    $region25: #{tpu_custom_call.1} parent=1 // pred_fallthru
      _
    // Predicated region
    $region26: #{tpu_custom_call.1} parent=1 // pred_check
      _
    $region27: #{tpu_custom_call.1} parent=1 // pred_check_branch
      %89 = sbr.rel (0) target = $region29
    $region28: #{tpu_custom_call.1} parent=1 // pred_region
      %90 = dma.done [#allocation3], 2048
    $region29: #{tpu_custom_call.1} parent=1 // pred_fallthru
      _
    // Predicated region
    $region30: #{tpu_custom_call.1} parent=1 // pred_check
      _
    $region31: #{tpu_custom_call.1} parent=1 // pred_check_branch
      %92 = sbr.rel (0) target = $region33
    $region32: #{tpu_custom_call.1} parent=1 // pred_region
      %93 = dma.done [#allocation6], 256
    $region33: #{tpu_custom_call.1} parent=1 // pred_fallthru
      _
    // Predicated region
    $region34: #{tpu_custom_call.1} parent=1 // pred_check
      _
    $region35: #{tpu_custom_call.1} parent=1 // pred_check_branch
      %95 = sbr.rel (0) target = $region37
    $region36: #{tpu_custom_call.1} parent=1 // pred_region
      %96 = dma.done [#allocation6], 256
    $region37: #{tpu_custom_call.1} parent=1 // pred_fallthru
      _
    // Predicated region
    $region38: #{tpu_custom_call.1} parent=1 // pred_check
      _
    $region39: #{tpu_custom_call.1} parent=1 // pred_check_branch
      %98 = sbr.rel (0) target = $region41
    $region40: #{tpu_custom_call.1} parent=1 // pred_region
      %99 = dma.done [#allocation9], 256
    $region41: #{tpu_custom_call.1} parent=1 // pred_fallthru
      _
    // Predicated region
    $region42: #{tpu_custom_call.1} parent=1 // pred_check
      _
    $region43: #{tpu_custom_call.1} parent=1 // pred_check_branch
      %101 = sbr.rel (0) target = $region45
    $region44: #{tpu_custom_call.1} parent=1 // pred_region
      %102 = dma.done [#allocation9], 256
    $region45: #{tpu_custom_call.1} parent=1 // pred_fallthru
      _
    // Predicated region
    $region46: #{tpu_custom_call.1} parent=1 // pred_check
      _
    $region47: #{tpu_custom_call.1} parent=1 // pred_check_branch
      %104 = sbr.rel (0) target = $region49
    $region48: #{tpu_custom_call.1} parent=1 // pred_region
      %105 = dma.done [#allocation12], 512
    $region49: #{tpu_custom_call.1} parent=1 // pred_fallthru
      _
    %v107 = vld [vmem:[#allocation2] sm:$0xf]
    %v108 = vld [vmem:[#allocation2 + $0x4] sm:$0xf]
    %v109 = vld [vmem:[#allocation2 + $0x8] sm:$0xf]
    %v110 = vld [vmem:[#allocation2 + $0xc] sm:$0xf]
    %v111 = vld [vmem:[#allocation2 + $0x10] sm:$0xf]
    %v112 = vld [vmem:[#allocation2 + $0x14] sm:$0xf]
    %v113 = vld [vmem:[#allocation2 + $0x18] sm:$0xf]
    %v114 = vld [vmem:[#allocation2 + $0x1c] sm:$0xf]
    %v115 = vld [vmem:[#allocation2 + $0x20] sm:$0xf]
    %v116 = vld [vmem:[#allocation2 + $0x24] sm:$0xf]
    %v117 = vld [vmem:[#allocation2 + $0x28] sm:$0xf]
    %v118 = vld [vmem:[#allocation2 + $0x2c] sm:$0xf]
    %v119 = vld [vmem:[#allocation2 + $0x30] sm:$0xf]
    %v120 = vld [vmem:[#allocation2 + $0x34] sm:$0xf]
    %v121 = vld [vmem:[#allocation2 + $0x38] sm:$0xf]
    %v122 = vld [vmem:[#allocation2 + $0x3c] sm:$0xf]
    %v123 = vld [vmem:[#allocation2 + $0x40] sm:$0xf]
    %v124 = vld [vmem:[#allocation2 + $0x44] sm:$0xf]
    %v125 = vld [vmem:[#allocation2 + $0x48] sm:$0xf]
    %v126 = vld [vmem:[#allocation2 + $0x4c] sm:$0xf]
    %v127 = vld [vmem:[#allocation2 + $0x50] sm:$0xf]
    %v128 = vld [vmem:[#allocation2 + $0x54] sm:$0xf]
    %v129 = vld [vmem:[#allocation2 + $0x58] sm:$0xf]
    %v130 = vld [vmem:[#allocation2 + $0x5c] sm:$0xf]
    %v131 = vld [vmem:[#allocation2 + $0x60] sm:$0xf]
    %v132 = vld [vmem:[#allocation2 + $0x64] sm:$0xf]
    %v133 = vld [vmem:[#allocation2 + $0x68] sm:$0xf]
    %v134 = vld [vmem:[#allocation2 + $0x6c] sm:$0xf]
    %v135 = vld [vmem:[#allocation2 + $0x70] sm:$0xf]
    %v136 = vld [vmem:[#allocation2 + $0x74] sm:$0xf]
    %v137 = vld [vmem:[#allocation2 + $0x78] sm:$0xf]
    %v138 = vld [vmem:[#allocation2 + $0x7c] sm:$0xf]
    %v139 = vld [vmem:[#allocation5] sm:$0xf]
    %v140 = vld [vmem:[#allocation5 + $0x4] sm:$0xf]
    %v141 = vld [vmem:[#allocation5 + $0x8] sm:$0xf]
    %v142 = vld [vmem:[#allocation5 + $0xc] sm:$0xf]
    %v175 = vunpack.c.l.b16 %v107
    %v176 = vunpack.c.l.b16 %v108
    %v177 = vunpack.c.l.b16 %v109
    %v178 = vunpack.c.l.b16 %v110
    %v179 = vunpack.c.l.b16 %v111
    %v180 = vunpack.c.l.b16 %v112
    %v181 = vunpack.c.l.b16 %v113
    %v182 = vunpack.c.l.b16 %v114
    %v183 = vunpack.c.l.b16 %v115
    %v184 = vunpack.c.l.b16 %v116
    %v185 = vunpack.c.l.b16 %v117
    %v186 = vunpack.c.l.b16 %v118
    %v187 = vunpack.c.l.b16 %v119
    %v188 = vunpack.c.l.b16 %v120
    %v189 = vunpack.c.l.b16 %v121
    %v190 = vunpack.c.l.b16 %v122
    %v191 = vunpack.c.l.b16 %v123
    %v192 = vunpack.c.l.b16 %v124
    %v193 = vunpack.c.l.b16 %v125
    %v194 = vunpack.c.l.b16 %v126
    %v195 = vunpack.c.l.b16 %v127
    %v196 = vunpack.c.l.b16 %v128
    %v197 = vunpack.c.l.b16 %v129
    %v198 = vunpack.c.l.b16 %v130
    %v199 = vunpack.c.l.b16 %v131
    %v200 = vunpack.c.l.b16 %v132
    %v201 = vunpack.c.l.b16 %v133
    %v202 = vunpack.c.l.b16 %v134
    %v203 = vunpack.c.l.b16 %v135
    %v204 = vunpack.c.l.b16 %v136
    %v205 = vunpack.c.l.b16 %v137
    %v206 = vunpack.c.l.b16 %v138
    %v207 = vpack.c.b16 %v176, %v175
    %v208 = vpack.c.b16 %v178, %v177
    %v209 = vpack.c.b16 %v180, %v179
    %v210 = vpack.c.b16 %v182, %v181
    %v211 = vpack.c.b16 %v184, %v183
    %v212 = vpack.c.b16 %v186, %v185
    %v213 = vpack.c.b16 %v188, %v187
    %v214 = vpack.c.b16 %v190, %v189
    %v215 = vpack.c.b16 %v192, %v191
    %v216 = vpack.c.b16 %v194, %v193
    %v217 = vpack.c.b16 %v196, %v195
    %v218 = vpack.c.b16 %v198, %v197
    %v219 = vpack.c.b16 %v200, %v199
    %v220 = vpack.c.b16 %v202, %v201
    %v221 = vpack.c.b16 %v204, %v203
    %v222 = vpack.c.b16 %v206, %v205
    %v227 = vunpack.c.l.b16 %v139
    %v228 = vunpack.c.l.b16 %v140
    %v229 = vunpack.c.l.b16 %v141
    %v230 = vunpack.c.l.b16 %v142
    %v231 = vpack.c.b16 %v228, %v227
    %v232 = vpack.c.b16 %v230, %v229
    %vm235 = vcmask 261120
    %v237 = vsel %vm235, %v207, 0
    %v240 = vsel %vm235, %v208, 0
    %v243 = vsel %vm235, %v209, 0
    %v246 = vsel %vm235, %v210, 0
    %v249 = vsel %vm235, %v211, 0
    %v252 = vsel %vm235, %v212, 0
    %v255 = vsel %vm235, %v213, 0
    %v258 = vsel %vm235, %v214, 0
    %v261 = vsel %vm235, %v215, 0
    %v264 = vsel %vm235, %v216, 0
    %v267 = vsel %vm235, %v217, 0
    %v270 = vsel %vm235, %v218, 0
    %v273 = vsel %vm235, %v219, 0
    %v276 = vsel %vm235, %v220, 0
    %v279 = vsel %vm235, %v221, 0
    %v282 = vsel %vm235, %v222, 0
    %284 = vmatprep.subr.bf16.mxu0 0
    %285 = vmatpush1.bf16.msra.mxu0 %v231
    %286 = vmatprep.subr.bf16.mxu0 0
    %287 = vmatpush1.bf16.msra.mxu0 %v232
    %288 = vmatprep.subr.bf16.mxu0 0
    %289 = vmatpush1.bf16.msra.mxu0 0
    %290 = vmatprep.subr.bf16.mxu0 0
    %291 = vmatpush1.bf16.msra.mxu0 0
    %292 = vmatprep.subr.bf16.mxu0 0
    %293 = vmatpush1.bf16.msra.mxu0 0
    %294 = vmatprep.subr.bf16.mxu0 0
    %295 = vmatpush1.bf16.msra.mxu0 0
    %296 = vmatprep.subr.bf16.mxu0 0
    %297 = vmatpush1.bf16.msra.mxu0 0
    %298 = vmatprep.subr.bf16.mxu0 0
    %299 = vmatpush1.bf16.msra.mxu0 0
    %300 = vmatprep.subr.bf16.mxu0 0
    %301 = vmatpush1.bf16.msra.mxu0 0
    %302 = vmatprep.subr.bf16.mxu0 0
    %303 = vmatpush1.bf16.msra.mxu0 0
    %304 = vmatprep.subr.bf16.mxu0 0
    %305 = vmatpush1.bf16.msra.mxu0 0
    %306 = vmatprep.subr.bf16.mxu0 0
    %307 = vmatpush1.bf16.msra.mxu0 0
    %308 = vmatprep.subr.bf16.mxu0 0
    %309 = vmatpush1.bf16.msra.mxu0 0
    %310 = vmatprep.subr.bf16.mxu0 0
    %311 = vmatpush1.bf16.msra.mxu0 0
    %312 = vmatprep.subr.bf16.mxu0 0
    %313 = vmatpush1.bf16.msra.mxu0 0
    %314 = vmatprep.subr.bf16.mxu0 0
    %315 = vmatpush1.bf16.msra.mxu0 0
    %316 = vmatprep.mubr.bf16.mxu0 0
    %317 = vmatmul.mubr.bf16.gmra.mrb[0].mxu0 %v237
    %v318 = vpop.f32.mrb[0].mxu0
    %v319 = vadd.f32 0.0, %v318
    %v320 = vpop.f32.mrb[0].mxu0
    %v321 = vpop.f32.mrb[0].mxu0
    %v322 = vadd.f32 0.0, %v321
    %v323 = vpop.f32.mrb[0].mxu0
    %324 = vmatprep.mubr.bf16.mxu0 0
    %325 = vmatmul.mubr.bf16.gmra.mrb[0].mxu0 %v240
    %v326 = vpop.f32.mrb[0].mxu0
    %v327 = vadd.f32 0.0, %v326
    %v328 = vpop.f32.mrb[0].mxu0
    %v329 = vpop.f32.mrb[0].mxu0
    %v330 = vadd.f32 0.0, %v329
    %v331 = vpop.f32.mrb[0].mxu0
    %332 = vmatprep.mubr.bf16.mxu0 0
    %333 = vmatmul.mubr.bf16.gmra.mrb[0].mxu0 %v243
    %v334 = vpop.f32.mrb[0].mxu0
    %v335 = vadd.f32 0.0, %v334
    %v336 = vpop.f32.mrb[0].mxu0
    %v337 = vpop.f32.mrb[0].mxu0
    %v338 = vadd.f32 0.0, %v337
    %v339 = vpop.f32.mrb[0].mxu0
    %340 = vmatprep.mubr.bf16.mxu0 0
    %341 = vmatmul.mubr.bf16.gmra.mrb[0].mxu0 %v246
    %v342 = vpop.f32.mrb[0].mxu0
    %v343 = vadd.f32 0.0, %v342
    %v344 = vpop.f32.mrb[0].mxu0
    %v345 = vpop.f32.mrb[0].mxu0
    %v346 = vadd.f32 0.0, %v345
    %v347 = vpop.f32.mrb[0].mxu0
    %348 = vmatprep.mubr.bf16.mxu0 0
    %349 = vmatmul.mubr.bf16.gmra.mrb[0].mxu0 %v249
    %v350 = vpop.f32.mrb[0].mxu0
    %v351 = vadd.f32 0.0, %v350
    %v352 = vpop.f32.mrb[0].mxu0
    %v353 = vpop.f32.mrb[0].mxu0
    %v354 = vadd.f32 0.0, %v353
    %v355 = vpop.f32.mrb[0].mxu0
    %356 = vmatprep.mubr.bf16.mxu0 0
    %357 = vmatmul.mubr.bf16.gmra.mrb[0].mxu0 %v252
    %v358 = vpop.f32.mrb[0].mxu0
    %v359 = vadd.f32 0.0, %v358
    %v360 = vpop.f32.mrb[0].mxu0
    %v361 = vpop.f32.mrb[0].mxu0
    %v362 = vadd.f32 0.0, %v361
    %v363 = vpop.f32.mrb[0].mxu0
    %364 = vmatprep.mubr.bf16.mxu0 0
    %365 = vmatmul.mubr.bf16.gmra.mrb[0].mxu0 %v255
    %v366 = vpop.f32.mrb[0].mxu0
    %v367 = vadd.f32 0.0, %v366
    %v368 = vpop.f32.mrb[0].mxu0
    %v369 = vpop.f32.mrb[0].mxu0
    %v370 = vadd.f32 0.0, %v369
    %v371 = vpop.f32.mrb[0].mxu0
    %372 = vmatprep.mubr.bf16.mxu0 0
    %373 = vmatmul.mubr.bf16.gmra.mrb[0].mxu0 %v258
    %v374 = vpop.f32.mrb[0].mxu0
    %v375 = vadd.f32 0.0, %v374
    %v376 = vpop.f32.mrb[0].mxu0
    %v377 = vpop.f32.mrb[0].mxu0
    %v378 = vadd.f32 0.0, %v377
    %v379 = vpop.f32.mrb[0].mxu0
    %380 = vmatprep.mubr.bf16.mxu0 0
    %381 = vmatmul.mubr.bf16.gmra.mrb[0].mxu0 %v261
    %v382 = vpop.f32.mrb[0].mxu0
    %v383 = vadd.f32 0.0, %v382
    %v384 = vpop.f32.mrb[0].mxu0
    %v385 = vpop.f32.mrb[0].mxu0
    %v386 = vadd.f32 0.0, %v385
    %v387 = vpop.f32.mrb[0].mxu0
    %388 = vmatprep.mubr.bf16.mxu0 0
    %389 = vmatmul.mubr.bf16.gmra.mrb[0].mxu0 %v264
    %v390 = vpop.f32.mrb[0].mxu0
    %v391 = vadd.f32 0.0, %v390
    %v392 = vpop.f32.mrb[0].mxu0
    %v393 = vpop.f32.mrb[0].mxu0
    %v394 = vadd.f32 0.0, %v393
    %v395 = vpop.f32.mrb[0].mxu0
    %396 = vmatprep.mubr.bf16.mxu0 0
    %397 = vmatmul.mubr.bf16.gmra.mrb[0].mxu0 %v267
    %v398 = vpop.f32.mrb[0].mxu0
    %v399 = vadd.f32 0.0, %v398
    %v400 = vpop.f32.mrb[0].mxu0
    %v401 = vpop.f32.mrb[0].mxu0
    %v402 = vadd.f32 0.0, %v401
    %v403 = vpop.f32.mrb[0].mxu0
    %404 = vmatprep.mubr.bf16.mxu0 0
    %405 = vmatmul.mubr.bf16.gmra.mrb[0].mxu0 %v270
    %v406 = vpop.f32.mrb[0].mxu0
    %v407 = vadd.f32 0.0, %v406
    %v408 = vpop.f32.mrb[0].mxu0
    %v409 = vpop.f32.mrb[0].mxu0
    %v410 = vadd.f32 0.0, %v409
    %v411 = vpop.f32.mrb[0].mxu0
    %412 = vmatprep.mubr.bf16.mxu0 0
    %413 = vmatmul.mubr.bf16.gmra.mrb[0].mxu0 %v273
    %v414 = vpop.f32.mrb[0].mxu0
    %v415 = vadd.f32 0.0, %v414
    %v416 = vpop.f32.mrb[0].mxu0
    %v417 = vpop.f32.mrb[0].mxu0
    %v418 = vadd.f32 0.0, %v417
    %v419 = vpop.f32.mrb[0].mxu0
    %420 = vmatprep.mubr.bf16.mxu0 0
    %421 = vmatmul.mubr.bf16.gmra.mrb[0].mxu0 %v276
    %v422 = vpop.f32.mrb[0].mxu0
    %v423 = vadd.f32 0.0, %v422
    %v424 = vpop.f32.mrb[0].mxu0
    %v425 = vpop.f32.mrb[0].mxu0
    %v426 = vadd.f32 0.0, %v425
    %v427 = vpop.f32.mrb[0].mxu0
    %428 = vmatprep.mubr.bf16.mxu0 0
    %429 = vmatmul.mubr.bf16.gmra.mrb[0].mxu0 %v279
    %v430 = vpop.f32.mrb[0].mxu0
    %v431 = vadd.f32 0.0, %v430
    %v432 = vpop.f32.mrb[0].mxu0
    %v433 = vpop.f32.mrb[0].mxu0
    %v434 = vadd.f32 0.0, %v433
    %v435 = vpop.f32.mrb[0].mxu0
    %436 = vmatprep.mubr.bf16.mxu0 0
    %437 = vmatmul.mubr.bf16.gmra.mrb[0].mxu0 %v282
    %v438 = vpop.f32.mrb[0].mxu0
    %v439 = vadd.f32 0.0, %v438
    %v440 = vpop.f32.mrb[0].mxu0
    %v441 = vpop.f32.mrb[0].mxu0
    %v442 = vadd.f32 0.0, %v441
    %v443 = vpop.f32.mrb[0].mxu0
    %444 = vdwg.mxu0
    %v445 = vpack.c.bf16 %v322, %v319
    %v446 = vpack.c.bf16 %v330, %v327
    %v447 = vpack.c.bf16 %v338, %v335
    %v448 = vpack.c.bf16 %v346, %v343
    %v449 = vpack.c.bf16 %v354, %v351
    %v450 = vpack.c.bf16 %v362, %v359
    %v451 = vpack.c.bf16 %v370, %v367
    %v452 = vpack.c.bf16 %v378, %v375
    %v453 = vpack.c.bf16 %v386, %v383
    %v454 = vpack.c.bf16 %v394, %v391
    %v455 = vpack.c.bf16 %v402, %v399
    %v456 = vpack.c.bf16 %v410, %v407
    %v457 = vpack.c.bf16 %v418, %v415
    %v458 = vpack.c.bf16 %v426, %v423
    %v459 = vpack.c.bf16 %v434, %v431
    %v460 = vpack.c.bf16 %v442, %v439
    %v461 = vld [vmem:[#allocation7] sm:$0xf]
    %v462 = vld [vmem:[#allocation7 + $0x4] sm:$0xf]
    %v463 = vld [vmem:[#allocation7 + $0x8] sm:$0xf]
    %v464 = vld [vmem:[#allocation7 + $0xc] sm:$0xf]
    %v469 = vunpack.c.l.b16 %v461
    %v470 = vunpack.c.l.b16 %v462
    %v471 = vunpack.c.l.b16 %v463
    %v472 = vunpack.c.l.b16 %v464
    %v473 = vpack.c.b16 %v470, %v469
    %v474 = vpack.c.b16 %v472, %v471
    %477 = vmatprep.subr.bf16.mxu0 0
    %478 = vmatpush1.bf16.msra.mxu0 %v473
    %479 = vmatprep.subr.bf16.mxu0 0
    %480 = vmatpush1.bf16.msra.mxu0 %v474
    %481 = vmatprep.subr.bf16.mxu0 0
    %482 = vmatpush1.bf16.msra.mxu0 0
    %483 = vmatprep.subr.bf16.mxu0 0
    %484 = vmatpush1.bf16.msra.mxu0 0
    %485 = vmatprep.subr.bf16.mxu0 0
    %486 = vmatpush1.bf16.msra.mxu0 0
    %487 = vmatprep.subr.bf16.mxu0 0
    %488 = vmatpush1.bf16.msra.mxu0 0
    %489 = vmatprep.subr.bf16.mxu0 0
    %490 = vmatpush1.bf16.msra.mxu0 0
    %491 = vmatprep.subr.bf16.mxu0 0
    %492 = vmatpush1.bf16.msra.mxu0 0
    %493 = vmatprep.subr.bf16.mxu0 0
    %494 = vmatpush1.bf16.msra.mxu0 0
    %495 = vmatprep.subr.bf16.mxu0 0
    %496 = vmatpush1.bf16.msra.mxu0 0
    %497 = vmatprep.subr.bf16.mxu0 0
    %498 = vmatpush1.bf16.msra.mxu0 0
    %499 = vmatprep.subr.bf16.mxu0 0
    %500 = vmatpush1.bf16.msra.mxu0 0
    %501 = vmatprep.subr.bf16.mxu0 0
    %502 = vmatpush1.bf16.msra.mxu0 0
    %503 = vmatprep.subr.bf16.mxu0 0
    %504 = vmatpush1.bf16.msra.mxu0 0
    %505 = vmatprep.subr.bf16.mxu0 0
    %506 = vmatpush1.bf16.msra.mxu0 0
    %507 = vmatprep.subr.bf16.mxu0 0
    %508 = vmatpush1.bf16.msra.mxu0 0
    %509 = vmatprep.mubr.bf16.mxu0 0
    %510 = vmatmul.mubr.bf16.gmra.mrb[0].mxu0 %v237
    %v511 = vpop.f32.mrb[0].mxu0
    %v512 = vadd.f32 0.0, %v511
    %v513 = vpop.f32.mrb[0].mxu0
    %v514 = vpop.f32.mrb[0].mxu0
    %v515 = vadd.f32 0.0, %v514
    %v516 = vpop.f32.mrb[0].mxu0
    %517 = vmatprep.mubr.bf16.mxu0 0
    %518 = vmatmul.mubr.bf16.gmra.mrb[0].mxu0 %v240
    %v519 = vpop.f32.mrb[0].mxu0
    %v520 = vadd.f32 0.0, %v519
    %v521 = vpop.f32.mrb[0].mxu0
    %v522 = vpop.f32.mrb[0].mxu0
    %v523 = vadd.f32 0.0, %v522
    %v524 = vpop.f32.mrb[0].mxu0
    %525 = vmatprep.mubr.bf16.mxu0 0
    %526 = vmatmul.mubr.bf16.gmra.mrb[0].mxu0 %v243
    %v527 = vpop.f32.mrb[0].mxu0
    %v528 = vadd.f32 0.0, %v527
    %v529 = vpop.f32.mrb[0].mxu0
    %v530 = vpop.f32.mrb[0].mxu0
    %v531 = vadd.f32 0.0, %v530
    %v532 = vpop.f32.mrb[0].mxu0
    %533 = vmatprep.mubr.bf16.mxu0 0
    %534 = vmatmul.mubr.bf16.gmra.mrb[0].mxu0 %v246
    %v535 = vpop.f32.mrb[0].mxu0
    %v536 = vadd.f32 0.0, %v535
    %v537 = vpop.f32.mrb[0].mxu0
    %v538 = vpop.f32.mrb[0].mxu0
    %v539 = vadd.f32 0.0, %v538
    %v540 = vpop.f32.mrb[0].mxu0
    %541 = vmatprep.mubr.bf16.mxu0 0
    %542 = vmatmul.mubr.bf16.gmra.mrb[0].mxu0 %v249
    %v543 = vpop.f32.mrb[0].mxu0
    %v544 = vadd.f32 0.0, %v543
    %v545 = vpop.f32.mrb[0].mxu0
    %v546 = vpop.f32.mrb[0].mxu0
    %v547 = vadd.f32 0.0, %v546
    %v548 = vpop.f32.mrb[0].mxu0
    %549 = vmatprep.mubr.bf16.mxu0 0
    %550 = vmatmul.mubr.bf16.gmra.mrb[0].mxu0 %v252
    %v551 = vpop.f32.mrb[0].mxu0
    %v552 = vadd.f32 0.0, %v551
    %v553 = vpop.f32.mrb[0].mxu0
    %v554 = vpop.f32.mrb[0].mxu0
    %v555 = vadd.f32 0.0, %v554
    %v556 = vpop.f32.mrb[0].mxu0
    %557 = vmatprep.mubr.bf16.mxu0 0
    %558 = vmatmul.mubr.bf16.gmra.mrb[0].mxu0 %v255
    %v559 = vpop.f32.mrb[0].mxu0
    %v560 = vadd.f32 0.0, %v559
    %v561 = vpop.f32.mrb[0].mxu0
    %v562 = vpop.f32.mrb[0].mxu0
    %v563 = vadd.f32 0.0, %v562
    %v564 = vpop.f32.mrb[0].mxu0
    %565 = vmatprep.mubr.bf16.mxu0 0
    %566 = vmatmul.mubr.bf16.gmra.mrb[0].mxu0 %v258
    %v567 = vpop.f32.mrb[0].mxu0
    %v568 = vadd.f32 0.0, %v567
    %v569 = vpop.f32.mrb[0].mxu0
    %v570 = vpop.f32.mrb[0].mxu0
    %v571 = vadd.f32 0.0, %v570
    %v572 = vpop.f32.mrb[0].mxu0
    %573 = vmatprep.mubr.bf16.mxu0 0
    %574 = vmatmul.mubr.bf16.gmra.mrb[0].mxu0 %v261
    %v575 = vpop.f32.mrb[0].mxu0
    %v576 = vadd.f32 0.0, %v575
    %v577 = vpop.f32.mrb[0].mxu0
    %v578 = vpop.f32.mrb[0].mxu0
    %v579 = vadd.f32 0.0, %v578
    %v580 = vpop.f32.mrb[0].mxu0
    %581 = vmatprep.mubr.bf16.mxu0 0
    %582 = vmatmul.mubr.bf16.gmra.mrb[0].mxu0 %v264
    %v583 = vpop.f32.mrb[0].mxu0
    %v584 = vadd.f32 0.0, %v583
    %v585 = vpop.f32.mrb[0].mxu0
    %v586 = vpop.f32.mrb[0].mxu0
    %v587 = vadd.f32 0.0, %v586
    %v588 = vpop.f32.mrb[0].mxu0
    %589 = vmatprep.mubr.bf16.mxu0 0
    %590 = vmatmul.mubr.bf16.gmra.mrb[0].mxu0 %v267
    %v591 = vpop.f32.mrb[0].mxu0
    %v592 = vadd.f32 0.0, %v591
    %v593 = vpop.f32.mrb[0].mxu0
    %v594 = vpop.f32.mrb[0].mxu0
    %v595 = vadd.f32 0.0, %v594
    %v596 = vpop.f32.mrb[0].mxu0
    %597 = vmatprep.mubr.bf16.mxu0 0
    %598 = vmatmul.mubr.bf16.gmra.mrb[0].mxu0 %v270
    %v599 = vpop.f32.mrb[0].mxu0
    %v600 = vadd.f32 0.0, %v599
    %v601 = vpop.f32.mrb[0].mxu0
    %v602 = vpop.f32.mrb[0].mxu0
    %v603 = vadd.f32 0.0, %v602
    %v604 = vpop.f32.mrb[0].mxu0
    %605 = vmatprep.mubr.bf16.mxu0 0
    %606 = vmatmul.mubr.bf16.gmra.mrb[0].mxu0 %v273
    %v607 = vpop.f32.mrb[0].mxu0
    %v608 = vadd.f32 0.0, %v607
    %v609 = vpop.f32.mrb[0].mxu0
    %v610 = vpop.f32.mrb[0].mxu0
    %v611 = vadd.f32 0.0, %v610
    %v612 = vpop.f32.mrb[0].mxu0
    %613 = vmatprep.mubr.bf16.mxu0 0
    %614 = vmatmul.mubr.bf16.gmra.mrb[0].mxu0 %v276
    %v615 = vpop.f32.mrb[0].mxu0
    %v616 = vadd.f32 0.0, %v615
    %v617 = vpop.f32.mrb[0].mxu0
    %v618 = vpop.f32.mrb[0].mxu0
    %v619 = vadd.f32 0.0, %v618
    %v620 = vpop.f32.mrb[0].mxu0
    %621 = vmatprep.mubr.bf16.mxu0 0
    %622 = vmatmul.mubr.bf16.gmra.mrb[0].mxu0 %v279
    %v623 = vpop.f32.mrb[0].mxu0
    %v624 = vadd.f32 0.0, %v623
    %v625 = vpop.f32.mrb[0].mxu0
    %v626 = vpop.f32.mrb[0].mxu0
    %v627 = vadd.f32 0.0, %v626
    %v628 = vpop.f32.mrb[0].mxu0
    %629 = vmatprep.mubr.bf16.mxu0 0
    %630 = vmatmul.mubr.bf16.gmra.mrb[0].mxu0 %v282
    %v631 = vpop.f32.mrb[0].mxu0
    %v632 = vadd.f32 0.0, %v631
    %v633 = vpop.f32.mrb[0].mxu0
    %v634 = vpop.f32.mrb[0].mxu0
    %v635 = vadd.f32 0.0, %v634
    %v636 = vpop.f32.mrb[0].mxu0
    %637 = vdwg.mxu0
    %v638 = vpack.c.bf16 %v515, %v512
    %v639 = vpack.c.bf16 %v523, %v520
    %v640 = vpack.c.bf16 %v531, %v528
    %v641 = vpack.c.bf16 %v539, %v536
    %v642 = vpack.c.bf16 %v547, %v544
    %v643 = vpack.c.bf16 %v555, %v552
    %v644 = vpack.c.bf16 %v563, %v560
    %v645 = vpack.c.bf16 %v571, %v568
    %v646 = vpack.c.bf16 %v579, %v576
    %v647 = vpack.c.bf16 %v587, %v584
    %v648 = vpack.c.bf16 %v595, %v592
    %v649 = vpack.c.bf16 %v603, %v600
    %v650 = vpack.c.bf16 %v611, %v608
    %v651 = vpack.c.bf16 %v619, %v616
    %v652 = vpack.c.bf16 %v627, %v624
    %v653 = vpack.c.bf16 %v635, %v632
    %v654 = vld [vmem:[#allocation8] sm:$0xf]
    %v655 = vld [vmem:[#allocation8 + $0x4] sm:$0xf]
    %v656 = vld [vmem:[#allocation8 + $0x8] sm:$0xf]
    %v657 = vld [vmem:[#allocation8 + $0xc] sm:$0xf]
    %v662 = vunpack.c.l.b16 %v654
    %v663 = vunpack.c.l.b16 %v655
    %v664 = vunpack.c.l.b16 %v656
    %v665 = vunpack.c.l.b16 %v657
    %v666 = vpack.c.b16 %v663, %v662
    %v667 = vpack.c.b16 %v665, %v664
    %670 = vmatprep.subr.bf16.mxu0 0
    %671 = vmatpush1.bf16.msra.mxu0 %v666
    %672 = vmatprep.subr.bf16.mxu0 0
    %673 = vmatpush1.bf16.msra.mxu0 %v667
    %674 = vmatprep.subr.bf16.mxu0 0
    %675 = vmatpush1.bf16.msra.mxu0 0
    %676 = vmatprep.subr.bf16.mxu0 0
    %677 = vmatpush1.bf16.msra.mxu0 0
    %678 = vmatprep.subr.bf16.mxu0 0
    %679 = vmatpush1.bf16.msra.mxu0 0
    %680 = vmatprep.subr.bf16.mxu0 0
    %681 = vmatpush1.bf16.msra.mxu0 0
    %682 = vmatprep.subr.bf16.mxu0 0
    %683 = vmatpush1.bf16.msra.mxu0 0
    %684 = vmatprep.subr.bf16.mxu0 0
    %685 = vmatpush1.bf16.msra.mxu0 0
    %686 = vmatprep.subr.bf16.mxu0 0
    %687 = vmatpush1.bf16.msra.mxu0 0
    %688 = vmatprep.subr.bf16.mxu0 0
    %689 = vmatpush1.bf16.msra.mxu0 0
    %690 = vmatprep.subr.bf16.mxu0 0
    %691 = vmatpush1.bf16.msra.mxu0 0
    %692 = vmatprep.subr.bf16.mxu0 0
    %693 = vmatpush1.bf16.msra.mxu0 0
    %694 = vmatprep.subr.bf16.mxu0 0
    %695 = vmatpush1.bf16.msra.mxu0 0
    %696 = vmatprep.subr.bf16.mxu0 0
    %697 = vmatpush1.bf16.msra.mxu0 0
    %698 = vmatprep.subr.bf16.mxu0 0
    %699 = vmatpush1.bf16.msra.mxu0 0
    %700 = vmatprep.subr.bf16.mxu0 0
    %701 = vmatpush1.bf16.msra.mxu0 0
    %702 = vmatprep.mubr.bf16.mxu0 0
    %703 = vmatmul.mubr.bf16.gmra.mrb[0].mxu0 %v237
    %v704 = vpop.f32.mrb[0].mxu0
    %v705 = vadd.f32 0.0, %v704
    %v706 = vpop.f32.mrb[0].mxu0
    %v707 = vpop.f32.mrb[0].mxu0
    %v708 = vadd.f32 0.0, %v707
    %v709 = vpop.f32.mrb[0].mxu0
    %710 = vmatprep.mubr.bf16.mxu0 0
    %711 = vmatmul.mubr.bf16.gmra.mrb[0].mxu0 %v240
    %v712 = vpop.f32.mrb[0].mxu0
    %v713 = vadd.f32 0.0, %v712
    %v714 = vpop.f32.mrb[0].mxu0
    %v715 = vpop.f32.mrb[0].mxu0
    %v716 = vadd.f32 0.0, %v715
    %v717 = vpop.f32.mrb[0].mxu0
    %718 = vmatprep.mubr.bf16.mxu0 0
    %719 = vmatmul.mubr.bf16.gmra.mrb[0].mxu0 %v243
    %v720 = vpop.f32.mrb[0].mxu0
    %v721 = vadd.f32 0.0, %v720
    %v722 = vpop.f32.mrb[0].mxu0
    %v723 = vpop.f32.mrb[0].mxu0
    %v724 = vadd.f32 0.0, %v723
    %v725 = vpop.f32.mrb[0].mxu0
    %726 = vmatprep.mubr.bf16.mxu0 0
    %727 = vmatmul.mubr.bf16.gmra.mrb[0].mxu0 %v246
    %v728 = vpop.f32.mrb[0].mxu0
    %v729 = vadd.f32 0.0, %v728
    %v730 = vpop.f32.mrb[0].mxu0
    %v731 = vpop.f32.mrb[0].mxu0
    %v732 = vadd.f32 0.0, %v731
    %v733 = vpop.f32.mrb[0].mxu0
    %734 = vmatprep.mubr.bf16.mxu0 0
    %735 = vmatmul.mubr.bf16.gmra.mrb[0].mxu0 %v249
    %v736 = vpop.f32.mrb[0].mxu0
    %v737 = vadd.f32 0.0, %v736
    %v738 = vpop.f32.mrb[0].mxu0
    %v739 = vpop.f32.mrb[0].mxu0
    %v740 = vadd.f32 0.0, %v739
    %v741 = vpop.f32.mrb[0].mxu0
    %742 = vmatprep.mubr.bf16.mxu0 0
    %743 = vmatmul.mubr.bf16.gmra.mrb[0].mxu0 %v252
    %v744 = vpop.f32.mrb[0].mxu0
    %v745 = vadd.f32 0.0, %v744
    %v746 = vpop.f32.mrb[0].mxu0
    %v747 = vpop.f32.mrb[0].mxu0
    %v748 = vadd.f32 0.0, %v747
    %v749 = vpop.f32.mrb[0].mxu0
    %750 = vmatprep.mubr.bf16.mxu0 0
    %751 = vmatmul.mubr.bf16.gmra.mrb[0].mxu0 %v255
    %v752 = vpop.f32.mrb[0].mxu0
    %v753 = vadd.f32 0.0, %v752
    %v754 = vpop.f32.mrb[0].mxu0
    %v755 = vpop.f32.mrb[0].mxu0
    %v756 = vadd.f32 0.0, %v755
    %v757 = vpop.f32.mrb[0].mxu0
    %758 = vmatprep.mubr.bf16.mxu0 0
    %759 = vmatmul.mubr.bf16.gmra.mrb[0].mxu0 %v258
    %v760 = vpop.f32.mrb[0].mxu0
    %v761 = vadd.f32 0.0, %v760
    %v762 = vpop.f32.mrb[0].mxu0
    %v763 = vpop.f32.mrb[0].mxu0
    %v764 = vadd.f32 0.0, %v763
    %v765 = vpop.f32.mrb[0].mxu0
    %766 = vmatprep.mubr.bf16.mxu0 0
    %767 = vmatmul.mubr.bf16.gmra.mrb[0].mxu0 %v261
    %v768 = vpop.f32.mrb[0].mxu0
    %v769 = vadd.f32 0.0, %v768
    %v770 = vpop.f32.mrb[0].mxu0
    %v771 = vpop.f32.mrb[0].mxu0
    %v772 = vadd.f32 0.0, %v771
    %v773 = vpop.f32.mrb[0].mxu0
    %774 = vmatprep.mubr.bf16.mxu0 0
    %775 = vmatmul.mubr.bf16.gmra.mrb[0].mxu0 %v264
    %v776 = vpop.f32.mrb[0].mxu0
    %v777 = vadd.f32 0.0, %v776
    %v778 = vpop.f32.mrb[0].mxu0
    %v779 = vpop.f32.mrb[0].mxu0
    %v780 = vadd.f32 0.0, %v779
    %v781 = vpop.f32.mrb[0].mxu0
    %782 = vmatprep.mubr.bf16.mxu0 0
    %783 = vmatmul.mubr.bf16.gmra.mrb[0].mxu0 %v267
    %v784 = vpop.f32.mrb[0].mxu0
    %v785 = vadd.f32 0.0, %v784
    %v786 = vpop.f32.mrb[0].mxu0
    %v787 = vpop.f32.mrb[0].mxu0
    %v788 = vadd.f32 0.0, %v787
    %v789 = vpop.f32.mrb[0].mxu0
    %790 = vmatprep.mubr.bf16.mxu0 0
    %791 = vmatmul.mubr.bf16.gmra.mrb[0].mxu0 %v270
    %v792 = vpop.f32.mrb[0].mxu0
    %v793 = vadd.f32 0.0, %v792
    %v794 = vpop.f32.mrb[0].mxu0
    %v795 = vpop.f32.mrb[0].mxu0
    %v796 = vadd.f32 0.0, %v795
    %v797 = vpop.f32.mrb[0].mxu0
    %798 = vmatprep.mubr.bf16.mxu0 0
    %799 = vmatmul.mubr.bf16.gmra.mrb[0].mxu0 %v273
    %v800 = vpop.f32.mrb[0].mxu0
    %v801 = vadd.f32 0.0, %v800
    %v802 = vpop.f32.mrb[0].mxu0
    %v803 = vpop.f32.mrb[0].mxu0
    %v804 = vadd.f32 0.0, %v803
    %v805 = vpop.f32.mrb[0].mxu0
    %806 = vmatprep.mubr.bf16.mxu0 0
    %807 = vmatmul.mubr.bf16.gmra.mrb[0].mxu0 %v276
    %v808 = vpop.f32.mrb[0].mxu0
    %v809 = vadd.f32 0.0, %v808
    %v810 = vpop.f32.mrb[0].mxu0
    %v811 = vpop.f32.mrb[0].mxu0
    %v812 = vadd.f32 0.0, %v811
    %v813 = vpop.f32.mrb[0].mxu0
    %814 = vmatprep.mubr.bf16.mxu0 0
    %815 = vmatmul.mubr.bf16.gmra.mrb[0].mxu0 %v279
    %v816 = vpop.f32.mrb[0].mxu0
    %v817 = vadd.f32 0.0, %v816
    %v818 = vpop.f32.mrb[0].mxu0
    %v819 = vpop.f32.mrb[0].mxu0
    %v820 = vadd.f32 0.0, %v819
    %v821 = vpop.f32.mrb[0].mxu0
    %822 = vmatprep.mubr.bf16.mxu0 0
    %823 = vmatmul.mubr.bf16.gmra.mrb[0].mxu0 %v282
    %v824 = vpop.f32.mrb[0].mxu0
    %v825 = vadd.f32 0.0, %v824
    %v826 = vpop.f32.mrb[0].mxu0
    %v827 = vpop.f32.mrb[0].mxu0
    %v828 = vadd.f32 0.0, %v827
    %v829 = vpop.f32.mrb[0].mxu0
    %830 = vdwg.mxu0
    %v831 = vpack.c.bf16 %v708, %v705
    %v832 = vpack.c.bf16 %v716, %v713
    %v833 = vpack.c.bf16 %v724, %v721
    %v834 = vpack.c.bf16 %v732, %v729
    %v835 = vpack.c.bf16 %v740, %v737
    %v836 = vpack.c.bf16 %v748, %v745
    %v837 = vpack.c.bf16 %v756, %v753
    %v838 = vpack.c.bf16 %v764, %v761
    %v839 = vpack.c.bf16 %v772, %v769
    %v840 = vpack.c.bf16 %v780, %v777
    %v841 = vpack.c.bf16 %v788, %v785
    %v842 = vpack.c.bf16 %v796, %v793
    %v843 = vpack.c.bf16 %v804, %v801
    %v844 = vpack.c.bf16 %v812, %v809
    %v845 = vpack.c.bf16 %v820, %v817
    %v846 = vpack.c.bf16 %v828, %v825
    %v847 = vld [vmem:[#allocation11] sm:$0xff]
    %v848 = vld [vmem:[#allocation11 + $0x8] sm:$0xff]
    %vm849 = vcmask 130048
    %v851 = vsel %vm849, %v445, 0
    %v854 = vsel %vm849, %v638, 0
    %856 = vmatprep.subr.bf16.mxu0 0
    %857 = vmatpush1.bf16.xpose.msra.mxu0 %v854
    %858 = vmatprep.subr.bf16.mxu0 0
    %859 = vmatpush1.bf16.xpose.msra.mxu0 0
    %860 = vmatprep.subr.bf16.mxu0 0
    %861 = vmatpush1.bf16.xpose.msra.mxu0 0
    %862 = vmatprep.subr.bf16.mxu0 0
    %863 = vmatpush1.bf16.xpose.msra.mxu0 0
    %864 = vmatprep.subr.bf16.mxu0 0
    %865 = vmatpush1.bf16.xpose.msra.mxu0 0
    %866 = vmatprep.subr.bf16.mxu0 0
    %867 = vmatpush1.bf16.xpose.msra.mxu0 0
    %868 = vmatprep.subr.bf16.mxu0 0
    %869 = vmatpush1.bf16.xpose.msra.mxu0 0
    %870 = vmatprep.subr.bf16.mxu0 0
    %871 = vmatpush1.bf16.xpose.msra.mxu0 0
    %872 = vmatprep.subr.bf16.mxu0 0
    %873 = vmatpush1.bf16.xpose.msra.mxu0 0
    %874 = vmatprep.subr.bf16.mxu0 0
    %875 = vmatpush1.bf16.xpose.msra.mxu0 0
    %876 = vmatprep.subr.bf16.mxu0 0
    %877 = vmatpush1.bf16.xpose.msra.mxu0 0
    %878 = vmatprep.subr.bf16.mxu0 0
    %879 = vmatpush1.bf16.xpose.msra.mxu0 0
    %880 = vmatprep.subr.bf16.mxu0 0
    %881 = vmatpush1.bf16.xpose.msra.mxu0 0
    %882 = vmatprep.subr.bf16.mxu0 0
    %883 = vmatpush1.bf16.xpose.msra.mxu0 0
    %884 = vmatprep.subr.bf16.mxu0 0
    %885 = vmatpush1.bf16.xpose.msra.mxu0 0
    %886 = vmatprep.subr.bf16.mxu0 0
    %887 = vmatpush1.bf16.xpose.msra.mxu0 0
    %888 = vmatprep.mubr.bf16.mxu0 0
    %889 = vmatmul.mubr.bf16.gmra.mrb[0].mxu0 %v851
    %v890 = vpop.f32.mrb[0].mxu0
    %v891 = vadd.f32 %v847, %v890
    %v892 = vpop.f32.mrb[0].mxu0
    %v893 = vpop.f32.mrb[0].mxu0
    %v894 = vadd.f32 %v848, %v893
    %v895 = vpop.f32.mrb[0].mxu0
    %896 = vdwg.mxu0
    %v898 = vsel %vm849, %v446, 0
    %v901 = vsel %vm849, %v639, 0
    %903 = vmatprep.subr.bf16.mxu0 0
    %904 = vmatpush1.bf16.xpose.msra.mxu0 %v901
    %905 = vmatprep.subr.bf16.mxu0 0
    %906 = vmatpush1.bf16.xpose.msra.mxu0 0
    %907 = vmatprep.subr.bf16.mxu0 0
    %908 = vmatpush1.bf16.xpose.msra.mxu0 0
    %909 = vmatprep.subr.bf16.mxu0 0
    %910 = vmatpush1.bf16.xpose.msra.mxu0 0
    %911 = vmatprep.subr.bf16.mxu0 0
    %912 = vmatpush1.bf16.xpose.msra.mxu0 0
    %913 = vmatprep.subr.bf16.mxu0 0
    %914 = vmatpush1.bf16.xpose.msra.mxu0 0
    %915 = vmatprep.subr.bf16.mxu0 0
    %916 = vmatpush1.bf16.xpose.msra.mxu0 0
    %917 = vmatprep.subr.bf16.mxu0 0
    %918 = vmatpush1.bf16.xpose.msra.mxu0 0
    %919 = vmatprep.subr.bf16.mxu0 0
    %920 = vmatpush1.bf16.xpose.msra.mxu0 0
    %921 = vmatprep.subr.bf16.mxu0 0
    %922 = vmatpush1.bf16.xpose.msra.mxu0 0
    %923 = vmatprep.subr.bf16.mxu0 0
    %924 = vmatpush1.bf16.xpose.msra.mxu0 0
    %925 = vmatprep.subr.bf16.mxu0 0
    %926 = vmatpush1.bf16.xpose.msra.mxu0 0
    %927 = vmatprep.subr.bf16.mxu0 0
    %928 = vmatpush1.bf16.xpose.msra.mxu0 0
    %929 = vmatprep.subr.bf16.mxu0 0
    %930 = vmatpush1.bf16.xpose.msra.mxu0 0
    %931 = vmatprep.subr.bf16.mxu0 0
    %932 = vmatpush1.bf16.xpose.msra.mxu0 0
    %933 = vmatprep.subr.bf16.mxu0 0
    %934 = vmatpush1.bf16.xpose.msra.mxu0 0
    %935 = vmatprep.mubr.bf16.mxu0 0
    %936 = vmatmul.mubr.bf16.gmra.mrb[0].mxu0 %v898
    %v937 = vpop.f32.mrb[0].mxu0
    %v938 = vadd.f32 %v847, %v937
    %v939 = vpop.f32.mrb[0].mxu0
    %v940 = vpop.f32.mrb[0].mxu0
    %v941 = vadd.f32 %v848, %v940
    %v942 = vpop.f32.mrb[0].mxu0
    %943 = vdwg.mxu0
    %v945 = vsel %vm849, %v447, 0
    %v948 = vsel %vm849, %v640, 0
    %950 = vmatprep.subr.bf16.mxu0 0
    %951 = vmatpush1.bf16.xpose.msra.mxu0 %v948
    %952 = vmatprep.subr.bf16.mxu0 0
    %953 = vmatpush1.bf16.xpose.msra.mxu0 0
    %954 = vmatprep.subr.bf16.mxu0 0
    %955 = vmatpush1.bf16.xpose.msra.mxu0 0
    %956 = vmatprep.subr.bf16.mxu0 0
    %957 = vmatpush1.bf16.xpose.msra.mxu0 0
    %958 = vmatprep.subr.bf16.mxu0 0
    %959 = vmatpush1.bf16.xpose.msra.mxu0 0
    %960 = vmatprep.subr.bf16.mxu0 0
    %961 = vmatpush1.bf16.xpose.msra.mxu0 0
    %962 = vmatprep.subr.bf16.mxu0 0
    %963 = vmatpush1.bf16.xpose.msra.mxu0 0
    %964 = vmatprep.subr.bf16.mxu0 0
    %965 = vmatpush1.bf16.xpose.msra.mxu0 0
    %966 = vmatprep.subr.bf16.mxu0 0
    %967 = vmatpush1.bf16.xpose.msra.mxu0 0
    %968 = vmatprep.subr.bf16.mxu0 0
    %969 = vmatpush1.bf16.xpose.msra.mxu0 0
    %970 = vmatprep.subr.bf16.mxu0 0
    %971 = vmatpush1.bf16.xpose.msra.mxu0 0
    %972 = vmatprep.subr.bf16.mxu0 0
    %973 = vmatpush1.bf16.xpose.msra.mxu0 0
    %974 = vmatprep.subr.bf16.mxu0 0
    %975 = vmatpush1.bf16.xpose.msra.mxu0 0
    %976 = vmatprep.subr.bf16.mxu0 0
    %977 = vmatpush1.bf16.xpose.msra.mxu0 0
    %978 = vmatprep.subr.bf16.mxu0 0
    %979 = vmatpush1.bf16.xpose.msra.mxu0 0
    %980 = vmatprep.subr.bf16.mxu0 0
    %981 = vmatpush1.bf16.xpose.msra.mxu0 0
    %982 = vmatprep.mubr.bf16.mxu0 0
    %983 = vmatmul.mubr.bf16.gmra.mrb[0].mxu0 %v945
    %v984 = vpop.f32.mrb[0].mxu0
    %v985 = vadd.f32 %v847, %v984
    %v986 = vpop.f32.mrb[0].mxu0
    %v987 = vpop.f32.mrb[0].mxu0
    %v988 = vadd.f32 %v848, %v987
    %v989 = vpop.f32.mrb[0].mxu0
    %990 = vdwg.mxu0
    %v992 = vsel %vm849, %v448, 0
    %v995 = vsel %vm849, %v641, 0
    %997 = vmatprep.subr.bf16.mxu0 0
    %998 = vmatpush1.bf16.xpose.msra.mxu0 %v995
    %999 = vmatprep.subr.bf16.mxu0 0
    %1000 = vmatpush1.bf16.xpose.msra.mxu0 0
    %1001 = vmatprep.subr.bf16.mxu0 0
    %1002 = vmatpush1.bf16.xpose.msra.mxu0 0
    %1003 = vmatprep.subr.bf16.mxu0 0
    %1004 = vmatpush1.bf16.xpose.msra.mxu0 0
    %1005 = vmatprep.subr.bf16.mxu0 0
    %1006 = vmatpush1.bf16.xpose.msra.mxu0 0
    %1007 = vmatprep.subr.bf16.mxu0 0
    %1008 = vmatpush1.bf16.xpose.msra.mxu0 0
    %1009 = vmatprep.subr.bf16.mxu0 0
    %1010 = vmatpush1.bf16.xpose.msra.mxu0 0
    %1011 = vmatprep.subr.bf16.mxu0 0
    %1012 = vmatpush1.bf16.xpose.msra.mxu0 0
    %1013 = vmatprep.subr.bf16.mxu0 0
    %1014 = vmatpush1.bf16.xpose.msra.mxu0 0
    %1015 = vmatprep.subr.bf16.mxu0 0
    %1016 = vmatpush1.bf16.xpose.msra.mxu0 0
    %1017 = vmatprep.subr.bf16.mxu0 0
    %1018 = vmatpush1.bf16.xpose.msra.mxu0 0
    %1019 = vmatprep.subr.bf16.mxu0 0
    %1020 = vmatpush1.bf16.xpose.msra.mxu0 0
    %1021 = vmatprep.subr.bf16.mxu0 0
    %1022 = vmatpush1.bf16.xpose.msra.mxu0 0
    %1023 = vmatprep.subr.bf16.mxu0 0
    %1024 = vmatpush1.bf16.xpose.msra.mxu0 0
    %1025 = vmatprep.subr.bf16.mxu0 0
    %1026 = vmatpush1.bf16.xpose.msra.mxu0 0
    %1027 = vmatprep.subr.bf16.mxu0 0
    %1028 = vmatpush1.bf16.xpose.msra.mxu0 0
    %1029 = vmatprep.mubr.bf16.mxu0 0
    %1030 = vmatmul.mubr.bf16.gmra.mrb[0].mxu0 %v992
    %v1031 = vpop.f32.mrb[0].mxu0
    %v1032 = vadd.f32 %v847, %v1031
    %v1033 = vpop.f32.mrb[0].mxu0
    %v1034 = vpop.f32.mrb[0].mxu0
    %v1035 = vadd.f32 %v848, %v1034
    %v1036 = vpop.f32.mrb[0].mxu0
    %1037 = vdwg.mxu0
    %v1039 = vsel %vm849, %v449, 0
    %v1042 = vsel %vm849, %v642, 0
    %1044 = vmatprep.subr.bf16.mxu0 0
    %1045 = vmatpush1.bf16.xpose.msra.mxu0 %v1042
    %1046 = vmatprep.subr.bf16.mxu0 0
    %1047 = vmatpush1.bf16.xpose.msra.mxu0 0
    %1048 = vmatprep.subr.bf16.mxu0 0
    %1049 = vmatpush1.bf16.xpose.msra.mxu0 0
    %1050 = vmatprep.subr.bf16.mxu0 0
    %1051 = vmatpush1.bf16.xpose.msra.mxu0 0
    %1052 = vmatprep.subr.bf16.mxu0 0
    %1053 = vmatpush1.bf16.xpose.msra.mxu0 0
    %1054 = vmatprep.subr.bf16.mxu0 0
    %1055 = vmatpush1.bf16.xpose.msra.mxu0 0
    %1056 = vmatprep.subr.bf16.mxu0 0
    %1057 = vmatpush1.bf16.xpose.msra.mxu0 0
    %1058 = vmatprep.subr.bf16.mxu0 0
    %1059 = vmatpush1.bf16.xpose.msra.mxu0 0
    %1060 = vmatprep.subr.bf16.mxu0 0
    %1061 = vmatpush1.bf16.xpose.msra.mxu0 0
    %1062 = vmatprep.subr.bf16.mxu0 0
    %1063 = vmatpush1.bf16.xpose.msra.mxu0 0
    %1064 = vmatprep.subr.bf16.mxu0 0
    %1065 = vmatpush1.bf16.xpose.msra.mxu0 0
    %1066 = vmatprep.subr.bf16.mxu0 0
    %1067 = vmatpush1.bf16.xpose.msra.mxu0 0
    %1068 = vmatprep.subr.bf16.mxu0 0
    %1069 = vmatpush1.bf16.xpose.msra.mxu0 0
    %1070 = vmatprep.subr.bf16.mxu0 0
    %1071 = vmatpush1.bf16.xpose.msra.mxu0 0
    %1072 = vmatprep.subr.bf16.mxu0 0
    %1073 = vmatpush1.bf16.xpose.msra.mxu0 0
    %1074 = vmatprep.subr.bf16.mxu0 0
    %1075 = vmatpush1.bf16.xpose.msra.mxu0 0
    %1076 = vmatprep.mubr.bf16.mxu0 0
    %1077 = vmatmul.mubr.bf16.gmra.mrb[0].mxu0 %v1039
    %v1078 = vpop.f32.mrb[0].mxu0
    %v1079 = vadd.f32 %v847, %v1078
    %v1080 = vpop.f32.mrb[0].mxu0
    %v1081 = vpop.f32.mrb[0].mxu0
    %v1082 = vadd.f32 %v848, %v1081
    %v1083 = vpop.f32.mrb[0].mxu0
    %1084 = vdwg.mxu0
    %v1086 = vsel %vm849, %v450, 0
    %v1089 = vsel %vm849, %v643, 0
    %1091 = vmatprep.subr.bf16.mxu0 0
    %1092 = vmatpush1.bf16.xpose.msra.mxu0 %v1089
    %1093 = vmatprep.subr.bf16.mxu0 0
    %1094 = vmatpush1.bf16.xpose.msra.mxu0 0
    %1095 = vmatprep.subr.bf16.mxu0 0
    %1096 = vmatpush1.bf16.xpose.msra.mxu0 0
    %1097 = vmatprep.subr.bf16.mxu0 0
    %1098 = vmatpush1.bf16.xpose.msra.mxu0 0
    %1099 = vmatprep.subr.bf16.mxu0 0
    %1100 = vmatpush1.bf16.xpose.msra.mxu0 0
    %1101 = vmatprep.subr.bf16.mxu0 0
    %1102 = vmatpush1.bf16.xpose.msra.mxu0 0
    %1103 = vmatprep.subr.bf16.mxu0 0
    %1104 = vmatpush1.bf16.xpose.msra.mxu0 0
    %1105 = vmatprep.subr.bf16.mxu0 0
    %1106 = vmatpush1.bf16.xpose.msra.mxu0 0
    %1107 = vmatprep.subr.bf16.mxu0 0
    %1108 = vmatpush1.bf16.xpose.msra.mxu0 0
    %1109 = vmatprep.subr.bf16.mxu0 0
    %1110 = vmatpush1.bf16.xpose.msra.mxu0 0
    %1111 = vmatprep.subr.bf16.mxu0 0
    %1112 = vmatpush1.bf16.xpose.msra.mxu0 0
    %1113 = vmatprep.subr.bf16.mxu0 0
    %1114 = vmatpush1.bf16.xpose.msra.mxu0 0
    %1115 = vmatprep.subr.bf16.mxu0 0
    %1116 = vmatpush1.bf16.xpose.msra.mxu0 0
    %1117 = vmatprep.subr.bf16.mxu0 0
    %1118 = vmatpush1.bf16.xpose.msra.mxu0 0
    %1119 = vmatprep.subr.bf16.mxu0 0
    %1120 = vmatpush1.bf16.xpose.msra.mxu0 0
    %1121 = vmatprep.subr.bf16.mxu0 0
    %1122 = vmatpush1.bf16.xpose.msra.mxu0 0
    %1123 = vmatprep.mubr.bf16.mxu0 0
    %1124 = vmatmul.mubr.bf16.gmra.mrb[0].mxu0 %v1086
    %v1125 = vpop.f32.mrb[0].mxu0
    %v1126 = vadd.f32 %v847, %v1125
    %v1127 = vpop.f32.mrb[0].mxu0
    %v1128 = vpop.f32.mrb[0].mxu0
    %v1129 = vadd.f32 %v848, %v1128
    %v1130 = vpop.f32.mrb[0].mxu0
    %1131 = vdwg.mxu0
    %v1133 = vsel %vm849, %v451, 0
    %v1136 = vsel %vm849, %v644, 0
    %1138 = vmatprep.subr.bf16.mxu0 0
    %1139 = vmatpush1.bf16.xpose.msra.mxu0 %v1136
    %1140 = vmatprep.subr.bf16.mxu0 0
    %1141 = vmatpush1.bf16.xpose.msra.mxu0 0
    %1142 = vmatprep.subr.bf16.mxu0 0
    %1143 = vmatpush1.bf16.xpose.msra.mxu0 0
    %1144 = vmatprep.subr.bf16.mxu0 0
    %1145 = vmatpush1.bf16.xpose.msra.mxu0 0
    %1146 = vmatprep.subr.bf16.mxu0 0
    %1147 = vmatpush1.bf16.xpose.msra.mxu0 0
    %1148 = vmatprep.subr.bf16.mxu0 0
    %1149 = vmatpush1.bf16.xpose.msra.mxu0 0
    %1150 = vmatprep.subr.bf16.mxu0 0
    %1151 = vmatpush1.bf16.xpose.msra.mxu0 0
    %1152 = vmatprep.subr.bf16.mxu0 0
    %1153 = vmatpush1.bf16.xpose.msra.mxu0 0
    %1154 = vmatprep.subr.bf16.mxu0 0
    %1155 = vmatpush1.bf16.xpose.msra.mxu0 0
    %1156 = vmatprep.subr.bf16.mxu0 0
    %1157 = vmatpush1.bf16.xpose.msra.mxu0 0
    %1158 = vmatprep.subr.bf16.mxu0 0
    %1159 = vmatpush1.bf16.xpose.msra.mxu0 0
    %1160 = vmatprep.subr.bf16.mxu0 0
    %1161 = vmatpush1.bf16.xpose.msra.mxu0 0
    %1162 = vmatprep.subr.bf16.mxu0 0
    %1163 = vmatpush1.bf16.xpose.msra.mxu0 0
    %1164 = vmatprep.subr.bf16.mxu0 0
    %1165 = vmatpush1.bf16.xpose.msra.mxu0 0
    %1166 = vmatprep.subr.bf16.mxu0 0
    %1167 = vmatpush1.bf16.xpose.msra.mxu0 0
    %1168 = vmatprep.subr.bf16.mxu0 0
    %1169 = vmatpush1.bf16.xpose.msra.mxu0 0
    %1170 = vmatprep.mubr.bf16.mxu0 0
    %1171 = vmatmul.mubr.bf16.gmra.mrb[0].mxu0 %v1133
    %v1172 = vpop.f32.mrb[0].mxu0
    %v1173 = vadd.f32 %v847, %v1172
    %v1174 = vpop.f32.mrb[0].mxu0
    %v1175 = vpop.f32.mrb[0].mxu0
    %v1176 = vadd.f32 %v848, %v1175
    %v1177 = vpop.f32.mrb[0].mxu0
    %1178 = vdwg.mxu0
    %v1180 = vsel %vm849, %v452, 0
    %v1183 = vsel %vm849, %v645, 0
    %1185 = vmatprep.subr.bf16.mxu0 0
    %1186 = vmatpush1.bf16.xpose.msra.mxu0 %v1183
    %1187 = vmatprep.subr.bf16.mxu0 0
    %1188 = vmatpush1.bf16.xpose.msra.mxu0 0
    %1189 = vmatprep.subr.bf16.mxu0 0
    %1190 = vmatpush1.bf16.xpose.msra.mxu0 0
    %1191 = vmatprep.subr.bf16.mxu0 0
    %1192 = vmatpush1.bf16.xpose.msra.mxu0 0
    %1193 = vmatprep.subr.bf16.mxu0 0
    %1194 = vmatpush1.bf16.xpose.msra.mxu0 0
    %1195 = vmatprep.subr.bf16.mxu0 0
    %1196 = vmatpush1.bf16.xpose.msra.mxu0 0
    %1197 = vmatprep.subr.bf16.mxu0 0
    %1198 = vmatpush1.bf16.xpose.msra.mxu0 0
    %1199 = vmatprep.subr.bf16.mxu0 0
    %1200 = vmatpush1.bf16.xpose.msra.mxu0 0
    %1201 = vmatprep.subr.bf16.mxu0 0
    %1202 = vmatpush1.bf16.xpose.msra.mxu0 0
    %1203 = vmatprep.subr.bf16.mxu0 0
    %1204 = vmatpush1.bf16.xpose.msra.mxu0 0
    %1205 = vmatprep.subr.bf16.mxu0 0
    %1206 = vmatpush1.bf16.xpose.msra.mxu0 0
    %1207 = vmatprep.subr.bf16.mxu0 0
    %1208 = vmatpush1.bf16.xpose.msra.mxu0 0
    %1209 = vmatprep.subr.bf16.mxu0 0
    %1210 = vmatpush1.bf16.xpose.msra.mxu0 0
    %1211 = vmatprep.subr.bf16.mxu0 0
    %1212 = vmatpush1.bf16.xpose.msra.mxu0 0
    %1213 = vmatprep.subr.bf16.mxu0 0
    %1214 = vmatpush1.bf16.xpose.msra.mxu0 0
    %1215 = vmatprep.subr.bf16.mxu0 0
    %1216 = vmatpush1.bf16.xpose.msra.mxu0 0
    %1217 = vmatprep.mubr.bf16.mxu0 0
    %1218 = vmatmul.mubr.bf16.gmra.mrb[0].mxu0 %v1180
    %v1219 = vpop.f32.mrb[0].mxu0
    %v1220 = vadd.f32 %v847, %v1219
    %v1221 = vpop.f32.mrb[0].mxu0
    %v1222 = vpop.f32.mrb[0].mxu0
    %v1223 = vadd.f32 %v848, %v1222
    %v1224 = vpop.f32.mrb[0].mxu0
    %1225 = vdwg.mxu0
    %v1227 = vsel %vm849, %v453, 0
    %v1230 = vsel %vm849, %v646, 0
    %1232 = vmatprep.subr.bf16.mxu0 0
    %1233 = vmatpush1.bf16.xpose.msra.mxu0 %v1230
    %1234 = vmatprep.subr.bf16.mxu0 0
    %1235 = vmatpush1.bf16.xpose.msra.mxu0 0
    %1236 = vmatprep.subr.bf16.mxu0 0
    %1237 = vmatpush1.bf16.xpose.msra.mxu0 0
    %1238 = vmatprep.subr.bf16.mxu0 0
    %1239 = vmatpush1.bf16.xpose.msra.mxu0 0
    %1240 = vmatprep.subr.bf16.mxu0 0
    %1241 = vmatpush1.bf16.xpose.msra.mxu0 0
    %1242 = vmatprep.subr.bf16.mxu0 0
    %1243 = vmatpush1.bf16.xpose.msra.mxu0 0
    %1244 = vmatprep.subr.bf16.mxu0 0
    %1245 = vmatpush1.bf16.xpose.msra.mxu0 0
    %1246 = vmatprep.subr.bf16.mxu0 0
    %1247 = vmatpush1.bf16.xpose.msra.mxu0 0
    %1248 = vmatprep.subr.bf16.mxu0 0
    %1249 = vmatpush1.bf16.xpose.msra.mxu0 0
    %1250 = vmatprep.subr.bf16.mxu0 0
    %1251 = vmatpush1.bf16.xpose.msra.mxu0 0
    %1252 = vmatprep.subr.bf16.mxu0 0
    %1253 = vmatpush1.bf16.xpose.msra.mxu0 0
    %1254 = vmatprep.subr.bf16.mxu0 0
    %1255 = vmatpush1.bf16.xpose.msra.mxu0 0
    %1256 = vmatprep.subr.bf16.mxu0 0
    %1257 = vmatpush1.bf16.xpose.msra.mxu0 0
    %1258 = vmatprep.subr.bf16.mxu0 0
    %1259 = vmatpush1.bf16.xpose.msra.mxu0 0
    %1260 = vmatprep.subr.bf16.mxu0 0
    %1261 = vmatpush1.bf16.xpose.msra.mxu0 0
    %1262 = vmatprep.subr.bf16.mxu0 0
    %1263 = vmatpush1.bf16.xpose.msra.mxu0 0
    %1264 = vmatprep.mubr.bf16.mxu0 0
    %1265 = vmatmul.mubr.bf16.gmra.mrb[0].mxu0 %v1227
    %v1266 = vpop.f32.mrb[0].mxu0
    %v1267 = vadd.f32 %v847, %v1266
    %v1268 = vpop.f32.mrb[0].mxu0
    %v1269 = vpop.f32.mrb[0].mxu0
    %v1270 = vadd.f32 %v848, %v1269
    %v1271 = vpop.f32.mrb[0].mxu0
    %1272 = vdwg.mxu0
    %v1274 = vsel %vm849, %v454, 0
    %v1277 = vsel %vm849, %v647, 0
    %1279 = vmatprep.subr.bf16.mxu0 0
    %1280 = vmatpush1.bf16.xpose.msra.mxu0 %v1277
    %1281 = vmatprep.subr.bf16.mxu0 0
    %1282 = vmatpush1.bf16.xpose.msra.mxu0 0
    %1283 = vmatprep.subr.bf16.mxu0 0
    %1284 = vmatpush1.bf16.xpose.msra.mxu0 0
    %1285 = vmatprep.subr.bf16.mxu0 0
    %1286 = vmatpush1.bf16.xpose.msra.mxu0 0
    %1287 = vmatprep.subr.bf16.mxu0 0
    %1288 = vmatpush1.bf16.xpose.msra.mxu0 0
    %1289 = vmatprep.subr.bf16.mxu0 0
    %1290 = vmatpush1.bf16.xpose.msra.mxu0 0
    %1291 = vmatprep.subr.bf16.mxu0 0
    %1292 = vmatpush1.bf16.xpose.msra.mxu0 0
    %1293 = vmatprep.subr.bf16.mxu0 0
    %1294 = vmatpush1.bf16.xpose.msra.mxu0 0
    %1295 = vmatprep.subr.bf16.mxu0 0
    %1296 = vmatpush1.bf16.xpose.msra.mxu0 0
    %1297 = vmatprep.subr.bf16.mxu0 0
    %1298 = vmatpush1.bf16.xpose.msra.mxu0 0
    %1299 = vmatprep.subr.bf16.mxu0 0
    %1300 = vmatpush1.bf16.xpose.msra.mxu0 0
    %1301 = vmatprep.subr.bf16.mxu0 0
    %1302 = vmatpush1.bf16.xpose.msra.mxu0 0
    %1303 = vmatprep.subr.bf16.mxu0 0
    %1304 = vmatpush1.bf16.xpose.msra.mxu0 0
    %1305 = vmatprep.subr.bf16.mxu0 0
    %1306 = vmatpush1.bf16.xpose.msra.mxu0 0
    %1307 = vmatprep.subr.bf16.mxu0 0
    %1308 = vmatpush1.bf16.xpose.msra.mxu0 0
    %1309 = vmatprep.subr.bf16.mxu0 0
    %1310 = vmatpush1.bf16.xpose.msra.mxu0 0
    %1311 = vmatprep.mubr.bf16.mxu0 0
    %1312 = vmatmul.mubr.bf16.gmra.mrb[0].mxu0 %v1274
    %v1313 = vpop.f32.mrb[0].mxu0
    %v1314 = vadd.f32 %v847, %v1313
    %v1315 = vpop.f32.mrb[0].mxu0
    %v1316 = vpop.f32.mrb[0].mxu0
    %v1317 = vadd.f32 %v848, %v1316
    %v1318 = vpop.f32.mrb[0].mxu0
    %1319 = vdwg.mxu0
    %v1321 = vsel %vm849, %v455, 0
    %v1324 = vsel %vm849, %v648, 0
    %1326 = vmatprep.subr.bf16.mxu0 0
    %1327 = vmatpush1.bf16.xpose.msra.mxu0 %v1324
    %1328 = vmatprep.subr.bf16.mxu0 0
    %1329 = vmatpush1.bf16.xpose.msra.mxu0 0
    %1330 = vmatprep.subr.bf16.mxu0 0
    %1331 = vmatpush1.bf16.xpose.msra.mxu0 0
    %1332 = vmatprep.subr.bf16.mxu0 0
    %1333 = vmatpush1.bf16.xpose.msra.mxu0 0
    %1334 = vmatprep.subr.bf16.mxu0 0
    %1335 = vmatpush1.bf16.xpose.msra.mxu0 0
    %1336 = vmatprep.subr.bf16.mxu0 0
    %1337 = vmatpush1.bf16.xpose.msra.mxu0 0
    %1338 = vmatprep.subr.bf16.mxu0 0
    %1339 = vmatpush1.bf16.xpose.msra.mxu0 0
    %1340 = vmatprep.subr.bf16.mxu0 0
    %1341 = vmatpush1.bf16.xpose.msra.mxu0 0
    %1342 = vmatprep.subr.bf16.mxu0 0
    %1343 = vmatpush1.bf16.xpose.msra.mxu0 0
    %1344 = vmatprep.subr.bf16.mxu0 0
    %1345 = vmatpush1.bf16.xpose.msra.mxu0 0
    %1346 = vmatprep.subr.bf16.mxu0 0
    %1347 = vmatpush1.bf16.xpose.msra.mxu0 0
    %1348 = vmatprep.subr.bf16.mxu0 0
    %1349 = vmatpush1.bf16.xpose.msra.mxu0 0
    %1350 = vmatprep.subr.bf16.mxu0 0
    %1351 = vmatpush1.bf16.xpose.msra.mxu0 0
    %1352 = vmatprep.subr.bf16.mxu0 0
    %1353 = vmatpush1.bf16.xpose.msra.mxu0 0
    %1354 = vmatprep.subr.bf16.mxu0 0
    %1355 = vmatpush1.bf16.xpose.msra.mxu0 0
    %1356 = vmatprep.subr.bf16.mxu0 0
    %1357 = vmatpush1.bf16.xpose.msra.mxu0 0
    %1358 = vmatprep.mubr.bf16.mxu0 0
    %1359 = vmatmul.mubr.bf16.gmra.mrb[0].mxu0 %v1321
    %v1360 = vpop.f32.mrb[0].mxu0
    %v1361 = vadd.f32 %v847, %v1360
    %v1362 = vpop.f32.mrb[0].mxu0
    %v1363 = vpop.f32.mrb[0].mxu0
    %v1364 = vadd.f32 %v848, %v1363
    %v1365 = vpop.f32.mrb[0].mxu0
    %1366 = vdwg.mxu0
    %v1368 = vsel %vm849, %v456, 0
    %v1371 = vsel %vm849, %v649, 0
    %1373 = vmatprep.subr.bf16.mxu0 0
    %1374 = vmatpush1.bf16.xpose.msra.mxu0 %v1371
    %1375 = vmatprep.subr.bf16.mxu0 0
    %1376 = vmatpush1.bf16.xpose.msra.mxu0 0
    %1377 = vmatprep.subr.bf16.mxu0 0
    %1378 = vmatpush1.bf16.xpose.msra.mxu0 0
    %1379 = vmatprep.subr.bf16.mxu0 0
    %1380 = vmatpush1.bf16.xpose.msra.mxu0 0
    %1381 = vmatprep.subr.bf16.mxu0 0
    %1382 = vmatpush1.bf16.xpose.msra.mxu0 0
    %1383 = vmatprep.subr.bf16.mxu0 0
    %1384 = vmatpush1.bf16.xpose.msra.mxu0 0
    %1385 = vmatprep.subr.bf16.mxu0 0
    %1386 = vmatpush1.bf16.xpose.msra.mxu0 0
    %1387 = vmatprep.subr.bf16.mxu0 0
    %1388 = vmatpush1.bf16.xpose.msra.mxu0 0
    %1389 = vmatprep.subr.bf16.mxu0 0
    %1390 = vmatpush1.bf16.xpose.msra.mxu0 0
    %1391 = vmatprep.subr.bf16.mxu0 0
    %1392 = vmatpush1.bf16.xpose.msra.mxu0 0
    %1393 = vmatprep.subr.bf16.mxu0 0
    %1394 = vmatpush1.bf16.xpose.msra.mxu0 0
    %1395 = vmatprep.subr.bf16.mxu0 0
    %1396 = vmatpush1.bf16.xpose.msra.mxu0 0
    %1397 = vmatprep.subr.bf16.mxu0 0
    %1398 = vmatpush1.bf16.xpose.msra.mxu0 0
    %1399 = vmatprep.subr.bf16.mxu0 0
    %1400 = vmatpush1.bf16.xpose.msra.mxu0 0
    %1401 = vmatprep.subr.bf16.mxu0 0
    %1402 = vmatpush1.bf16.xpose.msra.mxu0 0
    %1403 = vmatprep.subr.bf16.mxu0 0
    %1404 = vmatpush1.bf16.xpose.msra.mxu0 0
    %1405 = vmatprep.mubr.bf16.mxu0 0
    %1406 = vmatmul.mubr.bf16.gmra.mrb[0].mxu0 %v1368
    %v1407 = vpop.f32.mrb[0].mxu0
    %v1408 = vadd.f32 %v847, %v1407
    %v1409 = vpop.f32.mrb[0].mxu0
    %v1410 = vpop.f32.mrb[0].mxu0
    %v1411 = vadd.f32 %v848, %v1410
    %v1412 = vpop.f32.mrb[0].mxu0
    %1413 = vdwg.mxu0
    %v1415 = vsel %vm849, %v457, 0
    %v1418 = vsel %vm849, %v650, 0
    %1420 = vmatprep.subr.bf16.mxu0 0
    %1421 = vmatpush1.bf16.xpose.msra.mxu0 %v1418
    %1422 = vmatprep.subr.bf16.mxu0 0
    %1423 = vmatpush1.bf16.xpose.msra.mxu0 0
    %1424 = vmatprep.subr.bf16.mxu0 0
    %1425 = vmatpush1.bf16.xpose.msra.mxu0 0
    %1426 = vmatprep.subr.bf16.mxu0 0
    %1427 = vmatpush1.bf16.xpose.msra.mxu0 0
    %1428 = vmatprep.subr.bf16.mxu0 0
    %1429 = vmatpush1.bf16.xpose.msra.mxu0 0
    %1430 = vmatprep.subr.bf16.mxu0 0
    %1431 = vmatpush1.bf16.xpose.msra.mxu0 0
    %1432 = vmatprep.subr.bf16.mxu0 0
    %1433 = vmatpush1.bf16.xpose.msra.mxu0 0
    %1434 = vmatprep.subr.bf16.mxu0 0
    %1435 = vmatpush1.bf16.xpose.msra.mxu0 0
    %1436 = vmatprep.subr.bf16.mxu0 0
    %1437 = vmatpush1.bf16.xpose.msra.mxu0 0
    %1438 = vmatprep.subr.bf16.mxu0 0
    %1439 = vmatpush1.bf16.xpose.msra.mxu0 0
    %1440 = vmatprep.subr.bf16.mxu0 0
    %1441 = vmatpush1.bf16.xpose.msra.mxu0 0
    %1442 = vmatprep.subr.bf16.mxu0 0
    %1443 = vmatpush1.bf16.xpose.msra.mxu0 0
    %1444 = vmatprep.subr.bf16.mxu0 0
    %1445 = vmatpush1.bf16.xpose.msra.mxu0 0
    %1446 = vmatprep.subr.bf16.mxu0 0
    %1447 = vmatpush1.bf16.xpose.msra.mxu0 0
    %1448 = vmatprep.subr.bf16.mxu0 0
    %1449 = vmatpush1.bf16.xpose.msra.mxu0 0
    %1450 = vmatprep.subr.bf16.mxu0 0
    %1451 = vmatpush1.bf16.xpose.msra.mxu0 0
    %1452 = vmatprep.mubr.bf16.mxu0 0
    %1453 = vmatmul.mubr.bf16.gmra.mrb[0].mxu0 %v1415
    %v1454 = vpop.f32.mrb[0].mxu0
    %v1455 = vadd.f32 %v847, %v1454
    %v1456 = vpop.f32.mrb[0].mxu0
    %v1457 = vpop.f32.mrb[0].mxu0
    %v1458 = vadd.f32 %v848, %v1457
    %v1459 = vpop.f32.mrb[0].mxu0
    %1460 = vdwg.mxu0
    %v1462 = vsel %vm849, %v458, 0
    %v1465 = vsel %vm849, %v651, 0
    %1467 = vmatprep.subr.bf16.mxu0 0
    %1468 = vmatpush1.bf16.xpose.msra.mxu0 %v1465
    %1469 = vmatprep.subr.bf16.mxu0 0
    %1470 = vmatpush1.bf16.xpose.msra.mxu0 0
    %1471 = vmatprep.subr.bf16.mxu0 0
    %1472 = vmatpush1.bf16.xpose.msra.mxu0 0
    %1473 = vmatprep.subr.bf16.mxu0 0
    %1474 = vmatpush1.bf16.xpose.msra.mxu0 0
    %1475 = vmatprep.subr.bf16.mxu0 0
    %1476 = vmatpush1.bf16.xpose.msra.mxu0 0
    %1477 = vmatprep.subr.bf16.mxu0 0
    %1478 = vmatpush1.bf16.xpose.msra.mxu0 0
    %1479 = vmatprep.subr.bf16.mxu0 0
    %1480 = vmatpush1.bf16.xpose.msra.mxu0 0
    %1481 = vmatprep.subr.bf16.mxu0 0
    %1482 = vmatpush1.bf16.xpose.msra.mxu0 0
    %1483 = vmatprep.subr.bf16.mxu0 0
    %1484 = vmatpush1.bf16.xpose.msra.mxu0 0
    %1485 = vmatprep.subr.bf16.mxu0 0
    %1486 = vmatpush1.bf16.xpose.msra.mxu0 0
    %1487 = vmatprep.subr.bf16.mxu0 0
    %1488 = vmatpush1.bf16.xpose.msra.mxu0 0
    %1489 = vmatprep.subr.bf16.mxu0 0
    %1490 = vmatpush1.bf16.xpose.msra.mxu0 0
    %1491 = vmatprep.subr.bf16.mxu0 0
    %1492 = vmatpush1.bf16.xpose.msra.mxu0 0
    %1493 = vmatprep.subr.bf16.mxu0 0
    %1494 = vmatpush1.bf16.xpose.msra.mxu0 0
    %1495 = vmatprep.subr.bf16.mxu0 0
    %1496 = vmatpush1.bf16.xpose.msra.mxu0 0
    %1497 = vmatprep.subr.bf16.mxu0 0
    %1498 = vmatpush1.bf16.xpose.msra.mxu0 0
    %1499 = vmatprep.mubr.bf16.mxu0 0
    %1500 = vmatmul.mubr.bf16.gmra.mrb[0].mxu0 %v1462
    %v1501 = vpop.f32.mrb[0].mxu0
    %v1502 = vadd.f32 %v847, %v1501
    %v1503 = vpop.f32.mrb[0].mxu0
    %v1504 = vpop.f32.mrb[0].mxu0
    %v1505 = vadd.f32 %v848, %v1504
    %v1506 = vpop.f32.mrb[0].mxu0
    %1507 = vdwg.mxu0
    %v1509 = vsel %vm849, %v459, 0
    %v1512 = vsel %vm849, %v652, 0
    %1514 = vmatprep.subr.bf16.mxu0 0
    %1515 = vmatpush1.bf16.xpose.msra.mxu0 %v1512
    %1516 = vmatprep.subr.bf16.mxu0 0
    %1517 = vmatpush1.bf16.xpose.msra.mxu0 0
    %1518 = vmatprep.subr.bf16.mxu0 0
    %1519 = vmatpush1.bf16.xpose.msra.mxu0 0
    %1520 = vmatprep.subr.bf16.mxu0 0
    %1521 = vmatpush1.bf16.xpose.msra.mxu0 0
    %1522 = vmatprep.subr.bf16.mxu0 0
    %1523 = vmatpush1.bf16.xpose.msra.mxu0 0
    %1524 = vmatprep.subr.bf16.mxu0 0
    %1525 = vmatpush1.bf16.xpose.msra.mxu0 0
    %1526 = vmatprep.subr.bf16.mxu0 0
    %1527 = vmatpush1.bf16.xpose.msra.mxu0 0
    %1528 = vmatprep.subr.bf16.mxu0 0
    %1529 = vmatpush1.bf16.xpose.msra.mxu0 0
    %1530 = vmatprep.subr.bf16.mxu0 0
    %1531 = vmatpush1.bf16.xpose.msra.mxu0 0
    %1532 = vmatprep.subr.bf16.mxu0 0
    %1533 = vmatpush1.bf16.xpose.msra.mxu0 0
    %1534 = vmatprep.subr.bf16.mxu0 0
    %1535 = vmatpush1.bf16.xpose.msra.mxu0 0
    %1536 = vmatprep.subr.bf16.mxu0 0
    %1537 = vmatpush1.bf16.xpose.msra.mxu0 0
    %1538 = vmatprep.subr.bf16.mxu0 0
    %1539 = vmatpush1.bf16.xpose.msra.mxu0 0
    %1540 = vmatprep.subr.bf16.mxu0 0
    %1541 = vmatpush1.bf16.xpose.msra.mxu0 0
    %1542 = vmatprep.subr.bf16.mxu0 0
    %1543 = vmatpush1.bf16.xpose.msra.mxu0 0
    %1544 = vmatprep.subr.bf16.mxu0 0
    %1545 = vmatpush1.bf16.xpose.msra.mxu0 0
    %1546 = vmatprep.mubr.bf16.mxu0 0
    %1547 = vmatmul.mubr.bf16.gmra.mrb[0].mxu0 %v1509
    %v1548 = vpop.f32.mrb[0].mxu0
    %v1549 = vadd.f32 %v847, %v1548
    %v1550 = vpop.f32.mrb[0].mxu0
    %v1551 = vpop.f32.mrb[0].mxu0
    %v1552 = vadd.f32 %v848, %v1551
    %v1553 = vpop.f32.mrb[0].mxu0
    %1554 = vdwg.mxu0
    %v1556 = vsel %vm849, %v460, 0
    %v1559 = vsel %vm849, %v653, 0
    %1561 = vmatprep.subr.bf16.mxu0 0
    %1562 = vmatpush1.bf16.xpose.msra.mxu0 %v1559
    %1563 = vmatprep.subr.bf16.mxu0 0
    %1564 = vmatpush1.bf16.xpose.msra.mxu0 0
    %1565 = vmatprep.subr.bf16.mxu0 0
    %1566 = vmatpush1.bf16.xpose.msra.mxu0 0
    %1567 = vmatprep.subr.bf16.mxu0 0
    %1568 = vmatpush1.bf16.xpose.msra.mxu0 0
    %1569 = vmatprep.subr.bf16.mxu0 0
    %1570 = vmatpush1.bf16.xpose.msra.mxu0 0
    %1571 = vmatprep.subr.bf16.mxu0 0
    %1572 = vmatpush1.bf16.xpose.msra.mxu0 0
    %1573 = vmatprep.subr.bf16.mxu0 0
    %1574 = vmatpush1.bf16.xpose.msra.mxu0 0
    %1575 = vmatprep.subr.bf16.mxu0 0
    %1576 = vmatpush1.bf16.xpose.msra.mxu0 0
    %1577 = vmatprep.subr.bf16.mxu0 0
    %1578 = vmatpush1.bf16.xpose.msra.mxu0 0
    %1579 = vmatprep.subr.bf16.mxu0 0
    %1580 = vmatpush1.bf16.xpose.msra.mxu0 0
    %1581 = vmatprep.subr.bf16.mxu0 0
    %1582 = vmatpush1.bf16.xpose.msra.mxu0 0
    %1583 = vmatprep.subr.bf16.mxu0 0
    %1584 = vmatpush1.bf16.xpose.msra.mxu0 0
    %1585 = vmatprep.subr.bf16.mxu0 0
    %1586 = vmatpush1.bf16.xpose.msra.mxu0 0
    %1587 = vmatprep.subr.bf16.mxu0 0
    %1588 = vmatpush1.bf16.xpose.msra.mxu0 0
    %1589 = vmatprep.subr.bf16.mxu0 0
    %1590 = vmatpush1.bf16.xpose.msra.mxu0 0
    %1591 = vmatprep.subr.bf16.mxu0 0
    %1592 = vmatpush1.bf16.xpose.msra.mxu0 0
    %1593 = vmatprep.mubr.bf16.mxu0 0
    %1594 = vmatmul.mubr.bf16.gmra.mrb[0].mxu0 %v1556
    %v1595 = vpop.f32.mrb[0].mxu0
    %v1596 = vadd.f32 %v847, %v1595
    %v1597 = vpop.f32.mrb[0].mxu0
    %v1598 = vpop.f32.mrb[0].mxu0
    %v1599 = vadd.f32 %v848, %v1598
    %v1600 = vpop.f32.mrb[0].mxu0
    %1601 = vdwg.mxu0
    %v1602 = vsel %vm849, %v891, -inf
    %1603 = vmax.xlane.f32.xlu0 %v1602
    %v1604 = vpop.xlane.xlu0 %1603
    %v1605 = vsel %vm849, %v894, -inf
    %1606 = vmax.xlane.f32.xlu0 %v1605
    %v1607 = vpop.xlane.xlu0 %1606
    %v1608 = vsel %vm849, %v938, -inf
    %1609 = vmax.xlane.f32.xlu0 %v1608
    %v1610 = vpop.xlane.xlu0 %1609
    %v1611 = vsel %vm849, %v941, -inf
    %1612 = vmax.xlane.f32.xlu0 %v1611
    %v1613 = vpop.xlane.xlu0 %1612
    %v1614 = vsel %vm849, %v985, -inf
    %1615 = vmax.xlane.f32.xlu0 %v1614
    %v1616 = vpop.xlane.xlu0 %1615
    %v1617 = vsel %vm849, %v988, -inf
    %1618 = vmax.xlane.f32.xlu0 %v1617
    %v1619 = vpop.xlane.xlu0 %1618
    %v1620 = vsel %vm849, %v1032, -inf
    %1621 = vmax.xlane.f32.xlu0 %v1620
    %v1622 = vpop.xlane.xlu0 %1621
    %v1623 = vsel %vm849, %v1035, -inf
    %1624 = vmax.xlane.f32.xlu0 %v1623
    %v1625 = vpop.xlane.xlu0 %1624
    %v1626 = vsel %vm849, %v1079, -inf
    %1627 = vmax.xlane.f32.xlu0 %v1626
    %v1628 = vpop.xlane.xlu0 %1627
    %v1629 = vsel %vm849, %v1082, -inf
    %1630 = vmax.xlane.f32.xlu0 %v1629
    %v1631 = vpop.xlane.xlu0 %1630
    %v1632 = vsel %vm849, %v1126, -inf
    %1633 = vmax.xlane.f32.xlu0 %v1632
    %v1634 = vpop.xlane.xlu0 %1633
    %v1635 = vsel %vm849, %v1129, -inf
    %1636 = vmax.xlane.f32.xlu0 %v1635
    %v1637 = vpop.xlane.xlu0 %1636
    %v1638 = vsel %vm849, %v1173, -inf
    %1639 = vmax.xlane.f32.xlu0 %v1638
    %v1640 = vpop.xlane.xlu0 %1639
    %v1641 = vsel %vm849, %v1176, -inf
    %1642 = vmax.xlane.f32.xlu0 %v1641
    %v1643 = vpop.xlane.xlu0 %1642
    %v1644 = vsel %vm849, %v1220, -inf
    %1645 = vmax.xlane.f32.xlu0 %v1644
    %v1646 = vpop.xlane.xlu0 %1645
    %v1647 = vsel %vm849, %v1223, -inf
    %1648 = vmax.xlane.f32.xlu0 %v1647
    %v1649 = vpop.xlane.xlu0 %1648
    %v1650 = vsel %vm849, %v1267, -inf
    %1651 = vmax.xlane.f32.xlu0 %v1650
    %v1652 = vpop.xlane.xlu0 %1651
    %v1653 = vsel %vm849, %v1270, -inf
    %1654 = vmax.xlane.f32.xlu0 %v1653
    %v1655 = vpop.xlane.xlu0 %1654
    %v1656 = vsel %vm849, %v1314, -inf
    %1657 = vmax.xlane.f32.xlu0 %v1656
    %v1658 = vpop.xlane.xlu0 %1657
    %v1659 = vsel %vm849, %v1317, -inf
    %1660 = vmax.xlane.f32.xlu0 %v1659
    %v1661 = vpop.xlane.xlu0 %1660
    %v1662 = vsel %vm849, %v1361, -inf
    %1663 = vmax.xlane.f32.xlu0 %v1662
    %v1664 = vpop.xlane.xlu0 %1663
    %v1665 = vsel %vm849, %v1364, -inf
    %1666 = vmax.xlane.f32.xlu0 %v1665
    %v1667 = vpop.xlane.xlu0 %1666
    %v1668 = vsel %vm849, %v1408, -inf
    %1669 = vmax.xlane.f32.xlu0 %v1668
    %v1670 = vpop.xlane.xlu0 %1669
    %v1671 = vsel %vm849, %v1411, -inf
    %1672 = vmax.xlane.f32.xlu0 %v1671
    %v1673 = vpop.xlane.xlu0 %1672
    %v1674 = vsel %vm849, %v1455, -inf
    %1675 = vmax.xlane.f32.xlu0 %v1674
    %v1676 = vpop.xlane.xlu0 %1675
    %v1677 = vsel %vm849, %v1458, -inf
    %1678 = vmax.xlane.f32.xlu0 %v1677
    %v1679 = vpop.xlane.xlu0 %1678
    %v1680 = vsel %vm849, %v1502, -inf
    %1681 = vmax.xlane.f32.xlu0 %v1680
    %v1682 = vpop.xlane.xlu0 %1681
    %v1683 = vsel %vm849, %v1505, -inf
    %1684 = vmax.xlane.f32.xlu0 %v1683
    %v1685 = vpop.xlane.xlu0 %1684
    %v1686 = vsel %vm849, %v1549, -inf
    %1687 = vmax.xlane.f32.xlu0 %v1686
    %v1688 = vpop.xlane.xlu0 %1687
    %v1689 = vsel %vm849, %v1552, -inf
    %1690 = vmax.xlane.f32.xlu0 %v1689
    %v1691 = vpop.xlane.xlu0 %1690
    %v1692 = vsel %vm849, %v1596, -inf
    %1693 = vmax.xlane.f32.xlu0 %v1692
    %v1694 = vpop.xlane.xlu0 %1693
    %v1695 = vsel %vm849, %v1599, -inf
    %1696 = vmax.xlane.f32.xlu0 %v1695
    %v1697 = vpop.xlane.xlu0 %1696
    %v1698 = vsub.f32 %v891, %v1604
    %v1699 = vsub.f32 %v894, %v1607
    %v1700 = vsub.f32 %v938, %v1610
    %v1701 = vsub.f32 %v941, %v1613
    %v1702 = vsub.f32 %v985, %v1616
    %v1703 = vsub.f32 %v988, %v1619
    %v1704 = vsub.f32 %v1032, %v1622
    %v1705 = vsub.f32 %v1035, %v1625
    %v1706 = vsub.f32 %v1079, %v1628
    %v1707 = vsub.f32 %v1082, %v1631
    %v1708 = vsub.f32 %v1126, %v1634
    %v1709 = vsub.f32 %v1129, %v1637
    %v1710 = vsub.f32 %v1173, %v1640
    %v1711 = vsub.f32 %v1176, %v1643
    %v1712 = vsub.f32 %v1220, %v1646
    %v1713 = vsub.f32 %v1223, %v1649
    %v1714 = vsub.f32 %v1267, %v1652
    %v1715 = vsub.f32 %v1270, %v1655
    %v1716 = vsub.f32 %v1314, %v1658
    %v1717 = vsub.f32 %v1317, %v1661
    %v1718 = vsub.f32 %v1361, %v1664
    %v1719 = vsub.f32 %v1364, %v1667
    %v1720 = vsub.f32 %v1408, %v1670
    %v1721 = vsub.f32 %v1411, %v1673
    %v1722 = vsub.f32 %v1455, %v1676
    %v1723 = vsub.f32 %v1458, %v1679
    %v1724 = vsub.f32 %v1502, %v1682
    %v1725 = vsub.f32 %v1505, %v1685
    %v1726 = vsub.f32 %v1549, %v1688
    %v1727 = vsub.f32 %v1552, %v1691
    %v1728 = vsub.f32 %v1596, %v1694
    %v1729 = vsub.f32 %v1599, %v1697
    %v1730 = vmul.f32 %v1698, 1.442695
    %v1731 = vpow.pop %v1730
    %v1732 = vmul.f32 %v1699, 1.442695
    %v1733 = vpow.pop %v1732
    %v1734 = vmul.f32 %v1700, 1.442695
    %v1735 = vpow.pop %v1734
    %v1736 = vmul.f32 %v1701, 1.442695
    %v1737 = vpow.pop %v1736
    %v1738 = vmul.f32 %v1702, 1.442695
    %v1739 = vpow.pop %v1738
    %v1740 = vmul.f32 %v1703, 1.442695
    %v1741 = vpow.pop %v1740
    %v1742 = vmul.f32 %v1704, 1.442695
    %v1743 = vpow.pop %v1742
    %v1744 = vmul.f32 %v1705, 1.442695
    %v1745 = vpow.pop %v1744
    %v1746 = vmul.f32 %v1706, 1.442695
    %v1747 = vpow.pop %v1746
    %v1748 = vmul.f32 %v1707, 1.442695
    %v1749 = vpow.pop %v1748
    %v1750 = vmul.f32 %v1708, 1.442695
    %v1751 = vpow.pop %v1750
    %v1752 = vmul.f32 %v1709, 1.442695
    %v1753 = vpow.pop %v1752
    %v1754 = vmul.f32 %v1710, 1.442695
    %v1755 = vpow.pop %v1754
    %v1756 = vmul.f32 %v1711, 1.442695
    %v1757 = vpow.pop %v1756
    %v1758 = vmul.f32 %v1712, 1.442695
    %v1759 = vpow.pop %v1758
    %v1760 = vmul.f32 %v1713, 1.442695
    %v1761 = vpow.pop %v1760
    %v1762 = vmul.f32 %v1714, 1.442695
    %v1763 = vpow.pop %v1762
    %v1764 = vmul.f32 %v1715, 1.442695
    %v1765 = vpow.pop %v1764
    %v1766 = vmul.f32 %v1716, 1.442695
    %v1767 = vpow.pop %v1766
    %v1768 = vmul.f32 %v1717, 1.442695
    %v1769 = vpow.pop %v1768
    %v1770 = vmul.f32 %v1718, 1.442695
    %v1771 = vpow.pop %v1770
    %v1772 = vmul.f32 %v1719, 1.442695
    %v1773 = vpow.pop %v1772
    %v1774 = vmul.f32 %v1720, 1.442695
    %v1775 = vpow.pop %v1774
    %v1776 = vmul.f32 %v1721, 1.442695
    %v1777 = vpow.pop %v1776
    %v1778 = vmul.f32 %v1722, 1.442695
    %v1779 = vpow.pop %v1778
    %v1780 = vmul.f32 %v1723, 1.442695
    %v1781 = vpow.pop %v1780
    %v1782 = vmul.f32 %v1724, 1.442695
    %v1783 = vpow.pop %v1782
    %v1784 = vmul.f32 %v1725, 1.442695
    %v1785 = vpow.pop %v1784
    %v1786 = vmul.f32 %v1726, 1.442695
    %v1787 = vpow.pop %v1786
    %v1788 = vmul.f32 %v1727, 1.442695
    %v1789 = vpow.pop %v1788
    %v1790 = vmul.f32 %v1728, 1.442695
    %v1791 = vpow.pop %v1790
    %v1792 = vmul.f32 %v1729, 1.442695
    %v1793 = vpow.pop %v1792
    %v1794 = vsel %vm849, %v1731, 0.0
    %1795 = vadd.xlane.f32.xlu0 %v1794
    %v1796 = vpop.xlane.xlu0 %1795
    %v1797 = vsel %vm849, %v1733, 0.0
    %1798 = vadd.xlane.f32.xlu0 %v1797
    %v1799 = vpop.xlane.xlu0 %1798
    %v1800 = vsel %vm849, %v1735, 0.0
    %1801 = vadd.xlane.f32.xlu0 %v1800
    %v1802 = vpop.xlane.xlu0 %1801
    %v1803 = vsel %vm849, %v1737, 0.0
    %1804 = vadd.xlane.f32.xlu0 %v1803
    %v1805 = vpop.xlane.xlu0 %1804
    %v1806 = vsel %vm849, %v1739, 0.0
    %1807 = vadd.xlane.f32.xlu0 %v1806
    %v1808 = vpop.xlane.xlu0 %1807
    %v1809 = vsel %vm849, %v1741, 0.0
    %1810 = vadd.xlane.f32.xlu0 %v1809
    %v1811 = vpop.xlane.xlu0 %1810
    %v1812 = vsel %vm849, %v1743, 0.0
    %1813 = vadd.xlane.f32.xlu0 %v1812
    %v1814 = vpop.xlane.xlu0 %1813
    %v1815 = vsel %vm849, %v1745, 0.0
    %1816 = vadd.xlane.f32.xlu0 %v1815
    %v1817 = vpop.xlane.xlu0 %1816
    %v1818 = vsel %vm849, %v1747, 0.0
    %1819 = vadd.xlane.f32.xlu0 %v1818
    %v1820 = vpop.xlane.xlu0 %1819
    %v1821 = vsel %vm849, %v1749, 0.0
    %1822 = vadd.xlane.f32.xlu0 %v1821
    %v1823 = vpop.xlane.xlu0 %1822
    %v1824 = vsel %vm849, %v1751, 0.0
    %1825 = vadd.xlane.f32.xlu0 %v1824
    %v1826 = vpop.xlane.xlu0 %1825
    %v1827 = vsel %vm849, %v1753, 0.0
    %1828 = vadd.xlane.f32.xlu0 %v1827
    %v1829 = vpop.xlane.xlu0 %1828
    %v1830 = vsel %vm849, %v1755, 0.0
    %1831 = vadd.xlane.f32.xlu0 %v1830
    %v1832 = vpop.xlane.xlu0 %1831
    %v1833 = vsel %vm849, %v1757, 0.0
    %1834 = vadd.xlane.f32.xlu0 %v1833
    %v1835 = vpop.xlane.xlu0 %1834
    %v1836 = vsel %vm849, %v1759, 0.0
    %1837 = vadd.xlane.f32.xlu0 %v1836
    %v1838 = vpop.xlane.xlu0 %1837
    %v1839 = vsel %vm849, %v1761, 0.0
    %1840 = vadd.xlane.f32.xlu0 %v1839
    %v1841 = vpop.xlane.xlu0 %1840
    %v1842 = vsel %vm849, %v1763, 0.0
    %1843 = vadd.xlane.f32.xlu0 %v1842
    %v1844 = vpop.xlane.xlu0 %1843
    %v1845 = vsel %vm849, %v1765, 0.0
    %1846 = vadd.xlane.f32.xlu0 %v1845
    %v1847 = vpop.xlane.xlu0 %1846
    %v1848 = vsel %vm849, %v1767, 0.0
    %1849 = vadd.xlane.f32.xlu0 %v1848
    %v1850 = vpop.xlane.xlu0 %1849
    %v1851 = vsel %vm849, %v1769, 0.0
    %1852 = vadd.xlane.f32.xlu0 %v1851
    %v1853 = vpop.xlane.xlu0 %1852
    %v1854 = vsel %vm849, %v1771, 0.0
    %1855 = vadd.xlane.f32.xlu0 %v1854
    %v1856 = vpop.xlane.xlu0 %1855
    %v1857 = vsel %vm849, %v1773, 0.0
    %1858 = vadd.xlane.f32.xlu0 %v1857
    %v1859 = vpop.xlane.xlu0 %1858
    %v1860 = vsel %vm849, %v1775, 0.0
    %1861 = vadd.xlane.f32.xlu0 %v1860
    %v1862 = vpop.xlane.xlu0 %1861
    %v1863 = vsel %vm849, %v1777, 0.0
    %1864 = vadd.xlane.f32.xlu0 %v1863
    %v1865 = vpop.xlane.xlu0 %1864
    %v1866 = vsel %vm849, %v1779, 0.0
    %1867 = vadd.xlane.f32.xlu0 %v1866
    %v1868 = vpop.xlane.xlu0 %1867
    %v1869 = vsel %vm849, %v1781, 0.0
    %1870 = vadd.xlane.f32.xlu0 %v1869
    %v1871 = vpop.xlane.xlu0 %1870
    %v1872 = vsel %vm849, %v1783, 0.0
    %1873 = vadd.xlane.f32.xlu0 %v1872
    %v1874 = vpop.xlane.xlu0 %1873
    %v1875 = vsel %vm849, %v1785, 0.0
    %1876 = vadd.xlane.f32.xlu0 %v1875
    %v1877 = vpop.xlane.xlu0 %1876
    %v1878 = vsel %vm849, %v1787, 0.0
    %1879 = vadd.xlane.f32.xlu0 %v1878
    %v1880 = vpop.xlane.xlu0 %1879
    %v1881 = vsel %vm849, %v1789, 0.0
    %1882 = vadd.xlane.f32.xlu0 %v1881
    %v1883 = vpop.xlane.xlu0 %1882
    %v1884 = vsel %vm849, %v1791, 0.0
    %1885 = vadd.xlane.f32.xlu0 %v1884
    %v1886 = vpop.xlane.xlu0 %1885
    %v1887 = vsel %vm849, %v1793, 0.0
    %1888 = vadd.xlane.f32.xlu0 %v1887
    %v1889 = vpop.xlane.xlu0 %1888
    %v1890 = vrcp.pop %v1796
    %v1891 = vrcp.pop %v1799
    %v1892 = vrcp.pop %v1802
    %v1893 = vrcp.pop %v1805
    %v1894 = vrcp.pop %v1808
    %v1895 = vrcp.pop %v1811
    %v1896 = vrcp.pop %v1814
    %v1897 = vrcp.pop %v1817
    %v1898 = vrcp.pop %v1820
    %v1899 = vrcp.pop %v1823
    %v1900 = vrcp.pop %v1826
    %v1901 = vrcp.pop %v1829
    %v1902 = vrcp.pop %v1832
    %v1903 = vrcp.pop %v1835
    %v1904 = vrcp.pop %v1838
    %v1905 = vrcp.pop %v1841
    %v1906 = vrcp.pop %v1844
    %v1907 = vrcp.pop %v1847
    %v1908 = vrcp.pop %v1850
    %v1909 = vrcp.pop %v1853
    %v1910 = vrcp.pop %v1856
    %v1911 = vrcp.pop %v1859
    %v1912 = vrcp.pop %v1862
    %v1913 = vrcp.pop %v1865
    %v1914 = vrcp.pop %v1868
    %v1915 = vrcp.pop %v1871
    %v1916 = vrcp.pop %v1874
    %v1917 = vrcp.pop %v1877
    %v1918 = vrcp.pop %v1880
    %v1919 = vrcp.pop %v1883
    %v1920 = vrcp.pop %v1886
    %v1921 = vrcp.pop %v1889
    %v1922 = vmul.f32 %v1731, %v1890
    %v1923 = vmul.f32 %v1733, %v1891
    %v1924 = vmul.f32 %v1735, %v1892
    %v1925 = vmul.f32 %v1737, %v1893
    %v1926 = vmul.f32 %v1739, %v1894
    %v1927 = vmul.f32 %v1741, %v1895
    %v1928 = vmul.f32 %v1743, %v1896
    %v1929 = vmul.f32 %v1745, %v1897
    %v1930 = vmul.f32 %v1747, %v1898
    %v1931 = vmul.f32 %v1749, %v1899
    %v1932 = vmul.f32 %v1751, %v1900
    %v1933 = vmul.f32 %v1753, %v1901
    %v1934 = vmul.f32 %v1755, %v1902
    %v1935 = vmul.f32 %v1757, %v1903
    %v1936 = vmul.f32 %v1759, %v1904
    %v1937 = vmul.f32 %v1761, %v1905
    %v1938 = vmul.f32 %v1763, %v1906
    %v1939 = vmul.f32 %v1765, %v1907
    %v1940 = vmul.f32 %v1767, %v1908
    %v1941 = vmul.f32 %v1769, %v1909
    %v1942 = vmul.f32 %v1771, %v1910
    %v1943 = vmul.f32 %v1773, %v1911
    %v1944 = vmul.f32 %v1775, %v1912
    %v1945 = vmul.f32 %v1777, %v1913
    %v1946 = vmul.f32 %v1779, %v1914
    %v1947 = vmul.f32 %v1781, %v1915
    %v1948 = vmul.f32 %v1783, %v1916
    %v1949 = vmul.f32 %v1785, %v1917
    %v1950 = vmul.f32 %v1787, %v1918
    %v1951 = vmul.f32 %v1789, %v1919
    %v1952 = vmul.f32 %v1791, %v1920
    %v1953 = vmul.f32 %v1793, %v1921
    %v1954 = vpack.c.bf16 %v1923, %v1922
    %v1955 = vpack.c.bf16 %v1925, %v1924
    %v1956 = vpack.c.bf16 %v1927, %v1926
    %v1957 = vpack.c.bf16 %v1929, %v1928
    %v1958 = vpack.c.bf16 %v1931, %v1930
    %v1959 = vpack.c.bf16 %v1933, %v1932
    %v1960 = vpack.c.bf16 %v1935, %v1934
    %v1961 = vpack.c.bf16 %v1937, %v1936
    %v1962 = vpack.c.bf16 %v1939, %v1938
    %v1963 = vpack.c.bf16 %v1941, %v1940
    %v1964 = vpack.c.bf16 %v1943, %v1942
    %v1965 = vpack.c.bf16 %v1945, %v1944
    %v1966 = vpack.c.bf16 %v1947, %v1946
    %v1967 = vpack.c.bf16 %v1949, %v1948
    %v1968 = vpack.c.bf16 %v1951, %v1950
    %v1969 = vpack.c.bf16 %v1953, %v1952
    %v1971 = vsel %vm849, %v1954, 0
    %1973 = vmatprep.subr.bf16.mxu0 0
    %1974 = vmatpush1.bf16.msra.mxu0 %v831
    %1975 = vmatprep.subr.bf16.mxu0 0
    %1976 = vmatpush1.bf16.msra.mxu0 0
    %1977 = vmatprep.subr.bf16.mxu0 0
    %1978 = vmatpush1.bf16.msra.mxu0 0
    %1979 = vmatprep.subr.bf16.mxu0 0
    %1980 = vmatpush1.bf16.msra.mxu0 0
    %1981 = vmatprep.subr.bf16.mxu0 0
    %1982 = vmatpush1.bf16.msra.mxu0 0
    %1983 = vmatprep.subr.bf16.mxu0 0
    %1984 = vmatpush1.bf16.msra.mxu0 0
    %1985 = vmatprep.subr.bf16.mxu0 0
    %1986 = vmatpush1.bf16.msra.mxu0 0
    %1987 = vmatprep.subr.bf16.mxu0 0
    %1988 = vmatpush1.bf16.msra.mxu0 0
    %1989 = vmatprep.subr.bf16.mxu0 0
    %1990 = vmatpush1.bf16.msra.mxu0 0
    %1991 = vmatprep.subr.bf16.mxu0 0
    %1992 = vmatpush1.bf16.msra.mxu0 0
    %1993 = vmatprep.subr.bf16.mxu0 0
    %1994 = vmatpush1.bf16.msra.mxu0 0
    %1995 = vmatprep.subr.bf16.mxu0 0
    %1996 = vmatpush1.bf16.msra.mxu0 0
    %1997 = vmatprep.subr.bf16.mxu0 0
    %1998 = vmatpush1.bf16.msra.mxu0 0
    %1999 = vmatprep.subr.bf16.mxu0 0
    %2000 = vmatpush1.bf16.msra.mxu0 0
    %2001 = vmatprep.subr.bf16.mxu0 0
    %2002 = vmatpush1.bf16.msra.mxu0 0
    %2003 = vmatprep.subr.bf16.mxu0 0
    %2004 = vmatpush1.bf16.msra.mxu0 0
    %2005 = vmatprep.mubr.bf16.mxu0 0
    %2006 = vmatmul.mubr.bf16.gmra.mrb[0].mxu0 %v1971
    %v2007 = vpop.f32.mrb[0].mxu0
    %v2008 = vadd.f32 0.0, %v2007
    %v2009 = vpop.f32.mrb[0].mxu0
    %v2010 = vpop.f32.mrb[0].mxu0
    %v2011 = vadd.f32 0.0, %v2010
    %v2012 = vpop.f32.mrb[0].mxu0
    %2013 = vdwg.mxu0
    %v2015 = vsel %vm849, %v1955, 0
    %2017 = vmatprep.subr.bf16.mxu0 0
    %2018 = vmatpush1.bf16.msra.mxu0 %v832
    %2019 = vmatprep.subr.bf16.mxu0 0
    %2020 = vmatpush1.bf16.msra.mxu0 0
    %2021 = vmatprep.subr.bf16.mxu0 0
    %2022 = vmatpush1.bf16.msra.mxu0 0
    %2023 = vmatprep.subr.bf16.mxu0 0
    %2024 = vmatpush1.bf16.msra.mxu0 0
    %2025 = vmatprep.subr.bf16.mxu0 0
    %2026 = vmatpush1.bf16.msra.mxu0 0
    %2027 = vmatprep.subr.bf16.mxu0 0
    %2028 = vmatpush1.bf16.msra.mxu0 0
    %2029 = vmatprep.subr.bf16.mxu0 0
    %2030 = vmatpush1.bf16.msra.mxu0 0
    %2031 = vmatprep.subr.bf16.mxu0 0
    %2032 = vmatpush1.bf16.msra.mxu0 0
    %2033 = vmatprep.subr.bf16.mxu0 0
    %2034 = vmatpush1.bf16.msra.mxu0 0
    %2035 = vmatprep.subr.bf16.mxu0 0
    %2036 = vmatpush1.bf16.msra.mxu0 0
    %2037 = vmatprep.subr.bf16.mxu0 0
    %2038 = vmatpush1.bf16.msra.mxu0 0
    %2039 = vmatprep.subr.bf16.mxu0 0
    %2040 = vmatpush1.bf16.msra.mxu0 0
    %2041 = vmatprep.subr.bf16.mxu0 0
    %2042 = vmatpush1.bf16.msra.mxu0 0
    %2043 = vmatprep.subr.bf16.mxu0 0
    %2044 = vmatpush1.bf16.msra.mxu0 0
    %2045 = vmatprep.subr.bf16.mxu0 0
    %2046 = vmatpush1.bf16.msra.mxu0 0
    %2047 = vmatprep.subr.bf16.mxu0 0
    %2048 = vmatpush1.bf16.msra.mxu0 0
    %2049 = vmatprep.mubr.bf16.mxu0 0
    %2050 = vmatmul.mubr.bf16.gmra.mrb[0].mxu0 %v2015
    %v2051 = vpop.f32.mrb[0].mxu0
    %v2052 = vadd.f32 0.0, %v2051
    %v2053 = vpop.f32.mrb[0].mxu0
    %v2054 = vpop.f32.mrb[0].mxu0
    %v2055 = vadd.f32 0.0, %v2054
    %v2056 = vpop.f32.mrb[0].mxu0
    %2057 = vdwg.mxu0
    %v2059 = vsel %vm849, %v1956, 0
    %2061 = vmatprep.subr.bf16.mxu0 0
    %2062 = vmatpush1.bf16.msra.mxu0 %v833
    %2063 = vmatprep.subr.bf16.mxu0 0
    %2064 = vmatpush1.bf16.msra.mxu0 0
    %2065 = vmatprep.subr.bf16.mxu0 0
    %2066 = vmatpush1.bf16.msra.mxu0 0
    %2067 = vmatprep.subr.bf16.mxu0 0
    %2068 = vmatpush1.bf16.msra.mxu0 0
    %2069 = vmatprep.subr.bf16.mxu0 0
    %2070 = vmatpush1.bf16.msra.mxu0 0
    %2071 = vmatprep.subr.bf16.mxu0 0
    %2072 = vmatpush1.bf16.msra.mxu0 0
    %2073 = vmatprep.subr.bf16.mxu0 0
    %2074 = vmatpush1.bf16.msra.mxu0 0
    %2075 = vmatprep.subr.bf16.mxu0 0
    %2076 = vmatpush1.bf16.msra.mxu0 0
    %2077 = vmatprep.subr.bf16.mxu0 0
    %2078 = vmatpush1.bf16.msra.mxu0 0
    %2079 = vmatprep.subr.bf16.mxu0 0
    %2080 = vmatpush1.bf16.msra.mxu0 0
    %2081 = vmatprep.subr.bf16.mxu0 0
    %2082 = vmatpush1.bf16.msra.mxu0 0
    %2083 = vmatprep.subr.bf16.mxu0 0
    %2084 = vmatpush1.bf16.msra.mxu0 0
    %2085 = vmatprep.subr.bf16.mxu0 0
    %2086 = vmatpush1.bf16.msra.mxu0 0
    %2087 = vmatprep.subr.bf16.mxu0 0
    %2088 = vmatpush1.bf16.msra.mxu0 0
    %2089 = vmatprep.subr.bf16.mxu0 0
    %2090 = vmatpush1.bf16.msra.mxu0 0
    %2091 = vmatprep.subr.bf16.mxu0 0
    %2092 = vmatpush1.bf16.msra.mxu0 0
    %2093 = vmatprep.mubr.bf16.mxu0 0
    %2094 = vmatmul.mubr.bf16.gmra.mrb[0].mxu0 %v2059
    %v2095 = vpop.f32.mrb[0].mxu0
    %v2096 = vadd.f32 0.0, %v2095
    %v2097 = vpop.f32.mrb[0].mxu0
    %v2098 = vpop.f32.mrb[0].mxu0
    %v2099 = vadd.f32 0.0, %v2098
    %v2100 = vpop.f32.mrb[0].mxu0
    %2101 = vdwg.mxu0
    %v2103 = vsel %vm849, %v1957, 0
    %2105 = vmatprep.subr.bf16.mxu0 0
    %2106 = vmatpush1.bf16.msra.mxu0 %v834
    %2107 = vmatprep.subr.bf16.mxu0 0
    %2108 = vmatpush1.bf16.msra.mxu0 0
    %2109 = vmatprep.subr.bf16.mxu0 0
    %2110 = vmatpush1.bf16.msra.mxu0 0
    %2111 = vmatprep.subr.bf16.mxu0 0
    %2112 = vmatpush1.bf16.msra.mxu0 0
    %2113 = vmatprep.subr.bf16.mxu0 0
    %2114 = vmatpush1.bf16.msra.mxu0 0
    %2115 = vmatprep.subr.bf16.mxu0 0
    %2116 = vmatpush1.bf16.msra.mxu0 0
    %2117 = vmatprep.subr.bf16.mxu0 0
    %2118 = vmatpush1.bf16.msra.mxu0 0
    %2119 = vmatprep.subr.bf16.mxu0 0
    %2120 = vmatpush1.bf16.msra.mxu0 0
    %2121 = vmatprep.subr.bf16.mxu0 0
    %2122 = vmatpush1.bf16.msra.mxu0 0
    %2123 = vmatprep.subr.bf16.mxu0 0
    %2124 = vmatpush1.bf16.msra.mxu0 0
    %2125 = vmatprep.subr.bf16.mxu0 0
    %2126 = vmatpush1.bf16.msra.mxu0 0
    %2127 = vmatprep.subr.bf16.mxu0 0
    %2128 = vmatpush1.bf16.msra.mxu0 0
    %2129 = vmatprep.subr.bf16.mxu0 0
    %2130 = vmatpush1.bf16.msra.mxu0 0
    %2131 = vmatprep.subr.bf16.mxu0 0
    %2132 = vmatpush1.bf16.msra.mxu0 0
    %2133 = vmatprep.subr.bf16.mxu0 0
    %2134 = vmatpush1.bf16.msra.mxu0 0
    %2135 = vmatprep.subr.bf16.mxu0 0
    %2136 = vmatpush1.bf16.msra.mxu0 0
    %2137 = vmatprep.mubr.bf16.mxu0 0
    %2138 = vmatmul.mubr.bf16.gmra.mrb[0].mxu0 %v2103
    %v2139 = vpop.f32.mrb[0].mxu0
    %v2140 = vadd.f32 0.0, %v2139
    %v2141 = vpop.f32.mrb[0].mxu0
    %v2142 = vpop.f32.mrb[0].mxu0
    %v2143 = vadd.f32 0.0, %v2142
    %v2144 = vpop.f32.mrb[0].mxu0
    %2145 = vdwg.mxu0
    %v2147 = vsel %vm849, %v1958, 0
    %2149 = vmatprep.subr.bf16.mxu0 0
    %2150 = vmatpush1.bf16.msra.mxu0 %v835
    %2151 = vmatprep.subr.bf16.mxu0 0
    %2152 = vmatpush1.bf16.msra.mxu0 0
    %2153 = vmatprep.subr.bf16.mxu0 0
    %2154 = vmatpush1.bf16.msra.mxu0 0
    %2155 = vmatprep.subr.bf16.mxu0 0
    %2156 = vmatpush1.bf16.msra.mxu0 0
    %2157 = vmatprep.subr.bf16.mxu0 0
    %2158 = vmatpush1.bf16.msra.mxu0 0
    %2159 = vmatprep.subr.bf16.mxu0 0
    %2160 = vmatpush1.bf16.msra.mxu0 0
    %2161 = vmatprep.subr.bf16.mxu0 0
    %2162 = vmatpush1.bf16.msra.mxu0 0
    %2163 = vmatprep.subr.bf16.mxu0 0
    %2164 = vmatpush1.bf16.msra.mxu0 0
    %2165 = vmatprep.subr.bf16.mxu0 0
    %2166 = vmatpush1.bf16.msra.mxu0 0
    %2167 = vmatprep.subr.bf16.mxu0 0
    %2168 = vmatpush1.bf16.msra.mxu0 0
    %2169 = vmatprep.subr.bf16.mxu0 0
    %2170 = vmatpush1.bf16.msra.mxu0 0
    %2171 = vmatprep.subr.bf16.mxu0 0
    %2172 = vmatpush1.bf16.msra.mxu0 0
    %2173 = vmatprep.subr.bf16.mxu0 0
    %2174 = vmatpush1.bf16.msra.mxu0 0
    %2175 = vmatprep.subr.bf16.mxu0 0
    %2176 = vmatpush1.bf16.msra.mxu0 0
    %2177 = vmatprep.subr.bf16.mxu0 0
    %2178 = vmatpush1.bf16.msra.mxu0 0
    %2179 = vmatprep.subr.bf16.mxu0 0
    %2180 = vmatpush1.bf16.msra.mxu0 0
    %2181 = vmatprep.mubr.bf16.mxu0 0
    %2182 = vmatmul.mubr.bf16.gmra.mrb[0].mxu0 %v2147
    %v2183 = vpop.f32.mrb[0].mxu0
    %v2184 = vadd.f32 0.0, %v2183
    %v2185 = vpop.f32.mrb[0].mxu0
    %v2186 = vpop.f32.mrb[0].mxu0
    %v2187 = vadd.f32 0.0, %v2186
    %v2188 = vpop.f32.mrb[0].mxu0
    %2189 = vdwg.mxu0
    %v2191 = vsel %vm849, %v1959, 0
    %2193 = vmatprep.subr.bf16.mxu0 0
    %2194 = vmatpush1.bf16.msra.mxu0 %v836
    %2195 = vmatprep.subr.bf16.mxu0 0
    %2196 = vmatpush1.bf16.msra.mxu0 0
    %2197 = vmatprep.subr.bf16.mxu0 0
    %2198 = vmatpush1.bf16.msra.mxu0 0
    %2199 = vmatprep.subr.bf16.mxu0 0
    %2200 = vmatpush1.bf16.msra.mxu0 0
    %2201 = vmatprep.subr.bf16.mxu0 0
    %2202 = vmatpush1.bf16.msra.mxu0 0
    %2203 = vmatprep.subr.bf16.mxu0 0
    %2204 = vmatpush1.bf16.msra.mxu0 0
    %2205 = vmatprep.subr.bf16.mxu0 0
    %2206 = vmatpush1.bf16.msra.mxu0 0
    %2207 = vmatprep.subr.bf16.mxu0 0
    %2208 = vmatpush1.bf16.msra.mxu0 0
    %2209 = vmatprep.subr.bf16.mxu0 0
    %2210 = vmatpush1.bf16.msra.mxu0 0
    %2211 = vmatprep.subr.bf16.mxu0 0
    %2212 = vmatpush1.bf16.msra.mxu0 0
    %2213 = vmatprep.subr.bf16.mxu0 0
    %2214 = vmatpush1.bf16.msra.mxu0 0
    %2215 = vmatprep.subr.bf16.mxu0 0
    %2216 = vmatpush1.bf16.msra.mxu0 0
    %2217 = vmatprep.subr.bf16.mxu0 0
    %2218 = vmatpush1.bf16.msra.mxu0 0
    %2219 = vmatprep.subr.bf16.mxu0 0
    %2220 = vmatpush1.bf16.msra.mxu0 0
    %2221 = vmatprep.subr.bf16.mxu0 0
    %2222 = vmatpush1.bf16.msra.mxu0 0
    %2223 = vmatprep.subr.bf16.mxu0 0
    %2224 = vmatpush1.bf16.msra.mxu0 0
    %2225 = vmatprep.mubr.bf16.mxu0 0
    %2226 = vmatmul.mubr.bf16.gmra.mrb[0].mxu0 %v2191
    %v2227 = vpop.f32.mrb[0].mxu0
    %v2228 = vadd.f32 0.0, %v2227
    %v2229 = vpop.f32.mrb[0].mxu0
    %v2230 = vpop.f32.mrb[0].mxu0
    %v2231 = vadd.f32 0.0, %v2230
    %v2232 = vpop.f32.mrb[0].mxu0
    %2233 = vdwg.mxu0
    %v2235 = vsel %vm849, %v1960, 0
    %2237 = vmatprep.subr.bf16.mxu0 0
    %2238 = vmatpush1.bf16.msra.mxu0 %v837
    %2239 = vmatprep.subr.bf16.mxu0 0
    %2240 = vmatpush1.bf16.msra.mxu0 0
    %2241 = vmatprep.subr.bf16.mxu0 0
    %2242 = vmatpush1.bf16.msra.mxu0 0
    %2243 = vmatprep.subr.bf16.mxu0 0
    %2244 = vmatpush1.bf16.msra.mxu0 0
    %2245 = vmatprep.subr.bf16.mxu0 0
    %2246 = vmatpush1.bf16.msra.mxu0 0
    %2247 = vmatprep.subr.bf16.mxu0 0
    %2248 = vmatpush1.bf16.msra.mxu0 0
    %2249 = vmatprep.subr.bf16.mxu0 0
    %2250 = vmatpush1.bf16.msra.mxu0 0
    %2251 = vmatprep.subr.bf16.mxu0 0
    %2252 = vmatpush1.bf16.msra.mxu0 0
    %2253 = vmatprep.subr.bf16.mxu0 0
    %2254 = vmatpush1.bf16.msra.mxu0 0
    %2255 = vmatprep.subr.bf16.mxu0 0
    %2256 = vmatpush1.bf16.msra.mxu0 0
    %2257 = vmatprep.subr.bf16.mxu0 0
    %2258 = vmatpush1.bf16.msra.mxu0 0
    %2259 = vmatprep.subr.bf16.mxu0 0
    %2260 = vmatpush1.bf16.msra.mxu0 0
    %2261 = vmatprep.subr.bf16.mxu0 0
    %2262 = vmatpush1.bf16.msra.mxu0 0
    %2263 = vmatprep.subr.bf16.mxu0 0
    %2264 = vmatpush1.bf16.msra.mxu0 0
    %2265 = vmatprep.subr.bf16.mxu0 0
    %2266 = vmatpush1.bf16.msra.mxu0 0
    %2267 = vmatprep.subr.bf16.mxu0 0
    %2268 = vmatpush1.bf16.msra.mxu0 0
    %2269 = vmatprep.mubr.bf16.mxu0 0
    %2270 = vmatmul.mubr.bf16.gmra.mrb[0].mxu0 %v2235
    %v2271 = vpop.f32.mrb[0].mxu0
    %v2272 = vadd.f32 0.0, %v2271
    %v2273 = vpop.f32.mrb[0].mxu0
    %v2274 = vpop.f32.mrb[0].mxu0
    %v2275 = vadd.f32 0.0, %v2274
    %v2276 = vpop.f32.mrb[0].mxu0
    %2277 = vdwg.mxu0
    %v2279 = vsel %vm849, %v1961, 0
    %2281 = vmatprep.subr.bf16.mxu0 0
    %2282 = vmatpush1.bf16.msra.mxu0 %v838
    %2283 = vmatprep.subr.bf16.mxu0 0
    %2284 = vmatpush1.bf16.msra.mxu0 0
    %2285 = vmatprep.subr.bf16.mxu0 0
    %2286 = vmatpush1.bf16.msra.mxu0 0
    %2287 = vmatprep.subr.bf16.mxu0 0
    %2288 = vmatpush1.bf16.msra.mxu0 0
    %2289 = vmatprep.subr.bf16.mxu0 0
    %2290 = vmatpush1.bf16.msra.mxu0 0
    %2291 = vmatprep.subr.bf16.mxu0 0
    %2292 = vmatpush1.bf16.msra.mxu0 0
    %2293 = vmatprep.subr.bf16.mxu0 0
    %2294 = vmatpush1.bf16.msra.mxu0 0
    %2295 = vmatprep.subr.bf16.mxu0 0
    %2296 = vmatpush1.bf16.msra.mxu0 0
    %2297 = vmatprep.subr.bf16.mxu0 0
    %2298 = vmatpush1.bf16.msra.mxu0 0
    %2299 = vmatprep.subr.bf16.mxu0 0
    %2300 = vmatpush1.bf16.msra.mxu0 0
    %2301 = vmatprep.subr.bf16.mxu0 0
    %2302 = vmatpush1.bf16.msra.mxu0 0
    %2303 = vmatprep.subr.bf16.mxu0 0
    %2304 = vmatpush1.bf16.msra.mxu0 0
    %2305 = vmatprep.subr.bf16.mxu0 0
    %2306 = vmatpush1.bf16.msra.mxu0 0
    %2307 = vmatprep.subr.bf16.mxu0 0
    %2308 = vmatpush1.bf16.msra.mxu0 0
    %2309 = vmatprep.subr.bf16.mxu0 0
    %2310 = vmatpush1.bf16.msra.mxu0 0
    %2311 = vmatprep.subr.bf16.mxu0 0
    %2312 = vmatpush1.bf16.msra.mxu0 0
    %2313 = vmatprep.mubr.bf16.mxu0 0
    %2314 = vmatmul.mubr.bf16.gmra.mrb[0].mxu0 %v2279
    %v2315 = vpop.f32.mrb[0].mxu0
    %v2316 = vadd.f32 0.0, %v2315
    %v2317 = vpop.f32.mrb[0].mxu0
    %v2318 = vpop.f32.mrb[0].mxu0
    %v2319 = vadd.f32 0.0, %v2318
    %v2320 = vpop.f32.mrb[0].mxu0
    %2321 = vdwg.mxu0
    %v2323 = vsel %vm849, %v1962, 0
    %2325 = vmatprep.subr.bf16.mxu0 0
    %2326 = vmatpush1.bf16.msra.mxu0 %v839
    %2327 = vmatprep.subr.bf16.mxu0 0
    %2328 = vmatpush1.bf16.msra.mxu0 0
    %2329 = vmatprep.subr.bf16.mxu0 0
    %2330 = vmatpush1.bf16.msra.mxu0 0
    %2331 = vmatprep.subr.bf16.mxu0 0
    %2332 = vmatpush1.bf16.msra.mxu0 0
    %2333 = vmatprep.subr.bf16.mxu0 0
    %2334 = vmatpush1.bf16.msra.mxu0 0
    %2335 = vmatprep.subr.bf16.mxu0 0
    %2336 = vmatpush1.bf16.msra.mxu0 0
    %2337 = vmatprep.subr.bf16.mxu0 0
    %2338 = vmatpush1.bf16.msra.mxu0 0
    %2339 = vmatprep.subr.bf16.mxu0 0
    %2340 = vmatpush1.bf16.msra.mxu0 0
    %2341 = vmatprep.subr.bf16.mxu0 0
    %2342 = vmatpush1.bf16.msra.mxu0 0
    %2343 = vmatprep.subr.bf16.mxu0 0
    %2344 = vmatpush1.bf16.msra.mxu0 0
    %2345 = vmatprep.subr.bf16.mxu0 0
    %2346 = vmatpush1.bf16.msra.mxu0 0
    %2347 = vmatprep.subr.bf16.mxu0 0
    %2348 = vmatpush1.bf16.msra.mxu0 0
    %2349 = vmatprep.subr.bf16.mxu0 0
    %2350 = vmatpush1.bf16.msra.mxu0 0
    %2351 = vmatprep.subr.bf16.mxu0 0
    %2352 = vmatpush1.bf16.msra.mxu0 0
    %2353 = vmatprep.subr.bf16.mxu0 0
    %2354 = vmatpush1.bf16.msra.mxu0 0
    %2355 = vmatprep.subr.bf16.mxu0 0
    %2356 = vmatpush1.bf16.msra.mxu0 0
    %2357 = vmatprep.mubr.bf16.mxu0 0
    %2358 = vmatmul.mubr.bf16.gmra.mrb[0].mxu0 %v2323
    %v2359 = vpop.f32.mrb[0].mxu0
    %v2360 = vadd.f32 0.0, %v2359
    %v2361 = vpop.f32.mrb[0].mxu0
    %v2362 = vpop.f32.mrb[0].mxu0
    %v2363 = vadd.f32 0.0, %v2362
    %v2364 = vpop.f32.mrb[0].mxu0
    %2365 = vdwg.mxu0
    %v2367 = vsel %vm849, %v1963, 0
    %2369 = vmatprep.subr.bf16.mxu0 0
    %2370 = vmatpush1.bf16.msra.mxu0 %v840
    %2371 = vmatprep.subr.bf16.mxu0 0
    %2372 = vmatpush1.bf16.msra.mxu0 0
    %2373 = vmatprep.subr.bf16.mxu0 0
    %2374 = vmatpush1.bf16.msra.mxu0 0
    %2375 = vmatprep.subr.bf16.mxu0 0
    %2376 = vmatpush1.bf16.msra.mxu0 0
    %2377 = vmatprep.subr.bf16.mxu0 0
    %2378 = vmatpush1.bf16.msra.mxu0 0
    %2379 = vmatprep.subr.bf16.mxu0 0
    %2380 = vmatpush1.bf16.msra.mxu0 0
    %2381 = vmatprep.subr.bf16.mxu0 0
    %2382 = vmatpush1.bf16.msra.mxu0 0
    %2383 = vmatprep.subr.bf16.mxu0 0
    %2384 = vmatpush1.bf16.msra.mxu0 0
    %2385 = vmatprep.subr.bf16.mxu0 0
    %2386 = vmatpush1.bf16.msra.mxu0 0
    %2387 = vmatprep.subr.bf16.mxu0 0
    %2388 = vmatpush1.bf16.msra.mxu0 0
    %2389 = vmatprep.subr.bf16.mxu0 0
    %2390 = vmatpush1.bf16.msra.mxu0 0
    %2391 = vmatprep.subr.bf16.mxu0 0
    %2392 = vmatpush1.bf16.msra.mxu0 0
    %2393 = vmatprep.subr.bf16.mxu0 0
    %2394 = vmatpush1.bf16.msra.mxu0 0
    %2395 = vmatprep.subr.bf16.mxu0 0
    %2396 = vmatpush1.bf16.msra.mxu0 0
    %2397 = vmatprep.subr.bf16.mxu0 0
    %2398 = vmatpush1.bf16.msra.mxu0 0
    %2399 = vmatprep.subr.bf16.mxu0 0
    %2400 = vmatpush1.bf16.msra.mxu0 0
    %2401 = vmatprep.mubr.bf16.mxu0 0
    %2402 = vmatmul.mubr.bf16.gmra.mrb[0].mxu0 %v2367
    %v2403 = vpop.f32.mrb[0].mxu0
    %v2404 = vadd.f32 0.0, %v2403
    %v2405 = vpop.f32.mrb[0].mxu0
    %v2406 = vpop.f32.mrb[0].mxu0
    %v2407 = vadd.f32 0.0, %v2406
    %v2408 = vpop.f32.mrb[0].mxu0
    %2409 = vdwg.mxu0
    %v2411 = vsel %vm849, %v1964, 0
    %2413 = vmatprep.subr.bf16.mxu0 0
    %2414 = vmatpush1.bf16.msra.mxu0 %v841
    %2415 = vmatprep.subr.bf16.mxu0 0
    %2416 = vmatpush1.bf16.msra.mxu0 0
    %2417 = vmatprep.subr.bf16.mxu0 0
    %2418 = vmatpush1.bf16.msra.mxu0 0
    %2419 = vmatprep.subr.bf16.mxu0 0
    %2420 = vmatpush1.bf16.msra.mxu0 0
    %2421 = vmatprep.subr.bf16.mxu0 0
    %2422 = vmatpush1.bf16.msra.mxu0 0
    %2423 = vmatprep.subr.bf16.mxu0 0
    %2424 = vmatpush1.bf16.msra.mxu0 0
    %2425 = vmatprep.subr.bf16.mxu0 0
    %2426 = vmatpush1.bf16.msra.mxu0 0
    %2427 = vmatprep.subr.bf16.mxu0 0
    %2428 = vmatpush1.bf16.msra.mxu0 0
    %2429 = vmatprep.subr.bf16.mxu0 0
    %2430 = vmatpush1.bf16.msra.mxu0 0
    %2431 = vmatprep.subr.bf16.mxu0 0
    %2432 = vmatpush1.bf16.msra.mxu0 0
    %2433 = vmatprep.subr.bf16.mxu0 0
    %2434 = vmatpush1.bf16.msra.mxu0 0
    %2435 = vmatprep.subr.bf16.mxu0 0
    %2436 = vmatpush1.bf16.msra.mxu0 0
    %2437 = vmatprep.subr.bf16.mxu0 0
    %2438 = vmatpush1.bf16.msra.mxu0 0
    %2439 = vmatprep.subr.bf16.mxu0 0
    %2440 = vmatpush1.bf16.msra.mxu0 0
    %2441 = vmatprep.subr.bf16.mxu0 0
    %2442 = vmatpush1.bf16.msra.mxu0 0
    %2443 = vmatprep.subr.bf16.mxu0 0
    %2444 = vmatpush1.bf16.msra.mxu0 0
    %2445 = vmatprep.mubr.bf16.mxu0 0
    %2446 = vmatmul.mubr.bf16.gmra.mrb[0].mxu0 %v2411
    %v2447 = vpop.f32.mrb[0].mxu0
    %v2448 = vadd.f32 0.0, %v2447
    %v2449 = vpop.f32.mrb[0].mxu0
    %v2450 = vpop.f32.mrb[0].mxu0
    %v2451 = vadd.f32 0.0, %v2450
    %v2452 = vpop.f32.mrb[0].mxu0
    %2453 = vdwg.mxu0
    %v2455 = vsel %vm849, %v1965, 0
    %2457 = vmatprep.subr.bf16.mxu0 0
    %2458 = vmatpush1.bf16.msra.mxu0 %v842
    %2459 = vmatprep.subr.bf16.mxu0 0
    %2460 = vmatpush1.bf16.msra.mxu0 0
    %2461 = vmatprep.subr.bf16.mxu0 0
    %2462 = vmatpush1.bf16.msra.mxu0 0
    %2463 = vmatprep.subr.bf16.mxu0 0
    %2464 = vmatpush1.bf16.msra.mxu0 0
    %2465 = vmatprep.subr.bf16.mxu0 0
    %2466 = vmatpush1.bf16.msra.mxu0 0
    %2467 = vmatprep.subr.bf16.mxu0 0
    %2468 = vmatpush1.bf16.msra.mxu0 0
    %2469 = vmatprep.subr.bf16.mxu0 0
    %2470 = vmatpush1.bf16.msra.mxu0 0
    %2471 = vmatprep.subr.bf16.mxu0 0
    %2472 = vmatpush1.bf16.msra.mxu0 0
    %2473 = vmatprep.subr.bf16.mxu0 0
    %2474 = vmatpush1.bf16.msra.mxu0 0
    %2475 = vmatprep.subr.bf16.mxu0 0
    %2476 = vmatpush1.bf16.msra.mxu0 0
    %2477 = vmatprep.subr.bf16.mxu0 0
    %2478 = vmatpush1.bf16.msra.mxu0 0
    %2479 = vmatprep.subr.bf16.mxu0 0
    %2480 = vmatpush1.bf16.msra.mxu0 0
    %2481 = vmatprep.subr.bf16.mxu0 0
    %2482 = vmatpush1.bf16.msra.mxu0 0
    %2483 = vmatprep.subr.bf16.mxu0 0
    %2484 = vmatpush1.bf16.msra.mxu0 0
    %2485 = vmatprep.subr.bf16.mxu0 0
    %2486 = vmatpush1.bf16.msra.mxu0 0
    %2487 = vmatprep.subr.bf16.mxu0 0
    %2488 = vmatpush1.bf16.msra.mxu0 0
    %2489 = vmatprep.mubr.bf16.mxu0 0
    %2490 = vmatmul.mubr.bf16.gmra.mrb[0].mxu0 %v2455
    %v2491 = vpop.f32.mrb[0].mxu0
    %v2492 = vadd.f32 0.0, %v2491
    %v2493 = vpop.f32.mrb[0].mxu0
    %v2494 = vpop.f32.mrb[0].mxu0
    %v2495 = vadd.f32 0.0, %v2494
    %v2496 = vpop.f32.mrb[0].mxu0
    %2497 = vdwg.mxu0
    %v2499 = vsel %vm849, %v1966, 0
    %2501 = vmatprep.subr.bf16.mxu0 0
    %2502 = vmatpush1.bf16.msra.mxu0 %v843
    %2503 = vmatprep.subr.bf16.mxu0 0
    %2504 = vmatpush1.bf16.msra.mxu0 0
    %2505 = vmatprep.subr.bf16.mxu0 0
    %2506 = vmatpush1.bf16.msra.mxu0 0
    %2507 = vmatprep.subr.bf16.mxu0 0
    %2508 = vmatpush1.bf16.msra.mxu0 0
    %2509 = vmatprep.subr.bf16.mxu0 0
    %2510 = vmatpush1.bf16.msra.mxu0 0
    %2511 = vmatprep.subr.bf16.mxu0 0
    %2512 = vmatpush1.bf16.msra.mxu0 0
    %2513 = vmatprep.subr.bf16.mxu0 0
    %2514 = vmatpush1.bf16.msra.mxu0 0
    %2515 = vmatprep.subr.bf16.mxu0 0
    %2516 = vmatpush1.bf16.msra.mxu0 0
    %2517 = vmatprep.subr.bf16.mxu0 0
    %2518 = vmatpush1.bf16.msra.mxu0 0
    %2519 = vmatprep.subr.bf16.mxu0 0
    %2520 = vmatpush1.bf16.msra.mxu0 0
    %2521 = vmatprep.subr.bf16.mxu0 0
    %2522 = vmatpush1.bf16.msra.mxu0 0
    %2523 = vmatprep.subr.bf16.mxu0 0
    %2524 = vmatpush1.bf16.msra.mxu0 0
    %2525 = vmatprep.subr.bf16.mxu0 0
    %2526 = vmatpush1.bf16.msra.mxu0 0
    %2527 = vmatprep.subr.bf16.mxu0 0
    %2528 = vmatpush1.bf16.msra.mxu0 0
    %2529 = vmatprep.subr.bf16.mxu0 0
    %2530 = vmatpush1.bf16.msra.mxu0 0
    %2531 = vmatprep.subr.bf16.mxu0 0
    %2532 = vmatpush1.bf16.msra.mxu0 0
    %2533 = vmatprep.mubr.bf16.mxu0 0
    %2534 = vmatmul.mubr.bf16.gmra.mrb[0].mxu0 %v2499
    %v2535 = vpop.f32.mrb[0].mxu0
    %v2536 = vadd.f32 0.0, %v2535
    %v2537 = vpop.f32.mrb[0].mxu0
    %v2538 = vpop.f32.mrb[0].mxu0
    %v2539 = vadd.f32 0.0, %v2538
    %v2540 = vpop.f32.mrb[0].mxu0
    %2541 = vdwg.mxu0
    %v2543 = vsel %vm849, %v1967, 0
    %2545 = vmatprep.subr.bf16.mxu0 0
    %2546 = vmatpush1.bf16.msra.mxu0 %v844
    %2547 = vmatprep.subr.bf16.mxu0 0
    %2548 = vmatpush1.bf16.msra.mxu0 0
    %2549 = vmatprep.subr.bf16.mxu0 0
    %2550 = vmatpush1.bf16.msra.mxu0 0
    %2551 = vmatprep.subr.bf16.mxu0 0
    %2552 = vmatpush1.bf16.msra.mxu0 0
    %2553 = vmatprep.subr.bf16.mxu0 0
    %2554 = vmatpush1.bf16.msra.mxu0 0
    %2555 = vmatprep.subr.bf16.mxu0 0
    %2556 = vmatpush1.bf16.msra.mxu0 0
    %2557 = vmatprep.subr.bf16.mxu0 0
    %2558 = vmatpush1.bf16.msra.mxu0 0
    %2559 = vmatprep.subr.bf16.mxu0 0
    %2560 = vmatpush1.bf16.msra.mxu0 0
    %2561 = vmatprep.subr.bf16.mxu0 0
    %2562 = vmatpush1.bf16.msra.mxu0 0
    %2563 = vmatprep.subr.bf16.mxu0 0
    %2564 = vmatpush1.bf16.msra.mxu0 0
    %2565 = vmatprep.subr.bf16.mxu0 0
    %2566 = vmatpush1.bf16.msra.mxu0 0
    %2567 = vmatprep.subr.bf16.mxu0 0
    %2568 = vmatpush1.bf16.msra.mxu0 0
    %2569 = vmatprep.subr.bf16.mxu0 0
    %2570 = vmatpush1.bf16.msra.mxu0 0
    %2571 = vmatprep.subr.bf16.mxu0 0
    %2572 = vmatpush1.bf16.msra.mxu0 0
    %2573 = vmatprep.subr.bf16.mxu0 0
    %2574 = vmatpush1.bf16.msra.mxu0 0
    %2575 = vmatprep.subr.bf16.mxu0 0
    %2576 = vmatpush1.bf16.msra.mxu0 0
    %2577 = vmatprep.mubr.bf16.mxu0 0
    %2578 = vmatmul.mubr.bf16.gmra.mrb[0].mxu0 %v2543
    %v2579 = vpop.f32.mrb[0].mxu0
    %v2580 = vadd.f32 0.0, %v2579
    %v2581 = vpop.f32.mrb[0].mxu0
    %v2582 = vpop.f32.mrb[0].mxu0
    %v2583 = vadd.f32 0.0, %v2582
    %v2584 = vpop.f32.mrb[0].mxu0
    %2585 = vdwg.mxu0
    %v2587 = vsel %vm849, %v1968, 0
    %2589 = vmatprep.subr.bf16.mxu0 0
    %2590 = vmatpush1.bf16.msra.mxu0 %v845
    %2591 = vmatprep.subr.bf16.mxu0 0
    %2592 = vmatpush1.bf16.msra.mxu0 0
    %2593 = vmatprep.subr.bf16.mxu0 0
    %2594 = vmatpush1.bf16.msra.mxu0 0
    %2595 = vmatprep.subr.bf16.mxu0 0
    %2596 = vmatpush1.bf16.msra.mxu0 0
    %2597 = vmatprep.subr.bf16.mxu0 0
    %2598 = vmatpush1.bf16.msra.mxu0 0
    %2599 = vmatprep.subr.bf16.mxu0 0
    %2600 = vmatpush1.bf16.msra.mxu0 0
    %2601 = vmatprep.subr.bf16.mxu0 0
    %2602 = vmatpush1.bf16.msra.mxu0 0
    %2603 = vmatprep.subr.bf16.mxu0 0
    %2604 = vmatpush1.bf16.msra.mxu0 0
    %2605 = vmatprep.subr.bf16.mxu0 0
    %2606 = vmatpush1.bf16.msra.mxu0 0
    %2607 = vmatprep.subr.bf16.mxu0 0
    %2608 = vmatpush1.bf16.msra.mxu0 0
    %2609 = vmatprep.subr.bf16.mxu0 0
    %2610 = vmatpush1.bf16.msra.mxu0 0
    %2611 = vmatprep.subr.bf16.mxu0 0
    %2612 = vmatpush1.bf16.msra.mxu0 0
    %2613 = vmatprep.subr.bf16.mxu0 0
    %2614 = vmatpush1.bf16.msra.mxu0 0
    %2615 = vmatprep.subr.bf16.mxu0 0
    %2616 = vmatpush1.bf16.msra.mxu0 0
    %2617 = vmatprep.subr.bf16.mxu0 0
    %2618 = vmatpush1.bf16.msra.mxu0 0
    %2619 = vmatprep.subr.bf16.mxu0 0
    %2620 = vmatpush1.bf16.msra.mxu0 0
    %2621 = vmatprep.mubr.bf16.mxu0 0
    %2622 = vmatmul.mubr.bf16.gmra.mrb[0].mxu0 %v2587
    %v2623 = vpop.f32.mrb[0].mxu0
    %v2624 = vadd.f32 0.0, %v2623
    %v2625 = vpop.f32.mrb[0].mxu0
    %v2626 = vpop.f32.mrb[0].mxu0
    %v2627 = vadd.f32 0.0, %v2626
    %v2628 = vpop.f32.mrb[0].mxu0
    %2629 = vdwg.mxu0
    %v2631 = vsel %vm849, %v1969, 0
    %2633 = vmatprep.subr.bf16.mxu0 0
    %2634 = vmatpush1.bf16.msra.mxu0 %v846
    %2635 = vmatprep.subr.bf16.mxu0 0
    %2636 = vmatpush1.bf16.msra.mxu0 0
    %2637 = vmatprep.subr.bf16.mxu0 0
    %2638 = vmatpush1.bf16.msra.mxu0 0
    %2639 = vmatprep.subr.bf16.mxu0 0
    %2640 = vmatpush1.bf16.msra.mxu0 0
    %2641 = vmatprep.subr.bf16.mxu0 0
    %2642 = vmatpush1.bf16.msra.mxu0 0
    %2643 = vmatprep.subr.bf16.mxu0 0
    %2644 = vmatpush1.bf16.msra.mxu0 0
    %2645 = vmatprep.subr.bf16.mxu0 0
    %2646 = vmatpush1.bf16.msra.mxu0 0
    %2647 = vmatprep.subr.bf16.mxu0 0
    %2648 = vmatpush1.bf16.msra.mxu0 0
    %2649 = vmatprep.subr.bf16.mxu0 0
    %2650 = vmatpush1.bf16.msra.mxu0 0
    %2651 = vmatprep.subr.bf16.mxu0 0
    %2652 = vmatpush1.bf16.msra.mxu0 0
    %2653 = vmatprep.subr.bf16.mxu0 0
    %2654 = vmatpush1.bf16.msra.mxu0 0
    %2655 = vmatprep.subr.bf16.mxu0 0
    %2656 = vmatpush1.bf16.msra.mxu0 0
    %2657 = vmatprep.subr.bf16.mxu0 0
    %2658 = vmatpush1.bf16.msra.mxu0 0
    %2659 = vmatprep.subr.bf16.mxu0 0
    %2660 = vmatpush1.bf16.msra.mxu0 0
    %2661 = vmatprep.subr.bf16.mxu0 0
    %2662 = vmatpush1.bf16.msra.mxu0 0
    %2663 = vmatprep.subr.bf16.mxu0 0
    %2664 = vmatpush1.bf16.msra.mxu0 0
    %2665 = vmatprep.mubr.bf16.mxu0 0
    %2666 = vmatmul.mubr.bf16.gmra.mrb[0].mxu0 %v2631
    %v2667 = vpop.f32.mrb[0].mxu0
    %v2668 = vadd.f32 0.0, %v2667
    %v2669 = vpop.f32.mrb[0].mxu0
    %v2670 = vpop.f32.mrb[0].mxu0
    %v2671 = vadd.f32 0.0, %v2670
    %v2672 = vpop.f32.mrb[0].mxu0
    %2673 = vdwg.mxu0
    %v2674 = vpack.c.bf16 %v2011, %v2008
    %v2675 = vpack.c.bf16 %v2055, %v2052
    %v2676 = vpack.c.bf16 %v2099, %v2096
    %v2677 = vpack.c.bf16 %v2143, %v2140
    %v2678 = vpack.c.bf16 %v2187, %v2184
    %v2679 = vpack.c.bf16 %v2231, %v2228
    %v2680 = vpack.c.bf16 %v2275, %v2272
    %v2681 = vpack.c.bf16 %v2319, %v2316
    %v2682 = vpack.c.bf16 %v2363, %v2360
    %v2683 = vpack.c.bf16 %v2407, %v2404
    %v2684 = vpack.c.bf16 %v2451, %v2448
    %v2685 = vpack.c.bf16 %v2495, %v2492
    %v2686 = vpack.c.bf16 %v2539, %v2536
    %v2687 = vpack.c.bf16 %v2583, %v2580
    %v2688 = vpack.c.bf16 %v2627, %v2624
    %v2689 = vpack.c.bf16 %v2671, %v2668
    %s2690 = scalar_lea.vmem [#allocation11], 16
    %v2691 = vld [vmem:[%s2690] sm:$0xff]
    %v2692 = vld [vmem:[%s2690 + $0x8] sm:$0xff]
    %2694 = vrot.lane.b32.xlu0 %v445, 112
    %v2695 = vpop.permute.xlu0 %2694
    %2697 = vrot.lane.b32.xlu0 %v638, 112
    %v2698 = vpop.permute.xlu0 %2697
    %v2700 = vsel %vm849, %v2695, 0
    %v2703 = vsel %vm849, %v2698, 0
    %2705 = vmatprep.subr.bf16.mxu0 0
    %2706 = vmatpush1.bf16.xpose.msra.mxu0 %v2703
    %2707 = vmatprep.subr.bf16.mxu0 0
    %2708 = vmatpush1.bf16.xpose.msra.mxu0 0
    %2709 = vmatprep.subr.bf16.mxu0 0
    %2710 = vmatpush1.bf16.xpose.msra.mxu0 0
    %2711 = vmatprep.subr.bf16.mxu0 0
    %2712 = vmatpush1.bf16.xpose.msra.mxu0 0
    %2713 = vmatprep.subr.bf16.mxu0 0
    %2714 = vmatpush1.bf16.xpose.msra.mxu0 0
    %2715 = vmatprep.subr.bf16.mxu0 0
    %2716 = vmatpush1.bf16.xpose.msra.mxu0 0
    %2717 = vmatprep.subr.bf16.mxu0 0
    %2718 = vmatpush1.bf16.xpose.msra.mxu0 0
    %2719 = vmatprep.subr.bf16.mxu0 0
    %2720 = vmatpush1.bf16.xpose.msra.mxu0 0
    %2721 = vmatprep.subr.bf16.mxu0 0
    %2722 = vmatpush1.bf16.xpose.msra.mxu0 0
    %2723 = vmatprep.subr.bf16.mxu0 0
    %2724 = vmatpush1.bf16.xpose.msra.mxu0 0
    %2725 = vmatprep.subr.bf16.mxu0 0
    %2726 = vmatpush1.bf16.xpose.msra.mxu0 0
    %2727 = vmatprep.subr.bf16.mxu0 0
    %2728 = vmatpush1.bf16.xpose.msra.mxu0 0
    %2729 = vmatprep.subr.bf16.mxu0 0
    %2730 = vmatpush1.bf16.xpose.msra.mxu0 0
    %2731 = vmatprep.subr.bf16.mxu0 0
    %2732 = vmatpush1.bf16.xpose.msra.mxu0 0
    %2733 = vmatprep.subr.bf16.mxu0 0
    %2734 = vmatpush1.bf16.xpose.msra.mxu0 0
    %2735 = vmatprep.subr.bf16.mxu0 0
    %2736 = vmatpush1.bf16.xpose.msra.mxu0 0
    %2737 = vmatprep.mubr.bf16.mxu0 0
    %2738 = vmatmul.mubr.bf16.gmra.mrb[0].mxu0 %v2700
    %v2739 = vpop.f32.mrb[0].mxu0
    %v2740 = vadd.f32 %v2691, %v2739
    %v2741 = vpop.f32.mrb[0].mxu0
    %v2742 = vpop.f32.mrb[0].mxu0
    %v2743 = vadd.f32 %v2692, %v2742
    %v2744 = vpop.f32.mrb[0].mxu0
    %2745 = vdwg.mxu0
    %2747 = vrot.lane.b32.xlu0 %v446, 112
    %v2748 = vpop.permute.xlu0 %2747
    %2750 = vrot.lane.b32.xlu0 %v639, 112
    %v2751 = vpop.permute.xlu0 %2750
    %v2753 = vsel %vm849, %v2748, 0
    %v2756 = vsel %vm849, %v2751, 0
    %2758 = vmatprep.subr.bf16.mxu0 0
    %2759 = vmatpush1.bf16.xpose.msra.mxu0 %v2756
    %2760 = vmatprep.subr.bf16.mxu0 0
    %2761 = vmatpush1.bf16.xpose.msra.mxu0 0
    %2762 = vmatprep.subr.bf16.mxu0 0
    %2763 = vmatpush1.bf16.xpose.msra.mxu0 0
    %2764 = vmatprep.subr.bf16.mxu0 0
    %2765 = vmatpush1.bf16.xpose.msra.mxu0 0
    %2766 = vmatprep.subr.bf16.mxu0 0
    %2767 = vmatpush1.bf16.xpose.msra.mxu0 0
    %2768 = vmatprep.subr.bf16.mxu0 0
    %2769 = vmatpush1.bf16.xpose.msra.mxu0 0
    %2770 = vmatprep.subr.bf16.mxu0 0
    %2771 = vmatpush1.bf16.xpose.msra.mxu0 0
    %2772 = vmatprep.subr.bf16.mxu0 0
    %2773 = vmatpush1.bf16.xpose.msra.mxu0 0
    %2774 = vmatprep.subr.bf16.mxu0 0
    %2775 = vmatpush1.bf16.xpose.msra.mxu0 0
    %2776 = vmatprep.subr.bf16.mxu0 0
    %2777 = vmatpush1.bf16.xpose.msra.mxu0 0
    %2778 = vmatprep.subr.bf16.mxu0 0
    %2779 = vmatpush1.bf16.xpose.msra.mxu0 0
    %2780 = vmatprep.subr.bf16.mxu0 0
    %2781 = vmatpush1.bf16.xpose.msra.mxu0 0
    %2782 = vmatprep.subr.bf16.mxu0 0
    %2783 = vmatpush1.bf16.xpose.msra.mxu0 0
    %2784 = vmatprep.subr.bf16.mxu0 0
    %2785 = vmatpush1.bf16.xpose.msra.mxu0 0
    %2786 = vmatprep.subr.bf16.mxu0 0
    %2787 = vmatpush1.bf16.xpose.msra.mxu0 0
    %2788 = vmatprep.subr.bf16.mxu0 0
    %2789 = vmatpush1.bf16.xpose.msra.mxu0 0
    %2790 = vmatprep.mubr.bf16.mxu0 0
    %2791 = vmatmul.mubr.bf16.gmra.mrb[0].mxu0 %v2753
    %v2792 = vpop.f32.mrb[0].mxu0
    %v2793 = vadd.f32 %v2691, %v2792
    %v2794 = vpop.f32.mrb[0].mxu0
    %v2795 = vpop.f32.mrb[0].mxu0
    %v2796 = vadd.f32 %v2692, %v2795
    %v2797 = vpop.f32.mrb[0].mxu0
    %2798 = vdwg.mxu0
    %2800 = vrot.lane.b32.xlu0 %v447, 112
    %v2801 = vpop.permute.xlu0 %2800
    %2803 = vrot.lane.b32.xlu0 %v640, 112
    %v2804 = vpop.permute.xlu0 %2803
    %v2806 = vsel %vm849, %v2801, 0
    %v2809 = vsel %vm849, %v2804, 0
    %2811 = vmatprep.subr.bf16.mxu0 0
    %2812 = vmatpush1.bf16.xpose.msra.mxu0 %v2809
    %2813 = vmatprep.subr.bf16.mxu0 0
    %2814 = vmatpush1.bf16.xpose.msra.mxu0 0
    %2815 = vmatprep.subr.bf16.mxu0 0
    %2816 = vmatpush1.bf16.xpose.msra.mxu0 0
    %2817 = vmatprep.subr.bf16.mxu0 0
    %2818 = vmatpush1.bf16.xpose.msra.mxu0 0
    %2819 = vmatprep.subr.bf16.mxu0 0
    %2820 = vmatpush1.bf16.xpose.msra.mxu0 0
    %2821 = vmatprep.subr.bf16.mxu0 0
    %2822 = vmatpush1.bf16.xpose.msra.mxu0 0
    %2823 = vmatprep.subr.bf16.mxu0 0
    %2824 = vmatpush1.bf16.xpose.msra.mxu0 0
    %2825 = vmatprep.subr.bf16.mxu0 0
    %2826 = vmatpush1.bf16.xpose.msra.mxu0 0
    %2827 = vmatprep.subr.bf16.mxu0 0
    %2828 = vmatpush1.bf16.xpose.msra.mxu0 0
    %2829 = vmatprep.subr.bf16.mxu0 0
    %2830 = vmatpush1.bf16.xpose.msra.mxu0 0
    %2831 = vmatprep.subr.bf16.mxu0 0
    %2832 = vmatpush1.bf16.xpose.msra.mxu0 0
    %2833 = vmatprep.subr.bf16.mxu0 0
    %2834 = vmatpush1.bf16.xpose.msra.mxu0 0
    %2835 = vmatprep.subr.bf16.mxu0 0
    %2836 = vmatpush1.bf16.xpose.msra.mxu0 0
    %2837 = vmatprep.subr.bf16.mxu0 0
    %2838 = vmatpush1.bf16.xpose.msra.mxu0 0
    %2839 = vmatprep.subr.bf16.mxu0 0
    %2840 = vmatpush1.bf16.xpose.msra.mxu0 0
    %2841 = vmatprep.subr.bf16.mxu0 0
    %2842 = vmatpush1.bf16.xpose.msra.mxu0 0
    %2843 = vmatprep.mubr.bf16.mxu0 0
    %2844 = vmatmul.mubr.bf16.gmra.mrb[0].mxu0 %v2806
    %v2845 = vpop.f32.mrb[0].mxu0
    %v2846 = vadd.f32 %v2691, %v2845
    %v2847 = vpop.f32.mrb[0].mxu0
    %v2848 = vpop.f32.mrb[0].mxu0
    %v2849 = vadd.f32 %v2692, %v2848
    %v2850 = vpop.f32.mrb[0].mxu0
    %2851 = vdwg.mxu0
    %2853 = vrot.lane.b32.xlu0 %v448, 112
    %v2854 = vpop.permute.xlu0 %2853
    %2856 = vrot.lane.b32.xlu0 %v641, 112
    %v2857 = vpop.permute.xlu0 %2856
    %v2859 = vsel %vm849, %v2854, 0
    %v2862 = vsel %vm849, %v2857, 0
    %2864 = vmatprep.subr.bf16.mxu0 0
    %2865 = vmatpush1.bf16.xpose.msra.mxu0 %v2862
    %2866 = vmatprep.subr.bf16.mxu0 0
    %2867 = vmatpush1.bf16.xpose.msra.mxu0 0
    %2868 = vmatprep.subr.bf16.mxu0 0
    %2869 = vmatpush1.bf16.xpose.msra.mxu0 0
    %2870 = vmatprep.subr.bf16.mxu0 0
    %2871 = vmatpush1.bf16.xpose.msra.mxu0 0
    %2872 = vmatprep.subr.bf16.mxu0 0
    %2873 = vmatpush1.bf16.xpose.msra.mxu0 0
    %2874 = vmatprep.subr.bf16.mxu0 0
    %2875 = vmatpush1.bf16.xpose.msra.mxu0 0
    %2876 = vmatprep.subr.bf16.mxu0 0
    %2877 = vmatpush1.bf16.xpose.msra.mxu0 0
    %2878 = vmatprep.subr.bf16.mxu0 0
    %2879 = vmatpush1.bf16.xpose.msra.mxu0 0
    %2880 = vmatprep.subr.bf16.mxu0 0
    %2881 = vmatpush1.bf16.xpose.msra.mxu0 0
    %2882 = vmatprep.subr.bf16.mxu0 0
    %2883 = vmatpush1.bf16.xpose.msra.mxu0 0
    %2884 = vmatprep.subr.bf16.mxu0 0
    %2885 = vmatpush1.bf16.xpose.msra.mxu0 0
    %2886 = vmatprep.subr.bf16.mxu0 0
    %2887 = vmatpush1.bf16.xpose.msra.mxu0 0
    %2888 = vmatprep.subr.bf16.mxu0 0
    %2889 = vmatpush1.bf16.xpose.msra.mxu0 0
    %2890 = vmatprep.subr.bf16.mxu0 0
    %2891 = vmatpush1.bf16.xpose.msra.mxu0 0
    %2892 = vmatprep.subr.bf16.mxu0 0
    %2893 = vmatpush1.bf16.xpose.msra.mxu0 0
    %2894 = vmatprep.subr.bf16.mxu0 0
    %2895 = vmatpush1.bf16.xpose.msra.mxu0 0
    %2896 = vmatprep.mubr.bf16.mxu0 0
    %2897 = vmatmul.mubr.bf16.gmra.mrb[0].mxu0 %v2859
    %v2898 = vpop.f32.mrb[0].mxu0
    %v2899 = vadd.f32 %v2691, %v2898
    %v2900 = vpop.f32.mrb[0].mxu0
    %v2901 = vpop.f32.mrb[0].mxu0
    %v2902 = vadd.f32 %v2692, %v2901
    %v2903 = vpop.f32.mrb[0].mxu0
    %2904 = vdwg.mxu0
    %2906 = vrot.lane.b32.xlu0 %v449, 112
    %v2907 = vpop.permute.xlu0 %2906
    %2909 = vrot.lane.b32.xlu0 %v642, 112
    %v2910 = vpop.permute.xlu0 %2909
    %v2912 = vsel %vm849, %v2907, 0
    %v2915 = vsel %vm849, %v2910, 0
    %2917 = vmatprep.subr.bf16.mxu0 0
    %2918 = vmatpush1.bf16.xpose.msra.mxu0 %v2915
    %2919 = vmatprep.subr.bf16.mxu0 0
    %2920 = vmatpush1.bf16.xpose.msra.mxu0 0
    %2921 = vmatprep.subr.bf16.mxu0 0
    %2922 = vmatpush1.bf16.xpose.msra.mxu0 0
    %2923 = vmatprep.subr.bf16.mxu0 0
    %2924 = vmatpush1.bf16.xpose.msra.mxu0 0
    %2925 = vmatprep.subr.bf16.mxu0 0
    %2926 = vmatpush1.bf16.xpose.msra.mxu0 0
    %2927 = vmatprep.subr.bf16.mxu0 0
    %2928 = vmatpush1.bf16.xpose.msra.mxu0 0
    %2929 = vmatprep.subr.bf16.mxu0 0
    %2930 = vmatpush1.bf16.xpose.msra.mxu0 0
    %2931 = vmatprep.subr.bf16.mxu0 0
    %2932 = vmatpush1.bf16.xpose.msra.mxu0 0
    %2933 = vmatprep.subr.bf16.mxu0 0
    %2934 = vmatpush1.bf16.xpose.msra.mxu0 0
    %2935 = vmatprep.subr.bf16.mxu0 0
    %2936 = vmatpush1.bf16.xpose.msra.mxu0 0
    %2937 = vmatprep.subr.bf16.mxu0 0
    %2938 = vmatpush1.bf16.xpose.msra.mxu0 0
    %2939 = vmatprep.subr.bf16.mxu0 0
    %2940 = vmatpush1.bf16.xpose.msra.mxu0 0
    %2941 = vmatprep.subr.bf16.mxu0 0
    %2942 = vmatpush1.bf16.xpose.msra.mxu0 0
    %2943 = vmatprep.subr.bf16.mxu0 0
    %2944 = vmatpush1.bf16.xpose.msra.mxu0 0
    %2945 = vmatprep.subr.bf16.mxu0 0
    %2946 = vmatpush1.bf16.xpose.msra.mxu0 0
    %2947 = vmatprep.subr.bf16.mxu0 0
    %2948 = vmatpush1.bf16.xpose.msra.mxu0 0
    %2949 = vmatprep.mubr.bf16.mxu0 0
    %2950 = vmatmul.mubr.bf16.gmra.mrb[0].mxu0 %v2912
    %v2951 = vpop.f32.mrb[0].mxu0
    %v2952 = vadd.f32 %v2691, %v2951
    %v2953 = vpop.f32.mrb[0].mxu0
    %v2954 = vpop.f32.mrb[0].mxu0
    %v2955 = vadd.f32 %v2692, %v2954
    %v2956 = vpop.f32.mrb[0].mxu0
    %2957 = vdwg.mxu0
    %2959 = vrot.lane.b32.xlu0 %v450, 112
    %v2960 = vpop.permute.xlu0 %2959
    %2962 = vrot.lane.b32.xlu0 %v643, 112
    %v2963 = vpop.permute.xlu0 %2962
    %v2965 = vsel %vm849, %v2960, 0
    %v2968 = vsel %vm849, %v2963, 0
    %2970 = vmatprep.subr.bf16.mxu0 0
    %2971 = vmatpush1.bf16.xpose.msra.mxu0 %v2968
    %2972 = vmatprep.subr.bf16.mxu0 0
    %2973 = vmatpush1.bf16.xpose.msra.mxu0 0
    %2974 = vmatprep.subr.bf16.mxu0 0
    %2975 = vmatpush1.bf16.xpose.msra.mxu0 0
    %2976 = vmatprep.subr.bf16.mxu0 0
    %2977 = vmatpush1.bf16.xpose.msra.mxu0 0
    %2978 = vmatprep.subr.bf16.mxu0 0
    %2979 = vmatpush1.bf16.xpose.msra.mxu0 0
    %2980 = vmatprep.subr.bf16.mxu0 0
    %2981 = vmatpush1.bf16.xpose.msra.mxu0 0
    %2982 = vmatprep.subr.bf16.mxu0 0
    %2983 = vmatpush1.bf16.xpose.msra.mxu0 0
    %2984 = vmatprep.subr.bf16.mxu0 0
    %2985 = vmatpush1.bf16.xpose.msra.mxu0 0
    %2986 = vmatprep.subr.bf16.mxu0 0
    %2987 = vmatpush1.bf16.xpose.msra.mxu0 0
    %2988 = vmatprep.subr.bf16.mxu0 0
    %2989 = vmatpush1.bf16.xpose.msra.mxu0 0
    %2990 = vmatprep.subr.bf16.mxu0 0
    %2991 = vmatpush1.bf16.xpose.msra.mxu0 0
    %2992 = vmatprep.subr.bf16.mxu0 0
    %2993 = vmatpush1.bf16.xpose.msra.mxu0 0
    %2994 = vmatprep.subr.bf16.mxu0 0
    %2995 = vmatpush1.bf16.xpose.msra.mxu0 0
    %2996 = vmatprep.subr.bf16.mxu0 0
    %2997 = vmatpush1.bf16.xpose.msra.mxu0 0
    %2998 = vmatprep.subr.bf16.mxu0 0
    %2999 = vmatpush1.bf16.xpose.msra.mxu0 0
    %3000 = vmatprep.subr.bf16.mxu0 0
    %3001 = vmatpush1.bf16.xpose.msra.mxu0 0
    %3002 = vmatprep.mubr.bf16.mxu0 0
    %3003 = vmatmul.mubr.bf16.gmra.mrb[0].mxu0 %v2965
    %v3004 = vpop.f32.mrb[0].mxu0
    %v3005 = vadd.f32 %v2691, %v3004
    %v3006 = vpop.f32.mrb[0].mxu0
    %v3007 = vpop.f32.mrb[0].mxu0
    %v3008 = vadd.f32 %v2692, %v3007
    %v3009 = vpop.f32.mrb[0].mxu0
    %3010 = vdwg.mxu0
    %3012 = vrot.lane.b32.xlu0 %v451, 112
    %v3013 = vpop.permute.xlu0 %3012
    %3015 = vrot.lane.b32.xlu0 %v644, 112
    %v3016 = vpop.permute.xlu0 %3015
    %v3018 = vsel %vm849, %v3013, 0
    %v3021 = vsel %vm849, %v3016, 0
    %3023 = vmatprep.subr.bf16.mxu0 0
    %3024 = vmatpush1.bf16.xpose.msra.mxu0 %v3021
    %3025 = vmatprep.subr.bf16.mxu0 0
    %3026 = vmatpush1.bf16.xpose.msra.mxu0 0
    %3027 = vmatprep.subr.bf16.mxu0 0
    %3028 = vmatpush1.bf16.xpose.msra.mxu0 0
    %3029 = vmatprep.subr.bf16.mxu0 0
    %3030 = vmatpush1.bf16.xpose.msra.mxu0 0
    %3031 = vmatprep.subr.bf16.mxu0 0
    %3032 = vmatpush1.bf16.xpose.msra.mxu0 0
    %3033 = vmatprep.subr.bf16.mxu0 0
    %3034 = vmatpush1.bf16.xpose.msra.mxu0 0
    %3035 = vmatprep.subr.bf16.mxu0 0
    %3036 = vmatpush1.bf16.xpose.msra.mxu0 0
    %3037 = vmatprep.subr.bf16.mxu0 0
    %3038 = vmatpush1.bf16.xpose.msra.mxu0 0
    %3039 = vmatprep.subr.bf16.mxu0 0
    %3040 = vmatpush1.bf16.xpose.msra.mxu0 0
    %3041 = vmatprep.subr.bf16.mxu0 0
    %3042 = vmatpush1.bf16.xpose.msra.mxu0 0
    %3043 = vmatprep.subr.bf16.mxu0 0
    %3044 = vmatpush1.bf16.xpose.msra.mxu0 0
    %3045 = vmatprep.subr.bf16.mxu0 0
    %3046 = vmatpush1.bf16.xpose.msra.mxu0 0
    %3047 = vmatprep.subr.bf16.mxu0 0
    %3048 = vmatpush1.bf16.xpose.msra.mxu0 0
    %3049 = vmatprep.subr.bf16.mxu0 0
    %3050 = vmatpush1.bf16.xpose.msra.mxu0 0
    %3051 = vmatprep.subr.bf16.mxu0 0
    %3052 = vmatpush1.bf16.xpose.msra.mxu0 0
    %3053 = vmatprep.subr.bf16.mxu0 0
    %3054 = vmatpush1.bf16.xpose.msra.mxu0 0
    %3055 = vmatprep.mubr.bf16.mxu0 0
    %3056 = vmatmul.mubr.bf16.gmra.mrb[0].mxu0 %v3018
    %v3057 = vpop.f32.mrb[0].mxu0
    %v3058 = vadd.f32 %v2691, %v3057
    %v3059 = vpop.f32.mrb[0].mxu0
    %v3060 = vpop.f32.mrb[0].mxu0
    %v3061 = vadd.f32 %v2692, %v3060
    %v3062 = vpop.f32.mrb[0].mxu0
    %3063 = vdwg.mxu0
    %3065 = vrot.lane.b32.xlu0 %v452, 112
    %v3066 = vpop.permute.xlu0 %3065
    %3068 = vrot.lane.b32.xlu0 %v645, 112
    %v3069 = vpop.permute.xlu0 %3068
    %v3071 = vsel %vm849, %v3066, 0
    %v3074 = vsel %vm849, %v3069, 0
    %3076 = vmatprep.subr.bf16.mxu0 0
    %3077 = vmatpush1.bf16.xpose.msra.mxu0 %v3074
    %3078 = vmatprep.subr.bf16.mxu0 0
    %3079 = vmatpush1.bf16.xpose.msra.mxu0 0
    %3080 = vmatprep.subr.bf16.mxu0 0
    %3081 = vmatpush1.bf16.xpose.msra.mxu0 0
    %3082 = vmatprep.subr.bf16.mxu0 0
    %3083 = vmatpush1.bf16.xpose.msra.mxu0 0
    %3084 = vmatprep.subr.bf16.mxu0 0
    %3085 = vmatpush1.bf16.xpose.msra.mxu0 0
    %3086 = vmatprep.subr.bf16.mxu0 0
    %3087 = vmatpush1.bf16.xpose.msra.mxu0 0
    %3088 = vmatprep.subr.bf16.mxu0 0
    %3089 = vmatpush1.bf16.xpose.msra.mxu0 0
    %3090 = vmatprep.subr.bf16.mxu0 0
    %3091 = vmatpush1.bf16.xpose.msra.mxu0 0
    %3092 = vmatprep.subr.bf16.mxu0 0
    %3093 = vmatpush1.bf16.xpose.msra.mxu0 0
    %3094 = vmatprep.subr.bf16.mxu0 0
    %3095 = vmatpush1.bf16.xpose.msra.mxu0 0
    %3096 = vmatprep.subr.bf16.mxu0 0
    %3097 = vmatpush1.bf16.xpose.msra.mxu0 0
    %3098 = vmatprep.subr.bf16.mxu0 0
    %3099 = vmatpush1.bf16.xpose.msra.mxu0 0
    %3100 = vmatprep.subr.bf16.mxu0 0
    %3101 = vmatpush1.bf16.xpose.msra.mxu0 0
    %3102 = vmatprep.subr.bf16.mxu0 0
    %3103 = vmatpush1.bf16.xpose.msra.mxu0 0
    %3104 = vmatprep.subr.bf16.mxu0 0
    %3105 = vmatpush1.bf16.xpose.msra.mxu0 0
    %3106 = vmatprep.subr.bf16.mxu0 0
    %3107 = vmatpush1.bf16.xpose.msra.mxu0 0
    %3108 = vmatprep.mubr.bf16.mxu0 0
    %3109 = vmatmul.mubr.bf16.gmra.mrb[0].mxu0 %v3071
    %v3110 = vpop.f32.mrb[0].mxu0
    %v3111 = vadd.f32 %v2691, %v3110
    %v3112 = vpop.f32.mrb[0].mxu0
    %v3113 = vpop.f32.mrb[0].mxu0
    %v3114 = vadd.f32 %v2692, %v3113
    %v3115 = vpop.f32.mrb[0].mxu0
    %3116 = vdwg.mxu0
    %3118 = vrot.lane.b32.xlu0 %v453, 112
    %v3119 = vpop.permute.xlu0 %3118
    %3121 = vrot.lane.b32.xlu0 %v646, 112
    %v3122 = vpop.permute.xlu0 %3121
    %v3124 = vsel %vm849, %v3119, 0
    %v3127 = vsel %vm849, %v3122, 0
    %3129 = vmatprep.subr.bf16.mxu0 0
    %3130 = vmatpush1.bf16.xpose.msra.mxu0 %v3127
    %3131 = vmatprep.subr.bf16.mxu0 0
    %3132 = vmatpush1.bf16.xpose.msra.mxu0 0
    %3133 = vmatprep.subr.bf16.mxu0 0
    %3134 = vmatpush1.bf16.xpose.msra.mxu0 0
    %3135 = vmatprep.subr.bf16.mxu0 0
    %3136 = vmatpush1.bf16.xpose.msra.mxu0 0
    %3137 = vmatprep.subr.bf16.mxu0 0
    %3138 = vmatpush1.bf16.xpose.msra.mxu0 0
    %3139 = vmatprep.subr.bf16.mxu0 0
    %3140 = vmatpush1.bf16.xpose.msra.mxu0 0
    %3141 = vmatprep.subr.bf16.mxu0 0
    %3142 = vmatpush1.bf16.xpose.msra.mxu0 0
    %3143 = vmatprep.subr.bf16.mxu0 0
    %3144 = vmatpush1.bf16.xpose.msra.mxu0 0
    %3145 = vmatprep.subr.bf16.mxu0 0
    %3146 = vmatpush1.bf16.xpose.msra.mxu0 0
    %3147 = vmatprep.subr.bf16.mxu0 0
    %3148 = vmatpush1.bf16.xpose.msra.mxu0 0
    %3149 = vmatprep.subr.bf16.mxu0 0
    %3150 = vmatpush1.bf16.xpose.msra.mxu0 0
    %3151 = vmatprep.subr.bf16.mxu0 0
    %3152 = vmatpush1.bf16.xpose.msra.mxu0 0
    %3153 = vmatprep.subr.bf16.mxu0 0
    %3154 = vmatpush1.bf16.xpose.msra.mxu0 0
    %3155 = vmatprep.subr.bf16.mxu0 0
    %3156 = vmatpush1.bf16.xpose.msra.mxu0 0
    %3157 = vmatprep.subr.bf16.mxu0 0
    %3158 = vmatpush1.bf16.xpose.msra.mxu0 0
    %3159 = vmatprep.subr.bf16.mxu0 0
    %3160 = vmatpush1.bf16.xpose.msra.mxu0 0
    %3161 = vmatprep.mubr.bf16.mxu0 0
    %3162 = vmatmul.mubr.bf16.gmra.mrb[0].mxu0 %v3124
    %v3163 = vpop.f32.mrb[0].mxu0
    %v3164 = vadd.f32 %v2691, %v3163
    %v3165 = vpop.f32.mrb[0].mxu0
    %v3166 = vpop.f32.mrb[0].mxu0
    %v3167 = vadd.f32 %v2692, %v3166
    %v3168 = vpop.f32.mrb[0].mxu0
    %3169 = vdwg.mxu0
    %3171 = vrot.lane.b32.xlu0 %v454, 112
    %v3172 = vpop.permute.xlu0 %3171
    %3174 = vrot.lane.b32.xlu0 %v647, 112
    %v3175 = vpop.permute.xlu0 %3174
    %v3177 = vsel %vm849, %v3172, 0
    %v3180 = vsel %vm849, %v3175, 0
    %3182 = vmatprep.subr.bf16.mxu0 0
    %3183 = vmatpush1.bf16.xpose.msra.mxu0 %v3180
    %3184 = vmatprep.subr.bf16.mxu0 0
    %3185 = vmatpush1.bf16.xpose.msra.mxu0 0
    %3186 = vmatprep.subr.bf16.mxu0 0
    %3187 = vmatpush1.bf16.xpose.msra.mxu0 0
    %3188 = vmatprep.subr.bf16.mxu0 0
    %3189 = vmatpush1.bf16.xpose.msra.mxu0 0
    %3190 = vmatprep.subr.bf16.mxu0 0
    %3191 = vmatpush1.bf16.xpose.msra.mxu0 0
    %3192 = vmatprep.subr.bf16.mxu0 0
    %3193 = vmatpush1.bf16.xpose.msra.mxu0 0
    %3194 = vmatprep.subr.bf16.mxu0 0
    %3195 = vmatpush1.bf16.xpose.msra.mxu0 0
    %3196 = vmatprep.subr.bf16.mxu0 0
    %3197 = vmatpush1.bf16.xpose.msra.mxu0 0
    %3198 = vmatprep.subr.bf16.mxu0 0
    %3199 = vmatpush1.bf16.xpose.msra.mxu0 0
    %3200 = vmatprep.subr.bf16.mxu0 0
    %3201 = vmatpush1.bf16.xpose.msra.mxu0 0
    %3202 = vmatprep.subr.bf16.mxu0 0
    %3203 = vmatpush1.bf16.xpose.msra.mxu0 0
    %3204 = vmatprep.subr.bf16.mxu0 0
    %3205 = vmatpush1.bf16.xpose.msra.mxu0 0
    %3206 = vmatprep.subr.bf16.mxu0 0
    %3207 = vmatpush1.bf16.xpose.msra.mxu0 0
    %3208 = vmatprep.subr.bf16.mxu0 0
    %3209 = vmatpush1.bf16.xpose.msra.mxu0 0
    %3210 = vmatprep.subr.bf16.mxu0 0
    %3211 = vmatpush1.bf16.xpose.msra.mxu0 0
    %3212 = vmatprep.subr.bf16.mxu0 0
    %3213 = vmatpush1.bf16.xpose.msra.mxu0 0
    %3214 = vmatprep.mubr.bf16.mxu0 0
    %3215 = vmatmul.mubr.bf16.gmra.mrb[0].mxu0 %v3177
    %v3216 = vpop.f32.mrb[0].mxu0
    %v3217 = vadd.f32 %v2691, %v3216
    %v3218 = vpop.f32.mrb[0].mxu0
    %v3219 = vpop.f32.mrb[0].mxu0
    %v3220 = vadd.f32 %v2692, %v3219
    %v3221 = vpop.f32.mrb[0].mxu0
    %3222 = vdwg.mxu0
    %3224 = vrot.lane.b32.xlu0 %v455, 112
    %v3225 = vpop.permute.xlu0 %3224
    %3227 = vrot.lane.b32.xlu0 %v648, 112
    %v3228 = vpop.permute.xlu0 %3227
    %v3230 = vsel %vm849, %v3225, 0
    %v3233 = vsel %vm849, %v3228, 0
    %3235 = vmatprep.subr.bf16.mxu0 0
    %3236 = vmatpush1.bf16.xpose.msra.mxu0 %v3233
    %3237 = vmatprep.subr.bf16.mxu0 0
    %3238 = vmatpush1.bf16.xpose.msra.mxu0 0
    %3239 = vmatprep.subr.bf16.mxu0 0
    %3240 = vmatpush1.bf16.xpose.msra.mxu0 0
    %3241 = vmatprep.subr.bf16.mxu0 0
    %3242 = vmatpush1.bf16.xpose.msra.mxu0 0
    %3243 = vmatprep.subr.bf16.mxu0 0
    %3244 = vmatpush1.bf16.xpose.msra.mxu0 0
    %3245 = vmatprep.subr.bf16.mxu0 0
    %3246 = vmatpush1.bf16.xpose.msra.mxu0 0
    %3247 = vmatprep.subr.bf16.mxu0 0
    %3248 = vmatpush1.bf16.xpose.msra.mxu0 0
    %3249 = vmatprep.subr.bf16.mxu0 0
    %3250 = vmatpush1.bf16.xpose.msra.mxu0 0
    %3251 = vmatprep.subr.bf16.mxu0 0
    %3252 = vmatpush1.bf16.xpose.msra.mxu0 0
    %3253 = vmatprep.subr.bf16.mxu0 0
    %3254 = vmatpush1.bf16.xpose.msra.mxu0 0
    %3255 = vmatprep.subr.bf16.mxu0 0
    %3256 = vmatpush1.bf16.xpose.msra.mxu0 0
    %3257 = vmatprep.subr.bf16.mxu0 0
    %3258 = vmatpush1.bf16.xpose.msra.mxu0 0
    %3259 = vmatprep.subr.bf16.mxu0 0
    %3260 = vmatpush1.bf16.xpose.msra.mxu0 0
    %3261 = vmatprep.subr.bf16.mxu0 0
    %3262 = vmatpush1.bf16.xpose.msra.mxu0 0
    %3263 = vmatprep.subr.bf16.mxu0 0
    %3264 = vmatpush1.bf16.xpose.msra.mxu0 0
    %3265 = vmatprep.subr.bf16.mxu0 0
    %3266 = vmatpush1.bf16.xpose.msra.mxu0 0
    %3267 = vmatprep.mubr.bf16.mxu0 0
    %3268 = vmatmul.mubr.bf16.gmra.mrb[0].mxu0 %v3230
    %v3269 = vpop.f32.mrb[0].mxu0
    %v3270 = vadd.f32 %v2691, %v3269
    %v3271 = vpop.f32.mrb[0].mxu0
    %v3272 = vpop.f32.mrb[0].mxu0
    %v3273 = vadd.f32 %v2692, %v3272
    %v3274 = vpop.f32.mrb[0].mxu0
    %3275 = vdwg.mxu0
    %3277 = vrot.lane.b32.xlu0 %v456, 112
    %v3278 = vpop.permute.xlu0 %3277
    %3280 = vrot.lane.b32.xlu0 %v649, 112
    %v3281 = vpop.permute.xlu0 %3280
    %v3283 = vsel %vm849, %v3278, 0
    %v3286 = vsel %vm849, %v3281, 0
    %3288 = vmatprep.subr.bf16.mxu0 0
    %3289 = vmatpush1.bf16.xpose.msra.mxu0 %v3286
    %3290 = vmatprep.subr.bf16.mxu0 0
    %3291 = vmatpush1.bf16.xpose.msra.mxu0 0
    %3292 = vmatprep.subr.bf16.mxu0 0
    %3293 = vmatpush1.bf16.xpose.msra.mxu0 0
    %3294 = vmatprep.subr.bf16.mxu0 0
    %3295 = vmatpush1.bf16.xpose.msra.mxu0 0
    %3296 = vmatprep.subr.bf16.mxu0 0
    %3297 = vmatpush1.bf16.xpose.msra.mxu0 0
    %3298 = vmatprep.subr.bf16.mxu0 0
    %3299 = vmatpush1.bf16.xpose.msra.mxu0 0
    %3300 = vmatprep.subr.bf16.mxu0 0
    %3301 = vmatpush1.bf16.xpose.msra.mxu0 0
    %3302 = vmatprep.subr.bf16.mxu0 0
    %3303 = vmatpush1.bf16.xpose.msra.mxu0 0
    %3304 = vmatprep.subr.bf16.mxu0 0
    %3305 = vmatpush1.bf16.xpose.msra.mxu0 0
    %3306 = vmatprep.subr.bf16.mxu0 0
    %3307 = vmatpush1.bf16.xpose.msra.mxu0 0
    %3308 = vmatprep.subr.bf16.mxu0 0
    %3309 = vmatpush1.bf16.xpose.msra.mxu0 0
    %3310 = vmatprep.subr.bf16.mxu0 0
    %3311 = vmatpush1.bf16.xpose.msra.mxu0 0
    %3312 = vmatprep.subr.bf16.mxu0 0
    %3313 = vmatpush1.bf16.xpose.msra.mxu0 0
    %3314 = vmatprep.subr.bf16.mxu0 0
    %3315 = vmatpush1.bf16.xpose.msra.mxu0 0
    %3316 = vmatprep.subr.bf16.mxu0 0
    %3317 = vmatpush1.bf16.xpose.msra.mxu0 0
    %3318 = vmatprep.subr.bf16.mxu0 0
    %3319 = vmatpush1.bf16.xpose.msra.mxu0 0
    %3320 = vmatprep.mubr.bf16.mxu0 0
    %3321 = vmatmul.mubr.bf16.gmra.mrb[0].mxu0 %v3283
    %v3322 = vpop.f32.mrb[0].mxu0
    %v3323 = vadd.f32 %v2691, %v3322
    %v3324 = vpop.f32.mrb[0].mxu0
    %v3325 = vpop.f32.mrb[0].mxu0
    %v3326 = vadd.f32 %v2692, %v3325
    %v3327 = vpop.f32.mrb[0].mxu0
    %3328 = vdwg.mxu0
    %3330 = vrot.lane.b32.xlu0 %v457, 112
    %v3331 = vpop.permute.xlu0 %3330
    %3333 = vrot.lane.b32.xlu0 %v650, 112
    %v3334 = vpop.permute.xlu0 %3333
    %v3336 = vsel %vm849, %v3331, 0
    %v3339 = vsel %vm849, %v3334, 0
    %3341 = vmatprep.subr.bf16.mxu0 0
    %3342 = vmatpush1.bf16.xpose.msra.mxu0 %v3339
    %3343 = vmatprep.subr.bf16.mxu0 0
    %3344 = vmatpush1.bf16.xpose.msra.mxu0 0
    %3345 = vmatprep.subr.bf16.mxu0 0
    %3346 = vmatpush1.bf16.xpose.msra.mxu0 0
    %3347 = vmatprep.subr.bf16.mxu0 0
    %3348 = vmatpush1.bf16.xpose.msra.mxu0 0
    %3349 = vmatprep.subr.bf16.mxu0 0
    %3350 = vmatpush1.bf16.xpose.msra.mxu0 0
    %3351 = vmatprep.subr.bf16.mxu0 0
    %3352 = vmatpush1.bf16.xpose.msra.mxu0 0
    %3353 = vmatprep.subr.bf16.mxu0 0
    %3354 = vmatpush1.bf16.xpose.msra.mxu0 0
    %3355 = vmatprep.subr.bf16.mxu0 0
    %3356 = vmatpush1.bf16.xpose.msra.mxu0 0
    %3357 = vmatprep.subr.bf16.mxu0 0
    %3358 = vmatpush1.bf16.xpose.msra.mxu0 0
    %3359 = vmatprep.subr.bf16.mxu0 0
    %3360 = vmatpush1.bf16.xpose.msra.mxu0 0
    %3361 = vmatprep.subr.bf16.mxu0 0
    %3362 = vmatpush1.bf16.xpose.msra.mxu0 0
    %3363 = vmatprep.subr.bf16.mxu0 0
    %3364 = vmatpush1.bf16.xpose.msra.mxu0 0
    %3365 = vmatprep.subr.bf16.mxu0 0
    %3366 = vmatpush1.bf16.xpose.msra.mxu0 0
    %3367 = vmatprep.subr.bf16.mxu0 0
    %3368 = vmatpush1.bf16.xpose.msra.mxu0 0
    %3369 = vmatprep.subr.bf16.mxu0 0
    %3370 = vmatpush1.bf16.xpose.msra.mxu0 0
    %3371 = vmatprep.subr.bf16.mxu0 0
    %3372 = vmatpush1.bf16.xpose.msra.mxu0 0
    %3373 = vmatprep.mubr.bf16.mxu0 0
    %3374 = vmatmul.mubr.bf16.gmra.mrb[0].mxu0 %v3336
    %v3375 = vpop.f32.mrb[0].mxu0
    %v3376 = vadd.f32 %v2691, %v3375
    %v3377 = vpop.f32.mrb[0].mxu0
    %v3378 = vpop.f32.mrb[0].mxu0
    %v3379 = vadd.f32 %v2692, %v3378
    %v3380 = vpop.f32.mrb[0].mxu0
    %3381 = vdwg.mxu0
    %3383 = vrot.lane.b32.xlu0 %v458, 112
    %v3384 = vpop.permute.xlu0 %3383
    %3386 = vrot.lane.b32.xlu0 %v651, 112
    %v3387 = vpop.permute.xlu0 %3386
    %v3389 = vsel %vm849, %v3384, 0
    %v3392 = vsel %vm849, %v3387, 0
    %3394 = vmatprep.subr.bf16.mxu0 0
    %3395 = vmatpush1.bf16.xpose.msra.mxu0 %v3392
    %3396 = vmatprep.subr.bf16.mxu0 0
    %3397 = vmatpush1.bf16.xpose.msra.mxu0 0
    %3398 = vmatprep.subr.bf16.mxu0 0
    %3399 = vmatpush1.bf16.xpose.msra.mxu0 0
    %3400 = vmatprep.subr.bf16.mxu0 0
    %3401 = vmatpush1.bf16.xpose.msra.mxu0 0
    %3402 = vmatprep.subr.bf16.mxu0 0
    %3403 = vmatpush1.bf16.xpose.msra.mxu0 0
    %3404 = vmatprep.subr.bf16.mxu0 0
    %3405 = vmatpush1.bf16.xpose.msra.mxu0 0
    %3406 = vmatprep.subr.bf16.mxu0 0
    %3407 = vmatpush1.bf16.xpose.msra.mxu0 0
    %3408 = vmatprep.subr.bf16.mxu0 0
    %3409 = vmatpush1.bf16.xpose.msra.mxu0 0
    %3410 = vmatprep.subr.bf16.mxu0 0
    %3411 = vmatpush1.bf16.xpose.msra.mxu0 0
    %3412 = vmatprep.subr.bf16.mxu0 0
    %3413 = vmatpush1.bf16.xpose.msra.mxu0 0
    %3414 = vmatprep.subr.bf16.mxu0 0
    %3415 = vmatpush1.bf16.xpose.msra.mxu0 0
    %3416 = vmatprep.subr.bf16.mxu0 0
    %3417 = vmatpush1.bf16.xpose.msra.mxu0 0
    %3418 = vmatprep.subr.bf16.mxu0 0
    %3419 = vmatpush1.bf16.xpose.msra.mxu0 0
    %3420 = vmatprep.subr.bf16.mxu0 0
    %3421 = vmatpush1.bf16.xpose.msra.mxu0 0
    %3422 = vmatprep.subr.bf16.mxu0 0
    %3423 = vmatpush1.bf16.xpose.msra.mxu0 0
    %3424 = vmatprep.subr.bf16.mxu0 0
    %3425 = vmatpush1.bf16.xpose.msra.mxu0 0
    %3426 = vmatprep.mubr.bf16.mxu0 0
    %3427 = vmatmul.mubr.bf16.gmra.mrb[0].mxu0 %v3389
    %v3428 = vpop.f32.mrb[0].mxu0
    %v3429 = vadd.f32 %v2691, %v3428
    %v3430 = vpop.f32.mrb[0].mxu0
    %v3431 = vpop.f32.mrb[0].mxu0
    %v3432 = vadd.f32 %v2692, %v3431
    %v3433 = vpop.f32.mrb[0].mxu0
    %3434 = vdwg.mxu0
    %3436 = vrot.lane.b32.xlu0 %v459, 112
    %v3437 = vpop.permute.xlu0 %3436
    %3439 = vrot.lane.b32.xlu0 %v652, 112
    %v3440 = vpop.permute.xlu0 %3439
    %v3442 = vsel %vm849, %v3437, 0
    %v3445 = vsel %vm849, %v3440, 0
    %3447 = vmatprep.subr.bf16.mxu0 0
    %3448 = vmatpush1.bf16.xpose.msra.mxu0 %v3445
    %3449 = vmatprep.subr.bf16.mxu0 0
    %3450 = vmatpush1.bf16.xpose.msra.mxu0 0
    %3451 = vmatprep.subr.bf16.mxu0 0
    %3452 = vmatpush1.bf16.xpose.msra.mxu0 0
    %3453 = vmatprep.subr.bf16.mxu0 0
    %3454 = vmatpush1.bf16.xpose.msra.mxu0 0
    %3455 = vmatprep.subr.bf16.mxu0 0
    %3456 = vmatpush1.bf16.xpose.msra.mxu0 0
    %3457 = vmatprep.subr.bf16.mxu0 0
    %3458 = vmatpush1.bf16.xpose.msra.mxu0 0
    %3459 = vmatprep.subr.bf16.mxu0 0
    %3460 = vmatpush1.bf16.xpose.msra.mxu0 0
    %3461 = vmatprep.subr.bf16.mxu0 0
    %3462 = vmatpush1.bf16.xpose.msra.mxu0 0
    %3463 = vmatprep.subr.bf16.mxu0 0
    %3464 = vmatpush1.bf16.xpose.msra.mxu0 0
    %3465 = vmatprep.subr.bf16.mxu0 0
    %3466 = vmatpush1.bf16.xpose.msra.mxu0 0
    %3467 = vmatprep.subr.bf16.mxu0 0
    %3468 = vmatpush1.bf16.xpose.msra.mxu0 0
    %3469 = vmatprep.subr.bf16.mxu0 0
    %3470 = vmatpush1.bf16.xpose.msra.mxu0 0
    %3471 = vmatprep.subr.bf16.mxu0 0
    %3472 = vmatpush1.bf16.xpose.msra.mxu0 0
    %3473 = vmatprep.subr.bf16.mxu0 0
    %3474 = vmatpush1.bf16.xpose.msra.mxu0 0
    %3475 = vmatprep.subr.bf16.mxu0 0
    %3476 = vmatpush1.bf16.xpose.msra.mxu0 0
    %3477 = vmatprep.subr.bf16.mxu0 0
    %3478 = vmatpush1.bf16.xpose.msra.mxu0 0
    %3479 = vmatprep.mubr.bf16.mxu0 0
    %3480 = vmatmul.mubr.bf16.gmra.mrb[0].mxu0 %v3442
    %v3481 = vpop.f32.mrb[0].mxu0
    %v3482 = vadd.f32 %v2691, %v3481
    %v3483 = vpop.f32.mrb[0].mxu0
    %v3484 = vpop.f32.mrb[0].mxu0
    %v3485 = vadd.f32 %v2692, %v3484
    %v3486 = vpop.f32.mrb[0].mxu0
    %3487 = vdwg.mxu0
    %3489 = vrot.lane.b32.xlu0 %v460, 112
    %v3490 = vpop.permute.xlu0 %3489
    %3492 = vrot.lane.b32.xlu0 %v653, 112
    %v3493 = vpop.permute.xlu0 %3492
    %v3495 = vsel %vm849, %v3490, 0
    %v3498 = vsel %vm849, %v3493, 0
    %3500 = vmatprep.subr.bf16.mxu0 0
    %3501 = vmatpush1.bf16.xpose.msra.mxu0 %v3498
    %3502 = vmatprep.subr.bf16.mxu0 0
    %3503 = vmatpush1.bf16.xpose.msra.mxu0 0
    %3504 = vmatprep.subr.bf16.mxu0 0
    %3505 = vmatpush1.bf16.xpose.msra.mxu0 0
    %3506 = vmatprep.subr.bf16.mxu0 0
    %3507 = vmatpush1.bf16.xpose.msra.mxu0 0
    %3508 = vmatprep.subr.bf16.mxu0 0
    %3509 = vmatpush1.bf16.xpose.msra.mxu0 0
    %3510 = vmatprep.subr.bf16.mxu0 0
    %3511 = vmatpush1.bf16.xpose.msra.mxu0 0
    %3512 = vmatprep.subr.bf16.mxu0 0
    %3513 = vmatpush1.bf16.xpose.msra.mxu0 0
    %3514 = vmatprep.subr.bf16.mxu0 0
    %3515 = vmatpush1.bf16.xpose.msra.mxu0 0
    %3516 = vmatprep.subr.bf16.mxu0 0
    %3517 = vmatpush1.bf16.xpose.msra.mxu0 0
    %3518 = vmatprep.subr.bf16.mxu0 0
    %3519 = vmatpush1.bf16.xpose.msra.mxu0 0
    %3520 = vmatprep.subr.bf16.mxu0 0
    %3521 = vmatpush1.bf16.xpose.msra.mxu0 0
    %3522 = vmatprep.subr.bf16.mxu0 0
    %3523 = vmatpush1.bf16.xpose.msra.mxu0 0
    %3524 = vmatprep.subr.bf16.mxu0 0
    %3525 = vmatpush1.bf16.xpose.msra.mxu0 0
    %3526 = vmatprep.subr.bf16.mxu0 0
    %3527 = vmatpush1.bf16.xpose.msra.mxu0 0
    %3528 = vmatprep.subr.bf16.mxu0 0
    %3529 = vmatpush1.bf16.xpose.msra.mxu0 0
    %3530 = vmatprep.subr.bf16.mxu0 0
    %3531 = vmatpush1.bf16.xpose.msra.mxu0 0
    %3532 = vmatprep.mubr.bf16.mxu0 0
    %3533 = vmatmul.mubr.bf16.gmra.mrb[0].mxu0 %v3495
    %v3534 = vpop.f32.mrb[0].mxu0
    %v3535 = vadd.f32 %v2691, %v3534
    %v3536 = vpop.f32.mrb[0].mxu0
    %v3537 = vpop.f32.mrb[0].mxu0
    %v3538 = vadd.f32 %v2692, %v3537
    %v3539 = vpop.f32.mrb[0].mxu0
    %3540 = vdwg.mxu0
    %v3541 = vsel %vm849, %v2740, -inf
    %3542 = vmax.xlane.f32.xlu0 %v3541
    %v3543 = vpop.xlane.xlu0 %3542
    %v3544 = vsel %vm849, %v2743, -inf
    %3545 = vmax.xlane.f32.xlu0 %v3544
    %v3546 = vpop.xlane.xlu0 %3545
    %v3547 = vsel %vm849, %v2793, -inf
    %3548 = vmax.xlane.f32.xlu0 %v3547
    %v3549 = vpop.xlane.xlu0 %3548
    %v3550 = vsel %vm849, %v2796, -inf
    %3551 = vmax.xlane.f32.xlu0 %v3550
    %v3552 = vpop.xlane.xlu0 %3551
    %v3553 = vsel %vm849, %v2846, -inf
    %3554 = vmax.xlane.f32.xlu0 %v3553
    %v3555 = vpop.xlane.xlu0 %3554
    %v3556 = vsel %vm849, %v2849, -inf
    %3557 = vmax.xlane.f32.xlu0 %v3556
    %v3558 = vpop.xlane.xlu0 %3557
    %v3559 = vsel %vm849, %v2899, -inf
    %3560 = vmax.xlane.f32.xlu0 %v3559
    %v3561 = vpop.xlane.xlu0 %3560
    %v3562 = vsel %vm849, %v2902, -inf
    %3563 = vmax.xlane.f32.xlu0 %v3562
    %v3564 = vpop.xlane.xlu0 %3563
    %v3565 = vsel %vm849, %v2952, -inf
    %3566 = vmax.xlane.f32.xlu0 %v3565
    %v3567 = vpop.xlane.xlu0 %3566
    %v3568 = vsel %vm849, %v2955, -inf
    %3569 = vmax.xlane.f32.xlu0 %v3568
    %v3570 = vpop.xlane.xlu0 %3569
    %v3571 = vsel %vm849, %v3005, -inf
    %3572 = vmax.xlane.f32.xlu0 %v3571
    %v3573 = vpop.xlane.xlu0 %3572
    %v3574 = vsel %vm849, %v3008, -inf
    %3575 = vmax.xlane.f32.xlu0 %v3574
    %v3576 = vpop.xlane.xlu0 %3575
    %v3577 = vsel %vm849, %v3058, -inf
    %3578 = vmax.xlane.f32.xlu0 %v3577
    %v3579 = vpop.xlane.xlu0 %3578
    %v3580 = vsel %vm849, %v3061, -inf
    %3581 = vmax.xlane.f32.xlu0 %v3580
    %v3582 = vpop.xlane.xlu0 %3581
    %v3583 = vsel %vm849, %v3111, -inf
    %3584 = vmax.xlane.f32.xlu0 %v3583
    %v3585 = vpop.xlane.xlu0 %3584
    %v3586 = vsel %vm849, %v3114, -inf
    %3587 = vmax.xlane.f32.xlu0 %v3586
    %v3588 = vpop.xlane.xlu0 %3587
    %v3589 = vsel %vm849, %v3164, -inf
    %3590 = vmax.xlane.f32.xlu0 %v3589
    %v3591 = vpop.xlane.xlu0 %3590
    %v3592 = vsel %vm849, %v3167, -inf
    %3593 = vmax.xlane.f32.xlu0 %v3592
    %v3594 = vpop.xlane.xlu0 %3593
    %v3595 = vsel %vm849, %v3217, -inf
    %3596 = vmax.xlane.f32.xlu0 %v3595
    %v3597 = vpop.xlane.xlu0 %3596
    %v3598 = vsel %vm849, %v3220, -inf
    %3599 = vmax.xlane.f32.xlu0 %v3598
    %v3600 = vpop.xlane.xlu0 %3599
    %v3601 = vsel %vm849, %v3270, -inf
    %3602 = vmax.xlane.f32.xlu0 %v3601
    %v3603 = vpop.xlane.xlu0 %3602
    %v3604 = vsel %vm849, %v3273, -inf
    %3605 = vmax.xlane.f32.xlu0 %v3604
    %v3606 = vpop.xlane.xlu0 %3605
    %v3607 = vsel %vm849, %v3323, -inf
    %3608 = vmax.xlane.f32.xlu0 %v3607
    %v3609 = vpop.xlane.xlu0 %3608
    %v3610 = vsel %vm849, %v3326, -inf
    %3611 = vmax.xlane.f32.xlu0 %v3610
    %v3612 = vpop.xlane.xlu0 %3611
    %v3613 = vsel %vm849, %v3376, -inf
    %3614 = vmax.xlane.f32.xlu0 %v3613
    %v3615 = vpop.xlane.xlu0 %3614
    %v3616 = vsel %vm849, %v3379, -inf
    %3617 = vmax.xlane.f32.xlu0 %v3616
    %v3618 = vpop.xlane.xlu0 %3617
    %v3619 = vsel %vm849, %v3429, -inf
    %3620 = vmax.xlane.f32.xlu0 %v3619
    %v3621 = vpop.xlane.xlu0 %3620
    %v3622 = vsel %vm849, %v3432, -inf
    %3623 = vmax.xlane.f32.xlu0 %v3622
    %v3624 = vpop.xlane.xlu0 %3623
    %v3625 = vsel %vm849, %v3482, -inf
    %3626 = vmax.xlane.f32.xlu0 %v3625
    %v3627 = vpop.xlane.xlu0 %3626
    %v3628 = vsel %vm849, %v3485, -inf
    %3629 = vmax.xlane.f32.xlu0 %v3628
    %v3630 = vpop.xlane.xlu0 %3629
    %v3631 = vsel %vm849, %v3535, -inf
    %3632 = vmax.xlane.f32.xlu0 %v3631
    %v3633 = vpop.xlane.xlu0 %3632
    %v3634 = vsel %vm849, %v3538, -inf
    %3635 = vmax.xlane.f32.xlu0 %v3634
    %v3636 = vpop.xlane.xlu0 %3635
    %v3637 = vsub.f32 %v2740, %v3543
    %v3638 = vsub.f32 %v2743, %v3546
    %v3639 = vsub.f32 %v2793, %v3549
    %v3640 = vsub.f32 %v2796, %v3552
    %v3641 = vsub.f32 %v2846, %v3555
    %v3642 = vsub.f32 %v2849, %v3558
    %v3643 = vsub.f32 %v2899, %v3561
    %v3644 = vsub.f32 %v2902, %v3564
    %v3645 = vsub.f32 %v2952, %v3567
    %v3646 = vsub.f32 %v2955, %v3570
    %v3647 = vsub.f32 %v3005, %v3573
    %v3648 = vsub.f32 %v3008, %v3576
    %v3649 = vsub.f32 %v3058, %v3579
    %v3650 = vsub.f32 %v3061, %v3582
    %v3651 = vsub.f32 %v3111, %v3585
    %v3652 = vsub.f32 %v3114, %v3588
    %v3653 = vsub.f32 %v3164, %v3591
    %v3654 = vsub.f32 %v3167, %v3594
    %v3655 = vsub.f32 %v3217, %v3597
    %v3656 = vsub.f32 %v3220, %v3600
    %v3657 = vsub.f32 %v3270, %v3603
    %v3658 = vsub.f32 %v3273, %v3606
    %v3659 = vsub.f32 %v3323, %v3609
    %v3660 = vsub.f32 %v3326, %v3612
    %v3661 = vsub.f32 %v3376, %v3615
    %v3662 = vsub.f32 %v3379, %v3618
    %v3663 = vsub.f32 %v3429, %v3621
    %v3664 = vsub.f32 %v3432, %v3624
    %v3665 = vsub.f32 %v3482, %v3627
    %v3666 = vsub.f32 %v3485, %v3630
    %v3667 = vsub.f32 %v3535, %v3633
    %v3668 = vsub.f32 %v3538, %v3636
    %v3669 = vmul.f32 %v3637, 1.442695
    %v3670 = vpow.pop %v3669
    %v3671 = vmul.f32 %v3638, 1.442695
    %v3672 = vpow.pop %v3671
    %v3673 = vmul.f32 %v3639, 1.442695
    %v3674 = vpow.pop %v3673
    %v3675 = vmul.f32 %v3640, 1.442695
    %v3676 = vpow.pop %v3675
    %v3677 = vmul.f32 %v3641, 1.442695
    %v3678 = vpow.pop %v3677
    %v3679 = vmul.f32 %v3642, 1.442695
    %v3680 = vpow.pop %v3679
    %v3681 = vmul.f32 %v3643, 1.442695
    %v3682 = vpow.pop %v3681
    %v3683 = vmul.f32 %v3644, 1.442695
    %v3684 = vpow.pop %v3683
    %v3685 = vmul.f32 %v3645, 1.442695
    %v3686 = vpow.pop %v3685
    %v3687 = vmul.f32 %v3646, 1.442695
    %v3688 = vpow.pop %v3687
    %v3689 = vmul.f32 %v3647, 1.442695
    %v3690 = vpow.pop %v3689
    %v3691 = vmul.f32 %v3648, 1.442695
    %v3692 = vpow.pop %v3691
    %v3693 = vmul.f32 %v3649, 1.442695
    %v3694 = vpow.pop %v3693
    %v3695 = vmul.f32 %v3650, 1.442695
    %v3696 = vpow.pop %v3695
    %v3697 = vmul.f32 %v3651, 1.442695
    %v3698 = vpow.pop %v3697
    %v3699 = vmul.f32 %v3652, 1.442695
    %v3700 = vpow.pop %v3699
    %v3701 = vmul.f32 %v3653, 1.442695
    %v3702 = vpow.pop %v3701
    %v3703 = vmul.f32 %v3654, 1.442695
    %v3704 = vpow.pop %v3703
    %v3705 = vmul.f32 %v3655, 1.442695
    %v3706 = vpow.pop %v3705
    %v3707 = vmul.f32 %v3656, 1.442695
    %v3708 = vpow.pop %v3707
    %v3709 = vmul.f32 %v3657, 1.442695
    %v3710 = vpow.pop %v3709
    %v3711 = vmul.f32 %v3658, 1.442695
    %v3712 = vpow.pop %v3711
    %v3713 = vmul.f32 %v3659, 1.442695
    %v3714 = vpow.pop %v3713
    %v3715 = vmul.f32 %v3660, 1.442695
    %v3716 = vpow.pop %v3715
    %v3717 = vmul.f32 %v3661, 1.442695
    %v3718 = vpow.pop %v3717
    %v3719 = vmul.f32 %v3662, 1.442695
    %v3720 = vpow.pop %v3719
    %v3721 = vmul.f32 %v3663, 1.442695
    %v3722 = vpow.pop %v3721
    %v3723 = vmul.f32 %v3664, 1.442695
    %v3724 = vpow.pop %v3723
    %v3725 = vmul.f32 %v3665, 1.442695
    %v3726 = vpow.pop %v3725
    %v3727 = vmul.f32 %v3666, 1.442695
    %v3728 = vpow.pop %v3727
    %v3729 = vmul.f32 %v3667, 1.442695
    %v3730 = vpow.pop %v3729
    %v3731 = vmul.f32 %v3668, 1.442695
    %v3732 = vpow.pop %v3731
    %v3733 = vsel %vm849, %v3670, 0.0
    %3734 = vadd.xlane.f32.xlu0 %v3733
    %v3735 = vpop.xlane.xlu0 %3734
    %v3736 = vsel %vm849, %v3672, 0.0
    %3737 = vadd.xlane.f32.xlu0 %v3736
    %v3738 = vpop.xlane.xlu0 %3737
    %v3739 = vsel %vm849, %v3674, 0.0
    %3740 = vadd.xlane.f32.xlu0 %v3739
    %v3741 = vpop.xlane.xlu0 %3740
    %v3742 = vsel %vm849, %v3676, 0.0
    %3743 = vadd.xlane.f32.xlu0 %v3742
    %v3744 = vpop.xlane.xlu0 %3743
    %v3745 = vsel %vm849, %v3678, 0.0
    %3746 = vadd.xlane.f32.xlu0 %v3745
    %v3747 = vpop.xlane.xlu0 %3746
    %v3748 = vsel %vm849, %v3680, 0.0
    %3749 = vadd.xlane.f32.xlu0 %v3748
    %v3750 = vpop.xlane.xlu0 %3749
    %v3751 = vsel %vm849, %v3682, 0.0
    %3752 = vadd.xlane.f32.xlu0 %v3751
    %v3753 = vpop.xlane.xlu0 %3752
    %v3754 = vsel %vm849, %v3684, 0.0
    %3755 = vadd.xlane.f32.xlu0 %v3754
    %v3756 = vpop.xlane.xlu0 %3755
    %v3757 = vsel %vm849, %v3686, 0.0
    %3758 = vadd.xlane.f32.xlu0 %v3757
    %v3759 = vpop.xlane.xlu0 %3758
    %v3760 = vsel %vm849, %v3688, 0.0
    %3761 = vadd.xlane.f32.xlu0 %v3760
    %v3762 = vpop.xlane.xlu0 %3761
    %v3763 = vsel %vm849, %v3690, 0.0
    %3764 = vadd.xlane.f32.xlu0 %v3763
    %v3765 = vpop.xlane.xlu0 %3764
    %v3766 = vsel %vm849, %v3692, 0.0
    %3767 = vadd.xlane.f32.xlu0 %v3766
    %v3768 = vpop.xlane.xlu0 %3767
    %v3769 = vsel %vm849, %v3694, 0.0
    %3770 = vadd.xlane.f32.xlu0 %v3769
    %v3771 = vpop.xlane.xlu0 %3770
    %v3772 = vsel %vm849, %v3696, 0.0
    %3773 = vadd.xlane.f32.xlu0 %v3772
    %v3774 = vpop.xlane.xlu0 %3773
    %v3775 = vsel %vm849, %v3698, 0.0
    %3776 = vadd.xlane.f32.xlu0 %v3775
    %v3777 = vpop.xlane.xlu0 %3776
    %v3778 = vsel %vm849, %v3700, 0.0
    %3779 = vadd.xlane.f32.xlu0 %v3778
    %v3780 = vpop.xlane.xlu0 %3779
    %v3781 = vsel %vm849, %v3702, 0.0
    %3782 = vadd.xlane.f32.xlu0 %v3781
    %v3783 = vpop.xlane.xlu0 %3782
    %v3784 = vsel %vm849, %v3704, 0.0
    %3785 = vadd.xlane.f32.xlu0 %v3784
    %v3786 = vpop.xlane.xlu0 %3785
    %v3787 = vsel %vm849, %v3706, 0.0
    %3788 = vadd.xlane.f32.xlu0 %v3787
    %v3789 = vpop.xlane.xlu0 %3788
    %v3790 = vsel %vm849, %v3708, 0.0
    %3791 = vadd.xlane.f32.xlu0 %v3790
    %v3792 = vpop.xlane.xlu0 %3791
    %v3793 = vsel %vm849, %v3710, 0.0
    %3794 = vadd.xlane.f32.xlu0 %v3793
    %v3795 = vpop.xlane.xlu0 %3794
    %v3796 = vsel %vm849, %v3712, 0.0
    %3797 = vadd.xlane.f32.xlu0 %v3796
    %v3798 = vpop.xlane.xlu0 %3797
    %v3799 = vsel %vm849, %v3714, 0.0
    %3800 = vadd.xlane.f32.xlu0 %v3799
    %v3801 = vpop.xlane.xlu0 %3800
    %v3802 = vsel %vm849, %v3716, 0.0
    %3803 = vadd.xlane.f32.xlu0 %v3802
    %v3804 = vpop.xlane.xlu0 %3803
    %v3805 = vsel %vm849, %v3718, 0.0
    %3806 = vadd.xlane.f32.xlu0 %v3805
    %v3807 = vpop.xlane.xlu0 %3806
    %v3808 = vsel %vm849, %v3720, 0.0
    %3809 = vadd.xlane.f32.xlu0 %v3808
    %v3810 = vpop.xlane.xlu0 %3809
    %v3811 = vsel %vm849, %v3722, 0.0
    %3812 = vadd.xlane.f32.xlu0 %v3811
    %v3813 = vpop.xlane.xlu0 %3812
    %v3814 = vsel %vm849, %v3724, 0.0
    %3815 = vadd.xlane.f32.xlu0 %v3814
    %v3816 = vpop.xlane.xlu0 %3815
    %v3817 = vsel %vm849, %v3726, 0.0
    %3818 = vadd.xlane.f32.xlu0 %v3817
    %v3819 = vpop.xlane.xlu0 %3818
    %v3820 = vsel %vm849, %v3728, 0.0
    %3821 = vadd.xlane.f32.xlu0 %v3820
    %v3822 = vpop.xlane.xlu0 %3821
    %v3823 = vsel %vm849, %v3730, 0.0
    %3824 = vadd.xlane.f32.xlu0 %v3823
    %v3825 = vpop.xlane.xlu0 %3824
    %v3826 = vsel %vm849, %v3732, 0.0
    %3827 = vadd.xlane.f32.xlu0 %v3826
    %v3828 = vpop.xlane.xlu0 %3827
    %v3829 = vrcp.pop %v3735
    %v3830 = vrcp.pop %v3738
    %v3831 = vrcp.pop %v3741
    %v3832 = vrcp.pop %v3744
    %v3833 = vrcp.pop %v3747
    %v3834 = vrcp.pop %v3750
    %v3835 = vrcp.pop %v3753
    %v3836 = vrcp.pop %v3756
    %v3837 = vrcp.pop %v3759
    %v3838 = vrcp.pop %v3762
    %v3839 = vrcp.pop %v3765
    %v3840 = vrcp.pop %v3768
    %v3841 = vrcp.pop %v3771
    %v3842 = vrcp.pop %v3774
    %v3843 = vrcp.pop %v3777
    %v3844 = vrcp.pop %v3780
    %v3845 = vrcp.pop %v3783
    %v3846 = vrcp.pop %v3786
    %v3847 = vrcp.pop %v3789
    %v3848 = vrcp.pop %v3792
    %v3849 = vrcp.pop %v3795
    %v3850 = vrcp.pop %v3798
    %v3851 = vrcp.pop %v3801
    %v3852 = vrcp.pop %v3804
    %v3853 = vrcp.pop %v3807
    %v3854 = vrcp.pop %v3810
    %v3855 = vrcp.pop %v3813
    %v3856 = vrcp.pop %v3816
    %v3857 = vrcp.pop %v3819
    %v3858 = vrcp.pop %v3822
    %v3859 = vrcp.pop %v3825
    %v3860 = vrcp.pop %v3828
    %v3861 = vmul.f32 %v3670, %v3829
    %v3862 = vmul.f32 %v3672, %v3830
    %v3863 = vmul.f32 %v3674, %v3831
    %v3864 = vmul.f32 %v3676, %v3832
    %v3865 = vmul.f32 %v3678, %v3833
    %v3866 = vmul.f32 %v3680, %v3834
    %v3867 = vmul.f32 %v3682, %v3835
    %v3868 = vmul.f32 %v3684, %v3836
    %v3869 = vmul.f32 %v3686, %v3837
    %v3870 = vmul.f32 %v3688, %v3838
    %v3871 = vmul.f32 %v3690, %v3839
    %v3872 = vmul.f32 %v3692, %v3840
    %v3873 = vmul.f32 %v3694, %v3841
    %v3874 = vmul.f32 %v3696, %v3842
    %v3875 = vmul.f32 %v3698, %v3843
    %v3876 = vmul.f32 %v3700, %v3844
    %v3877 = vmul.f32 %v3702, %v3845
    %v3878 = vmul.f32 %v3704, %v3846
    %v3879 = vmul.f32 %v3706, %v3847
    %v3880 = vmul.f32 %v3708, %v3848
    %v3881 = vmul.f32 %v3710, %v3849
    %v3882 = vmul.f32 %v3712, %v3850
    %v3883 = vmul.f32 %v3714, %v3851
    %v3884 = vmul.f32 %v3716, %v3852
    %v3885 = vmul.f32 %v3718, %v3853
    %v3886 = vmul.f32 %v3720, %v3854
    %v3887 = vmul.f32 %v3722, %v3855
    %v3888 = vmul.f32 %v3724, %v3856
    %v3889 = vmul.f32 %v3726, %v3857
    %v3890 = vmul.f32 %v3728, %v3858
    %v3891 = vmul.f32 %v3730, %v3859
    %v3892 = vmul.f32 %v3732, %v3860
    %v3893 = vpack.c.bf16 %v3862, %v3861
    %v3894 = vpack.c.bf16 %v3864, %v3863
    %v3895 = vpack.c.bf16 %v3866, %v3865
    %v3896 = vpack.c.bf16 %v3868, %v3867
    %v3897 = vpack.c.bf16 %v3870, %v3869
    %v3898 = vpack.c.bf16 %v3872, %v3871
    %v3899 = vpack.c.bf16 %v3874, %v3873
    %v3900 = vpack.c.bf16 %v3876, %v3875
    %v3901 = vpack.c.bf16 %v3878, %v3877
    %v3902 = vpack.c.bf16 %v3880, %v3879
    %v3903 = vpack.c.bf16 %v3882, %v3881
    %v3904 = vpack.c.bf16 %v3884, %v3883
    %v3905 = vpack.c.bf16 %v3886, %v3885
    %v3906 = vpack.c.bf16 %v3888, %v3887
    %v3907 = vpack.c.bf16 %v3890, %v3889
    %v3908 = vpack.c.bf16 %v3892, %v3891
    %3910 = vrot.lane.b32.xlu0 %v831, 112
    %v3911 = vpop.permute.xlu0 %3910
    %v3914 = vsel %vm849, %v3893, 0
    %3916 = vmatprep.subr.bf16.mxu0 0
    %3917 = vmatpush1.bf16.msra.mxu0 %v3911
    %3918 = vmatprep.subr.bf16.mxu0 0
    %3919 = vmatpush1.bf16.msra.mxu0 0
    %3920 = vmatprep.subr.bf16.mxu0 0
    %3921 = vmatpush1.bf16.msra.mxu0 0
    %3922 = vmatprep.subr.bf16.mxu0 0
    %3923 = vmatpush1.bf16.msra.mxu0 0
    %3924 = vmatprep.subr.bf16.mxu0 0
    %3925 = vmatpush1.bf16.msra.mxu0 0
    %3926 = vmatprep.subr.bf16.mxu0 0
    %3927 = vmatpush1.bf16.msra.mxu0 0
    %3928 = vmatprep.subr.bf16.mxu0 0
    %3929 = vmatpush1.bf16.msra.mxu0 0
    %3930 = vmatprep.subr.bf16.mxu0 0
    %3931 = vmatpush1.bf16.msra.mxu0 0
    %3932 = vmatprep.subr.bf16.mxu0 0
    %3933 = vmatpush1.bf16.msra.mxu0 0
    %3934 = vmatprep.subr.bf16.mxu0 0
    %3935 = vmatpush1.bf16.msra.mxu0 0
    %3936 = vmatprep.subr.bf16.mxu0 0
    %3937 = vmatpush1.bf16.msra.mxu0 0
    %3938 = vmatprep.subr.bf16.mxu0 0
    %3939 = vmatpush1.bf16.msra.mxu0 0
    %3940 = vmatprep.subr.bf16.mxu0 0
    %3941 = vmatpush1.bf16.msra.mxu0 0
    %3942 = vmatprep.subr.bf16.mxu0 0
    %3943 = vmatpush1.bf16.msra.mxu0 0
    %3944 = vmatprep.subr.bf16.mxu0 0
    %3945 = vmatpush1.bf16.msra.mxu0 0
    %3946 = vmatprep.subr.bf16.mxu0 0
    %3947 = vmatpush1.bf16.msra.mxu0 0
    %3948 = vmatprep.mubr.bf16.mxu0 0
    %3949 = vmatmul.mubr.bf16.gmra.mrb[0].mxu0 %v3914
    %v3950 = vpop.f32.mrb[0].mxu0
    %v3951 = vadd.f32 0.0, %v3950
    %v3952 = vpop.f32.mrb[0].mxu0
    %v3953 = vpop.f32.mrb[0].mxu0
    %v3954 = vadd.f32 0.0, %v3953
    %v3955 = vpop.f32.mrb[0].mxu0
    %3956 = vdwg.mxu0
    %3958 = vrot.lane.b32.xlu0 %v832, 112
    %v3959 = vpop.permute.xlu0 %3958
    %v3962 = vsel %vm849, %v3894, 0
    %3964 = vmatprep.subr.bf16.mxu0 0
    %3965 = vmatpush1.bf16.msra.mxu0 %v3959
    %3966 = vmatprep.subr.bf16.mxu0 0
    %3967 = vmatpush1.bf16.msra.mxu0 0
    %3968 = vmatprep.subr.bf16.mxu0 0
    %3969 = vmatpush1.bf16.msra.mxu0 0
    %3970 = vmatprep.subr.bf16.mxu0 0
    %3971 = vmatpush1.bf16.msra.mxu0 0
    %3972 = vmatprep.subr.bf16.mxu0 0
    %3973 = vmatpush1.bf16.msra.mxu0 0
    %3974 = vmatprep.subr.bf16.mxu0 0
    %3975 = vmatpush1.bf16.msra.mxu0 0
    %3976 = vmatprep.subr.bf16.mxu0 0
    %3977 = vmatpush1.bf16.msra.mxu0 0
    %3978 = vmatprep.subr.bf16.mxu0 0
    %3979 = vmatpush1.bf16.msra.mxu0 0
    %3980 = vmatprep.subr.bf16.mxu0 0
    %3981 = vmatpush1.bf16.msra.mxu0 0
    %3982 = vmatprep.subr.bf16.mxu0 0
    %3983 = vmatpush1.bf16.msra.mxu0 0
    %3984 = vmatprep.subr.bf16.mxu0 0
    %3985 = vmatpush1.bf16.msra.mxu0 0
    %3986 = vmatprep.subr.bf16.mxu0 0
    %3987 = vmatpush1.bf16.msra.mxu0 0
    %3988 = vmatprep.subr.bf16.mxu0 0
    %3989 = vmatpush1.bf16.msra.mxu0 0
    %3990 = vmatprep.subr.bf16.mxu0 0
    %3991 = vmatpush1.bf16.msra.mxu0 0
    %3992 = vmatprep.subr.bf16.mxu0 0
    %3993 = vmatpush1.bf16.msra.mxu0 0
    %3994 = vmatprep.subr.bf16.mxu0 0
    %3995 = vmatpush1.bf16.msra.mxu0 0
    %3996 = vmatprep.mubr.bf16.mxu0 0
    %3997 = vmatmul.mubr.bf16.gmra.mrb[0].mxu0 %v3962
    %v3998 = vpop.f32.mrb[0].mxu0
    %v3999 = vadd.f32 0.0, %v3998
    %v4000 = vpop.f32.mrb[0].mxu0
    %v4001 = vpop.f32.mrb[0].mxu0
    %v4002 = vadd.f32 0.0, %v4001
    %v4003 = vpop.f32.mrb[0].mxu0
    %4004 = vdwg.mxu0
    %4006 = vrot.lane.b32.xlu0 %v833, 112
    %v4007 = vpop.permute.xlu0 %4006
    %v4010 = vsel %vm849, %v3895, 0
    %4012 = vmatprep.subr.bf16.mxu0 0
    %4013 = vmatpush1.bf16.msra.mxu0 %v4007
    %4014 = vmatprep.subr.bf16.mxu0 0
    %4015 = vmatpush1.bf16.msra.mxu0 0
    %4016 = vmatprep.subr.bf16.mxu0 0
    %4017 = vmatpush1.bf16.msra.mxu0 0
    %4018 = vmatprep.subr.bf16.mxu0 0
    %4019 = vmatpush1.bf16.msra.mxu0 0
    %4020 = vmatprep.subr.bf16.mxu0 0
    %4021 = vmatpush1.bf16.msra.mxu0 0
    %4022 = vmatprep.subr.bf16.mxu0 0
    %4023 = vmatpush1.bf16.msra.mxu0 0
    %4024 = vmatprep.subr.bf16.mxu0 0
    %4025 = vmatpush1.bf16.msra.mxu0 0
    %4026 = vmatprep.subr.bf16.mxu0 0
    %4027 = vmatpush1.bf16.msra.mxu0 0
    %4028 = vmatprep.subr.bf16.mxu0 0
    %4029 = vmatpush1.bf16.msra.mxu0 0
    %4030 = vmatprep.subr.bf16.mxu0 0
    %4031 = vmatpush1.bf16.msra.mxu0 0
    %4032 = vmatprep.subr.bf16.mxu0 0
    %4033 = vmatpush1.bf16.msra.mxu0 0
    %4034 = vmatprep.subr.bf16.mxu0 0
    %4035 = vmatpush1.bf16.msra.mxu0 0
    %4036 = vmatprep.subr.bf16.mxu0 0
    %4037 = vmatpush1.bf16.msra.mxu0 0
    %4038 = vmatprep.subr.bf16.mxu0 0
    %4039 = vmatpush1.bf16.msra.mxu0 0
    %4040 = vmatprep.subr.bf16.mxu0 0
    %4041 = vmatpush1.bf16.msra.mxu0 0
    %4042 = vmatprep.subr.bf16.mxu0 0
    %4043 = vmatpush1.bf16.msra.mxu0 0
    %4044 = vmatprep.mubr.bf16.mxu0 0
    %4045 = vmatmul.mubr.bf16.gmra.mrb[0].mxu0 %v4010
    %v4046 = vpop.f32.mrb[0].mxu0
    %v4047 = vadd.f32 0.0, %v4046
    %v4048 = vpop.f32.mrb[0].mxu0
    %v4049 = vpop.f32.mrb[0].mxu0
    %v4050 = vadd.f32 0.0, %v4049
    %v4051 = vpop.f32.mrb[0].mxu0
    %4052 = vdwg.mxu0
    %4054 = vrot.lane.b32.xlu0 %v834, 112
    %v4055 = vpop.permute.xlu0 %4054
    %v4058 = vsel %vm849, %v3896, 0
    %4060 = vmatprep.subr.bf16.mxu0 0
    %4061 = vmatpush1.bf16.msra.mxu0 %v4055
    %4062 = vmatprep.subr.bf16.mxu0 0
    %4063 = vmatpush1.bf16.msra.mxu0 0
    %4064 = vmatprep.subr.bf16.mxu0 0
    %4065 = vmatpush1.bf16.msra.mxu0 0
    %4066 = vmatprep.subr.bf16.mxu0 0
    %4067 = vmatpush1.bf16.msra.mxu0 0
    %4068 = vmatprep.subr.bf16.mxu0 0
    %4069 = vmatpush1.bf16.msra.mxu0 0
    %4070 = vmatprep.subr.bf16.mxu0 0
    %4071 = vmatpush1.bf16.msra.mxu0 0
    %4072 = vmatprep.subr.bf16.mxu0 0
    %4073 = vmatpush1.bf16.msra.mxu0 0
    %4074 = vmatprep.subr.bf16.mxu0 0
    %4075 = vmatpush1.bf16.msra.mxu0 0
    %4076 = vmatprep.subr.bf16.mxu0 0
    %4077 = vmatpush1.bf16.msra.mxu0 0
    %4078 = vmatprep.subr.bf16.mxu0 0
    %4079 = vmatpush1.bf16.msra.mxu0 0
    %4080 = vmatprep.subr.bf16.mxu0 0
    %4081 = vmatpush1.bf16.msra.mxu0 0
    %4082 = vmatprep.subr.bf16.mxu0 0
    %4083 = vmatpush1.bf16.msra.mxu0 0
    %4084 = vmatprep.subr.bf16.mxu0 0
    %4085 = vmatpush1.bf16.msra.mxu0 0
    %4086 = vmatprep.subr.bf16.mxu0 0
    %4087 = vmatpush1.bf16.msra.mxu0 0
    %4088 = vmatprep.subr.bf16.mxu0 0
    %4089 = vmatpush1.bf16.msra.mxu0 0
    %4090 = vmatprep.subr.bf16.mxu0 0
    %4091 = vmatpush1.bf16.msra.mxu0 0
    %4092 = vmatprep.mubr.bf16.mxu0 0
    %4093 = vmatmul.mubr.bf16.gmra.mrb[0].mxu0 %v4058
    %v4094 = vpop.f32.mrb[0].mxu0
    %v4095 = vadd.f32 0.0, %v4094
    %v4096 = vpop.f32.mrb[0].mxu0
    %v4097 = vpop.f32.mrb[0].mxu0
    %v4098 = vadd.f32 0.0, %v4097
    %v4099 = vpop.f32.mrb[0].mxu0
    %4100 = vdwg.mxu0
    %4102 = vrot.lane.b32.xlu0 %v835, 112
    %v4103 = vpop.permute.xlu0 %4102
    %v4106 = vsel %vm849, %v3897, 0
    %4108 = vmatprep.subr.bf16.mxu0 0
    %4109 = vmatpush1.bf16.msra.mxu0 %v4103
    %4110 = vmatprep.subr.bf16.mxu0 0
    %4111 = vmatpush1.bf16.msra.mxu0 0
    %4112 = vmatprep.subr.bf16.mxu0 0
    %4113 = vmatpush1.bf16.msra.mxu0 0
    %4114 = vmatprep.subr.bf16.mxu0 0
    %4115 = vmatpush1.bf16.msra.mxu0 0
    %4116 = vmatprep.subr.bf16.mxu0 0
    %4117 = vmatpush1.bf16.msra.mxu0 0
    %4118 = vmatprep.subr.bf16.mxu0 0
    %4119 = vmatpush1.bf16.msra.mxu0 0
    %4120 = vmatprep.subr.bf16.mxu0 0
    %4121 = vmatpush1.bf16.msra.mxu0 0
    %4122 = vmatprep.subr.bf16.mxu0 0
    %4123 = vmatpush1.bf16.msra.mxu0 0
    %4124 = vmatprep.subr.bf16.mxu0 0
    %4125 = vmatpush1.bf16.msra.mxu0 0
    %4126 = vmatprep.subr.bf16.mxu0 0
    %4127 = vmatpush1.bf16.msra.mxu0 0
    %4128 = vmatprep.subr.bf16.mxu0 0
    %4129 = vmatpush1.bf16.msra.mxu0 0
    %4130 = vmatprep.subr.bf16.mxu0 0
    %4131 = vmatpush1.bf16.msra.mxu0 0
    %4132 = vmatprep.subr.bf16.mxu0 0
    %4133 = vmatpush1.bf16.msra.mxu0 0
    %4134 = vmatprep.subr.bf16.mxu0 0
    %4135 = vmatpush1.bf16.msra.mxu0 0
    %4136 = vmatprep.subr.bf16.mxu0 0
    %4137 = vmatpush1.bf16.msra.mxu0 0
    %4138 = vmatprep.subr.bf16.mxu0 0
    %4139 = vmatpush1.bf16.msra.mxu0 0
    %4140 = vmatprep.mubr.bf16.mxu0 0
    %4141 = vmatmul.mubr.bf16.gmra.mrb[0].mxu0 %v4106
    %v4142 = vpop.f32.mrb[0].mxu0
    %v4143 = vadd.f32 0.0, %v4142
    %v4144 = vpop.f32.mrb[0].mxu0
    %v4145 = vpop.f32.mrb[0].mxu0
    %v4146 = vadd.f32 0.0, %v4145
    %v4147 = vpop.f32.mrb[0].mxu0
    %4148 = vdwg.mxu0
    %4150 = vrot.lane.b32.xlu0 %v836, 112
    %v4151 = vpop.permute.xlu0 %4150
    %v4154 = vsel %vm849, %v3898, 0
    %4156 = vmatprep.subr.bf16.mxu0 0
    %4157 = vmatpush1.bf16.msra.mxu0 %v4151
    %4158 = vmatprep.subr.bf16.mxu0 0
    %4159 = vmatpush1.bf16.msra.mxu0 0
    %4160 = vmatprep.subr.bf16.mxu0 0
    %4161 = vmatpush1.bf16.msra.mxu0 0
    %4162 = vmatprep.subr.bf16.mxu0 0
    %4163 = vmatpush1.bf16.msra.mxu0 0
    %4164 = vmatprep.subr.bf16.mxu0 0
    %4165 = vmatpush1.bf16.msra.mxu0 0
    %4166 = vmatprep.subr.bf16.mxu0 0
    %4167 = vmatpush1.bf16.msra.mxu0 0
    %4168 = vmatprep.subr.bf16.mxu0 0
    %4169 = vmatpush1.bf16.msra.mxu0 0
    %4170 = vmatprep.subr.bf16.mxu0 0
    %4171 = vmatpush1.bf16.msra.mxu0 0
    %4172 = vmatprep.subr.bf16.mxu0 0
    %4173 = vmatpush1.bf16.msra.mxu0 0
    %4174 = vmatprep.subr.bf16.mxu0 0
    %4175 = vmatpush1.bf16.msra.mxu0 0
    %4176 = vmatprep.subr.bf16.mxu0 0
    %4177 = vmatpush1.bf16.msra.mxu0 0
    %4178 = vmatprep.subr.bf16.mxu0 0
    %4179 = vmatpush1.bf16.msra.mxu0 0
    %4180 = vmatprep.subr.bf16.mxu0 0
    %4181 = vmatpush1.bf16.msra.mxu0 0
    %4182 = vmatprep.subr.bf16.mxu0 0
    %4183 = vmatpush1.bf16.msra.mxu0 0
    %4184 = vmatprep.subr.bf16.mxu0 0
    %4185 = vmatpush1.bf16.msra.mxu0 0
    %4186 = vmatprep.subr.bf16.mxu0 0
    %4187 = vmatpush1.bf16.msra.mxu0 0
    %4188 = vmatprep.mubr.bf16.mxu0 0
    %4189 = vmatmul.mubr.bf16.gmra.mrb[0].mxu0 %v4154
    %v4190 = vpop.f32.mrb[0].mxu0
    %v4191 = vadd.f32 0.0, %v4190
    %v4192 = vpop.f32.mrb[0].mxu0
    %v4193 = vpop.f32.mrb[0].mxu0
    %v4194 = vadd.f32 0.0, %v4193
    %v4195 = vpop.f32.mrb[0].mxu0
    %4196 = vdwg.mxu0
    %4198 = vrot.lane.b32.xlu0 %v837, 112
    %v4199 = vpop.permute.xlu0 %4198
    %v4202 = vsel %vm849, %v3899, 0
    %4204 = vmatprep.subr.bf16.mxu0 0
    %4205 = vmatpush1.bf16.msra.mxu0 %v4199
    %4206 = vmatprep.subr.bf16.mxu0 0
    %4207 = vmatpush1.bf16.msra.mxu0 0
    %4208 = vmatprep.subr.bf16.mxu0 0
    %4209 = vmatpush1.bf16.msra.mxu0 0
    %4210 = vmatprep.subr.bf16.mxu0 0
    %4211 = vmatpush1.bf16.msra.mxu0 0
    %4212 = vmatprep.subr.bf16.mxu0 0
    %4213 = vmatpush1.bf16.msra.mxu0 0
    %4214 = vmatprep.subr.bf16.mxu0 0
    %4215 = vmatpush1.bf16.msra.mxu0 0
    %4216 = vmatprep.subr.bf16.mxu0 0
    %4217 = vmatpush1.bf16.msra.mxu0 0
    %4218 = vmatprep.subr.bf16.mxu0 0
    %4219 = vmatpush1.bf16.msra.mxu0 0
    %4220 = vmatprep.subr.bf16.mxu0 0
    %4221 = vmatpush1.bf16.msra.mxu0 0
    %4222 = vmatprep.subr.bf16.mxu0 0
    %4223 = vmatpush1.bf16.msra.mxu0 0
    %4224 = vmatprep.subr.bf16.mxu0 0
    %4225 = vmatpush1.bf16.msra.mxu0 0
    %4226 = vmatprep.subr.bf16.mxu0 0
    %4227 = vmatpush1.bf16.msra.mxu0 0
    %4228 = vmatprep.subr.bf16.mxu0 0
    %4229 = vmatpush1.bf16.msra.mxu0 0
    %4230 = vmatprep.subr.bf16.mxu0 0
    %4231 = vmatpush1.bf16.msra.mxu0 0
    %4232 = vmatprep.subr.bf16.mxu0 0
    %4233 = vmatpush1.bf16.msra.mxu0 0
    %4234 = vmatprep.subr.bf16.mxu0 0
    %4235 = vmatpush1.bf16.msra.mxu0 0
    %4236 = vmatprep.mubr.bf16.mxu0 0
    %4237 = vmatmul.mubr.bf16.gmra.mrb[0].mxu0 %v4202
    %v4238 = vpop.f32.mrb[0].mxu0
    %v4239 = vadd.f32 0.0, %v4238
    %v4240 = vpop.f32.mrb[0].mxu0
    %v4241 = vpop.f32.mrb[0].mxu0
    %v4242 = vadd.f32 0.0, %v4241
    %v4243 = vpop.f32.mrb[0].mxu0
    %4244 = vdwg.mxu0
    %4246 = vrot.lane.b32.xlu0 %v838, 112
    %v4247 = vpop.permute.xlu0 %4246
    %v4250 = vsel %vm849, %v3900, 0
    %4252 = vmatprep.subr.bf16.mxu0 0
    %4253 = vmatpush1.bf16.msra.mxu0 %v4247
    %4254 = vmatprep.subr.bf16.mxu0 0
    %4255 = vmatpush1.bf16.msra.mxu0 0
    %4256 = vmatprep.subr.bf16.mxu0 0
    %4257 = vmatpush1.bf16.msra.mxu0 0
    %4258 = vmatprep.subr.bf16.mxu0 0
    %4259 = vmatpush1.bf16.msra.mxu0 0
    %4260 = vmatprep.subr.bf16.mxu0 0
    %4261 = vmatpush1.bf16.msra.mxu0 0
    %4262 = vmatprep.subr.bf16.mxu0 0
    %4263 = vmatpush1.bf16.msra.mxu0 0
    %4264 = vmatprep.subr.bf16.mxu0 0
    %4265 = vmatpush1.bf16.msra.mxu0 0
    %4266 = vmatprep.subr.bf16.mxu0 0
    %4267 = vmatpush1.bf16.msra.mxu0 0
    %4268 = vmatprep.subr.bf16.mxu0 0
    %4269 = vmatpush1.bf16.msra.mxu0 0
    %4270 = vmatprep.subr.bf16.mxu0 0
    %4271 = vmatpush1.bf16.msra.mxu0 0
    %4272 = vmatprep.subr.bf16.mxu0 0
    %4273 = vmatpush1.bf16.msra.mxu0 0
    %4274 = vmatprep.subr.bf16.mxu0 0
    %4275 = vmatpush1.bf16.msra.mxu0 0
    %4276 = vmatprep.subr.bf16.mxu0 0
    %4277 = vmatpush1.bf16.msra.mxu0 0
    %4278 = vmatprep.subr.bf16.mxu0 0
    %4279 = vmatpush1.bf16.msra.mxu0 0
    %4280 = vmatprep.subr.bf16.mxu0 0
    %4281 = vmatpush1.bf16.msra.mxu0 0
    %4282 = vmatprep.subr.bf16.mxu0 0
    %4283 = vmatpush1.bf16.msra.mxu0 0
    %4284 = vmatprep.mubr.bf16.mxu0 0
    %4285 = vmatmul.mubr.bf16.gmra.mrb[0].mxu0 %v4250
    %v4286 = vpop.f32.mrb[0].mxu0
    %v4287 = vadd.f32 0.0, %v4286
    %v4288 = vpop.f32.mrb[0].mxu0
    %v4289 = vpop.f32.mrb[0].mxu0
    %v4290 = vadd.f32 0.0, %v4289
    %v4291 = vpop.f32.mrb[0].mxu0
    %4292 = vdwg.mxu0
    %4294 = vrot.lane.b32.xlu0 %v839, 112
    %v4295 = vpop.permute.xlu0 %4294
    %v4298 = vsel %vm849, %v3901, 0
    %4300 = vmatprep.subr.bf16.mxu0 0
    %4301 = vmatpush1.bf16.msra.mxu0 %v4295
    %4302 = vmatprep.subr.bf16.mxu0 0
    %4303 = vmatpush1.bf16.msra.mxu0 0
    %4304 = vmatprep.subr.bf16.mxu0 0
    %4305 = vmatpush1.bf16.msra.mxu0 0
    %4306 = vmatprep.subr.bf16.mxu0 0
    %4307 = vmatpush1.bf16.msra.mxu0 0
    %4308 = vmatprep.subr.bf16.mxu0 0
    %4309 = vmatpush1.bf16.msra.mxu0 0
    %4310 = vmatprep.subr.bf16.mxu0 0
    %4311 = vmatpush1.bf16.msra.mxu0 0
    %4312 = vmatprep.subr.bf16.mxu0 0
    %4313 = vmatpush1.bf16.msra.mxu0 0
    %4314 = vmatprep.subr.bf16.mxu0 0
    %4315 = vmatpush1.bf16.msra.mxu0 0
    %4316 = vmatprep.subr.bf16.mxu0 0
    %4317 = vmatpush1.bf16.msra.mxu0 0
    %4318 = vmatprep.subr.bf16.mxu0 0
    %4319 = vmatpush1.bf16.msra.mxu0 0
    %4320 = vmatprep.subr.bf16.mxu0 0
    %4321 = vmatpush1.bf16.msra.mxu0 0
    %4322 = vmatprep.subr.bf16.mxu0 0
    %4323 = vmatpush1.bf16.msra.mxu0 0
    %4324 = vmatprep.subr.bf16.mxu0 0
    %4325 = vmatpush1.bf16.msra.mxu0 0
    %4326 = vmatprep.subr.bf16.mxu0 0
    %4327 = vmatpush1.bf16.msra.mxu0 0
    %4328 = vmatprep.subr.bf16.mxu0 0
    %4329 = vmatpush1.bf16.msra.mxu0 0
    %4330 = vmatprep.subr.bf16.mxu0 0
    %4331 = vmatpush1.bf16.msra.mxu0 0
    %4332 = vmatprep.mubr.bf16.mxu0 0
    %4333 = vmatmul.mubr.bf16.gmra.mrb[0].mxu0 %v4298
    %v4334 = vpop.f32.mrb[0].mxu0
    %v4335 = vadd.f32 0.0, %v4334
    %v4336 = vpop.f32.mrb[0].mxu0
    %v4337 = vpop.f32.mrb[0].mxu0
    %v4338 = vadd.f32 0.0, %v4337
    %v4339 = vpop.f32.mrb[0].mxu0
    %4340 = vdwg.mxu0
    %4342 = vrot.lane.b32.xlu0 %v840, 112
    %v4343 = vpop.permute.xlu0 %4342
    %v4346 = vsel %vm849, %v3902, 0
    %4348 = vmatprep.subr.bf16.mxu0 0
    %4349 = vmatpush1.bf16.msra.mxu0 %v4343
    %4350 = vmatprep.subr.bf16.mxu0 0
    %4351 = vmatpush1.bf16.msra.mxu0 0
    %4352 = vmatprep.subr.bf16.mxu0 0
    %4353 = vmatpush1.bf16.msra.mxu0 0
    %4354 = vmatprep.subr.bf16.mxu0 0
    %4355 = vmatpush1.bf16.msra.mxu0 0
    %4356 = vmatprep.subr.bf16.mxu0 0
    %4357 = vmatpush1.bf16.msra.mxu0 0
    %4358 = vmatprep.subr.bf16.mxu0 0
    %4359 = vmatpush1.bf16.msra.mxu0 0
    %4360 = vmatprep.subr.bf16.mxu0 0
    %4361 = vmatpush1.bf16.msra.mxu0 0
    %4362 = vmatprep.subr.bf16.mxu0 0
    %4363 = vmatpush1.bf16.msra.mxu0 0
    %4364 = vmatprep.subr.bf16.mxu0 0
    %4365 = vmatpush1.bf16.msra.mxu0 0
    %4366 = vmatprep.subr.bf16.mxu0 0
    %4367 = vmatpush1.bf16.msra.mxu0 0
    %4368 = vmatprep.subr.bf16.mxu0 0
    %4369 = vmatpush1.bf16.msra.mxu0 0
    %4370 = vmatprep.subr.bf16.mxu0 0
    %4371 = vmatpush1.bf16.msra.mxu0 0
    %4372 = vmatprep.subr.bf16.mxu0 0
    %4373 = vmatpush1.bf16.msra.mxu0 0
    %4374 = vmatprep.subr.bf16.mxu0 0
    %4375 = vmatpush1.bf16.msra.mxu0 0
    %4376 = vmatprep.subr.bf16.mxu0 0
    %4377 = vmatpush1.bf16.msra.mxu0 0
    %4378 = vmatprep.subr.bf16.mxu0 0
    %4379 = vmatpush1.bf16.msra.mxu0 0
    %4380 = vmatprep.mubr.bf16.mxu0 0
    %4381 = vmatmul.mubr.bf16.gmra.mrb[0].mxu0 %v4346
    %v4382 = vpop.f32.mrb[0].mxu0
    %v4383 = vadd.f32 0.0, %v4382
    %v4384 = vpop.f32.mrb[0].mxu0
    %v4385 = vpop.f32.mrb[0].mxu0
    %v4386 = vadd.f32 0.0, %v4385
    %v4387 = vpop.f32.mrb[0].mxu0
    %4388 = vdwg.mxu0
    %4390 = vrot.lane.b32.xlu0 %v841, 112
    %v4391 = vpop.permute.xlu0 %4390
    %v4394 = vsel %vm849, %v3903, 0
    %4396 = vmatprep.subr.bf16.mxu0 0
    %4397 = vmatpush1.bf16.msra.mxu0 %v4391
    %4398 = vmatprep.subr.bf16.mxu0 0
    %4399 = vmatpush1.bf16.msra.mxu0 0
    %4400 = vmatprep.subr.bf16.mxu0 0
    %4401 = vmatpush1.bf16.msra.mxu0 0
    %4402 = vmatprep.subr.bf16.mxu0 0
    %4403 = vmatpush1.bf16.msra.mxu0 0
    %4404 = vmatprep.subr.bf16.mxu0 0
    %4405 = vmatpush1.bf16.msra.mxu0 0
    %4406 = vmatprep.subr.bf16.mxu0 0
    %4407 = vmatpush1.bf16.msra.mxu0 0
    %4408 = vmatprep.subr.bf16.mxu0 0
    %4409 = vmatpush1.bf16.msra.mxu0 0
    %4410 = vmatprep.subr.bf16.mxu0 0
    %4411 = vmatpush1.bf16.msra.mxu0 0
    %4412 = vmatprep.subr.bf16.mxu0 0
    %4413 = vmatpush1.bf16.msra.mxu0 0
    %4414 = vmatprep.subr.bf16.mxu0 0
    %4415 = vmatpush1.bf16.msra.mxu0 0
    %4416 = vmatprep.subr.bf16.mxu0 0
    %4417 = vmatpush1.bf16.msra.mxu0 0
    %4418 = vmatprep.subr.bf16.mxu0 0
    %4419 = vmatpush1.bf16.msra.mxu0 0
    %4420 = vmatprep.subr.bf16.mxu0 0
    %4421 = vmatpush1.bf16.msra.mxu0 0
    %4422 = vmatprep.subr.bf16.mxu0 0
    %4423 = vmatpush1.bf16.msra.mxu0 0
    %4424 = vmatprep.subr.bf16.mxu0 0
    %4425 = vmatpush1.bf16.msra.mxu0 0
    %4426 = vmatprep.subr.bf16.mxu0 0
    %4427 = vmatpush1.bf16.msra.mxu0 0
    %4428 = vmatprep.mubr.bf16.mxu0 0
    %4429 = vmatmul.mubr.bf16.gmra.mrb[0].mxu0 %v4394
    %v4430 = vpop.f32.mrb[0].mxu0
    %v4431 = vadd.f32 0.0, %v4430
    %v4432 = vpop.f32.mrb[0].mxu0
    %v4433 = vpop.f32.mrb[0].mxu0
    %v4434 = vadd.f32 0.0, %v4433
    %v4435 = vpop.f32.mrb[0].mxu0
    %4436 = vdwg.mxu0
    %4438 = vrot.lane.b32.xlu0 %v842, 112
    %v4439 = vpop.permute.xlu0 %4438
    %v4442 = vsel %vm849, %v3904, 0
    %4444 = vmatprep.subr.bf16.mxu0 0
    %4445 = vmatpush1.bf16.msra.mxu0 %v4439
    %4446 = vmatprep.subr.bf16.mxu0 0
    %4447 = vmatpush1.bf16.msra.mxu0 0
    %4448 = vmatprep.subr.bf16.mxu0 0
    %4449 = vmatpush1.bf16.msra.mxu0 0
    %4450 = vmatprep.subr.bf16.mxu0 0
    %4451 = vmatpush1.bf16.msra.mxu0 0
    %4452 = vmatprep.subr.bf16.mxu0 0
    %4453 = vmatpush1.bf16.msra.mxu0 0
    %4454 = vmatprep.subr.bf16.mxu0 0
    %4455 = vmatpush1.bf16.msra.mxu0 0
    %4456 = vmatprep.subr.bf16.mxu0 0
    %4457 = vmatpush1.bf16.msra.mxu0 0
    %4458 = vmatprep.subr.bf16.mxu0 0
    %4459 = vmatpush1.bf16.msra.mxu0 0
    %4460 = vmatprep.subr.bf16.mxu0 0
    %4461 = vmatpush1.bf16.msra.mxu0 0
    %4462 = vmatprep.subr.bf16.mxu0 0
    %4463 = vmatpush1.bf16.msra.mxu0 0
    %4464 = vmatprep.subr.bf16.mxu0 0
    %4465 = vmatpush1.bf16.msra.mxu0 0
    %4466 = vmatprep.subr.bf16.mxu0 0
    %4467 = vmatpush1.bf16.msra.mxu0 0
    %4468 = vmatprep.subr.bf16.mxu0 0
    %4469 = vmatpush1.bf16.msra.mxu0 0
    %4470 = vmatprep.subr.bf16.mxu0 0
    %4471 = vmatpush1.bf16.msra.mxu0 0
    %4472 = vmatprep.subr.bf16.mxu0 0
    %4473 = vmatpush1.bf16.msra.mxu0 0
    %4474 = vmatprep.subr.bf16.mxu0 0
    %4475 = vmatpush1.bf16.msra.mxu0 0
    %4476 = vmatprep.mubr.bf16.mxu0 0
    %4477 = vmatmul.mubr.bf16.gmra.mrb[0].mxu0 %v4442
    %v4478 = vpop.f32.mrb[0].mxu0
    %v4479 = vadd.f32 0.0, %v4478
    %v4480 = vpop.f32.mrb[0].mxu0
    %v4481 = vpop.f32.mrb[0].mxu0
    %v4482 = vadd.f32 0.0, %v4481
    %v4483 = vpop.f32.mrb[0].mxu0
    %4484 = vdwg.mxu0
    %4486 = vrot.lane.b32.xlu0 %v843, 112
    %v4487 = vpop.permute.xlu0 %4486
    %v4490 = vsel %vm849, %v3905, 0
    %4492 = vmatprep.subr.bf16.mxu0 0
    %4493 = vmatpush1.bf16.msra.mxu0 %v4487
    %4494 = vmatprep.subr.bf16.mxu0 0
    %4495 = vmatpush1.bf16.msra.mxu0 0
    %4496 = vmatprep.subr.bf16.mxu0 0
    %4497 = vmatpush1.bf16.msra.mxu0 0
    %4498 = vmatprep.subr.bf16.mxu0 0
    %4499 = vmatpush1.bf16.msra.mxu0 0
    %4500 = vmatprep.subr.bf16.mxu0 0
    %4501 = vmatpush1.bf16.msra.mxu0 0
    %4502 = vmatprep.subr.bf16.mxu0 0
    %4503 = vmatpush1.bf16.msra.mxu0 0
    %4504 = vmatprep.subr.bf16.mxu0 0
    %4505 = vmatpush1.bf16.msra.mxu0 0
    %4506 = vmatprep.subr.bf16.mxu0 0
    %4507 = vmatpush1.bf16.msra.mxu0 0
    %4508 = vmatprep.subr.bf16.mxu0 0
    %4509 = vmatpush1.bf16.msra.mxu0 0
    %4510 = vmatprep.subr.bf16.mxu0 0
    %4511 = vmatpush1.bf16.msra.mxu0 0
    %4512 = vmatprep.subr.bf16.mxu0 0
    %4513 = vmatpush1.bf16.msra.mxu0 0
    %4514 = vmatprep.subr.bf16.mxu0 0
    %4515 = vmatpush1.bf16.msra.mxu0 0
    %4516 = vmatprep.subr.bf16.mxu0 0
    %4517 = vmatpush1.bf16.msra.mxu0 0
    %4518 = vmatprep.subr.bf16.mxu0 0
    %4519 = vmatpush1.bf16.msra.mxu0 0
    %4520 = vmatprep.subr.bf16.mxu0 0
    %4521 = vmatpush1.bf16.msra.mxu0 0
    %4522 = vmatprep.subr.bf16.mxu0 0
    %4523 = vmatpush1.bf16.msra.mxu0 0
    %4524 = vmatprep.mubr.bf16.mxu0 0
    %4525 = vmatmul.mubr.bf16.gmra.mrb[0].mxu0 %v4490
    %v4526 = vpop.f32.mrb[0].mxu0
    %v4527 = vadd.f32 0.0, %v4526
    %v4528 = vpop.f32.mrb[0].mxu0
    %v4529 = vpop.f32.mrb[0].mxu0
    %v4530 = vadd.f32 0.0, %v4529
    %v4531 = vpop.f32.mrb[0].mxu0
    %4532 = vdwg.mxu0
    %4534 = vrot.lane.b32.xlu0 %v844, 112
    %v4535 = vpop.permute.xlu0 %4534
    %v4538 = vsel %vm849, %v3906, 0
    %4540 = vmatprep.subr.bf16.mxu0 0
    %4541 = vmatpush1.bf16.msra.mxu0 %v4535
    %4542 = vmatprep.subr.bf16.mxu0 0
    %4543 = vmatpush1.bf16.msra.mxu0 0
    %4544 = vmatprep.subr.bf16.mxu0 0
    %4545 = vmatpush1.bf16.msra.mxu0 0
    %4546 = vmatprep.subr.bf16.mxu0 0
    %4547 = vmatpush1.bf16.msra.mxu0 0
    %4548 = vmatprep.subr.bf16.mxu0 0
    %4549 = vmatpush1.bf16.msra.mxu0 0
    %4550 = vmatprep.subr.bf16.mxu0 0
    %4551 = vmatpush1.bf16.msra.mxu0 0
    %4552 = vmatprep.subr.bf16.mxu0 0
    %4553 = vmatpush1.bf16.msra.mxu0 0
    %4554 = vmatprep.subr.bf16.mxu0 0
    %4555 = vmatpush1.bf16.msra.mxu0 0
    %4556 = vmatprep.subr.bf16.mxu0 0
    %4557 = vmatpush1.bf16.msra.mxu0 0
    %4558 = vmatprep.subr.bf16.mxu0 0
    %4559 = vmatpush1.bf16.msra.mxu0 0
    %4560 = vmatprep.subr.bf16.mxu0 0
    %4561 = vmatpush1.bf16.msra.mxu0 0
    %4562 = vmatprep.subr.bf16.mxu0 0
    %4563 = vmatpush1.bf16.msra.mxu0 0
    %4564 = vmatprep.subr.bf16.mxu0 0
    %4565 = vmatpush1.bf16.msra.mxu0 0
    %4566 = vmatprep.subr.bf16.mxu0 0
    %4567 = vmatpush1.bf16.msra.mxu0 0
    %4568 = vmatprep.subr.bf16.mxu0 0
    %4569 = vmatpush1.bf16.msra.mxu0 0
    %4570 = vmatprep.subr.bf16.mxu0 0
    %4571 = vmatpush1.bf16.msra.mxu0 0
    %4572 = vmatprep.mubr.bf16.mxu0 0
    %4573 = vmatmul.mubr.bf16.gmra.mrb[0].mxu0 %v4538
    %v4574 = vpop.f32.mrb[0].mxu0
    %v4575 = vadd.f32 0.0, %v4574
    %v4576 = vpop.f32.mrb[0].mxu0
    %v4577 = vpop.f32.mrb[0].mxu0
    %v4578 = vadd.f32 0.0, %v4577
    %v4579 = vpop.f32.mrb[0].mxu0
    %4580 = vdwg.mxu0
    %4582 = vrot.lane.b32.xlu0 %v845, 112
    %v4583 = vpop.permute.xlu0 %4582
    %v4586 = vsel %vm849, %v3907, 0
    %4588 = vmatprep.subr.bf16.mxu0 0
    %4589 = vmatpush1.bf16.msra.mxu0 %v4583
    %4590 = vmatprep.subr.bf16.mxu0 0
    %4591 = vmatpush1.bf16.msra.mxu0 0
    %4592 = vmatprep.subr.bf16.mxu0 0
    %4593 = vmatpush1.bf16.msra.mxu0 0
    %4594 = vmatprep.subr.bf16.mxu0 0
    %4595 = vmatpush1.bf16.msra.mxu0 0
    %4596 = vmatprep.subr.bf16.mxu0 0
    %4597 = vmatpush1.bf16.msra.mxu0 0
    %4598 = vmatprep.subr.bf16.mxu0 0
    %4599 = vmatpush1.bf16.msra.mxu0 0
    %4600 = vmatprep.subr.bf16.mxu0 0
    %4601 = vmatpush1.bf16.msra.mxu0 0
    %4602 = vmatprep.subr.bf16.mxu0 0
    %4603 = vmatpush1.bf16.msra.mxu0 0
    %4604 = vmatprep.subr.bf16.mxu0 0
    %4605 = vmatpush1.bf16.msra.mxu0 0
    %4606 = vmatprep.subr.bf16.mxu0 0
    %4607 = vmatpush1.bf16.msra.mxu0 0
    %4608 = vmatprep.subr.bf16.mxu0 0
    %4609 = vmatpush1.bf16.msra.mxu0 0
    %4610 = vmatprep.subr.bf16.mxu0 0
    %4611 = vmatpush1.bf16.msra.mxu0 0
    %4612 = vmatprep.subr.bf16.mxu0 0
    %4613 = vmatpush1.bf16.msra.mxu0 0
    %4614 = vmatprep.subr.bf16.mxu0 0
    %4615 = vmatpush1.bf16.msra.mxu0 0
    %4616 = vmatprep.subr.bf16.mxu0 0
    %4617 = vmatpush1.bf16.msra.mxu0 0
    %4618 = vmatprep.subr.bf16.mxu0 0
    %4619 = vmatpush1.bf16.msra.mxu0 0
    %4620 = vmatprep.mubr.bf16.mxu0 0
    %4621 = vmatmul.mubr.bf16.gmra.mrb[0].mxu0 %v4586
    %v4622 = vpop.f32.mrb[0].mxu0
    %v4623 = vadd.f32 0.0, %v4622
    %v4624 = vpop.f32.mrb[0].mxu0
    %v4625 = vpop.f32.mrb[0].mxu0
    %v4626 = vadd.f32 0.0, %v4625
    %v4627 = vpop.f32.mrb[0].mxu0
    %4628 = vdwg.mxu0
    %4630 = vrot.lane.b32.xlu0 %v846, 112
    %v4631 = vpop.permute.xlu0 %4630
    %v4634 = vsel %vm849, %v3908, 0
    %4636 = vmatprep.subr.bf16.mxu0 0
    %4637 = vmatpush1.bf16.msra.mxu0 %v4631
    %4638 = vmatprep.subr.bf16.mxu0 0
    %4639 = vmatpush1.bf16.msra.mxu0 0
    %4640 = vmatprep.subr.bf16.mxu0 0
    %4641 = vmatpush1.bf16.msra.mxu0 0
    %4642 = vmatprep.subr.bf16.mxu0 0
    %4643 = vmatpush1.bf16.msra.mxu0 0
    %4644 = vmatprep.subr.bf16.mxu0 0
    %4645 = vmatpush1.bf16.msra.mxu0 0
    %4646 = vmatprep.subr.bf16.mxu0 0
    %4647 = vmatpush1.bf16.msra.mxu0 0
    %4648 = vmatprep.subr.bf16.mxu0 0
    %4649 = vmatpush1.bf16.msra.mxu0 0
    %4650 = vmatprep.subr.bf16.mxu0 0
    %4651 = vmatpush1.bf16.msra.mxu0 0
    %4652 = vmatprep.subr.bf16.mxu0 0
    %4653 = vmatpush1.bf16.msra.mxu0 0
    %4654 = vmatprep.subr.bf16.mxu0 0
    %4655 = vmatpush1.bf16.msra.mxu0 0
    %4656 = vmatprep.subr.bf16.mxu0 0
    %4657 = vmatpush1.bf16.msra.mxu0 0
    %4658 = vmatprep.subr.bf16.mxu0 0
    %4659 = vmatpush1.bf16.msra.mxu0 0
    %4660 = vmatprep.subr.bf16.mxu0 0
    %4661 = vmatpush1.bf16.msra.mxu0 0
    %4662 = vmatprep.subr.bf16.mxu0 0
    %4663 = vmatpush1.bf16.msra.mxu0 0
    %4664 = vmatprep.subr.bf16.mxu0 0
    %4665 = vmatpush1.bf16.msra.mxu0 0
    %4666 = vmatprep.subr.bf16.mxu0 0
    %4667 = vmatpush1.bf16.msra.mxu0 0
    %4668 = vmatprep.mubr.bf16.mxu0 0
    %4669 = vmatmul.mubr.bf16.gmra.mrb[0].mxu0 %v4634
    %v4670 = vpop.f32.mrb[0].mxu0
    %v4671 = vadd.f32 0.0, %v4670
    %v4672 = vpop.f32.mrb[0].mxu0
    %v4673 = vpop.f32.mrb[0].mxu0
    %v4674 = vadd.f32 0.0, %v4673
    %v4675 = vpop.f32.mrb[0].mxu0
    %4676 = vdwg.mxu0
    %v4677 = vpack.c.bf16 %v3954, %v3951
    %v4678 = vpack.c.bf16 %v4002, %v3999
    %v4679 = vpack.c.bf16 %v4050, %v4047
    %v4680 = vpack.c.bf16 %v4098, %v4095
    %v4681 = vpack.c.bf16 %v4146, %v4143
    %v4682 = vpack.c.bf16 %v4194, %v4191
    %v4683 = vpack.c.bf16 %v4242, %v4239
    %v4684 = vpack.c.bf16 %v4290, %v4287
    %v4685 = vpack.c.bf16 %v4338, %v4335
    %v4686 = vpack.c.bf16 %v4386, %v4383
    %v4687 = vpack.c.bf16 %v4434, %v4431
    %v4688 = vpack.c.bf16 %v4482, %v4479
    %v4689 = vpack.c.bf16 %v4530, %v4527
    %v4690 = vpack.c.bf16 %v4578, %v4575
    %v4691 = vpack.c.bf16 %v4626, %v4623
    %v4692 = vpack.c.bf16 %v4674, %v4671
    %4709 = vrot.lane.b32.xlu0 %v4677, 16
    %v4710 = vpop.permute.xlu0 %4709
    %4711 = vrot.lane.b32.xlu0 %v4678, 16
    %v4712 = vpop.permute.xlu0 %4711
    %4713 = vrot.lane.b32.xlu0 %v4679, 16
    %v4714 = vpop.permute.xlu0 %4713
    %4715 = vrot.lane.b32.xlu0 %v4680, 16
    %v4716 = vpop.permute.xlu0 %4715
    %4717 = vrot.lane.b32.xlu0 %v4681, 16
    %v4718 = vpop.permute.xlu0 %4717
    %4719 = vrot.lane.b32.xlu0 %v4682, 16
    %v4720 = vpop.permute.xlu0 %4719
    %4721 = vrot.lane.b32.xlu0 %v4683, 16
    %v4722 = vpop.permute.xlu0 %4721
    %4723 = vrot.lane.b32.xlu0 %v4684, 16
    %v4724 = vpop.permute.xlu0 %4723
    %4725 = vrot.lane.b32.xlu0 %v4685, 16
    %v4726 = vpop.permute.xlu0 %4725
    %4727 = vrot.lane.b32.xlu0 %v4686, 16
    %v4728 = vpop.permute.xlu0 %4727
    %4729 = vrot.lane.b32.xlu0 %v4687, 16
    %v4730 = vpop.permute.xlu0 %4729
    %4731 = vrot.lane.b32.xlu0 %v4688, 16
    %v4732 = vpop.permute.xlu0 %4731
    %4733 = vrot.lane.b32.xlu0 %v4689, 16
    %v4734 = vpop.permute.xlu0 %4733
    %4735 = vrot.lane.b32.xlu0 %v4690, 16
    %v4736 = vpop.permute.xlu0 %4735
    %4737 = vrot.lane.b32.xlu0 %v4691, 16
    %v4738 = vpop.permute.xlu0 %4737
    %4739 = vrot.lane.b32.xlu0 %v4692, 16
    %v4740 = vpop.permute.xlu0 %4739
    %v4743 = vsel %vm849, %v2674, %v4710
    %v4746 = vsel %vm849, %v2675, %v4712
    %v4749 = vsel %vm849, %v2676, %v4714
    %v4752 = vsel %vm849, %v2677, %v4716
    %v4755 = vsel %vm849, %v2678, %v4718
    %v4758 = vsel %vm849, %v2679, %v4720
    %v4761 = vsel %vm849, %v2680, %v4722
    %v4764 = vsel %vm849, %v2681, %v4724
    %v4767 = vsel %vm849, %v2682, %v4726
    %v4770 = vsel %vm849, %v2683, %v4728
    %v4773 = vsel %vm849, %v2684, %v4730
    %v4776 = vsel %vm849, %v2685, %v4732
    %v4779 = vsel %vm849, %v2686, %v4734
    %v4782 = vsel %vm849, %v2687, %v4736
    %v4785 = vsel %vm849, %v2688, %v4738
    %v4788 = vsel %vm849, %v2689, %v4740
    %v4789 = vld [vmem:[#allocation10] sm:$0xf]
    %v4790 = vld [vmem:[#allocation10 + $0x4] sm:$0xf]
    %v4791 = vld [vmem:[#allocation10 + $0x8] sm:$0xf]
    %v4792 = vld [vmem:[#allocation10 + $0xc] sm:$0xf]
    %v4797 = vunpack.c.l.b16 %v4789
    %v4798 = vunpack.c.l.b16 %v4790
    %v4799 = vunpack.c.l.b16 %v4791
    %v4800 = vunpack.c.l.b16 %v4792
    %v4801 = vpack.c.b16 %v4798, %v4797
    %v4802 = vpack.c.b16 %v4800, %v4799
    %v4805 = vsel %vm235, %v4743, 0
    %v4807 = vsel %vm235, %v4746, 0
    %v4809 = vsel %vm235, %v4749, 0
    %v4811 = vsel %vm235, %v4752, 0
    %v4813 = vsel %vm235, %v4755, 0
    %v4815 = vsel %vm235, %v4758, 0
    %v4817 = vsel %vm235, %v4761, 0
    %v4819 = vsel %vm235, %v4764, 0
    %v4821 = vsel %vm235, %v4767, 0
    %v4823 = vsel %vm235, %v4770, 0
    %v4825 = vsel %vm235, %v4773, 0
    %v4827 = vsel %vm235, %v4776, 0
    %v4829 = vsel %vm235, %v4779, 0
    %v4831 = vsel %vm235, %v4782, 0
    %v4833 = vsel %vm235, %v4785, 0
    %v4835 = vsel %vm235, %v4788, 0
    %4837 = vmatprep.subr.bf16.mxu0 0
    %4838 = vmatpush1.bf16.msra.mxu0 %v4801
    %4839 = vmatprep.subr.bf16.mxu0 0
    %4840 = vmatpush1.bf16.msra.mxu0 %v4802
    %4841 = vmatprep.subr.bf16.mxu0 0
    %4842 = vmatpush1.bf16.msra.mxu0 0
    %4843 = vmatprep.subr.bf16.mxu0 0
    %4844 = vmatpush1.bf16.msra.mxu0 0
    %4845 = vmatprep.subr.bf16.mxu0 0
    %4846 = vmatpush1.bf16.msra.mxu0 0
    %4847 = vmatprep.subr.bf16.mxu0 0
    %4848 = vmatpush1.bf16.msra.mxu0 0
    %4849 = vmatprep.subr.bf16.mxu0 0
    %4850 = vmatpush1.bf16.msra.mxu0 0
    %4851 = vmatprep.subr.bf16.mxu0 0
    %4852 = vmatpush1.bf16.msra.mxu0 0
    %4853 = vmatprep.subr.bf16.mxu0 0
    %4854 = vmatpush1.bf16.msra.mxu0 0
    %4855 = vmatprep.subr.bf16.mxu0 0
    %4856 = vmatpush1.bf16.msra.mxu0 0
    %4857 = vmatprep.subr.bf16.mxu0 0
    %4858 = vmatpush1.bf16.msra.mxu0 0
    %4859 = vmatprep.subr.bf16.mxu0 0
    %4860 = vmatpush1.bf16.msra.mxu0 0
    %4861 = vmatprep.subr.bf16.mxu0 0
    %4862 = vmatpush1.bf16.msra.mxu0 0
    %4863 = vmatprep.subr.bf16.mxu0 0
    %4864 = vmatpush1.bf16.msra.mxu0 0
    %4865 = vmatprep.subr.bf16.mxu0 0
    %4866 = vmatpush1.bf16.msra.mxu0 0
    %4867 = vmatprep.subr.bf16.mxu0 0
    %4868 = vmatpush1.bf16.msra.mxu0 0
    %4869 = vmatprep.mubr.bf16.mxu0 0
    %4870 = vmatmul.mubr.bf16.gmra.mrb[0].mxu0 %v4805
    %v4871 = vpop.f32.mrb[0].mxu0
    %v4872 = vadd.f32 0.0, %v4871
    %v4873 = vpop.f32.mrb[0].mxu0
    %v4874 = vpop.f32.mrb[0].mxu0
    %v4875 = vadd.f32 0.0, %v4874
    %v4876 = vpop.f32.mrb[0].mxu0
    %4877 = vmatprep.mubr.bf16.mxu0 0
    %4878 = vmatmul.mubr.bf16.gmra.mrb[0].mxu0 %v4807
    %v4879 = vpop.f32.mrb[0].mxu0
    %v4880 = vadd.f32 0.0, %v4879
    %v4881 = vpop.f32.mrb[0].mxu0
    %v4882 = vpop.f32.mrb[0].mxu0
    %v4883 = vadd.f32 0.0, %v4882
    %v4884 = vpop.f32.mrb[0].mxu0
    %4885 = vmatprep.mubr.bf16.mxu0 0
    %4886 = vmatmul.mubr.bf16.gmra.mrb[0].mxu0 %v4809
    %v4887 = vpop.f32.mrb[0].mxu0
    %v4888 = vadd.f32 0.0, %v4887
    %v4889 = vpop.f32.mrb[0].mxu0
    %v4890 = vpop.f32.mrb[0].mxu0
    %v4891 = vadd.f32 0.0, %v4890
    %v4892 = vpop.f32.mrb[0].mxu0
    %4893 = vmatprep.mubr.bf16.mxu0 0
    %4894 = vmatmul.mubr.bf16.gmra.mrb[0].mxu0 %v4811
    %v4895 = vpop.f32.mrb[0].mxu0
    %v4896 = vadd.f32 0.0, %v4895
    %v4897 = vpop.f32.mrb[0].mxu0
    %v4898 = vpop.f32.mrb[0].mxu0
    %v4899 = vadd.f32 0.0, %v4898
    %v4900 = vpop.f32.mrb[0].mxu0
    %4901 = vmatprep.mubr.bf16.mxu0 0
    %4902 = vmatmul.mubr.bf16.gmra.mrb[0].mxu0 %v4813
    %v4903 = vpop.f32.mrb[0].mxu0
    %v4904 = vadd.f32 0.0, %v4903
    %v4905 = vpop.f32.mrb[0].mxu0
    %v4906 = vpop.f32.mrb[0].mxu0
    %v4907 = vadd.f32 0.0, %v4906
    %v4908 = vpop.f32.mrb[0].mxu0
    %4909 = vmatprep.mubr.bf16.mxu0 0
    %4910 = vmatmul.mubr.bf16.gmra.mrb[0].mxu0 %v4815
    %v4911 = vpop.f32.mrb[0].mxu0
    %v4912 = vadd.f32 0.0, %v4911
    %v4913 = vpop.f32.mrb[0].mxu0
    %v4914 = vpop.f32.mrb[0].mxu0
    %v4915 = vadd.f32 0.0, %v4914
    %v4916 = vpop.f32.mrb[0].mxu0
    %4917 = vmatprep.mubr.bf16.mxu0 0
    %4918 = vmatmul.mubr.bf16.gmra.mrb[0].mxu0 %v4817
    %v4919 = vpop.f32.mrb[0].mxu0
    %v4920 = vadd.f32 0.0, %v4919
    %v4921 = vpop.f32.mrb[0].mxu0
    %v4922 = vpop.f32.mrb[0].mxu0
    %v4923 = vadd.f32 0.0, %v4922
    %v4924 = vpop.f32.mrb[0].mxu0
    %4925 = vmatprep.mubr.bf16.mxu0 0
    %4926 = vmatmul.mubr.bf16.gmra.mrb[0].mxu0 %v4819
    %v4927 = vpop.f32.mrb[0].mxu0
    %v4928 = vadd.f32 0.0, %v4927
    %v4929 = vpop.f32.mrb[0].mxu0
    %v4930 = vpop.f32.mrb[0].mxu0
    %v4931 = vadd.f32 0.0, %v4930
    %v4932 = vpop.f32.mrb[0].mxu0
    %4933 = vmatprep.mubr.bf16.mxu0 0
    %4934 = vmatmul.mubr.bf16.gmra.mrb[0].mxu0 %v4821
    %v4935 = vpop.f32.mrb[0].mxu0
    %v4936 = vadd.f32 0.0, %v4935
    %v4937 = vpop.f32.mrb[0].mxu0
    %v4938 = vpop.f32.mrb[0].mxu0
    %v4939 = vadd.f32 0.0, %v4938
    %v4940 = vpop.f32.mrb[0].mxu0
    %4941 = vmatprep.mubr.bf16.mxu0 0
    %4942 = vmatmul.mubr.bf16.gmra.mrb[0].mxu0 %v4823
    %v4943 = vpop.f32.mrb[0].mxu0
    %v4944 = vadd.f32 0.0, %v4943
    %v4945 = vpop.f32.mrb[0].mxu0
    %v4946 = vpop.f32.mrb[0].mxu0
    %v4947 = vadd.f32 0.0, %v4946
    %v4948 = vpop.f32.mrb[0].mxu0
    %4949 = vmatprep.mubr.bf16.mxu0 0
    %4950 = vmatmul.mubr.bf16.gmra.mrb[0].mxu0 %v4825
    %v4951 = vpop.f32.mrb[0].mxu0
    %v4952 = vadd.f32 0.0, %v4951
    %v4953 = vpop.f32.mrb[0].mxu0
    %v4954 = vpop.f32.mrb[0].mxu0
    %v4955 = vadd.f32 0.0, %v4954
    %v4956 = vpop.f32.mrb[0].mxu0
    %4957 = vmatprep.mubr.bf16.mxu0 0
    %4958 = vmatmul.mubr.bf16.gmra.mrb[0].mxu0 %v4827
    %v4959 = vpop.f32.mrb[0].mxu0
    %v4960 = vadd.f32 0.0, %v4959
    %v4961 = vpop.f32.mrb[0].mxu0
    %v4962 = vpop.f32.mrb[0].mxu0
    %v4963 = vadd.f32 0.0, %v4962
    %v4964 = vpop.f32.mrb[0].mxu0
    %4965 = vmatprep.mubr.bf16.mxu0 0
    %4966 = vmatmul.mubr.bf16.gmra.mrb[0].mxu0 %v4829
    %v4967 = vpop.f32.mrb[0].mxu0
    %v4968 = vadd.f32 0.0, %v4967
    %v4969 = vpop.f32.mrb[0].mxu0
    %v4970 = vpop.f32.mrb[0].mxu0
    %v4971 = vadd.f32 0.0, %v4970
    %v4972 = vpop.f32.mrb[0].mxu0
    %4973 = vmatprep.mubr.bf16.mxu0 0
    %4974 = vmatmul.mubr.bf16.gmra.mrb[0].mxu0 %v4831
    %v4975 = vpop.f32.mrb[0].mxu0
    %v4976 = vadd.f32 0.0, %v4975
    %v4977 = vpop.f32.mrb[0].mxu0
    %v4978 = vpop.f32.mrb[0].mxu0
    %v4979 = vadd.f32 0.0, %v4978
    %v4980 = vpop.f32.mrb[0].mxu0
    %4981 = vmatprep.mubr.bf16.mxu0 0
    %4982 = vmatmul.mubr.bf16.gmra.mrb[0].mxu0 %v4833
    %v4983 = vpop.f32.mrb[0].mxu0
    %v4984 = vadd.f32 0.0, %v4983
    %v4985 = vpop.f32.mrb[0].mxu0
    %v4986 = vpop.f32.mrb[0].mxu0
    %v4987 = vadd.f32 0.0, %v4986
    %v4988 = vpop.f32.mrb[0].mxu0
    %4989 = vmatprep.mubr.bf16.mxu0 0
    %4990 = vmatmul.mubr.bf16.gmra.mrb[0].mxu0 %v4835
    %v4991 = vpop.f32.mrb[0].mxu0
    %v4992 = vadd.f32 0.0, %v4991
    %v4993 = vpop.f32.mrb[0].mxu0
    %v4994 = vpop.f32.mrb[0].mxu0
    %v4995 = vadd.f32 0.0, %v4994
    %v4996 = vpop.f32.mrb[0].mxu0
    %4997 = vdwg.mxu0
    %4998 = vst.msk [vmem:[#allocation13] sm:$0xff] %vm235, %v4872
    %4999 = vst.msk [vmem:[#allocation13 + $0x8] sm:$0xff] %vm235, %v4875
    %5000 = vst.msk [vmem:[#allocation13 + $0x10] sm:$0xff] %vm235, %v4880
    %5001 = vst.msk [vmem:[#allocation13 + $0x18] sm:$0xff] %vm235, %v4883
    %5002 = vst.msk [vmem:[#allocation13 + $0x20] sm:$0xff] %vm235, %v4888
    %5003 = vst.msk [vmem:[#allocation13 + $0x28] sm:$0xff] %vm235, %v4891
    %5004 = vst.msk [vmem:[#allocation13 + $0x30] sm:$0xff] %vm235, %v4896
    %5005 = vst.msk [vmem:[#allocation13 + $0x38] sm:$0xff] %vm235, %v4899
    %5006 = vst.msk [vmem:[#allocation13 + $0x40] sm:$0xff] %vm235, %v4904
    %5007 = vst.msk [vmem:[#allocation13 + $0x48] sm:$0xff] %vm235, %v4907
    %5008 = vst.msk [vmem:[#allocation13 + $0x50] sm:$0xff] %vm235, %v4912
    %5009 = vst.msk [vmem:[#allocation13 + $0x58] sm:$0xff] %vm235, %v4915
    %5010 = vst.msk [vmem:[#allocation13 + $0x60] sm:$0xff] %vm235, %v4920
    %5011 = vst.msk [vmem:[#allocation13 + $0x68] sm:$0xff] %vm235, %v4923
    %5012 = vst.msk [vmem:[#allocation13 + $0x70] sm:$0xff] %vm235, %v4928
    %5013 = vst.msk [vmem:[#allocation13 + $0x78] sm:$0xff] %vm235, %v4931
    %5014 = vst.msk [vmem:[#allocation13 + $0x80] sm:$0xff] %vm235, %v4936
    %5015 = vst.msk [vmem:[#allocation13 + $0x88] sm:$0xff] %vm235, %v4939
    %5016 = vst.msk [vmem:[#allocation13 + $0x90] sm:$0xff] %vm235, %v4944
    %5017 = vst.msk [vmem:[#allocation13 + $0x98] sm:$0xff] %vm235, %v4947
    %5018 = vst.msk [vmem:[#allocation13 + $0xa0] sm:$0xff] %vm235, %v4952
    %5019 = vst.msk [vmem:[#allocation13 + $0xa8] sm:$0xff] %vm235, %v4955
    %5020 = vst.msk [vmem:[#allocation13 + $0xb0] sm:$0xff] %vm235, %v4960
    %5021 = vst.msk [vmem:[#allocation13 + $0xb8] sm:$0xff] %vm235, %v4963
    %5022 = vst.msk [vmem:[#allocation13 + $0xc0] sm:$0xff] %vm235, %v4968
    %5023 = vst.msk [vmem:[#allocation13 + $0xc8] sm:$0xff] %vm235, %v4971
    %5024 = vst.msk [vmem:[#allocation13 + $0xd0] sm:$0xff] %vm235, %v4976
    %5025 = vst.msk [vmem:[#allocation13 + $0xd8] sm:$0xff] %vm235, %v4979
    %5026 = vst.msk [vmem:[#allocation13 + $0xe0] sm:$0xff] %vm235, %v4984
    %5027 = vst.msk [vmem:[#allocation13 + $0xe8] sm:$0xff] %vm235, %v4987
    %5028 = vst.msk [vmem:[#allocation13 + $0xf0] sm:$0xff] %vm235, %v4992
    %5029 = vst.msk [vmem:[#allocation13 + $0xf8] sm:$0xff] %vm235, %v4995
    // Predicated region
    $region50: #{tpu_custom_call.1} parent=1 // pred_check
      _
    $region51: #{tpu_custom_call.1} parent=1 // pred_check_branch
      %5031 = sbr.rel (0) target = $region53
    $region52: #{tpu_custom_call.1} parent=1 // pred_region
      %s5033 = ssub.s32 4096, 4096
      %5034 = vsyncadd [#allocation4], %s5033
      %s5035 = sshll.u32 [#allocation13], 4
      %s5036 = int_to_ptr.vmem [resolvable:$true] %s5035
      %5041 = dma.vmem_to_hbm [thread:$0]  %s5036, 4096, %s6, [#allocation4], 128, 128, 8
    $region53: #{tpu_custom_call.1} parent=1 // pred_fallthru
      _
    // Predicated region
    $region54: #{tpu_custom_call.1} parent=1 // pred_check
      _
    $region55: #{tpu_custom_call.1} parent=1 // pred_check_branch
      %5043 = sbr.rel (0) target = $region57
    $region56: #{tpu_custom_call.1} parent=1 // pred_region
      %5044 = dma.done [#allocation4], 4096
    $region57: #{tpu_custom_call.1} parent=1 // pred_fallthru
      _
    %5045 = vsyncpa [#allocation3], 1
    %5046 = vsyncpa [#allocation6], 1
    %5047 = vsyncpa [#allocation9], 1
    %5048 = vsyncpa [#allocation12], 1
    %5049 = vsyncpa [#allocation4], 1

// kernel: tpu_custom_call.1
$region0: #{tpu_custom_call.1}
  #allocation0 [shape = 'u32[]', space=smem, size = 0x4, offset = 0x4, fixed_abs, tag = 'smem constant byte address 0x4 - core index']
  #allocation1 [shape = 'u32[144,128]{1,0:T(1,128)}', space=vmem, size = 0x12000, scoped, tag = 'internal scratch']
  %s0 = inlined_call_operand.hbm [shape: bf16[16,16,32], index: 0, kind: input, shape index: {}]
  %s1 = inlined_call_operand.hbm [shape: bf16[32,32], index: 1, kind: input, shape index: {}]
  %s2 = inlined_call_operand.hbm [shape: bf16[32,32], index: 2, kind: input, shape index: {}]
  %s3 = inlined_call_operand.hbm [shape: bf16[32,32], index: 3, kind: input, shape index: {}]
  %s4 = inlined_call_operand.hbm [shape: bf16[32,32], index: 4, kind: input, shape index: {}]
  %s5 = inlined_call_operand.hbm [shape: f32[2,16,16], index: 5, kind: input, shape index: {}]
  %s6 = inlined_call_operand.hbm [shape: f32[16,16,32], index: 6, kind: output, shape index: {}]
  %s7 = sld [smem:[#allocation0]]
  $region58: #{tpu_custom_call.1} parent=0
    _
  %s9 = ssub.s32 1, %s7
  %s10 = scalar_select 0, %s9, %s7
  $region1: #{tpu_custom_call.1} parent=0
    #allocation2 [shape = 'u8[65536]{0}', space=vmem, size = 0x10000, scoped, tag = 'input window, operand 0, single buffered']
    #allocation3 [shape = 's32[1]{0}', space=sflag, size = 0x4, scoped, tag = 'scoped memory for tpu_custom_call.1']
    #allocation4 [shape = 's32[1]{0}', space=sflag, size = 0x4, scoped, tag = 'scoped memory for tpu_custom_call.1']
    #allocation5 [shape = 'u8[8192]{0}', space=vmem, size = 0x2000, scoped, tag = 'input window, operand 1, single buffered']
    #allocation6 [shape = 's32[1]{0}', space=sflag, size = 0x4, scoped, tag = 'scoped memory for tpu_custom_call.1']
    #allocation7 [shape = 'u8[8192]{0}', space=vmem, size = 0x2000, scoped, tag = 'input window, operand 2, single buffered']
    #allocation8 [shape = 'u8[8192]{0}', space=vmem, size = 0x2000, scoped, tag = 'input window, operand 3, single buffered']
    #allocation9 [shape = 's32[1]{0}', space=sflag, size = 0x4, scoped, tag = 'scoped memory for tpu_custom_call.1']
    #allocation10 [shape = 'u8[8192]{0}', space=vmem, size = 0x2000, scoped, tag = 'input window, operand 4, single buffered']
    #allocation11 [shape = 'u8[16384]{0}', space=vmem, size = 0x4000, scoped, tag = 'input window, operand 5, single buffered']
    #allocation12 [shape = 's32[1]{0}', space=sflag, size = 0x4, scoped, tag = 'scoped memory for tpu_custom_call.1']
    #allocation13 [shape = 'u8[131072]{0}', space=vmem, size = 0x20000, scoped, tag = 'output window, operand 0, single buffered']
    %11 = vsyncpa [#allocation3], 0
    %12 = vsyncpa [#allocation6], 0
    %13 = vsyncpa [#allocation9], 0
    %14 = vsyncpa [#allocation12], 0
    %15 = vsyncpa [#allocation4], 0
    // Predicated region
    $region2: #{tpu_custom_call.1} parent=1 // pred_check
      _
    $region3: #{tpu_custom_call.1} parent=1 // pred_check_branch
      %17 = sbr.rel (0) target = $region5
    $region4: #{tpu_custom_call.1} parent=1 // pred_region
      %s19 = ssub.s32 2048, 2048
      %20 = vsyncadd [#allocation3], %s19
      %s21 = sshll.u32 [#allocation2], 4
      %s22 = int_to_ptr.vmem [resolvable:$true] %s21
      %27 = dma.hbm_to_vmem [thread:$0]  %s0, 2048, %s22, [#allocation3], 64, 64, 4
    $region5: #{tpu_custom_call.1} parent=1 // pred_fallthru
      _
    // Predicated region
    $region6: #{tpu_custom_call.1} parent=1 // pred_check
      _
    $region7: #{tpu_custom_call.1} parent=1 // pred_check_branch
      %29 = sbr.rel (0) target = $region9
    $region8: #{tpu_custom_call.1} parent=1 // pred_region
      %s31 = ssub.s32 256, 256
      %32 = vsyncadd [#allocation6], %s31
      %s33 = sshll.u32 [#allocation5], 4
      %s34 = int_to_ptr.vmem [resolvable:$true] %s33
      %39 = dma.hbm_to_vmem [thread:$0]  %s1, 256, %s34, [#allocation6], 64, 64, 4
    $region9: #{tpu_custom_call.1} parent=1 // pred_fallthru
      _
    // Predicated region
    $region10: #{tpu_custom_call.1} parent=1 // pred_check
      _
    $region11: #{tpu_custom_call.1} parent=1 // pred_check_branch
      %41 = sbr.rel (0) target = $region13
    $region12: #{tpu_custom_call.1} parent=1 // pred_region
      %s43 = ssub.s32 256, 256
      %44 = vsyncadd [#allocation6], %s43
      %s45 = sshll.u32 [#allocation7], 4
      %s46 = int_to_ptr.vmem [resolvable:$true] %s45
      %51 = dma.hbm_to_vmem [thread:$0]  %s2, 256, %s46, [#allocation6], 64, 64, 4
    $region13: #{tpu_custom_call.1} parent=1 // pred_fallthru
      _
    // Predicated region
    $region14: #{tpu_custom_call.1} parent=1 // pred_check
      _
    $region15: #{tpu_custom_call.1} parent=1 // pred_check_branch
      %53 = sbr.rel (0) target = $region17
    $region16: #{tpu_custom_call.1} parent=1 // pred_region
      %s55 = ssub.s32 256, 256
      %56 = vsyncadd [#allocation9], %s55
      %s57 = sshll.u32 [#allocation8], 4
      %s58 = int_to_ptr.vmem [resolvable:$true] %s57
      %63 = dma.hbm_to_vmem [thread:$0]  %s3, 256, %s58, [#allocation9], 64, 64, 4
    $region17: #{tpu_custom_call.1} parent=1 // pred_fallthru
      _
    // Predicated region
    $region18: #{tpu_custom_call.1} parent=1 // pred_check
      _
    $region19: #{tpu_custom_call.1} parent=1 // pred_check_branch
      %65 = sbr.rel (0) target = $region21
    $region20: #{tpu_custom_call.1} parent=1 // pred_region
      %s67 = ssub.s32 256, 256
      %68 = vsyncadd [#allocation9], %s67
      %s69 = sshll.u32 [#allocation10], 4
      %s70 = int_to_ptr.vmem [resolvable:$true] %s69
      %75 = dma.hbm_to_vmem [thread:$0]  %s4, 256, %s70, [#allocation9], 64, 64, 4
    $region21: #{tpu_custom_call.1} parent=1 // pred_fallthru
      _
    // Predicated region
    $region22: #{tpu_custom_call.1} parent=1 // pred_check
      _
    $region23: #{tpu_custom_call.1} parent=1 // pred_check_branch
      %77 = sbr.rel (0) target = $region25
    $region24: #{tpu_custom_call.1} parent=1 // pred_region
      %s79 = ssub.s32 512, 512
      %80 = vsyncadd [#allocation12], %s79
      %s81 = sshll.u32 [#allocation11], 4
      %s82 = int_to_ptr.vmem [resolvable:$true] %s81
      %87 = dma.hbm_to_vmem [thread:$0]  %s5, 512, %s82, [#allocation12], 128, 128, 8
    $region25: #{tpu_custom_call.1} parent=1 // pred_fallthru
      _
    // Predicated region
    $region26: #{tpu_custom_call.1} parent=1 // pred_check
      _
    $region27: #{tpu_custom_call.1} parent=1 // pred_check_branch
      %89 = sbr.rel (0) target = $region29
    $region28: #{tpu_custom_call.1} parent=1 // pred_region
      %90 = dma.done [#allocation3], 2048
    $region29: #{tpu_custom_call.1} parent=1 // pred_fallthru
      _
    // Predicated region
    $region30: #{tpu_custom_call.1} parent=1 // pred_check
      _
    $region31: #{tpu_custom_call.1} parent=1 // pred_check_branch
      %92 = sbr.rel (0) target = $region33
    $region32: #{tpu_custom_call.1} parent=1 // pred_region
      %93 = dma.done [#allocation6], 256
    $region33: #{tpu_custom_call.1} parent=1 // pred_fallthru
      _
    // Predicated region
    $region34: #{tpu_custom_call.1} parent=1 // pred_check
      _
    $region35: #{tpu_custom_call.1} parent=1 // pred_check_branch
      %95 = sbr.rel (0) target = $region37
    $region36: #{tpu_custom_call.1} parent=1 // pred_region
      %96 = dma.done [#allocation6], 256
    $region37: #{tpu_custom_call.1} parent=1 // pred_fallthru
      _
    // Predicated region
    $region38: #{tpu_custom_call.1} parent=1 // pred_check
      _
    $region39: #{tpu_custom_call.1} parent=1 // pred_check_branch
      %98 = sbr.rel (0) target = $region41
    $region40: #{tpu_custom_call.1} parent=1 // pred_region
      %99 = dma.done [#allocation9], 256
    $region41: #{tpu_custom_call.1} parent=1 // pred_fallthru
      _
    // Predicated region
    $region42: #{tpu_custom_call.1} parent=1 // pred_check
      _
    $region43: #{tpu_custom_call.1} parent=1 // pred_check_branch
      %101 = sbr.rel (0) target = $region45
    $region44: #{tpu_custom_call.1} parent=1 // pred_region
      %102 = dma.done [#allocation9], 256
    $region45: #{tpu_custom_call.1} parent=1 // pred_fallthru
      _
    // Predicated region
    $region46: #{tpu_custom_call.1} parent=1 // pred_check
      _
    $region47: #{tpu_custom_call.1} parent=1 // pred_check_branch
      %104 = sbr.rel (0) target = $region49
    $region48: #{tpu_custom_call.1} parent=1 // pred_region
      %105 = dma.done [#allocation12], 512
    $region49: #{tpu_custom_call.1} parent=1 // pred_fallthru
      _
    %v107 = vld [vmem:[#allocation2] sm:$0xf]
    %v108 = vld [vmem:[#allocation2 + $0x4] sm:$0xf]
    %v109 = vld [vmem:[#allocation2 + $0x8] sm:$0xf]
    %v110 = vld [vmem:[#allocation2 + $0xc] sm:$0xf]
    %v111 = vld [vmem:[#allocation2 + $0x10] sm:$0xf]
    %v112 = vld [vmem:[#allocation2 + $0x14] sm:$0xf]
    %v113 = vld [vmem:[#allocation2 + $0x18] sm:$0xf]
    %v114 = vld [vmem:[#allocation2 + $0x1c] sm:$0xf]
    %v115 = vld [vmem:[#allocation2 + $0x20] sm:$0xf]
    %v116 = vld [vmem:[#allocation2 + $0x24] sm:$0xf]
    %v117 = vld [vmem:[#allocation2 + $0x28] sm:$0xf]
    %v118 = vld [vmem:[#allocation2 + $0x2c] sm:$0xf]
    %v119 = vld [vmem:[#allocation2 + $0x30] sm:$0xf]
    %v120 = vld [vmem:[#allocation2 + $0x34] sm:$0xf]
    %v121 = vld [vmem:[#allocation2 + $0x38] sm:$0xf]
    %v122 = vld [vmem:[#allocation2 + $0x3c] sm:$0xf]
    %v123 = vld [vmem:[#allocation2 + $0x40] sm:$0xf]
    %v124 = vld [vmem:[#allocation2 + $0x44] sm:$0xf]
    %v125 = vld [vmem:[#allocation2 + $0x48] sm:$0xf]
    %v126 = vld [vmem:[#allocation2 + $0x4c] sm:$0xf]
    %v127 = vld [vmem:[#allocation2 + $0x50] sm:$0xf]
    %v128 = vld [vmem:[#allocation2 + $0x54] sm:$0xf]
    %v129 = vld [vmem:[#allocation2 + $0x58] sm:$0xf]
    %v130 = vld [vmem:[#allocation2 + $0x5c] sm:$0xf]
    %v131 = vld [vmem:[#allocation2 + $0x60] sm:$0xf]
    %v132 = vld [vmem:[#allocation2 + $0x64] sm:$0xf]
    %v133 = vld [vmem:[#allocation2 + $0x68] sm:$0xf]
    %v134 = vld [vmem:[#allocation2 + $0x6c] sm:$0xf]
    %v135 = vld [vmem:[#allocation2 + $0x70] sm:$0xf]
    %v136 = vld [vmem:[#allocation2 + $0x74] sm:$0xf]
    %v137 = vld [vmem:[#allocation2 + $0x78] sm:$0xf]
    %v138 = vld [vmem:[#allocation2 + $0x7c] sm:$0xf]
    %v139 = vld [vmem:[#allocation5] sm:$0xf]
    %v140 = vld [vmem:[#allocation5 + $0x4] sm:$0xf]
    %v141 = vld [vmem:[#allocation5 + $0x8] sm:$0xf]
    %v142 = vld [vmem:[#allocation5 + $0xc] sm:$0xf]
    %v175 = vunpack.c.l.b16 %v107
    %v176 = vunpack.c.l.b16 %v108
    %v177 = vunpack.c.l.b16 %v109
    %v178 = vunpack.c.l.b16 %v110
    %v179 = vunpack.c.l.b16 %v111
    %v180 = vunpack.c.l.b16 %v112
    %v181 = vunpack.c.l.b16 %v113
    %v182 = vunpack.c.l.b16 %v114
    %v183 = vunpack.c.l.b16 %v115
    %v184 = vunpack.c.l.b16 %v116
    %v185 = vunpack.c.l.b16 %v117
    %v186 = vunpack.c.l.b16 %v118
    %v187 = vunpack.c.l.b16 %v119
    %v188 = vunpack.c.l.b16 %v120
    %v189 = vunpack.c.l.b16 %v121
    %v190 = vunpack.c.l.b16 %v122
    %v191 = vunpack.c.l.b16 %v123
    %v192 = vunpack.c.l.b16 %v124
    %v193 = vunpack.c.l.b16 %v125
    %v194 = vunpack.c.l.b16 %v126
    %v195 = vunpack.c.l.b16 %v127
    %v196 = vunpack.c.l.b16 %v128
    %v197 = vunpack.c.l.b16 %v129
    %v198 = vunpack.c.l.b16 %v130
    %v199 = vunpack.c.l.b16 %v131
    %v200 = vunpack.c.l.b16 %v132
    %v201 = vunpack.c.l.b16 %v133
    %v202 = vunpack.c.l.b16 %v134
    %v203 = vunpack.c.l.b16 %v135
    %v204 = vunpack.c.l.b16 %v136
    %v205 = vunpack.c.l.b16 %v137
    %v206 = vunpack.c.l.b16 %v138
    %v207 = vpack.c.b16 %v176, %v175
    %v208 = vpack.c.b16 %v178, %v177
    %v209 = vpack.c.b16 %v180, %v179
    %v210 = vpack.c.b16 %v182, %v181
    %v211 = vpack.c.b16 %v184, %v183
    %v212 = vpack.c.b16 %v186, %v185
    %v213 = vpack.c.b16 %v188, %v187
    %v214 = vpack.c.b16 %v190, %v189
    %v215 = vpack.c.b16 %v192, %v191
    %v216 = vpack.c.b16 %v194, %v193
    %v217 = vpack.c.b16 %v196, %v195
    %v218 = vpack.c.b16 %v198, %v197
    %v219 = vpack.c.b16 %v200, %v199
    %v220 = vpack.c.b16 %v202, %v201
    %v221 = vpack.c.b16 %v204, %v203
    %v222 = vpack.c.b16 %v206, %v205
    %v227 = vunpack.c.l.b16 %v139
    %v228 = vunpack.c.l.b16 %v140
    %v229 = vunpack.c.l.b16 %v141
    %v230 = vunpack.c.l.b16 %v142
    %v231 = vpack.c.b16 %v228, %v227
    %v232 = vpack.c.b16 %v230, %v229
    %vm235 = vcmask 261120
    %v237 = vsel %vm235, %v207, 0
    %v240 = vsel %vm235, %v208, 0
    %v243 = vsel %vm235, %v209, 0
    %v246 = vsel %vm235, %v210, 0
    %v249 = vsel %vm235, %v211, 0
    %v252 = vsel %vm235, %v212, 0
    %v255 = vsel %vm235, %v213, 0
    %v258 = vsel %vm235, %v214, 0
    %v261 = vsel %vm235, %v215, 0
    %v264 = vsel %vm235, %v216, 0
    %v267 = vsel %vm235, %v217, 0
    %v270 = vsel %vm235, %v218, 0
    %v273 = vsel %vm235, %v219, 0
    %v276 = vsel %vm235, %v220, 0
    %v279 = vsel %vm235, %v221, 0
    %v282 = vsel %vm235, %v222, 0
    %284 = vmatprep.subr.bf16.mxu0 0
    %285 = vmatpush1.bf16.msra.mxu0 %v231
    %286 = vmatprep.subr.bf16.mxu0 0
    %287 = vmatpush1.bf16.msra.mxu0 %v232
    %288 = vmatprep.subr.bf16.mxu0 0
    %289 = vmatpush1.bf16.msra.mxu0 0
    %290 = vmatprep.subr.bf16.mxu0 0
    %291 = vmatpush1.bf16.msra.mxu0 0
    %292 = vmatprep.subr.bf16.mxu0 0
    %293 = vmatpush1.bf16.msra.mxu0 0
    %294 = vmatprep.subr.bf16.mxu0 0
    %295 = vmatpush1.bf16.msra.mxu0 0
    %296 = vmatprep.subr.bf16.mxu0 0
    %297 = vmatpush1.bf16.msra.mxu0 0
    %298 = vmatprep.subr.bf16.mxu0 0
    %299 = vmatpush1.bf16.msra.mxu0 0
    %300 = vmatprep.subr.bf16.mxu0 0
    %301 = vmatpush1.bf16.msra.mxu0 0
    %302 = vmatprep.subr.bf16.mxu0 0
    %303 = vmatpush1.bf16.msra.mxu0 0
    %304 = vmatprep.subr.bf16.mxu0 0
    %305 = vmatpush1.bf16.msra.mxu0 0
    %306 = vmatprep.subr.bf16.mxu0 0
    %307 = vmatpush1.bf16.msra.mxu0 0
    %308 = vmatprep.subr.bf16.mxu0 0
    %309 = vmatpush1.bf16.msra.mxu0 0
    %310 = vmatprep.subr.bf16.mxu0 0
    %311 = vmatpush1.bf16.msra.mxu0 0
    %312 = vmatprep.subr.bf16.mxu0 0
    %313 = vmatpush1.bf16.msra.mxu0 0
    %314 = vmatprep.subr.bf16.mxu0 0
    %315 = vmatpush1.bf16.msra.mxu0 0
    %316 = vmatprep.mubr.bf16.mxu0 0
    %317 = vmatmul.mubr.bf16.gmra.mrb[0].mxu0 %v237
    %v318 = vpop.f32.mrb[0].mxu0
    %v319 = vadd.f32 0.0, %v318
    %v320 = vpop.f32.mrb[0].mxu0
    %v321 = vpop.f32.mrb[0].mxu0
    %v322 = vadd.f32 0.0, %v321
    %v323 = vpop.f32.mrb[0].mxu0
    %324 = vmatprep.mubr.bf16.mxu0 0
    %325 = vmatmul.mubr.bf16.gmra.mrb[0].mxu0 %v240
    %v326 = vpop.f32.mrb[0].mxu0
    %v327 = vadd.f32 0.0, %v326
    %v328 = vpop.f32.mrb[0].mxu0
    %v329 = vpop.f32.mrb[0].mxu0
    %v330 = vadd.f32 0.0, %v329
    %v331 = vpop.f32.mrb[0].mxu0
    %332 = vmatprep.mubr.bf16.mxu0 0
    %333 = vmatmul.mubr.bf16.gmra.mrb[0].mxu0 %v243
    %v334 = vpop.f32.mrb[0].mxu0
    %v335 = vadd.f32 0.0, %v334
    %v336 = vpop.f32.mrb[0].mxu0
    %v337 = vpop.f32.mrb[0].mxu0
    %v338 = vadd.f32 0.0, %v337
    %v339 = vpop.f32.mrb[0].mxu0
    %340 = vmatprep.mubr.bf16.mxu0 0
    %341 = vmatmul.mubr.bf16.gmra.mrb[0].mxu0 %v246
    %v342 = vpop.f32.mrb[0].mxu0
    %v343 = vadd.f32 0.0, %v342
    %v344 = vpop.f32.mrb[0].mxu0
    %v345 = vpop.f32.mrb[0].mxu0
    %v346 = vadd.f32 0.0, %v345
    %v347 = vpop.f32.mrb[0].mxu0
    %348 = vmatprep.mubr.bf16.mxu0 0
    %349 = vmatmul.mubr.bf16.gmra.mrb[0].mxu0 %v249
    %v350 = vpop.f32.mrb[0].mxu0
    %v351 = vadd.f32 0.0, %v350
    %v352 = vpop.f32.mrb[0].mxu0
    %v353 = vpop.f32.mrb[0].mxu0
    %v354 = vadd.f32 0.0, %v353
    %v355 = vpop.f32.mrb[0].mxu0
    %356 = vmatprep.mubr.bf16.mxu0 0
    %357 = vmatmul.mubr.bf16.gmra.mrb[0].mxu0 %v252
    %v358 = vpop.f32.mrb[0].mxu0
    %v359 = vadd.f32 0.0, %v358
    %v360 = vpop.f32.mrb[0].mxu0
    %v361 = vpop.f32.mrb[0].mxu0
    %v362 = vadd.f32 0.0, %v361
    %v363 = vpop.f32.mrb[0].mxu0
    %364 = vmatprep.mubr.bf16.mxu0 0
    %365 = vmatmul.mubr.bf16.gmra.mrb[0].mxu0 %v255
    %v366 = vpop.f32.mrb[0].mxu0
    %v367 = vadd.f32 0.0, %v366
    %v368 = vpop.f32.mrb[0].mxu0
    %v369 = vpop.f32.mrb[0].mxu0
    %v370 = vadd.f32 0.0, %v369
    %v371 = vpop.f32.mrb[0].mxu0
    %372 = vmatprep.mubr.bf16.mxu0 0
    %373 = vmatmul.mubr.bf16.gmra.mrb[0].mxu0 %v258
    %v374 = vpop.f32.mrb[0].mxu0
    %v375 = vadd.f32 0.0, %v374
    %v376 = vpop.f32.mrb[0].mxu0
    %v377 = vpop.f32.mrb[0].mxu0
    %v378 = vadd.f32 0.0, %v377
    %v379 = vpop.f32.mrb[0].mxu0
    %380 = vmatprep.mubr.bf16.mxu0 0
    %381 = vmatmul.mubr.bf16.gmra.mrb[0].mxu0 %v261
    %v382 = vpop.f32.mrb[0].mxu0
    %v383 = vadd.f32 0.0, %v382
    %v384 = vpop.f32.mrb[0].mxu0
    %v385 = vpop.f32.mrb[0].mxu0
    %v386 = vadd.f32 0.0, %v385
    %v387 = vpop.f32.mrb[0].mxu0
    %388 = vmatprep.mubr.bf16.mxu0 0
    %389 = vmatmul.mubr.bf16.gmra.mrb[0].mxu0 %v264
    %v390 = vpop.f32.mrb[0].mxu0
    %v391 = vadd.f32 0.0, %v390
    %v392 = vpop.f32.mrb[0].mxu0
    %v393 = vpop.f32.mrb[0].mxu0
    %v394 = vadd.f32 0.0, %v393
    %v395 = vpop.f32.mrb[0].mxu0
    %396 = vmatprep.mubr.bf16.mxu0 0
    %397 = vmatmul.mubr.bf16.gmra.mrb[0].mxu0 %v267
    %v398 = vpop.f32.mrb[0].mxu0
    %v399 = vadd.f32 0.0, %v398
    %v400 = vpop.f32.mrb[0].mxu0
    %v401 = vpop.f32.mrb[0].mxu0
    %v402 = vadd.f32 0.0, %v401
    %v403 = vpop.f32.mrb[0].mxu0
    %404 = vmatprep.mubr.bf16.mxu0 0
    %405 = vmatmul.mubr.bf16.gmra.mrb[0].mxu0 %v270
    %v406 = vpop.f32.mrb[0].mxu0
    %v407 = vadd.f32 0.0, %v406
    %v408 = vpop.f32.mrb[0].mxu0
    %v409 = vpop.f32.mrb[0].mxu0
    %v410 = vadd.f32 0.0, %v409
    %v411 = vpop.f32.mrb[0].mxu0
    %412 = vmatprep.mubr.bf16.mxu0 0
    %413 = vmatmul.mubr.bf16.gmra.mrb[0].mxu0 %v273
    %v414 = vpop.f32.mrb[0].mxu0
    %v415 = vadd.f32 0.0, %v414
    %v416 = vpop.f32.mrb[0].mxu0
    %v417 = vpop.f32.mrb[0].mxu0
    %v418 = vadd.f32 0.0, %v417
    %v419 = vpop.f32.mrb[0].mxu0
    %420 = vmatprep.mubr.bf16.mxu0 0
    %421 = vmatmul.mubr.bf16.gmra.mrb[0].mxu0 %v276
    %v422 = vpop.f32.mrb[0].mxu0
    %v423 = vadd.f32 0.0, %v422
    %v424 = vpop.f32.mrb[0].mxu0
    %v425 = vpop.f32.mrb[0].mxu0
    %v426 = vadd.f32 0.0, %v425
    %v427 = vpop.f32.mrb[0].mxu0
    %428 = vmatprep.mubr.bf16.mxu0 0
    %429 = vmatmul.mubr.bf16.gmra.mrb[0].mxu0 %v279
    %v430 = vpop.f32.mrb[0].mxu0
    %v431 = vadd.f32 0.0, %v430
    %v432 = vpop.f32.mrb[0].mxu0
    %v433 = vpop.f32.mrb[0].mxu0
    %v434 = vadd.f32 0.0, %v433
    %v435 = vpop.f32.mrb[0].mxu0
    %436 = vmatprep.mubr.bf16.mxu0 0
    %437 = vmatmul.mubr.bf16.gmra.mrb[0].mxu0 %v282
    %v438 = vpop.f32.mrb[0].mxu0
    %v439 = vadd.f32 0.0, %v438
    %v440 = vpop.f32.mrb[0].mxu0
    %v441 = vpop.f32.mrb[0].mxu0
    %v442 = vadd.f32 0.0, %v441
    %v443 = vpop.f32.mrb[0].mxu0
    %444 = vdwg.mxu0
    %v445 = vpack.c.bf16 %v322, %v319
    %v446 = vpack.c.bf16 %v330, %v327
    %v447 = vpack.c.bf16 %v338, %v335
    %v448 = vpack.c.bf16 %v346, %v343
    %v449 = vpack.c.bf16 %v354, %v351
    %v450 = vpack.c.bf16 %v362, %v359
    %v451 = vpack.c.bf16 %v370, %v367
    %v452 = vpack.c.bf16 %v378, %v375
    %v453 = vpack.c.bf16 %v386, %v383
    %v454 = vpack.c.bf16 %v394, %v391
    %v455 = vpack.c.bf16 %v402, %v399
    %v456 = vpack.c.bf16 %v410, %v407
    %v457 = vpack.c.bf16 %v418, %v415
    %v458 = vpack.c.bf16 %v426, %v423
    %v459 = vpack.c.bf16 %v434, %v431
    %v460 = vpack.c.bf16 %v442, %v439
    %v461 = vld [vmem:[#allocation7] sm:$0xf]
    %v462 = vld [vmem:[#allocation7 + $0x4] sm:$0xf]
    %v463 = vld [vmem:[#allocation7 + $0x8] sm:$0xf]
    %v464 = vld [vmem:[#allocation7 + $0xc] sm:$0xf]
    %v469 = vunpack.c.l.b16 %v461
    %v470 = vunpack.c.l.b16 %v462
    %v471 = vunpack.c.l.b16 %v463
    %v472 = vunpack.c.l.b16 %v464
    %v473 = vpack.c.b16 %v470, %v469
    %v474 = vpack.c.b16 %v472, %v471
    %477 = vmatprep.subr.bf16.mxu0 0
    %478 = vmatpush1.bf16.msra.mxu0 %v473
    %479 = vmatprep.subr.bf16.mxu0 0
    %480 = vmatpush1.bf16.msra.mxu0 %v474
    %481 = vmatprep.subr.bf16.mxu0 0
    %482 = vmatpush1.bf16.msra.mxu0 0
    %483 = vmatprep.subr.bf16.mxu0 0
    %484 = vmatpush1.bf16.msra.mxu0 0
    %485 = vmatprep.subr.bf16.mxu0 0
    %486 = vmatpush1.bf16.msra.mxu0 0
    %487 = vmatprep.subr.bf16.mxu0 0
    %488 = vmatpush1.bf16.msra.mxu0 0
    %489 = vmatprep.subr.bf16.mxu0 0
    %490 = vmatpush1.bf16.msra.mxu0 0
    %491 = vmatprep.subr.bf16.mxu0 0
    %492 = vmatpush1.bf16.msra.mxu0 0
    %493 = vmatprep.subr.bf16.mxu0 0
    %494 = vmatpush1.bf16.msra.mxu0 0
    %495 = vmatprep.subr.bf16.mxu0 0
    %496 = vmatpush1.bf16.msra.mxu0 0
    %497 = vmatprep.subr.bf16.mxu0 0
    %498 = vmatpush1.bf16.msra.mxu0 0
    %499 = vmatprep.subr.bf16.mxu0 0
    %500 = vmatpush1.bf16.msra.mxu0 0
    %501 = vmatprep.subr.bf16.mxu0 0
    %502 = vmatpush1.bf16.msra.mxu0 0
    %503 = vmatprep.subr.bf16.mxu0 0
    %504 = vmatpush1.bf16.msra.mxu0 0
    %505 = vmatprep.subr.bf16.mxu0 0
    %506 = vmatpush1.bf16.msra.mxu0 0
    %507 = vmatprep.subr.bf16.mxu0 0
    %508 = vmatpush1.bf16.msra.mxu0 0
    %509 = vmatprep.mubr.bf16.mxu0 0
    %510 = vmatmul.mubr.bf16.gmra.mrb[0].mxu0 %v237
    %v511 = vpop.f32.mrb[0].mxu0
    %v512 = vadd.f32 0.0, %v511
    %v513 = vpop.f32.mrb[0].mxu0
    %v514 = vpop.f32.mrb[0].mxu0
    %v515 = vadd.f32 0.0, %v514
    %v516 = vpop.f32.mrb[0].mxu0
    %517 = vmatprep.mubr.bf16.mxu0 0
    %518 = vmatmul.mubr.bf16.gmra.mrb[0].mxu0 %v240
    %v519 = vpop.f32.mrb[0].mxu0
    %v520 = vadd.f32 0.0, %v519
    %v521 = vpop.f32.mrb[0].mxu0
    %v522 = vpop.f32.mrb[0].mxu0
    %v523 = vadd.f32 0.0, %v522
    %v524 = vpop.f32.mrb[0].mxu0
    %525 = vmatprep.mubr.bf16.mxu0 0
    %526 = vmatmul.mubr.bf16.gmra.mrb[0].mxu0 %v243
    %v527 = vpop.f32.mrb[0].mxu0
    %v528 = vadd.f32 0.0, %v527
    %v529 = vpop.f32.mrb[0].mxu0
    %v530 = vpop.f32.mrb[0].mxu0
    %v531 = vadd.f32 0.0, %v530
    %v532 = vpop.f32.mrb[0].mxu0
    %533 = vmatprep.mubr.bf16.mxu0 0
    %534 = vmatmul.mubr.bf16.gmra.mrb[0].mxu0 %v246
    %v535 = vpop.f32.mrb[0].mxu0
    %v536 = vadd.f32 0.0, %v535
    %v537 = vpop.f32.mrb[0].mxu0
    %v538 = vpop.f32.mrb[0].mxu0
    %v539 = vadd.f32 0.0, %v538
    %v540 = vpop.f32.mrb[0].mxu0
    %541 = vmatprep.mubr.bf16.mxu0 0
    %542 = vmatmul.mubr.bf16.gmra.mrb[0].mxu0 %v249
    %v543 = vpop.f32.mrb[0].mxu0
    %v544 = vadd.f32 0.0, %v543
    %v545 = vpop.f32.mrb[0].mxu0
    %v546 = vpop.f32.mrb[0].mxu0
    %v547 = vadd.f32 0.0, %v546
    %v548 = vpop.f32.mrb[0].mxu0
    %549 = vmatprep.mubr.bf16.mxu0 0
    %550 = vmatmul.mubr.bf16.gmra.mrb[0].mxu0 %v252
    %v551 = vpop.f32.mrb[0].mxu0
    %v552 = vadd.f32 0.0, %v551
    %v553 = vpop.f32.mrb[0].mxu0
    %v554 = vpop.f32.mrb[0].mxu0
    %v555 = vadd.f32 0.0, %v554
    %v556 = vpop.f32.mrb[0].mxu0
    %557 = vmatprep.mubr.bf16.mxu0 0
    %558 = vmatmul.mubr.bf16.gmra.mrb[0].mxu0 %v255
    %v559 = vpop.f32.mrb[0].mxu0
    %v560 = vadd.f32 0.0, %v559
    %v561 = vpop.f32.mrb[0].mxu0
    %v562 = vpop.f32.mrb[0].mxu0
    %v563 = vadd.f32 0.0, %v562
    %v564 = vpop.f32.mrb[0].mxu0
    %565 = vmatprep.mubr.bf16.mxu0 0
    %566 = vmatmul.mubr.bf16.gmra.mrb[0].mxu0 %v258
    %v567 = vpop.f32.mrb[0].mxu0
    %v568 = vadd.f32 0.0, %v567
    %v569 = vpop.f32.mrb[0].mxu0
    %v570 = vpop.f32.mrb[0].mxu0
    %v571 = vadd.f32 0.0, %v570
    %v572 = vpop.f32.mrb[0].mxu0
    %573 = vmatprep.mubr.bf16.mxu0 0
    %574 = vmatmul.mubr.bf16.gmra.mrb[0].mxu0 %v261
    %v575 = vpop.f32.mrb[0].mxu0
    %v576 = vadd.f32 0.0, %v575
    %v577 = vpop.f32.mrb[0].mxu0
    %v578 = vpop.f32.mrb[0].mxu0
    %v579 = vadd.f32 0.0, %v578
    %v580 = vpop.f32.mrb[0].mxu0
    %581 = vmatprep.mubr.bf16.mxu0 0
    %582 = vmatmul.mubr.bf16.gmra.mrb[0].mxu0 %v264
    %v583 = vpop.f32.mrb[0].mxu0
    %v584 = vadd.f32 0.0, %v583
    %v585 = vpop.f32.mrb[0].mxu0
    %v586 = vpop.f32.mrb[0].mxu0
    %v587 = vadd.f32 0.0, %v586
    %v588 = vpop.f32.mrb[0].mxu0
    %589 = vmatprep.mubr.bf16.mxu0 0
    %590 = vmatmul.mubr.bf16.gmra.mrb[0].mxu0 %v267
    %v591 = vpop.f32.mrb[0].mxu0
    %v592 = vadd.f32 0.0, %v591
    %v593 = vpop.f32.mrb[0].mxu0
    %v594 = vpop.f32.mrb[0].mxu0
    %v595 = vadd.f32 0.0, %v594
    %v596 = vpop.f32.mrb[0].mxu0
    %597 = vmatprep.mubr.bf16.mxu0 0
    %598 = vmatmul.mubr.bf16.gmra.mrb[0].mxu0 %v270
    %v599 = vpop.f32.mrb[0].mxu0
    %v600 = vadd.f32 0.0, %v599
    %v601 = vpop.f32.mrb[0].mxu0
    %v602 = vpop.f32.mrb[0].mxu0
    %v603 = vadd.f32 0.0, %v602
    %v604 = vpop.f32.mrb[0].mxu0
    %605 = vmatprep.mubr.bf16.mxu0 0
    %606 = vmatmul.mubr.bf16.gmra.mrb[0].mxu0 %v273
    %v607 = vpop.f32.mrb[0].mxu0
    %v608 = vadd.f32 0.0, %v607
    %v609 = vpop.f32.mrb[0].mxu0
    %v610 = vpop.f32.mrb[0].mxu0
    %v611 = vadd.f32 0.0, %v610
    %v612 = vpop.f32.mrb[0].mxu0
    %613 = vmatprep.mubr.bf16.mxu0 0
    %614 = vmatmul.mubr.bf16.gmra.mrb[0].mxu0 %v276
    %v615 = vpop.f32.mrb[0].mxu0
    %v616 = vadd.f32 0.0, %v615
    %v617 = vpop.f32.mrb[0].mxu0
    %v618 = vpop.f32.mrb[0].mxu0
    %v619 = vadd.f32 0.0, %v618
    %v620 = vpop.f32.mrb[0].mxu0
    %621 = vmatprep.mubr.bf16.mxu0 0
    %622 = vmatmul.mubr.bf16.gmra.mrb[0].mxu0 %v279
    %v623 = vpop.f32.mrb[0].mxu0
    %v624 = vadd.f32 0.0, %v623
    %v625 = vpop.f32.mrb[0].mxu0
    %v626 = vpop.f32.mrb[0].mxu0
    %v627 = vadd.f32 0.0, %v626
    %v628 = vpop.f32.mrb[0].mxu0
    %629 = vmatprep.mubr.bf16.mxu0 0
    %630 = vmatmul.mubr.bf16.gmra.mrb[0].mxu0 %v282
    %v631 = vpop.f32.mrb[0].mxu0
    %v632 = vadd.f32 0.0, %v631
    %v633 = vpop.f32.mrb[0].mxu0
    %v634 = vpop.f32.mrb[0].mxu0
    %v635 = vadd.f32 0.0, %v634
    %v636 = vpop.f32.mrb[0].mxu0
    %637 = vdwg.mxu0
    %v638 = vpack.c.bf16 %v515, %v512
    %v639 = vpack.c.bf16 %v523, %v520
    %v640 = vpack.c.bf16 %v531, %v528
    %v641 = vpack.c.bf16 %v539, %v536
    %v642 = vpack.c.bf16 %v547, %v544
    %v643 = vpack.c.bf16 %v555, %v552
    %v644 = vpack.c.bf16 %v563, %v560
    %v645 = vpack.c.bf16 %v571, %v568
    %v646 = vpack.c.bf16 %v579, %v576
    %v647 = vpack.c.bf16 %v587, %v584
    %v648 = vpack.c.bf16 %v595, %v592
    %v649 = vpack.c.bf16 %v603, %v600
    %v650 = vpack.c.bf16 %v611, %v608
    %v651 = vpack.c.bf16 %v619, %v616
    %v652 = vpack.c.bf16 %v627, %v624
    %v653 = vpack.c.bf16 %v635, %v632
    %v654 = vld [vmem:[#allocation8] sm:$0xf]
    %v655 = vld [vmem:[#allocation8 + $0x4] sm:$0xf]
    %v656 = vld [vmem:[#allocation8 + $0x8] sm:$0xf]
    %v657 = vld [vmem:[#allocation8 + $0xc] sm:$0xf]
    %v662 = vunpack.c.l.b16 %v654
    %v663 = vunpack.c.l.b16 %v655
    %v664 = vunpack.c.l.b16 %v656
    %v665 = vunpack.c.l.b16 %v657
    %v666 = vpack.c.b16 %v663, %v662
    %v667 = vpack.c.b16 %v665, %v664
    %670 = vmatprep.subr.bf16.mxu0 0
    %671 = vmatpush1.bf16.msra.mxu0 %v666
    %672 = vmatprep.subr.bf16.mxu0 0
    %673 = vmatpush1.bf16.msra.mxu0 %v667
    %674 = vmatprep.subr.bf16.mxu0 0
    %675 = vmatpush1.bf16.msra.mxu0 0
    %676 = vmatprep.subr.bf16.mxu0 0
    %677 = vmatpush1.bf16.msra.mxu0 0
    %678 = vmatprep.subr.bf16.mxu0 0
    %679 = vmatpush1.bf16.msra.mxu0 0
    %680 = vmatprep.subr.bf16.mxu0 0
    %681 = vmatpush1.bf16.msra.mxu0 0
    %682 = vmatprep.subr.bf16.mxu0 0
    %683 = vmatpush1.bf16.msra.mxu0 0
    %684 = vmatprep.subr.bf16.mxu0 0
    %685 = vmatpush1.bf16.msra.mxu0 0
    %686 = vmatprep.subr.bf16.mxu0 0
    %687 = vmatpush1.bf16.msra.mxu0 0
    %688 = vmatprep.subr.bf16.mxu0 0
    %689 = vmatpush1.bf16.msra.mxu0 0
    %690 = vmatprep.subr.bf16.mxu0 0
    %691 = vmatpush1.bf16.msra.mxu0 0
    %692 = vmatprep.subr.bf16.mxu0 0
    %693 = vmatpush1.bf16.msra.mxu0 0
    %694 = vmatprep.subr.bf16.mxu0 0
    %695 = vmatpush1.bf16.msra.mxu0 0
    %696 = vmatprep.subr.bf16.mxu0 0
    %697 = vmatpush1.bf16.msra.mxu0 0
    %698 = vmatprep.subr.bf16.mxu0 0
    %699 = vmatpush1.bf16.msra.mxu0 0
    %700 = vmatprep.subr.bf16.mxu0 0
    %701 = vmatpush1.bf16.msra.mxu0 0
    %702 = vmatprep.mubr.bf16.mxu0 0
    %703 = vmatmul.mubr.bf16.gmra.mrb[0].mxu0 %v237
    %v704 = vpop.f32.mrb[0].mxu0
    %v705 = vadd.f32 0.0, %v704
    %v706 = vpop.f32.mrb[0].mxu0
    %v707 = vpop.f32.mrb[0].mxu0
    %v708 = vadd.f32 0.0, %v707
    %v709 = vpop.f32.mrb[0].mxu0
    %710 = vmatprep.mubr.bf16.mxu0 0
    %711 = vmatmul.mubr.bf16.gmra.mrb[0].mxu0 %v240
    %v712 = vpop.f32.mrb[0].mxu0
    %v713 = vadd.f32 0.0, %v712
    %v714 = vpop.f32.mrb[0].mxu0
    %v715 = vpop.f32.mrb[0].mxu0
    %v716 = vadd.f32 0.0, %v715
    %v717 = vpop.f32.mrb[0].mxu0
    %718 = vmatprep.mubr.bf16.mxu0 0
    %719 = vmatmul.mubr.bf16.gmra.mrb[0].mxu0 %v243
    %v720 = vpop.f32.mrb[0].mxu0
    %v721 = vadd.f32 0.0, %v720
    %v722 = vpop.f32.mrb[0].mxu0
    %v723 = vpop.f32.mrb[0].mxu0
    %v724 = vadd.f32 0.0, %v723
    %v725 = vpop.f32.mrb[0].mxu0
    %726 = vmatprep.mubr.bf16.mxu0 0
    %727 = vmatmul.mubr.bf16.gmra.mrb[0].mxu0 %v246
    %v728 = vpop.f32.mrb[0].mxu0
    %v729 = vadd.f32 0.0, %v728
    %v730 = vpop.f32.mrb[0].mxu0
    %v731 = vpop.f32.mrb[0].mxu0
    %v732 = vadd.f32 0.0, %v731
    %v733 = vpop.f32.mrb[0].mxu0
    %734 = vmatprep.mubr.bf16.mxu0 0
    %735 = vmatmul.mubr.bf16.gmra.mrb[0].mxu0 %v249
    %v736 = vpop.f32.mrb[0].mxu0
    %v737 = vadd.f32 0.0, %v736
    %v738 = vpop.f32.mrb[0].mxu0
    %v739 = vpop.f32.mrb[0].mxu0
    %v740 = vadd.f32 0.0, %v739
    %v741 = vpop.f32.mrb[0].mxu0
    %742 = vmatprep.mubr.bf16.mxu0 0
    %743 = vmatmul.mubr.bf16.gmra.mrb[0].mxu0 %v252
    %v744 = vpop.f32.mrb[0].mxu0
    %v745 = vadd.f32 0.0, %v744
    %v746 = vpop.f32.mrb[0].mxu0
    %v747 = vpop.f32.mrb[0].mxu0
    %v748 = vadd.f32 0.0, %v747
    %v749 = vpop.f32.mrb[0].mxu0
    %750 = vmatprep.mubr.bf16.mxu0 0
    %751 = vmatmul.mubr.bf16.gmra.mrb[0].mxu0 %v255
    %v752 = vpop.f32.mrb[0].mxu0
    %v753 = vadd.f32 0.0, %v752
    %v754 = vpop.f32.mrb[0].mxu0
    %v755 = vpop.f32.mrb[0].mxu0
    %v756 = vadd.f32 0.0, %v755
    %v757 = vpop.f32.mrb[0].mxu0
    %758 = vmatprep.mubr.bf16.mxu0 0
    %759 = vmatmul.mubr.bf16.gmra.mrb[0].mxu0 %v258
    %v760 = vpop.f32.mrb[0].mxu0
    %v761 = vadd.f32 0.0, %v760
    %v762 = vpop.f32.mrb[0].mxu0
    %v763 = vpop.f32.mrb[0].mxu0
    %v764 = vadd.f32 0.0, %v763
    %v765 = vpop.f32.mrb[0].mxu0
    %766 = vmatprep.mubr.bf16.mxu0 0
    %767 = vmatmul.mubr.bf16.gmra.mrb[0].mxu0 %v261
    %v768 = vpop.f32.mrb[0].mxu0
    %v769 = vadd.f32 0.0, %v768
    %v770 = vpop.f32.mrb[0].mxu0
    %v771 = vpop.f32.mrb[0].mxu0
    %v772 = vadd.f32 0.0, %v771
    %v773 = vpop.f32.mrb[0].mxu0
    %774 = vmatprep.mubr.bf16.mxu0 0
    %775 = vmatmul.mubr.bf16.gmra.mrb[0].mxu0 %v264
    %v776 = vpop.f32.mrb[0].mxu0
    %v777 = vadd.f32 0.0, %v776
    %v778 = vpop.f32.mrb[0].mxu0
    %v779 = vpop.f32.mrb[0].mxu0
    %v780 = vadd.f32 0.0, %v779
    %v781 = vpop.f32.mrb[0].mxu0
    %782 = vmatprep.mubr.bf16.mxu0 0
    %783 = vmatmul.mubr.bf16.gmra.mrb[0].mxu0 %v267
    %v784 = vpop.f32.mrb[0].mxu0
    %v785 = vadd.f32 0.0, %v784
    %v786 = vpop.f32.mrb[0].mxu0
    %v787 = vpop.f32.mrb[0].mxu0
    %v788 = vadd.f32 0.0, %v787
    %v789 = vpop.f32.mrb[0].mxu0
    %790 = vmatprep.mubr.bf16.mxu0 0
    %791 = vmatmul.mubr.bf16.gmra.mrb[0].mxu0 %v270
    %v792 = vpop.f32.mrb[0].mxu0
    %v793 = vadd.f32 0.0, %v792
    %v794 = vpop.f32.mrb[0].mxu0
    %v795 = vpop.f32.mrb[0].mxu0
    %v796 = vadd.f32 0.0, %v795
    %v797 = vpop.f32.mrb[0].mxu0
    %798 = vmatprep.mubr.bf16.mxu0 0
    %799 = vmatmul.mubr.bf16.gmra.mrb[0].mxu0 %v273
    %v800 = vpop.f32.mrb[0].mxu0
    %v801 = vadd.f32 0.0, %v800
    %v802 = vpop.f32.mrb[0].mxu0
    %v803 = vpop.f32.mrb[0].mxu0
    %v804 = vadd.f32 0.0, %v803
    %v805 = vpop.f32.mrb[0].mxu0
    %806 = vmatprep.mubr.bf16.mxu0 0
    %807 = vmatmul.mubr.bf16.gmra.mrb[0].mxu0 %v276
    %v808 = vpop.f32.mrb[0].mxu0
    %v809 = vadd.f32 0.0, %v808
    %v810 = vpop.f32.mrb[0].mxu0
    %v811 = vpop.f32.mrb[0].mxu0
    %v812 = vadd.f32 0.0, %v811
    %v813 = vpop.f32.mrb[0].mxu0
    %814 = vmatprep.mubr.bf16.mxu0 0
    %815 = vmatmul.mubr.bf16.gmra.mrb[0].mxu0 %v279
    %v816 = vpop.f32.mrb[0].mxu0
    %v817 = vadd.f32 0.0, %v816
    %v818 = vpop.f32.mrb[0].mxu0
    %v819 = vpop.f32.mrb[0].mxu0
    %v820 = vadd.f32 0.0, %v819
    %v821 = vpop.f32.mrb[0].mxu0
    %822 = vmatprep.mubr.bf16.mxu0 0
    %823 = vmatmul.mubr.bf16.gmra.mrb[0].mxu0 %v282
    %v824 = vpop.f32.mrb[0].mxu0
    %v825 = vadd.f32 0.0, %v824
    %v826 = vpop.f32.mrb[0].mxu0
    %v827 = vpop.f32.mrb[0].mxu0
    %v828 = vadd.f32 0.0, %v827
    %v829 = vpop.f32.mrb[0].mxu0
    %830 = vdwg.mxu0
    %v831 = vpack.c.bf16 %v708, %v705
    %v832 = vpack.c.bf16 %v716, %v713
    %v833 = vpack.c.bf16 %v724, %v721
    %v834 = vpack.c.bf16 %v732, %v729
    %v835 = vpack.c.bf16 %v740, %v737
    %v836 = vpack.c.bf16 %v748, %v745
    %v837 = vpack.c.bf16 %v756, %v753
    %v838 = vpack.c.bf16 %v764, %v761
    %v839 = vpack.c.bf16 %v772, %v769
    %v840 = vpack.c.bf16 %v780, %v777
    %v841 = vpack.c.bf16 %v788, %v785
    %v842 = vpack.c.bf16 %v796, %v793
    %v843 = vpack.c.bf16 %v804, %v801
    %v844 = vpack.c.bf16 %v812, %v809
    %v845 = vpack.c.bf16 %v820, %v817
    %v846 = vpack.c.bf16 %v828, %v825
    %v847 = vld [vmem:[#allocation11] sm:$0xff]
    %v848 = vld [vmem:[#allocation11 + $0x8] sm:$0xff]
    %vm849 = vcmask 130048
    %v851 = vsel %vm849, %v445, 0
    %v854 = vsel %vm849, %v638, 0
    %856 = vmatprep.subr.bf16.mxu0 0
    %857 = vmatpush1.bf16.xpose.msra.mxu0 %v854
    %858 = vmatprep.subr.bf16.mxu0 0
    %859 = vmatpush1.bf16.xpose.msra.mxu0 0
    %860 = vmatprep.subr.bf16.mxu0 0
    %861 = vmatpush1.bf16.xpose.msra.mxu0 0
    %862 = vmatprep.subr.bf16.mxu0 0
    %863 = vmatpush1.bf16.xpose.msra.mxu0 0
    %864 = vmatprep.subr.bf16.mxu0 0
    %865 = vmatpush1.bf16.xpose.msra.mxu0 0
    %866 = vmatprep.subr.bf16.mxu0 0
    %867 = vmatpush1.bf16.xpose.msra.mxu0 0
    %868 = vmatprep.subr.bf16.mxu0 0
    %869 = vmatpush1.bf16.xpose.msra.mxu0 0
    %870 = vmatprep.subr.bf16.mxu0 0
    %871 = vmatpush1.bf16.xpose.msra.mxu0 0
    %872 = vmatprep.subr.bf16.mxu0 0
    %873 = vmatpush1.bf16.xpose.msra.mxu0 0
    %874 = vmatprep.subr.bf16.mxu0 0
    %875 = vmatpush1.bf16.xpose.msra.mxu0 0
    %876 = vmatprep.subr.bf16.mxu0 0
    %877 = vmatpush1.bf16.xpose.msra.mxu0 0
    %878 = vmatprep.subr.bf16.mxu0 0
    %879 = vmatpush1.bf16.xpose.msra.mxu0 0
    %880 = vmatprep.subr.bf16.mxu0 0
    %881 = vmatpush1.bf16.xpose.msra.mxu0 0
    %882 = vmatprep.subr.bf16.mxu0 0
    %883 = vmatpush1.bf16.xpose.msra.mxu0 0
    %884 = vmatprep.subr.bf16.mxu0 0
    %885 = vmatpush1.bf16.xpose.msra.mxu0 0
    %886 = vmatprep.subr.bf16.mxu0 0
    %887 = vmatpush1.bf16.xpose.msra.mxu0 0
    %888 = vmatprep.mubr.bf16.mxu0 0
    %889 = vmatmul.mubr.bf16.gmra.mrb[0].mxu0 %v851
    %v890 = vpop.f32.mrb[0].mxu0
    %v891 = vadd.f32 %v847, %v890
    %v892 = vpop.f32.mrb[0].mxu0
    %v893 = vpop.f32.mrb[0].mxu0
    %v894 = vadd.f32 %v848, %v893
    %v895 = vpop.f32.mrb[0].mxu0
    %896 = vdwg.mxu0
    %v898 = vsel %vm849, %v446, 0
    %v901 = vsel %vm849, %v639, 0
    %903 = vmatprep.subr.bf16.mxu0 0
    %904 = vmatpush1.bf16.xpose.msra.mxu0 %v901
    %905 = vmatprep.subr.bf16.mxu0 0
    %906 = vmatpush1.bf16.xpose.msra.mxu0 0
    %907 = vmatprep.subr.bf16.mxu0 0
    %908 = vmatpush1.bf16.xpose.msra.mxu0 0
    %909 = vmatprep.subr.bf16.mxu0 0
    %910 = vmatpush1.bf16.xpose.msra.mxu0 0
    %911 = vmatprep.subr.bf16.mxu0 0
    %912 = vmatpush1.bf16.xpose.msra.mxu0 0
    %913 = vmatprep.subr.bf16.mxu0 0
    %914 = vmatpush1.bf16.xpose.msra.mxu0 0
    %915 = vmatprep.subr.bf16.mxu0 0
    %916 = vmatpush1.bf16.xpose.msra.mxu0 0
    %917 = vmatprep.subr.bf16.mxu0 0
    %918 = vmatpush1.bf16.xpose.msra.mxu0 0
    %919 = vmatprep.subr.bf16.mxu0 0
    %920 = vmatpush1.bf16.xpose.msra.mxu0 0
    %921 = vmatprep.subr.bf16.mxu0 0
    %922 = vmatpush1.bf16.xpose.msra.mxu0 0
    %923 = vmatprep.subr.bf16.mxu0 0
    %924 = vmatpush1.bf16.xpose.msra.mxu0 0
    %925 = vmatprep.subr.bf16.mxu0 0
    %926 = vmatpush1.bf16.xpose.msra.mxu0 0
    %927 = vmatprep.subr.bf16.mxu0 0
    %928 = vmatpush1.bf16.xpose.msra.mxu0 0
    %929 = vmatprep.subr.bf16.mxu0 0
    %930 = vmatpush1.bf16.xpose.msra.mxu0 0
    %931 = vmatprep.subr.bf16.mxu0 0
    %932 = vmatpush1.bf16.xpose.msra.mxu0 0
    %933 = vmatprep.subr.bf16.mxu0 0
    %934 = vmatpush1.bf16.xpose.msra.mxu0 0
    %935 = vmatprep.mubr.bf16.mxu0 0
    %936 = vmatmul.mubr.bf16.gmra.mrb[0].mxu0 %v898
    %v937 = vpop.f32.mrb[0].mxu0
    %v938 = vadd.f32 %v847, %v937
    %v939 = vpop.f32.mrb[0].mxu0
    %v940 = vpop.f32.mrb[0].mxu0
    %v941 = vadd.f32 %v848, %v940
    %v942 = vpop.f32.mrb[0].mxu0
    %943 = vdwg.mxu0
    %v945 = vsel %vm849, %v447, 0
    %v948 = vsel %vm849, %v640, 0
    %950 = vmatprep.subr.bf16.mxu0 0
    %951 = vmatpush1.bf16.xpose.msra.mxu0 %v948
    %952 = vmatprep.subr.bf16.mxu0 0
    %953 = vmatpush1.bf16.xpose.msra.mxu0 0
    %954 = vmatprep.subr.bf16.mxu0 0
    %955 = vmatpush1.bf16.xpose.msra.mxu0 0
    %956 = vmatprep.subr.bf16.mxu0 0
    %957 = vmatpush1.bf16.xpose.msra.mxu0 0
    %958 = vmatprep.subr.bf16.mxu0 0
    %959 = vmatpush1.bf16.xpose.msra.mxu0 0
    %960 = vmatprep.subr.bf16.mxu0 0
    %961 = vmatpush1.bf16.xpose.msra.mxu0 0
    %962 = vmatprep.subr.bf16.mxu0 0
    %963 = vmatpush1.bf16.xpose.msra.mxu0 0
    %964 = vmatprep.subr.bf16.mxu0 0
    %965 = vmatpush1.bf16.xpose.msra.mxu0 0
    %966 = vmatprep.subr.bf16.mxu0 0
    %967 = vmatpush1.bf16.xpose.msra.mxu0 0
    %968 = vmatprep.subr.bf16.mxu0 0
    %969 = vmatpush1.bf16.xpose.msra.mxu0 0
    %970 = vmatprep.subr.bf16.mxu0 0
    %971 = vmatpush1.bf16.xpose.msra.mxu0 0
    %972 = vmatprep.subr.bf16.mxu0 0
    %973 = vmatpush1.bf16.xpose.msra.mxu0 0
    %974 = vmatprep.subr.bf16.mxu0 0
    %975 = vmatpush1.bf16.xpose.msra.mxu0 0
    %976 = vmatprep.subr.bf16.mxu0 0
    %977 = vmatpush1.bf16.xpose.msra.mxu0 0
    %978 = vmatprep.subr.bf16.mxu0 0
    %979 = vmatpush1.bf16.xpose.msra.mxu0 0
    %980 = vmatprep.subr.bf16.mxu0 0
    %981 = vmatpush1.bf16.xpose.msra.mxu0 0
    %982 = vmatprep.mubr.bf16.mxu0 0
    %983 = vmatmul.mubr.bf16.gmra.mrb[0].mxu0 %v945
    %v984 = vpop.f32.mrb[0].mxu0
    %v985 = vadd.f32 %v847, %v984
    %v986 = vpop.f32.mrb[0].mxu0
    %v987 = vpop.f32.mrb[0].mxu0
    %v988 = vadd.f32 %v848, %v987
    %v989 = vpop.f32.mrb[0].mxu0
    %990 = vdwg.mxu0
    %v992 = vsel %vm849, %v448, 0
    %v995 = vsel %vm849, %v641, 0
    %997 = vmatprep.subr.bf16.mxu0 0
    %998 = vmatpush1.bf16.xpose.msra.mxu0 %v995
    %999 = vmatprep.subr.bf16.mxu0 0
    %1000 = vmatpush1.bf16.xpose.msra.mxu0 0
    %1001 = vmatprep.subr.bf16.mxu0 0
    %1002 = vmatpush1.bf16.xpose.msra.mxu0 0
    %1003 = vmatprep.subr.bf16.mxu0 0
    %1004 = vmatpush1.bf16.xpose.msra.mxu0 0
    %1005 = vmatprep.subr.bf16.mxu0 0
    %1006 = vmatpush1.bf16.xpose.msra.mxu0 0
    %1007 = vmatprep.subr.bf16.mxu0 0
    %1008 = vmatpush1.bf16.xpose.msra.mxu0 0
    %1009 = vmatprep.subr.bf16.mxu0 0
    %1010 = vmatpush1.bf16.xpose.msra.mxu0 0
    %1011 = vmatprep.subr.bf16.mxu0 0
    %1012 = vmatpush1.bf16.xpose.msra.mxu0 0
    %1013 = vmatprep.subr.bf16.mxu0 0
    %1014 = vmatpush1.bf16.xpose.msra.mxu0 0
    %1015 = vmatprep.subr.bf16.mxu0 0
    %1016 = vmatpush1.bf16.xpose.msra.mxu0 0
    %1017 = vmatprep.subr.bf16.mxu0 0
    %1018 = vmatpush1.bf16.xpose.msra.mxu0 0
    %1019 = vmatprep.subr.bf16.mxu0 0
    %1020 = vmatpush1.bf16.xpose.msra.mxu0 0
    %1021 = vmatprep.subr.bf16.mxu0 0
    %1022 = vmatpush1.bf16.xpose.msra.mxu0 0
    %1023 = vmatprep.subr.bf16.mxu0 0
    %1024 = vmatpush1.bf16.xpose.msra.mxu0 0
    %1025 = vmatprep.subr.bf16.mxu0 0
    %1026 = vmatpush1.bf16.xpose.msra.mxu0 0
    %1027 = vmatprep.subr.bf16.mxu0 0
    %1028 = vmatpush1.bf16.xpose.msra.mxu0 0
    %1029 = vmatprep.mubr.bf16.mxu0 0
    %1030 = vmatmul.mubr.bf16.gmra.mrb[0].mxu0 %v992
    %v1031 = vpop.f32.mrb[0].mxu0
    %v1032 = vadd.f32 %v847, %v1031
    %v1033 = vpop.f32.mrb[0].mxu0
    %v1034 = vpop.f32.mrb[0].mxu0
    %v1035 = vadd.f32 %v848, %v1034
    %v1036 = vpop.f32.mrb[0].mxu0
    %1037 = vdwg.mxu0
    %v1039 = vsel %vm849, %v449, 0
    %v1042 = vsel %vm849, %v642, 0
    %1044 = vmatprep.subr.bf16.mxu0 0
    %1045 = vmatpush1.bf16.xpose.msra.mxu0 %v1042
    %1046 = vmatprep.subr.bf16.mxu0 0
    %1047 = vmatpush1.bf16.xpose.msra.mxu0 0
    %1048 = vmatprep.subr.bf16.mxu0 0
    %1049 = vmatpush1.bf16.xpose.msra.mxu0 0
    %1050 = vmatprep.subr.bf16.mxu0 0
    %1051 = vmatpush1.bf16.xpose.msra.mxu0 0
    %1052 = vmatprep.subr.bf16.mxu0 0
    %1053 = vmatpush1.bf16.xpose.msra.mxu0 0
    %1054 = vmatprep.subr.bf16.mxu0 0
    %1055 = vmatpush1.bf16.xpose.msra.mxu0 0
    %1056 = vmatprep.subr.bf16.mxu0 0
    %1057 = vmatpush1.bf16.xpose.msra.mxu0 0
    %1058 = vmatprep.subr.bf16.mxu0 0
    %1059 = vmatpush1.bf16.xpose.msra.mxu0 0
    %1060 = vmatprep.subr.bf16.mxu0 0
    %1061 = vmatpush1.bf16.xpose.msra.mxu0 0
    %1062 = vmatprep.subr.bf16.mxu0 0
    %1063 = vmatpush1.bf16.xpose.msra.mxu0 0
    %1064 = vmatprep.subr.bf16.mxu0 0
    %1065 = vmatpush1.bf16.xpose.msra.mxu0 0
    %1066 = vmatprep.subr.bf16.mxu0 0
    %1067 = vmatpush1.bf16.xpose.msra.mxu0 0
    %1068 = vmatprep.subr.bf16.mxu0 0
    %1069 = vmatpush1.bf16.xpose.msra.mxu0 0
    %1070 = vmatprep.subr.bf16.mxu0 0
    %1071 = vmatpush1.bf16.xpose.msra.mxu0 0
    %1072 = vmatprep.subr.bf16.mxu0 0
    %1073 = vmatpush1.bf16.xpose.msra.mxu0 0
    %1074 = vmatprep.subr.bf16.mxu0 0
    %1075 = vmatpush1.bf16.xpose.msra.mxu0 0
    %1076 = vmatprep.mubr.bf16.mxu0 0
    %1077 = vmatmul.mubr.bf16.gmra.mrb[0].mxu0 %v1039
    %v1078 = vpop.f32.mrb[0].mxu0
    %v1079 = vadd.f32 %v847, %v1078
    %v1080 = vpop.f32.mrb[0].mxu0
    %v1081 = vpop.f32.mrb[0].mxu0
    %v1082 = vadd.f32 %v848, %v1081
    %v1083 = vpop.f32.mrb[0].mxu0
    %1084 = vdwg.mxu0
    %v1086 = vsel %vm849, %v450, 0
    %v1089 = vsel %vm849, %v643, 0
    %1091 = vmatprep.subr.bf16.mxu0 0
    %1092 = vmatpush1.bf16.xpose.msra.mxu0 %v1089
    %1093 = vmatprep.subr.bf16.mxu0 0
    %1094 = vmatpush1.bf16.xpose.msra.mxu0 0
    %1095 = vmatprep.subr.bf16.mxu0 0
    %1096 = vmatpush1.bf16.xpose.msra.mxu0 0
    %1097 = vmatprep.subr.bf16.mxu0 0
    %1098 = vmatpush1.bf16.xpose.msra.mxu0 0
    %1099 = vmatprep.subr.bf16.mxu0 0
    %1100 = vmatpush1.bf16.xpose.msra.mxu0 0
    %1101 = vmatprep.subr.bf16.mxu0 0
    %1102 = vmatpush1.bf16.xpose.msra.mxu0 0
    %1103 = vmatprep.subr.bf16.mxu0 0
    %1104 = vmatpush1.bf16.xpose.msra.mxu0 0
    %1105 = vmatprep.subr.bf16.mxu0 0
    %1106 = vmatpush1.bf16.xpose.msra.mxu0 0
    %1107 = vmatprep.subr.bf16.mxu0 0
    %1108 = vmatpush1.bf16.xpose.msra.mxu0 0
    %1109 = vmatprep.subr.bf16.mxu0 0
    %1110 = vmatpush1.bf16.xpose.msra.mxu0 0
    %1111 = vmatprep.subr.bf16.mxu0 0
    %1112 = vmatpush1.bf16.xpose.msra.mxu0 0
    %1113 = vmatprep.subr.bf16.mxu0 0
    %1114 = vmatpush1.bf16.xpose.msra.mxu0 0
    %1115 = vmatprep.subr.bf16.mxu0 0
    %1116 = vmatpush1.bf16.xpose.msra.mxu0 0
    %1117 = vmatprep.subr.bf16.mxu0 0
    %1118 = vmatpush1.bf16.xpose.msra.mxu0 0
    %1119 = vmatprep.subr.bf16.mxu0 0
    %1120 = vmatpush1.bf16.xpose.msra.mxu0 0
    %1121 = vmatprep.subr.bf16.mxu0 0
    %1122 = vmatpush1.bf16.xpose.msra.mxu0 0
    %1123 = vmatprep.mubr.bf16.mxu0 0
    %1124 = vmatmul.mubr.bf16.gmra.mrb[0].mxu0 %v1086
    %v1125 = vpop.f32.mrb[0].mxu0
    %v1126 = vadd.f32 %v847, %v1125
    %v1127 = vpop.f32.mrb[0].mxu0
    %v1128 = vpop.f32.mrb[0].mxu0
    %v1129 = vadd.f32 %v848, %v1128
    %v1130 = vpop.f32.mrb[0].mxu0
    %1131 = vdwg.mxu0
    %v1133 = vsel %vm849, %v451, 0
    %v1136 = vsel %vm849, %v644, 0
    %1138 = vmatprep.subr.bf16.mxu0 0
    %1139 = vmatpush1.bf16.xpose.msra.mxu0 %v1136
    %1140 = vmatprep.subr.bf16.mxu0 0
    %1141 = vmatpush1.bf16.xpose.msra.mxu0 0
    %1142 = vmatprep.subr.bf16.mxu0 0
    %1143 = vmatpush1.bf16.xpose.msra.mxu0 0
    %1144 = vmatprep.subr.bf16.mxu0 0
    %1145 = vmatpush1.bf16.xpose.msra.mxu0 0
    %1146 = vmatprep.subr.bf16.mxu0 0
    %1147 = vmatpush1.bf16.xpose.msra.mxu0 0
    %1148 = vmatprep.subr.bf16.mxu0 0
    %1149 = vmatpush1.bf16.xpose.msra.mxu0 0
    %1150 = vmatprep.subr.bf16.mxu0 0
    %1151 = vmatpush1.bf16.xpose.msra.mxu0 0
    %1152 = vmatprep.subr.bf16.mxu0 0
    %1153 = vmatpush1.bf16.xpose.msra.mxu0 0
    %1154 = vmatprep.subr.bf16.mxu0 0
    %1155 = vmatpush1.bf16.xpose.msra.mxu0 0
    %1156 = vmatprep.subr.bf16.mxu0 0
    %1157 = vmatpush1.bf16.xpose.msra.mxu0 0
    %1158 = vmatprep.subr.bf16.mxu0 0
    %1159 = vmatpush1.bf16.xpose.msra.mxu0 0
    %1160 = vmatprep.subr.bf16.mxu0 0
    %1161 = vmatpush1.bf16.xpose.msra.mxu0 0
    %1162 = vmatprep.subr.bf16.mxu0 0
    %1163 = vmatpush1.bf16.xpose.msra.mxu0 0
    %1164 = vmatprep.subr.bf16.mxu0 0
    %1165 = vmatpush1.bf16.xpose.msra.mxu0 0
    %1166 = vmatprep.subr.bf16.mxu0 0
    %1167 = vmatpush1.bf16.xpose.msra.mxu0 0
    %1168 = vmatprep.subr.bf16.mxu0 0
    %1169 = vmatpush1.bf16.xpose.msra.mxu0 0
    %1170 = vmatprep.mubr.bf16.mxu0 0
    %1171 = vmatmul.mubr.bf16.gmra.mrb[0].mxu0 %v1133
    %v1172 = vpop.f32.mrb[0].mxu0
    %v1173 = vadd.f32 %v847, %v1172
    %v1174 = vpop.f32.mrb[0].mxu0
    %v1175 = vpop.f32.mrb[0].mxu0
    %v1176 = vadd.f32 %v848, %v1175
    %v1177 = vpop.f32.mrb[0].mxu0
    %1178 = vdwg.mxu0
    %v1180 = vsel %vm849, %v452, 0
    %v1183 = vsel %vm849, %v645, 0
    %1185 = vmatprep.subr.bf16.mxu0 0
    %1186 = vmatpush1.bf16.xpose.msra.mxu0 %v1183
    %1187 = vmatprep.subr.bf16.mxu0 0
    %1188 = vmatpush1.bf16.xpose.msra.mxu0 0
    %1189 = vmatprep.subr.bf16.mxu0 0
    %1190 = vmatpush1.bf16.xpose.msra.mxu0 0
    %1191 = vmatprep.subr.bf16.mxu0 0
    %1192 = vmatpush1.bf16.xpose.msra.mxu0 0
    %1193 = vmatprep.subr.bf16.mxu0 0
    %1194 = vmatpush1.bf16.xpose.msra.mxu0 0
    %1195 = vmatprep.subr.bf16.mxu0 0
    %1196 = vmatpush1.bf16.xpose.msra.mxu0 0
    %1197 = vmatprep.subr.bf16.mxu0 0
    %1198 = vmatpush1.bf16.xpose.msra.mxu0 0
    %1199 = vmatprep.subr.bf16.mxu0 0
    %1200 = vmatpush1.bf16.xpose.msra.mxu0 0
    %1201 = vmatprep.subr.bf16.mxu0 0
    %1202 = vmatpush1.bf16.xpose.msra.mxu0 0
    %1203 = vmatprep.subr.bf16.mxu0 0
    %1204 = vmatpush1.bf16.xpose.msra.mxu0 0
    %1205 = vmatprep.subr.bf16.mxu0 0
    %1206 = vmatpush1.bf16.xpose.msra.mxu0 0
    %1207 = vmatprep.subr.bf16.mxu0 0
    %1208 = vmatpush1.bf16.xpose.msra.mxu0 0
    %1209 = vmatprep.subr.bf16.mxu0 0
    %1210 = vmatpush1.bf16.xpose.msra.mxu0 0
    %1211 = vmatprep.subr.bf16.mxu0 0
    %1212 = vmatpush1.bf16.xpose.msra.mxu0 0
    %1213 = vmatprep.subr.bf16.mxu0 0
    %1214 = vmatpush1.bf16.xpose.msra.mxu0 0
    %1215 = vmatprep.subr.bf16.mxu0 0
    %1216 = vmatpush1.bf16.xpose.msra.mxu0 0
    %1217 = vmatprep.mubr.bf16.mxu0 0
    %1218 = vmatmul.mubr.bf16.gmra.mrb[0].mxu0 %v1180
    %v1219 = vpop.f32.mrb[0].mxu0
    %v1220 = vadd.f32 %v847, %v1219
    %v1221 = vpop.f32.mrb[0].mxu0
    %v1222 = vpop.f32.mrb[0].mxu0
    %v1223 = vadd.f32 %v848, %v1222
    %v1224 = vpop.f32.mrb[0].mxu0
    %1225 = vdwg.mxu0
    %v1227 = vsel %vm849, %v453, 0
    %v1230 = vsel %vm849, %v646, 0
    %1232 = vmatprep.subr.bf16.mxu0 0
    %1233 = vmatpush1.bf16.xpose.msra.mxu0 %v1230
    %1234 = vmatprep.subr.bf16.mxu0 0
    %1235 = vmatpush1.bf16.xpose.msra.mxu0 0
    %1236 = vmatprep.subr.bf16.mxu0 0
    %1237 = vmatpush1.bf16.xpose.msra.mxu0 0
    %1238 = vmatprep.subr.bf16.mxu0 0
    %1239 = vmatpush1.bf16.xpose.msra.mxu0 0
    %1240 = vmatprep.subr.bf16.mxu0 0
    %1241 = vmatpush1.bf16.xpose.msra.mxu0 0
    %1242 = vmatprep.subr.bf16.mxu0 0
    %1243 = vmatpush1.bf16.xpose.msra.mxu0 0
    %1244 = vmatprep.subr.bf16.mxu0 0
    %1245 = vmatpush1.bf16.xpose.msra.mxu0 0
    %1246 = vmatprep.subr.bf16.mxu0 0
    %1247 = vmatpush1.bf16.xpose.msra.mxu0 0
    %1248 = vmatprep.subr.bf16.mxu0 0
    %1249 = vmatpush1.bf16.xpose.msra.mxu0 0
    %1250 = vmatprep.subr.bf16.mxu0 0
    %1251 = vmatpush1.bf16.xpose.msra.mxu0 0
    %1252 = vmatprep.subr.bf16.mxu0 0
    %1253 = vmatpush1.bf16.xpose.msra.mxu0 0
    %1254 = vmatprep.subr.bf16.mxu0 0
    %1255 = vmatpush1.bf16.xpose.msra.mxu0 0
    %1256 = vmatprep.subr.bf16.mxu0 0
    %1257 = vmatpush1.bf16.xpose.msra.mxu0 0
    %1258 = vmatprep.subr.bf16.mxu0 0
    %1259 = vmatpush1.bf16.xpose.msra.mxu0 0
    %1260 = vmatprep.subr.bf16.mxu0 0
    %1261 = vmatpush1.bf16.xpose.msra.mxu0 0
    %1262 = vmatprep.subr.bf16.mxu0 0
    %1263 = vmatpush1.bf16.xpose.msra.mxu0 0
    %1264 = vmatprep.mubr.bf16.mxu0 0
    %1265 = vmatmul.mubr.bf16.gmra.mrb[0].mxu0 %v1227
    %v1266 = vpop.f32.mrb[0].mxu0
    %v1267 = vadd.f32 %v847, %v1266
    %v1268 = vpop.f32.mrb[0].mxu0
    %v1269 = vpop.f32.mrb[0].mxu0
    %v1270 = vadd.f32 %v848, %v1269
    %v1271 = vpop.f32.mrb[0].mxu0
    %1272 = vdwg.mxu0
    %v1274 = vsel %vm849, %v454, 0
    %v1277 = vsel %vm849, %v647, 0
    %1279 = vmatprep.subr.bf16.mxu0 0
    %1280 = vmatpush1.bf16.xpose.msra.mxu0 %v1277
    %1281 = vmatprep.subr.bf16.mxu0 0
    %1282 = vmatpush1.bf16.xpose.msra.mxu0 0
    %1283 = vmatprep.subr.bf16.mxu0 0
    %1284 = vmatpush1.bf16.xpose.msra.mxu0 0
    %1285 = vmatprep.subr.bf16.mxu0 0
    %1286 = vmatpush1.bf16.xpose.msra.mxu0 0
    %1287 = vmatprep.subr.bf16.mxu0 0
    %1288 = vmatpush1.bf16.xpose.msra.mxu0 0
    %1289 = vmatprep.subr.bf16.mxu0 0
    %1290 = vmatpush1.bf16.xpose.msra.mxu0 0
    %1291 = vmatprep.subr.bf16.mxu0 0
    %1292 = vmatpush1.bf16.xpose.msra.mxu0 0
    %1293 = vmatprep.subr.bf16.mxu0 0
    %1294 = vmatpush1.bf16.xpose.msra.mxu0 0
    %1295 = vmatprep.subr.bf16.mxu0 0
    %1296 = vmatpush1.bf16.xpose.msra.mxu0 0
    %1297 = vmatprep.subr.bf16.mxu0 0
    %1298 = vmatpush1.bf16.xpose.msra.mxu0 0
    %1299 = vmatprep.subr.bf16.mxu0 0
    %1300 = vmatpush1.bf16.xpose.msra.mxu0 0
    %1301 = vmatprep.subr.bf16.mxu0 0
    %1302 = vmatpush1.bf16.xpose.msra.mxu0 0
    %1303 = vmatprep.subr.bf16.mxu0 0
    %1304 = vmatpush1.bf16.xpose.msra.mxu0 0
    %1305 = vmatprep.subr.bf16.mxu0 0
    %1306 = vmatpush1.bf16.xpose.msra.mxu0 0
    %1307 = vmatprep.subr.bf16.mxu0 0
    %1308 = vmatpush1.bf16.xpose.msra.mxu0 0
    %1309 = vmatprep.subr.bf16.mxu0 0
    %1310 = vmatpush1.bf16.xpose.msra.mxu0 0
    %1311 = vmatprep.mubr.bf16.mxu0 0
    %1312 = vmatmul.mubr.bf16.gmra.mrb[0].mxu0 %v1274
    %v1313 = vpop.f32.mrb[0].mxu0
    %v1314 = vadd.f32 %v847, %v1313
    %v1315 = vpop.f32.mrb[0].mxu0
    %v1316 = vpop.f32.mrb[0].mxu0
    %v1317 = vadd.f32 %v848, %v1316
    %v1318 = vpop.f32.mrb[0].mxu0
    %1319 = vdwg.mxu0
    %v1321 = vsel %vm849, %v455, 0
    %v1324 = vsel %vm849, %v648, 0
    %1326 = vmatprep.subr.bf16.mxu0 0
    %1327 = vmatpush1.bf16.xpose.msra.mxu0 %v1324
    %1328 = vmatprep.subr.bf16.mxu0 0
    %1329 = vmatpush1.bf16.xpose.msra.mxu0 0
    %1330 = vmatprep.subr.bf16.mxu0 0
    %1331 = vmatpush1.bf16.xpose.msra.mxu0 0
    %1332 = vmatprep.subr.bf16.mxu0 0
    %1333 = vmatpush1.bf16.xpose.msra.mxu0 0
    %1334 = vmatprep.subr.bf16.mxu0 0
    %1335 = vmatpush1.bf16.xpose.msra.mxu0 0
    %1336 = vmatprep.subr.bf16.mxu0 0
    %1337 = vmatpush1.bf16.xpose.msra.mxu0 0
    %1338 = vmatprep.subr.bf16.mxu0 0
    %1339 = vmatpush1.bf16.xpose.msra.mxu0 0
    %1340 = vmatprep.subr.bf16.mxu0 0
    %1341 = vmatpush1.bf16.xpose.msra.mxu0 0
    %1342 = vmatprep.subr.bf16.mxu0 0
    %1343 = vmatpush1.bf16.xpose.msra.mxu0 0
    %1344 = vmatprep.subr.bf16.mxu0 0
    %1345 = vmatpush1.bf16.xpose.msra.mxu0 0
    %1346 = vmatprep.subr.bf16.mxu0 0
    %1347 = vmatpush1.bf16.xpose.msra.mxu0 0
    %1348 = vmatprep.subr.bf16.mxu0 0
    %1349 = vmatpush1.bf16.xpose.msra.mxu0 0
    %1350 = vmatprep.subr.bf16.mxu0 0
    %1351 = vmatpush1.bf16.xpose.msra.mxu0 0
    %1352 = vmatprep.subr.bf16.mxu0 0
    %1353 = vmatpush1.bf16.xpose.msra.mxu0 0
    %1354 = vmatprep.subr.bf16.mxu0 0
    %1355 = vmatpush1.bf16.xpose.msra.mxu0 0
    %1356 = vmatprep.subr.bf16.mxu0 0
    %1357 = vmatpush1.bf16.xpose.msra.mxu0 0
    %1358 = vmatprep.mubr.bf16.mxu0 0
    %1359 = vmatmul.mubr.bf16.gmra.mrb[0].mxu0 %v1321
    %v1360 = vpop.f32.mrb[0].mxu0
    %v1361 = vadd.f32 %v847, %v1360
    %v1362 = vpop.f32.mrb[0].mxu0
    %v1363 = vpop.f32.mrb[0].mxu0
    %v1364 = vadd.f32 %v848, %v1363
    %v1365 = vpop.f32.mrb[0].mxu0
    %1366 = vdwg.mxu0
    %v1368 = vsel %vm849, %v456, 0
    %v1371 = vsel %vm849, %v649, 0
    %1373 = vmatprep.subr.bf16.mxu0 0
    %1374 = vmatpush1.bf16.xpose.msra.mxu0 %v1371
    %1375 = vmatprep.subr.bf16.mxu0 0
    %1376 = vmatpush1.bf16.xpose.msra.mxu0 0
    %1377 = vmatprep.subr.bf16.mxu0 0
    %1378 = vmatpush1.bf16.xpose.msra.mxu0 0
    %1379 = vmatprep.subr.bf16.mxu0 0
    %1380 = vmatpush1.bf16.xpose.msra.mxu0 0
    %1381 = vmatprep.subr.bf16.mxu0 0
    %1382 = vmatpush1.bf16.xpose.msra.mxu0 0
    %1383 = vmatprep.subr.bf16.mxu0 0
    %1384 = vmatpush1.bf16.xpose.msra.mxu0 0
    %1385 = vmatprep.subr.bf16.mxu0 0
    %1386 = vmatpush1.bf16.xpose.msra.mxu0 0
    %1387 = vmatprep.subr.bf16.mxu0 0
    %1388 = vmatpush1.bf16.xpose.msra.mxu0 0
    %1389 = vmatprep.subr.bf16.mxu0 0
    %1390 = vmatpush1.bf16.xpose.msra.mxu0 0
    %1391 = vmatprep.subr.bf16.mxu0 0
    %1392 = vmatpush1.bf16.xpose.msra.mxu0 0
    %1393 = vmatprep.subr.bf16.mxu0 0
    %1394 = vmatpush1.bf16.xpose.msra.mxu0 0
    %1395 = vmatprep.subr.bf16.mxu0 0
    %1396 = vmatpush1.bf16.xpose.msra.mxu0 0
    %1397 = vmatprep.subr.bf16.mxu0 0
    %1398 = vmatpush1.bf16.xpose.msra.mxu0 0
    %1399 = vmatprep.subr.bf16.mxu0 0
    %1400 = vmatpush1.bf16.xpose.msra.mxu0 0
    %1401 = vmatprep.subr.bf16.mxu0 0
    %1402 = vmatpush1.bf16.xpose.msra.mxu0 0
    %1403 = vmatprep.subr.bf16.mxu0 0
    %1404 = vmatpush1.bf16.xpose.msra.mxu0 0
    %1405 = vmatprep.mubr.bf16.mxu0 0
    %1406 = vmatmul.mubr.bf16.gmra.mrb[0].mxu0 %v1368
    %v1407 = vpop.f32.mrb[0].mxu0
    %v1408 = vadd.f32 %v847, %v1407
    %v1409 = vpop.f32.mrb[0].mxu0
    %v1410 = vpop.f32.mrb[0].mxu0
    %v1411 = vadd.f32 %v848, %v1410
    %v1412 = vpop.f32.mrb[0].mxu0
    %1413 = vdwg.mxu0
    %v1415 = vsel %vm849, %v457, 0
    %v1418 = vsel %vm849, %v650, 0
    %1420 = vmatprep.subr.bf16.mxu0 0
    %1421 = vmatpush1.bf16.xpose.msra.mxu0 %v1418
    %1422 = vmatprep.subr.bf16.mxu0 0
    %1423 = vmatpush1.bf16.xpose.msra.mxu0 0
    %1424 = vmatprep.subr.bf16.mxu0 0
    %1425 = vmatpush1.bf16.xpose.msra.mxu0 0
    %1426 = vmatprep.subr.bf16.mxu0 0
    %1427 = vmatpush1.bf16.xpose.msra.mxu0 0
    %1428 = vmatprep.subr.bf16.mxu0 0
    %1429 = vmatpush1.bf16.xpose.msra.mxu0 0
    %1430 = vmatprep.subr.bf16.mxu0 0
    %1431 = vmatpush1.bf16.xpose.msra.mxu0 0
    %1432 = vmatprep.subr.bf16.mxu0 0
    %1433 = vmatpush1.bf16.xpose.msra.mxu0 0
    %1434 = vmatprep.subr.bf16.mxu0 0
    %1435 = vmatpush1.bf16.xpose.msra.mxu0 0
    %1436 = vmatprep.subr.bf16.mxu0 0
    %1437 = vmatpush1.bf16.xpose.msra.mxu0 0
    %1438 = vmatprep.subr.bf16.mxu0 0
    %1439 = vmatpush1.bf16.xpose.msra.mxu0 0
    %1440 = vmatprep.subr.bf16.mxu0 0
    %1441 = vmatpush1.bf16.xpose.msra.mxu0 0
    %1442 = vmatprep.subr.bf16.mxu0 0
    %1443 = vmatpush1.bf16.xpose.msra.mxu0 0
    %1444 = vmatprep.subr.bf16.mxu0 0
    %1445 = vmatpush1.bf16.xpose.msra.mxu0 0
    %1446 = vmatprep.subr.bf16.mxu0 0
    %1447 = vmatpush1.bf16.xpose.msra.mxu0 0
    %1448 = vmatprep.subr.bf16.mxu0 0
    %1449 = vmatpush1.bf16.xpose.msra.mxu0 0
    %1450 = vmatprep.subr.bf16.mxu0 0
    %1451 = vmatpush1.bf16.xpose.msra.mxu0 0
    %1452 = vmatprep.mubr.bf16.mxu0 0
    %1453 = vmatmul.mubr.bf16.gmra.mrb[0].mxu0 %v1415
    %v1454 = vpop.f32.mrb[0].mxu0
    %v1455 = vadd.f32 %v847, %v1454
    %v1456 = vpop.f32.mrb[0].mxu0
    %v1457 = vpop.f32.mrb[0].mxu0
    %v1458 = vadd.f32 %v848, %v1457
    %v1459 = vpop.f32.mrb[0].mxu0
    %1460 = vdwg.mxu0
    %v1462 = vsel %vm849, %v458, 0
    %v1465 = vsel %vm849, %v651, 0
    %1467 = vmatprep.subr.bf16.mxu0 0
    %1468 = vmatpush1.bf16.xpose.msra.mxu0 %v1465
    %1469 = vmatprep.subr.bf16.mxu0 0
    %1470 = vmatpush1.bf16.xpose.msra.mxu0 0
    %1471 = vmatprep.subr.bf16.mxu0 0
    %1472 = vmatpush1.bf16.xpose.msra.mxu0 0
    %1473 = vmatprep.subr.bf16.mxu0 0
    %1474 = vmatpush1.bf16.xpose.msra.mxu0 0
    %1475 = vmatprep.subr.bf16.mxu0 0
    %1476 = vmatpush1.bf16.xpose.msra.mxu0 0
    %1477 = vmatprep.subr.bf16.mxu0 0
    %1478 = vmatpush1.bf16.xpose.msra.mxu0 0
    %1479 = vmatprep.subr.bf16.mxu0 0
    %1480 = vmatpush1.bf16.xpose.msra.mxu0 0
    %1481 = vmatprep.subr.bf16.mxu0 0
    %1482 = vmatpush1.bf16.xpose.msra.mxu0 0
    %1483 = vmatprep.subr.bf16.mxu0 0
    %1484 = vmatpush1.bf16.xpose.msra.mxu0 0
    %1485 = vmatprep.subr.bf16.mxu0 0
    %1486 = vmatpush1.bf16.xpose.msra.mxu0 0
    %1487 = vmatprep.subr.bf16.mxu0 0
    %1488 = vmatpush1.bf16.xpose.msra.mxu0 0
    %1489 = vmatprep.subr.bf16.mxu0 0
    %1490 = vmatpush1.bf16.xpose.msra.mxu0 0
    %1491 = vmatprep.subr.bf16.mxu0 0
    %1492 = vmatpush1.bf16.xpose.msra.mxu0 0
    %1493 = vmatprep.subr.bf16.mxu0 0
    %1494 = vmatpush1.bf16.xpose.msra.mxu0 0
    %1495 = vmatprep.subr.bf16.mxu0 0
    %1496 = vmatpush1.bf16.xpose.msra.mxu0 0
    %1497 = vmatprep.subr.bf16.mxu0 0
    %1498 = vmatpush1.bf16.xpose.msra.mxu0 0
    %1499 = vmatprep.mubr.bf16.mxu0 0
    %1500 = vmatmul.mubr.bf16.gmra.mrb[0].mxu0 %v1462
    %v1501 = vpop.f32.mrb[0].mxu0
    %v1502 = vadd.f32 %v847, %v1501
    %v1503 = vpop.f32.mrb[0].mxu0
    %v1504 = vpop.f32.mrb[0].mxu0
    %v1505 = vadd.f32 %v848, %v1504
    %v1506 = vpop.f32.mrb[0].mxu0
    %1507 = vdwg.mxu0
    %v1509 = vsel %vm849, %v459, 0
    %v1512 = vsel %vm849, %v652, 0
    %1514 = vmatprep.subr.bf16.mxu0 0
    %1515 = vmatpush1.bf16.xpose.msra.mxu0 %v1512
    %1516 = vmatprep.subr.bf16.mxu0 0
    %1517 = vmatpush1.bf16.xpose.msra.mxu0 0
    %1518 = vmatprep.subr.bf16.mxu0 0
    %1519 = vmatpush1.bf16.xpose.msra.mxu0 0
    %1520 = vmatprep.subr.bf16.mxu0 0
    %1521 = vmatpush1.bf16.xpose.msra.mxu0 0
    %1522 = vmatprep.subr.bf16.mxu0 0
    %1523 = vmatpush1.bf16.xpose.msra.mxu0 0
    %1524 = vmatprep.subr.bf16.mxu0 0
    %1525 = vmatpush1.bf16.xpose.msra.mxu0 0
    %1526 = vmatprep.subr.bf16.mxu0 0
    %1527 = vmatpush1.bf16.xpose.msra.mxu0 0
    %1528 = vmatprep.subr.bf16.mxu0 0
    %1529 = vmatpush1.bf16.xpose.msra.mxu0 0
    %1530 = vmatprep.subr.bf16.mxu0 0
    %1531 = vmatpush1.bf16.xpose.msra.mxu0 0
    %1532 = vmatprep.subr.bf16.mxu0 0
    %1533 = vmatpush1.bf16.xpose.msra.mxu0 0
    %1534 = vmatprep.subr.bf16.mxu0 0
    %1535 = vmatpush1.bf16.xpose.msra.mxu0 0
    %1536 = vmatprep.subr.bf16.mxu0 0
    %1537 = vmatpush1.bf16.xpose.msra.mxu0 0
    %1538 = vmatprep.subr.bf16.mxu0 0
    %1539 = vmatpush1.bf16.xpose.msra.mxu0 0
    %1540 = vmatprep.subr.bf16.mxu0 0
    %1541 = vmatpush1.bf16.xpose.msra.mxu0 0
    %1542 = vmatprep.subr.bf16.mxu0 0
    %1543 = vmatpush1.bf16.xpose.msra.mxu0 0
    %1544 = vmatprep.subr.bf16.mxu0 0
    %1545 = vmatpush1.bf16.xpose.msra.mxu0 0
    %1546 = vmatprep.mubr.bf16.mxu0 0
    %1547 = vmatmul.mubr.bf16.gmra.mrb[0].mxu0 %v1509
    %v1548 = vpop.f32.mrb[0].mxu0
    %v1549 = vadd.f32 %v847, %v1548
    %v1550 = vpop.f32.mrb[0].mxu0
    %v1551 = vpop.f32.mrb[0].mxu0
    %v1552 = vadd.f32 %v848, %v1551
    %v1553 = vpop.f32.mrb[0].mxu0
    %1554 = vdwg.mxu0
    %v1556 = vsel %vm849, %v460, 0
    %v1559 = vsel %vm849, %v653, 0
    %1561 = vmatprep.subr.bf16.mxu0 0
    %1562 = vmatpush1.bf16.xpose.msra.mxu0 %v1559
    %1563 = vmatprep.subr.bf16.mxu0 0
    %1564 = vmatpush1.bf16.xpose.msra.mxu0 0
    %1565 = vmatprep.subr.bf16.mxu0 0
    %1566 = vmatpush1.bf16.xpose.msra.mxu0 0
    %1567 = vmatprep.subr.bf16.mxu0 0
    %1568 = vmatpush1.bf16.xpose.msra.mxu0 0
    %1569 = vmatprep.subr.bf16.mxu0 0
    %1570 = vmatpush1.bf16.xpose.msra.mxu0 0
    %1571 = vmatprep.subr.bf16.mxu0 0
    %1572 = vmatpush1.bf16.xpose.msra.mxu0 0
    %1573 = vmatprep.subr.bf16.mxu0 0
    %1574 = vmatpush1.bf16.xpose.msra.mxu0 0
    %1575 = vmatprep.subr.bf16.mxu0 0
    %1576 = vmatpush1.bf16.xpose.msra.mxu0 0
    %1577 = vmatprep.subr.bf16.mxu0 0
    %1578 = vmatpush1.bf16.xpose.msra.mxu0 0
    %1579 = vmatprep.subr.bf16.mxu0 0
    %1580 = vmatpush1.bf16.xpose.msra.mxu0 0
    %1581 = vmatprep.subr.bf16.mxu0 0
    %1582 = vmatpush1.bf16.xpose.msra.mxu0 0
    %1583 = vmatprep.subr.bf16.mxu0 0
    %1584 = vmatpush1.bf16.xpose.msra.mxu0 0
    %1585 = vmatprep.subr.bf16.mxu0 0
    %1586 = vmatpush1.bf16.xpose.msra.mxu0 0
    %1587 = vmatprep.subr.bf16.mxu0 0
    %1588 = vmatpush1.bf16.xpose.msra.mxu0 0
    %1589 = vmatprep.subr.bf16.mxu0 0
    %1590 = vmatpush1.bf16.xpose.msra.mxu0 0
    %1591 = vmatprep.subr.bf16.mxu0 0
    %1592 = vmatpush1.bf16.xpose.msra.mxu0 0
    %1593 = vmatprep.mubr.bf16.mxu0 0
    %1594 = vmatmul.mubr.bf16.gmra.mrb[0].mxu0 %v1556
    %v1595 = vpop.f32.mrb[0].mxu0
    %v1596 = vadd.f32 %v847, %v1595
    %v1597 = vpop.f32.mrb[0].mxu0
    %v1598 = vpop.f32.mrb[0].mxu0
    %v1599 = vadd.f32 %v848, %v1598
    %v1600 = vpop.f32.mrb[0].mxu0
    %1601 = vdwg.mxu0
    %v1602 = vsel %vm849, %v891, -inf
    %1603 = vmax.xlane.f32.xlu0 %v1602
    %v1604 = vpop.xlane.xlu0 %1603
    %v1605 = vsel %vm849, %v894, -inf
    %1606 = vmax.xlane.f32.xlu0 %v1605
    %v1607 = vpop.xlane.xlu0 %1606
    %v1608 = vsel %vm849, %v938, -inf
    %1609 = vmax.xlane.f32.xlu0 %v1608
    %v1610 = vpop.xlane.xlu0 %1609
    %v1611 = vsel %vm849, %v941, -inf
    %1612 = vmax.xlane.f32.xlu0 %v1611
    %v1613 = vpop.xlane.xlu0 %1612
    %v1614 = vsel %vm849, %v985, -inf
    %1615 = vmax.xlane.f32.xlu0 %v1614
    %v1616 = vpop.xlane.xlu0 %1615
    %v1617 = vsel %vm849, %v988, -inf
    %1618 = vmax.xlane.f32.xlu0 %v1617
    %v1619 = vpop.xlane.xlu0 %1618
    %v1620 = vsel %vm849, %v1032, -inf
    %1621 = vmax.xlane.f32.xlu0 %v1620
    %v1622 = vpop.xlane.xlu0 %1621
    %v1623 = vsel %vm849, %v1035, -inf
    %1624 = vmax.xlane.f32.xlu0 %v1623
    %v1625 = vpop.xlane.xlu0 %1624
    %v1626 = vsel %vm849, %v1079, -inf
    %1627 = vmax.xlane.f32.xlu0 %v1626
    %v1628 = vpop.xlane.xlu0 %1627
    %v1629 = vsel %vm849, %v1082, -inf
    %1630 = vmax.xlane.f32.xlu0 %v1629
    %v1631 = vpop.xlane.xlu0 %1630
    %v1632 = vsel %vm849, %v1126, -inf
    %1633 = vmax.xlane.f32.xlu0 %v1632
    %v1634 = vpop.xlane.xlu0 %1633
    %v1635 = vsel %vm849, %v1129, -inf
    %1636 = vmax.xlane.f32.xlu0 %v1635
    %v1637 = vpop.xlane.xlu0 %1636
    %v1638 = vsel %vm849, %v1173, -inf
    %1639 = vmax.xlane.f32.xlu0 %v1638
    %v1640 = vpop.xlane.xlu0 %1639
    %v1641 = vsel %vm849, %v1176, -inf
    %1642 = vmax.xlane.f32.xlu0 %v1641
    %v1643 = vpop.xlane.xlu0 %1642
    %v1644 = vsel %vm849, %v1220, -inf
    %1645 = vmax.xlane.f32.xlu0 %v1644
    %v1646 = vpop.xlane.xlu0 %1645
    %v1647 = vsel %vm849, %v1223, -inf
    %1648 = vmax.xlane.f32.xlu0 %v1647
    %v1649 = vpop.xlane.xlu0 %1648
    %v1650 = vsel %vm849, %v1267, -inf
    %1651 = vmax.xlane.f32.xlu0 %v1650
    %v1652 = vpop.xlane.xlu0 %1651
    %v1653 = vsel %vm849, %v1270, -inf
    %1654 = vmax.xlane.f32.xlu0 %v1653
    %v1655 = vpop.xlane.xlu0 %1654
    %v1656 = vsel %vm849, %v1314, -inf
    %1657 = vmax.xlane.f32.xlu0 %v1656
    %v1658 = vpop.xlane.xlu0 %1657
    %v1659 = vsel %vm849, %v1317, -inf
    %1660 = vmax.xlane.f32.xlu0 %v1659
    %v1661 = vpop.xlane.xlu0 %1660
    %v1662 = vsel %vm849, %v1361, -inf
    %1663 = vmax.xlane.f32.xlu0 %v1662
    %v1664 = vpop.xlane.xlu0 %1663
    %v1665 = vsel %vm849, %v1364, -inf
    %1666 = vmax.xlane.f32.xlu0 %v1665
    %v1667 = vpop.xlane.xlu0 %1666
    %v1668 = vsel %vm849, %v1408, -inf
    %1669 = vmax.xlane.f32.xlu0 %v1668
    %v1670 = vpop.xlane.xlu0 %1669
    %v1671 = vsel %vm849, %v1411, -inf
    %1672 = vmax.xlane.f32.xlu0 %v1671
    %v1673 = vpop.xlane.xlu0 %1672
    %v1674 = vsel %vm849, %v1455, -inf
    %1675 = vmax.xlane.f32.xlu0 %v1674
    %v1676 = vpop.xlane.xlu0 %1675
    %v1677 = vsel %vm849, %v1458, -inf
    %1678 = vmax.xlane.f32.xlu0 %v1677
    %v1679 = vpop.xlane.xlu0 %1678
    %v1680 = vsel %vm849, %v1502, -inf
    %1681 = vmax.xlane.f32.xlu0 %v1680
    %v1682 = vpop.xlane.xlu0 %1681
    %v1683 = vsel %vm849, %v1505, -inf
    %1684 = vmax.xlane.f32.xlu0 %v1683
    %v1685 = vpop.xlane.xlu0 %1684
    %v1686 = vsel %vm849, %v1549, -inf
    %1687 = vmax.xlane.f32.xlu0 %v1686
    %v1688 = vpop.xlane.xlu0 %1687
    %v1689 = vsel %vm849, %v1552, -inf
    %1690 = vmax.xlane.f32.xlu0 %v1689
    %v1691 = vpop.xlane.xlu0 %1690
    %v1692 = vsel %vm849, %v1596, -inf
    %1693 = vmax.xlane.f32.xlu0 %v1692
    %v1694 = vpop.xlane.xlu0 %1693
    %v1695 = vsel %vm849, %v1599, -inf
    %1696 = vmax.xlane.f32.xlu0 %v1695
    %v1697 = vpop.xlane.xlu0 %1696
    %v1698 = vsub.f32 %v891, %v1604
    %v1699 = vsub.f32 %v894, %v1607
    %v1700 = vsub.f32 %v938, %v1610
    %v1701 = vsub.f32 %v941, %v1613
    %v1702 = vsub.f32 %v985, %v1616
    %v1703 = vsub.f32 %v988, %v1619
    %v1704 = vsub.f32 %v1032, %v1622
    %v1705 = vsub.f32 %v1035, %v1625
    %v1706 = vsub.f32 %v1079, %v1628
    %v1707 = vsub.f32 %v1082, %v1631
    %v1708 = vsub.f32 %v1126, %v1634
    %v1709 = vsub.f32 %v1129, %v1637
    %v1710 = vsub.f32 %v1173, %v1640
    %v1711 = vsub.f32 %v1176, %v1643
    %v1712 = vsub.f32 %v1220, %v1646
    %v1713 = vsub.f32 %v1223, %v1649
    %v1714 = vsub.f32 %v1267, %v1652
    %v1715 = vsub.f32 %v1270, %v1655
    %v1716 = vsub.f32 %v1314, %v1658
    %v1717 = vsub.f32 %v1317, %v1661
    %v1718 = vsub.f32 %v1361, %v1664
    %v1719 = vsub.f32 %v1364, %v1667
    %v1720 = vsub.f32 %v1408, %v1670
    %v1721 = vsub.f32 %v1411, %v1673
    %v1722 = vsub.f32 %v1455, %v1676
    %v1723 = vsub.f32 %v1458, %v1679
    %v1724 = vsub.f32 %v1502, %v1682
    %v1725 = vsub.f32 %v1505, %v1685
    %v1726 = vsub.f32 %v1549, %v1688
    %v1727 = vsub.f32 %v1552, %v1691
    %v1728 = vsub.f32 %v1596, %v1694
    %v1729 = vsub.f32 %v1599, %v1697
    %v1730 = vmul.f32 %v1698, 1.442695
    %v1731 = vpow.pop %v1730
    %v1732 = vmul.f32 %v1699, 1.442695
    %v1733 = vpow.pop %v1732
    %v1734 = vmul.f32 %v1700, 1.442695
    %v1735 = vpow.pop %v1734
    %v1736 = vmul.f32 %v1701, 1.442695
    %v1737 = vpow.pop %v1736
    %v1738 = vmul.f32 %v1702, 1.442695
    %v1739 = vpow.pop %v1738
    %v1740 = vmul.f32 %v1703, 1.442695
    %v1741 = vpow.pop %v1740
    %v1742 = vmul.f32 %v1704, 1.442695
    %v1743 = vpow.pop %v1742
    %v1744 = vmul.f32 %v1705, 1.442695
    %v1745 = vpow.pop %v1744
    %v1746 = vmul.f32 %v1706, 1.442695
    %v1747 = vpow.pop %v1746
    %v1748 = vmul.f32 %v1707, 1.442695
    %v1749 = vpow.pop %v1748
    %v1750 = vmul.f32 %v1708, 1.442695
    %v1751 = vpow.pop %v1750
    %v1752 = vmul.f32 %v1709, 1.442695
    %v1753 = vpow.pop %v1752
    %v1754 = vmul.f32 %v1710, 1.442695
    %v1755 = vpow.pop %v1754
    %v1756 = vmul.f32 %v1711, 1.442695
    %v1757 = vpow.pop %v1756
    %v1758 = vmul.f32 %v1712, 1.442695
    %v1759 = vpow.pop %v1758
    %v1760 = vmul.f32 %v1713, 1.442695
    %v1761 = vpow.pop %v1760
    %v1762 = vmul.f32 %v1714, 1.442695
    %v1763 = vpow.pop %v1762
    %v1764 = vmul.f32 %v1715, 1.442695
    %v1765 = vpow.pop %v1764
    %v1766 = vmul.f32 %v1716, 1.442695
    %v1767 = vpow.pop %v1766
    %v1768 = vmul.f32 %v1717, 1.442695
    %v1769 = vpow.pop %v1768
    %v1770 = vmul.f32 %v1718, 1.442695
    %v1771 = vpow.pop %v1770
    %v1772 = vmul.f32 %v1719, 1.442695
    %v1773 = vpow.pop %v1772
    %v1774 = vmul.f32 %v1720, 1.442695
    %v1775 = vpow.pop %v1774
    %v1776 = vmul.f32 %v1721, 1.442695
    %v1777 = vpow.pop %v1776
    %v1778 = vmul.f32 %v1722, 1.442695
    %v1779 = vpow.pop %v1778
    %v1780 = vmul.f32 %v1723, 1.442695
    %v1781 = vpow.pop %v1780
    %v1782 = vmul.f32 %v1724, 1.442695
    %v1783 = vpow.pop %v1782
    %v1784 = vmul.f32 %v1725, 1.442695
    %v1785 = vpow.pop %v1784
    %v1786 = vmul.f32 %v1726, 1.442695
    %v1787 = vpow.pop %v1786
    %v1788 = vmul.f32 %v1727, 1.442695
    %v1789 = vpow.pop %v1788
    %v1790 = vmul.f32 %v1728, 1.442695
    %v1791 = vpow.pop %v1790
    %v1792 = vmul.f32 %v1729, 1.442695
    %v1793 = vpow.pop %v1792
    %v1794 = vsel %vm849, %v1731, 0.0
    %1795 = vadd.xlane.f32.xlu0 %v1794
    %v1796 = vpop.xlane.xlu0 %1795
    %v1797 = vsel %vm849, %v1733, 0.0
    %1798 = vadd.xlane.f32.xlu0 %v1797
    %v1799 = vpop.xlane.xlu0 %1798
    %v1800 = vsel %vm849, %v1735, 0.0
    %1801 = vadd.xlane.f32.xlu0 %v1800
    %v1802 = vpop.xlane.xlu0 %1801
    %v1803 = vsel %vm849, %v1737, 0.0
    %1804 = vadd.xlane.f32.xlu0 %v1803
    %v1805 = vpop.xlane.xlu0 %1804
    %v1806 = vsel %vm849, %v1739, 0.0
    %1807 = vadd.xlane.f32.xlu0 %v1806
    %v1808 = vpop.xlane.xlu0 %1807
    %v1809 = vsel %vm849, %v1741, 0.0
    %1810 = vadd.xlane.f32.xlu0 %v1809
    %v1811 = vpop.xlane.xlu0 %1810
    %v1812 = vsel %vm849, %v1743, 0.0
    %1813 = vadd.xlane.f32.xlu0 %v1812
    %v1814 = vpop.xlane.xlu0 %1813
    %v1815 = vsel %vm849, %v1745, 0.0
    %1816 = vadd.xlane.f32.xlu0 %v1815
    %v1817 = vpop.xlane.xlu0 %1816
    %v1818 = vsel %vm849, %v1747, 0.0
    %1819 = vadd.xlane.f32.xlu0 %v1818
    %v1820 = vpop.xlane.xlu0 %1819
    %v1821 = vsel %vm849, %v1749, 0.0
    %1822 = vadd.xlane.f32.xlu0 %v1821
    %v1823 = vpop.xlane.xlu0 %1822
    %v1824 = vsel %vm849, %v1751, 0.0
    %1825 = vadd.xlane.f32.xlu0 %v1824
    %v1826 = vpop.xlane.xlu0 %1825
    %v1827 = vsel %vm849, %v1753, 0.0
    %1828 = vadd.xlane.f32.xlu0 %v1827
    %v1829 = vpop.xlane.xlu0 %1828
    %v1830 = vsel %vm849, %v1755, 0.0
    %1831 = vadd.xlane.f32.xlu0 %v1830
    %v1832 = vpop.xlane.xlu0 %1831
    %v1833 = vsel %vm849, %v1757, 0.0
    %1834 = vadd.xlane.f32.xlu0 %v1833
    %v1835 = vpop.xlane.xlu0 %1834
    %v1836 = vsel %vm849, %v1759, 0.0
    %1837 = vadd.xlane.f32.xlu0 %v1836
    %v1838 = vpop.xlane.xlu0 %1837
    %v1839 = vsel %vm849, %v1761, 0.0
    %1840 = vadd.xlane.f32.xlu0 %v1839
    %v1841 = vpop.xlane.xlu0 %1840
    %v1842 = vsel %vm849, %v1763, 0.0
    %1843 = vadd.xlane.f32.xlu0 %v1842
    %v1844 = vpop.xlane.xlu0 %1843
    %v1845 = vsel %vm849, %v1765, 0.0
    %1846 = vadd.xlane.f32.xlu0 %v1845
    %v1847 = vpop.xlane.xlu0 %1846
    %v1848 = vsel %vm849, %v1767, 0.0
    %1849 = vadd.xlane.f32.xlu0 %v1848
    %v1850 = vpop.xlane.xlu0 %1849
    %v1851 = vsel %vm849, %v1769, 0.0
    %1852 = vadd.xlane.f32.xlu0 %v1851
    %v1853 = vpop.xlane.xlu0 %1852
    %v1854 = vsel %vm849, %v1771, 0.0
    %1855 = vadd.xlane.f32.xlu0 %v1854
    %v1856 = vpop.xlane.xlu0 %1855
    %v1857 = vsel %vm849, %v1773, 0.0
    %1858 = vadd.xlane.f32.xlu0 %v1857
    %v1859 = vpop.xlane.xlu0 %1858
    %v1860 = vsel %vm849, %v1775, 0.0
    %1861 = vadd.xlane.f32.xlu0 %v1860
    %v1862 = vpop.xlane.xlu0 %1861
    %v1863 = vsel %vm849, %v1777, 0.0
    %1864 = vadd.xlane.f32.xlu0 %v1863
    %v1865 = vpop.xlane.xlu0 %1864
    %v1866 = vsel %vm849, %v1779, 0.0
    %1867 = vadd.xlane.f32.xlu0 %v1866
    %v1868 = vpop.xlane.xlu0 %1867
    %v1869 = vsel %vm849, %v1781, 0.0
    %1870 = vadd.xlane.f32.xlu0 %v1869
    %v1871 = vpop.xlane.xlu0 %1870
    %v1872 = vsel %vm849, %v1783, 0.0
    %1873 = vadd.xlane.f32.xlu0 %v1872
    %v1874 = vpop.xlane.xlu0 %1873
    %v1875 = vsel %vm849, %v1785, 0.0
    %1876 = vadd.xlane.f32.xlu0 %v1875
    %v1877 = vpop.xlane.xlu0 %1876
    %v1878 = vsel %vm849, %v1787, 0.0
    %1879 = vadd.xlane.f32.xlu0 %v1878
    %v1880 = vpop.xlane.xlu0 %1879
    %v1881 = vsel %vm849, %v1789, 0.0
    %1882 = vadd.xlane.f32.xlu0 %v1881
    %v1883 = vpop.xlane.xlu0 %1882
    %v1884 = vsel %vm849, %v1791, 0.0
    %1885 = vadd.xlane.f32.xlu0 %v1884
    %v1886 = vpop.xlane.xlu0 %1885
    %v1887 = vsel %vm849, %v1793, 0.0
    %1888 = vadd.xlane.f32.xlu0 %v1887
    %v1889 = vpop.xlane.xlu0 %1888
    %v1890 = vrcp.pop %v1796
    %v1891 = vrcp.pop %v1799
    %v1892 = vrcp.pop %v1802
    %v1893 = vrcp.pop %v1805
    %v1894 = vrcp.pop %v1808
    %v1895 = vrcp.pop %v1811
    %v1896 = vrcp.pop %v1814
    %v1897 = vrcp.pop %v1817
    %v1898 = vrcp.pop %v1820
    %v1899 = vrcp.pop %v1823
    %v1900 = vrcp.pop %v1826
    %v1901 = vrcp.pop %v1829
    %v1902 = vrcp.pop %v1832
    %v1903 = vrcp.pop %v1835
    %v1904 = vrcp.pop %v1838
    %v1905 = vrcp.pop %v1841
    %v1906 = vrcp.pop %v1844
    %v1907 = vrcp.pop %v1847
    %v1908 = vrcp.pop %v1850
    %v1909 = vrcp.pop %v1853
    %v1910 = vrcp.pop %v1856
    %v1911 = vrcp.pop %v1859
    %v1912 = vrcp.pop %v1862
    %v1913 = vrcp.pop %v1865
    %v1914 = vrcp.pop %v1868
    %v1915 = vrcp.pop %v1871
    %v1916 = vrcp.pop %v1874
    %v1917 = vrcp.pop %v1877
    %v1918 = vrcp.pop %v1880
    %v1919 = vrcp.pop %v1883
    %v1920 = vrcp.pop %v1886
    %v1921 = vrcp.pop %v1889
    %v1922 = vmul.f32 %v1731, %v1890
    %v1923 = vmul.f32 %v1733, %v1891
    %v1924 = vmul.f32 %v1735, %v1892
    %v1925 = vmul.f32 %v1737, %v1893
    %v1926 = vmul.f32 %v1739, %v1894
    %v1927 = vmul.f32 %v1741, %v1895
    %v1928 = vmul.f32 %v1743, %v1896
    %v1929 = vmul.f32 %v1745, %v1897
    %v1930 = vmul.f32 %v1747, %v1898
    %v1931 = vmul.f32 %v1749, %v1899
    %v1932 = vmul.f32 %v1751, %v1900
    %v1933 = vmul.f32 %v1753, %v1901
    %v1934 = vmul.f32 %v1755, %v1902
    %v1935 = vmul.f32 %v1757, %v1903
    %v1936 = vmul.f32 %v1759, %v1904
    %v1937 = vmul.f32 %v1761, %v1905
    %v1938 = vmul.f32 %v1763, %v1906
    %v1939 = vmul.f32 %v1765, %v1907
    %v1940 = vmul.f32 %v1767, %v1908
    %v1941 = vmul.f32 %v1769, %v1909
    %v1942 = vmul.f32 %v1771, %v1910
    %v1943 = vmul.f32 %v1773, %v1911
    %v1944 = vmul.f32 %v1775, %v1912
    %v1945 = vmul.f32 %v1777, %v1913
    %v1946 = vmul.f32 %v1779, %v1914
    %v1947 = vmul.f32 %v1781, %v1915
    %v1948 = vmul.f32 %v1783, %v1916
    %v1949 = vmul.f32 %v1785, %v1917
    %v1950 = vmul.f32 %v1787, %v1918
    %v1951 = vmul.f32 %v1789, %v1919
    %v1952 = vmul.f32 %v1791, %v1920
    %v1953 = vmul.f32 %v1793, %v1921
    %v1954 = vpack.c.bf16 %v1923, %v1922
    %v1955 = vpack.c.bf16 %v1925, %v1924
    %v1956 = vpack.c.bf16 %v1927, %v1926
    %v1957 = vpack.c.bf16 %v1929, %v1928
    %v1958 = vpack.c.bf16 %v1931, %v1930
    %v1959 = vpack.c.bf16 %v1933, %v1932
    %v1960 = vpack.c.bf16 %v1935, %v1934
    %v1961 = vpack.c.bf16 %v1937, %v1936
    %v1962 = vpack.c.bf16 %v1939, %v1938
    %v1963 = vpack.c.bf16 %v1941, %v1940
    %v1964 = vpack.c.bf16 %v1943, %v1942
    %v1965 = vpack.c.bf16 %v1945, %v1944
    %v1966 = vpack.c.bf16 %v1947, %v1946
    %v1967 = vpack.c.bf16 %v1949, %v1948
    %v1968 = vpack.c.bf16 %v1951, %v1950
    %v1969 = vpack.c.bf16 %v1953, %v1952
    %v1971 = vsel %vm849, %v1954, 0
    %1973 = vmatprep.subr.bf16.mxu0 0
    %1974 = vmatpush1.bf16.msra.mxu0 %v831
    %1975 = vmatprep.subr.bf16.mxu0 0
    %1976 = vmatpush1.bf16.msra.mxu0 0
    %1977 = vmatprep.subr.bf16.mxu0 0
    %1978 = vmatpush1.bf16.msra.mxu0 0
    %1979 = vmatprep.subr.bf16.mxu0 0
    %1980 = vmatpush1.bf16.msra.mxu0 0
    %1981 = vmatprep.subr.bf16.mxu0 0
    %1982 = vmatpush1.bf16.msra.mxu0 0
    %1983 = vmatprep.subr.bf16.mxu0 0
    %1984 = vmatpush1.bf16.msra.mxu0 0
    %1985 = vmatprep.subr.bf16.mxu0 0
    %1986 = vmatpush1.bf16.msra.mxu0 0
    %1987 = vmatprep.subr.bf16.mxu0 0
    %1988 = vmatpush1.bf16.msra.mxu0 0
    %1989 = vmatprep.subr.bf16.mxu0 0
    %1990 = vmatpush1.bf16.msra.mxu0 0
    %1991 = vmatprep.subr.bf16.mxu0 0
    %1992 = vmatpush1.bf16.msra.mxu0 0
    %1993 = vmatprep.subr.bf16.mxu0 0
    %1994 = vmatpush1.bf16.msra.mxu0 0
    %1995 = vmatprep.subr.bf16.mxu0 0
    %1996 = vmatpush1.bf16.msra.mxu0 0
    %1997 = vmatprep.subr.bf16.mxu0 0
    %1998 = vmatpush1.bf16.msra.mxu0 0
    %1999 = vmatprep.subr.bf16.mxu0 0
    %2000 = vmatpush1.bf16.msra.mxu0 0
    %2001 = vmatprep.subr.bf16.mxu0 0
    %2002 = vmatpush1.bf16.msra.mxu0 0
    %2003 = vmatprep.subr.bf16.mxu0 0
    %2004 = vmatpush1.bf16.msra.mxu0 0
    %2005 = vmatprep.mubr.bf16.mxu0 0
    %2006 = vmatmul.mubr.bf16.gmra.mrb[0].mxu0 %v1971
    %v2007 = vpop.f32.mrb[0].mxu0
    %v2008 = vadd.f32 0.0, %v2007
    %v2009 = vpop.f32.mrb[0].mxu0
    %v2010 = vpop.f32.mrb[0].mxu0
    %v2011 = vadd.f32 0.0, %v2010
    %v2012 = vpop.f32.mrb[0].mxu0
    %2013 = vdwg.mxu0
    %v2015 = vsel %vm849, %v1955, 0
    %2017 = vmatprep.subr.bf16.mxu0 0
    %2018 = vmatpush1.bf16.msra.mxu0 %v832
    %2019 = vmatprep.subr.bf16.mxu0 0
    %2020 = vmatpush1.bf16.msra.mxu0 0
    %2021 = vmatprep.subr.bf16.mxu0 0
    %2022 = vmatpush1.bf16.msra.mxu0 0
    %2023 = vmatprep.subr.bf16.mxu0 0
    %2024 = vmatpush1.bf16.msra.mxu0 0
    %2025 = vmatprep.subr.bf16.mxu0 0
    %2026 = vmatpush1.bf16.msra.mxu0 0
    %2027 = vmatprep.subr.bf16.mxu0 0
    %2028 = vmatpush1.bf16.msra.mxu0 0
    %2029 = vmatprep.subr.bf16.mxu0 0
    %2030 = vmatpush1.bf16.msra.mxu0 0
    %2031 = vmatprep.subr.bf16.mxu0 0
    %2032 = vmatpush1.bf16.msra.mxu0 0
    %2033 = vmatprep.subr.bf16.mxu0 0
    %2034 = vmatpush1.bf16.msra.mxu0 0
    %2035 = vmatprep.subr.bf16.mxu0 0
    %2036 = vmatpush1.bf16.msra.mxu0 0
    %2037 = vmatprep.subr.bf16.mxu0 0
    %2038 = vmatpush1.bf16.msra.mxu0 0
    %2039 = vmatprep.subr.bf16.mxu0 0
    %2040 = vmatpush1.bf16.msra.mxu0 0
    %2041 = vmatprep.subr.bf16.mxu0 0
    %2042 = vmatpush1.bf16.msra.mxu0 0
    %2043 = vmatprep.subr.bf16.mxu0 0
    %2044 = vmatpush1.bf16.msra.mxu0 0
    %2045 = vmatprep.subr.bf16.mxu0 0
    %2046 = vmatpush1.bf16.msra.mxu0 0
    %2047 = vmatprep.subr.bf16.mxu0 0
    %2048 = vmatpush1.bf16.msra.mxu0 0
    %2049 = vmatprep.mubr.bf16.mxu0 0
    %2050 = vmatmul.mubr.bf16.gmra.mrb[0].mxu0 %v2015
    %v2051 = vpop.f32.mrb[0].mxu0
    %v2052 = vadd.f32 0.0, %v2051
    %v2053 = vpop.f32.mrb[0].mxu0
    %v2054 = vpop.f32.mrb[0].mxu0
    %v2055 = vadd.f32 0.0, %v2054
    %v2056 = vpop.f32.mrb[0].mxu0
    %2057 = vdwg.mxu0
    %v2059 = vsel %vm849, %v1956, 0
    %2061 = vmatprep.subr.bf16.mxu0 0
    %2062 = vmatpush1.bf16.msra.mxu0 %v833
    %2063 = vmatprep.subr.bf16.mxu0 0
    %2064 = vmatpush1.bf16.msra.mxu0 0
    %2065 = vmatprep.subr.bf16.mxu0 0
    %2066 = vmatpush1.bf16.msra.mxu0 0
    %2067 = vmatprep.subr.bf16.mxu0 0
    %2068 = vmatpush1.bf16.msra.mxu0 0
    %2069 = vmatprep.subr.bf16.mxu0 0
    %2070 = vmatpush1.bf16.msra.mxu0 0
    %2071 = vmatprep.subr.bf16.mxu0 0
    %2072 = vmatpush1.bf16.msra.mxu0 0
    %2073 = vmatprep.subr.bf16.mxu0 0
    %2074 = vmatpush1.bf16.msra.mxu0 0
    %2075 = vmatprep.subr.bf16.mxu0 0
    %2076 = vmatpush1.bf16.msra.mxu0 0
    %2077 = vmatprep.subr.bf16.mxu0 0
    %2078 = vmatpush1.bf16.msra.mxu0 0
    %2079 = vmatprep.subr.bf16.mxu0 0
    %2080 = vmatpush1.bf16.msra.mxu0 0
    %2081 = vmatprep.subr.bf16.mxu0 0
    %2082 = vmatpush1.bf16.msra.mxu0 0
    %2083 = vmatprep.subr.bf16.mxu0 0
    %2084 = vmatpush1.bf16.msra.mxu0 0
    %2085 = vmatprep.subr.bf16.mxu0 0
    %2086 = vmatpush1.bf16.msra.mxu0 0
    %2087 = vmatprep.subr.bf16.mxu0 0
    %2088 = vmatpush1.bf16.msra.mxu0 0
    %2089 = vmatprep.subr.bf16.mxu0 0
    %2090 = vmatpush1.bf16.msra.mxu0 0
    %2091 = vmatprep.subr.bf16.mxu0 0
    %2092 = vmatpush1.bf16.msra.mxu0 0
    %2093 = vmatprep.mubr.bf16.mxu0 0
    %2094 = vmatmul.mubr.bf16.gmra.mrb[0].mxu0 %v2059
    %v2095 = vpop.f32.mrb[0].mxu0
    %v2096 = vadd.f32 0.0, %v2095
    %v2097 = vpop.f32.mrb[0].mxu0
    %v2098 = vpop.f32.mrb[0].mxu0
    %v2099 = vadd.f32 0.0, %v2098
    %v2100 = vpop.f32.mrb[0].mxu0
    %2101 = vdwg.mxu0
    %v2103 = vsel %vm849, %v1957, 0
    %2105 = vmatprep.subr.bf16.mxu0 0
    %2106 = vmatpush1.bf16.msra.mxu0 %v834
    %2107 = vmatprep.subr.bf16.mxu0 0
    %2108 = vmatpush1.bf16.msra.mxu0 0
    %2109 = vmatprep.subr.bf16.mxu0 0
    %2110 = vmatpush1.bf16.msra.mxu0 0
    %2111 = vmatprep.subr.bf16.mxu0 0
    %2112 = vmatpush1.bf16.msra.mxu0 0
    %2113 = vmatprep.subr.bf16.mxu0 0
    %2114 = vmatpush1.bf16.msra.mxu0 0
    %2115 = vmatprep.subr.bf16.mxu0 0
    %2116 = vmatpush1.bf16.msra.mxu0 0
    %2117 = vmatprep.subr.bf16.mxu0 0
    %2118 = vmatpush1.bf16.msra.mxu0 0
    %2119 = vmatprep.subr.bf16.mxu0 0
    %2120 = vmatpush1.bf16.msra.mxu0 0
    %2121 = vmatprep.subr.bf16.mxu0 0
    %2122 = vmatpush1.bf16.msra.mxu0 0
    %2123 = vmatprep.subr.bf16.mxu0 0
    %2124 = vmatpush1.bf16.msra.mxu0 0
    %2125 = vmatprep.subr.bf16.mxu0 0
    %2126 = vmatpush1.bf16.msra.mxu0 0
    %2127 = vmatprep.subr.bf16.mxu0 0
    %2128 = vmatpush1.bf16.msra.mxu0 0
    %2129 = vmatprep.subr.bf16.mxu0 0
    %2130 = vmatpush1.bf16.msra.mxu0 0
    %2131 = vmatprep.subr.bf16.mxu0 0
    %2132 = vmatpush1.bf16.msra.mxu0 0
    %2133 = vmatprep.subr.bf16.mxu0 0
    %2134 = vmatpush1.bf16.msra.mxu0 0
    %2135 = vmatprep.subr.bf16.mxu0 0
    %2136 = vmatpush1.bf16.msra.mxu0 0
    %2137 = vmatprep.mubr.bf16.mxu0 0
    %2138 = vmatmul.mubr.bf16.gmra.mrb[0].mxu0 %v2103
    %v2139 = vpop.f32.mrb[0].mxu0
    %v2140 = vadd.f32 0.0, %v2139
    %v2141 = vpop.f32.mrb[0].mxu0
    %v2142 = vpop.f32.mrb[0].mxu0
    %v2143 = vadd.f32 0.0, %v2142
    %v2144 = vpop.f32.mrb[0].mxu0
    %2145 = vdwg.mxu0
    %v2147 = vsel %vm849, %v1958, 0
    %2149 = vmatprep.subr.bf16.mxu0 0
    %2150 = vmatpush1.bf16.msra.mxu0 %v835
    %2151 = vmatprep.subr.bf16.mxu0 0
    %2152 = vmatpush1.bf16.msra.mxu0 0
    %2153 = vmatprep.subr.bf16.mxu0 0
    %2154 = vmatpush1.bf16.msra.mxu0 0
    %2155 = vmatprep.subr.bf16.mxu0 0
    %2156 = vmatpush1.bf16.msra.mxu0 0
    %2157 = vmatprep.subr.bf16.mxu0 0
    %2158 = vmatpush1.bf16.msra.mxu0 0
    %2159 = vmatprep.subr.bf16.mxu0 0
    %2160 = vmatpush1.bf16.msra.mxu0 0
    %2161 = vmatprep.subr.bf16.mxu0 0
    %2162 = vmatpush1.bf16.msra.mxu0 0
    %2163 = vmatprep.subr.bf16.mxu0 0
    %2164 = vmatpush1.bf16.msra.mxu0 0
    %2165 = vmatprep.subr.bf16.mxu0 0
    %2166 = vmatpush1.bf16.msra.mxu0 0
    %2167 = vmatprep.subr.bf16.mxu0 0
    %2168 = vmatpush1.bf16.msra.mxu0 0
    %2169 = vmatprep.subr.bf16.mxu0 0
    %2170 = vmatpush1.bf16.msra.mxu0 0
    %2171 = vmatprep.subr.bf16.mxu0 0
    %2172 = vmatpush1.bf16.msra.mxu0 0
    %2173 = vmatprep.subr.bf16.mxu0 0
    %2174 = vmatpush1.bf16.msra.mxu0 0
    %2175 = vmatprep.subr.bf16.mxu0 0
    %2176 = vmatpush1.bf16.msra.mxu0 0
    %2177 = vmatprep.subr.bf16.mxu0 0
    %2178 = vmatpush1.bf16.msra.mxu0 0
    %2179 = vmatprep.subr.bf16.mxu0 0
    %2180 = vmatpush1.bf16.msra.mxu0 0
    %2181 = vmatprep.mubr.bf16.mxu0 0
    %2182 = vmatmul.mubr.bf16.gmra.mrb[0].mxu0 %v2147
    %v2183 = vpop.f32.mrb[0].mxu0
    %v2184 = vadd.f32 0.0, %v2183
    %v2185 = vpop.f32.mrb[0].mxu0
    %v2186 = vpop.f32.mrb[0].mxu0
    %v2187 = vadd.f32 0.0, %v2186
    %v2188 = vpop.f32.mrb[0].mxu0
    %2189 = vdwg.mxu0
    %v2191 = vsel %vm849, %v1959, 0
    %2193 = vmatprep.subr.bf16.mxu0 0
    %2194 = vmatpush1.bf16.msra.mxu0 %v836
    %2195 = vmatprep.subr.bf16.mxu0 0
    %2196 = vmatpush1.bf16.msra.mxu0 0
    %2197 = vmatprep.subr.bf16.mxu0 0
    %2198 = vmatpush1.bf16.msra.mxu0 0
    %2199 = vmatprep.subr.bf16.mxu0 0
    %2200 = vmatpush1.bf16.msra.mxu0 0
    %2201 = vmatprep.subr.bf16.mxu0 0
    %2202 = vmatpush1.bf16.msra.mxu0 0
    %2203 = vmatprep.subr.bf16.mxu0 0
    %2204 = vmatpush1.bf16.msra.mxu0 0
    %2205 = vmatprep.subr.bf16.mxu0 0
    %2206 = vmatpush1.bf16.msra.mxu0 0
    %2207 = vmatprep.subr.bf16.mxu0 0
    %2208 = vmatpush1.bf16.msra.mxu0 0
    %2209 = vmatprep.subr.bf16.mxu0 0
    %2210 = vmatpush1.bf16.msra.mxu0 0
    %2211 = vmatprep.subr.bf16.mxu0 0
    %2212 = vmatpush1.bf16.msra.mxu0 0
    %2213 = vmatprep.subr.bf16.mxu0 0
    %2214 = vmatpush1.bf16.msra.mxu0 0
    %2215 = vmatprep.subr.bf16.mxu0 0
    %2216 = vmatpush1.bf16.msra.mxu0 0
    %2217 = vmatprep.subr.bf16.mxu0 0
    %2218 = vmatpush1.bf16.msra.mxu0 0
    %2219 = vmatprep.subr.bf16.mxu0 0
    %2220 = vmatpush1.bf16.msra.mxu0 0
    %2221 = vmatprep.subr.bf16.mxu0 0
    %2222 = vmatpush1.bf16.msra.mxu0 0
    %2223 = vmatprep.subr.bf16.mxu0 0
    %2224 = vmatpush1.bf16.msra.mxu0 0
    %2225 = vmatprep.mubr.bf16.mxu0 0
    %2226 = vmatmul.mubr.bf16.gmra.mrb[0].mxu0 %v2191
    %v2227 = vpop.f32.mrb[0].mxu0
    %v2228 = vadd.f32 0.0, %v2227
    %v2229 = vpop.f32.mrb[0].mxu0
    %v2230 = vpop.f32.mrb[0].mxu0
    %v2231 = vadd.f32 0.0, %v2230
    %v2232 = vpop.f32.mrb[0].mxu0
    %2233 = vdwg.mxu0
    %v2235 = vsel %vm849, %v1960, 0
    %2237 = vmatprep.subr.bf16.mxu0 0
    %2238 = vmatpush1.bf16.msra.mxu0 %v837
    %2239 = vmatprep.subr.bf16.mxu0 0
    %2240 = vmatpush1.bf16.msra.mxu0 0
    %2241 = vmatprep.subr.bf16.mxu0 0
    %2242 = vmatpush1.bf16.msra.mxu0 0
    %2243 = vmatprep.subr.bf16.mxu0 0
    %2244 = vmatpush1.bf16.msra.mxu0 0
    %2245 = vmatprep.subr.bf16.mxu0 0
    %2246 = vmatpush1.bf16.msra.mxu0 0
    %2247 = vmatprep.subr.bf16.mxu0 0
    %2248 = vmatpush1.bf16.msra.mxu0 0
    %2249 = vmatprep.subr.bf16.mxu0 0
    %2250 = vmatpush1.bf16.msra.mxu0 0
    %2251 = vmatprep.subr.bf16.mxu0 0
    %2252 = vmatpush1.bf16.msra.mxu0 0
    %2253 = vmatprep.subr.bf16.mxu0 0
    %2254 = vmatpush1.bf16.msra.mxu0 0
    %2255 = vmatprep.subr.bf16.mxu0 0
    %2256 = vmatpush1.bf16.msra.mxu0 0
    %2257 = vmatprep.subr.bf16.mxu0 0
    %2258 = vmatpush1.bf16.msra.mxu0 0
    %2259 = vmatprep.subr.bf16.mxu0 0
    %2260 = vmatpush1.bf16.msra.mxu0 0
    %2261 = vmatprep.subr.bf16.mxu0 0
    %2262 = vmatpush1.bf16.msra.mxu0 0
    %2263 = vmatprep.subr.bf16.mxu0 0
    %2264 = vmatpush1.bf16.msra.mxu0 0
    %2265 = vmatprep.subr.bf16.mxu0 0
    %2266 = vmatpush1.bf16.msra.mxu0 0
    %2267 = vmatprep.subr.bf16.mxu0 0
    %2268 = vmatpush1.bf16.msra.mxu0 0
    %2269 = vmatprep.mubr.bf16.mxu0 0
    %2270 = vmatmul.mubr.bf16.gmra.mrb[0].mxu0 %v2235
    %v2271 = vpop.f32.mrb[0].mxu0
    %v2272 = vadd.f32 0.0, %v2271
    %v2273 = vpop.f32.mrb[0].mxu0
    %v2274 = vpop.f32.mrb[0].mxu0
    %v2275 = vadd.f32 0.0, %v2274
    %v2276 = vpop.f32.mrb[0].mxu0
    %2277 = vdwg.mxu0
    %v2279 = vsel %vm849, %v1961, 0
    %2281 = vmatprep.subr.bf16.mxu0 0
    %2282 = vmatpush1.bf16.msra.mxu0 %v838
    %2283 = vmatprep.subr.bf16.mxu0 0
    %2284 = vmatpush1.bf16.msra.mxu0 0
    %2285 = vmatprep.subr.bf16.mxu0 0
    %2286 = vmatpush1.bf16.msra.mxu0 0
    %2287 = vmatprep.subr.bf16.mxu0 0
    %2288 = vmatpush1.bf16.msra.mxu0 0
    %2289 = vmatprep.subr.bf16.mxu0 0
    %2290 = vmatpush1.bf16.msra.mxu0 0
    %2291 = vmatprep.subr.bf16.mxu0 0
    %2292 = vmatpush1.bf16.msra.mxu0 0
    %2293 = vmatprep.subr.bf16.mxu0 0
    %2294 = vmatpush1.bf16.msra.mxu0 0
    %2295 = vmatprep.subr.bf16.mxu0 0
    %2296 = vmatpush1.bf16.msra.mxu0 0
    %2297 = vmatprep.subr.bf16.mxu0 0
    %2298 = vmatpush1.bf16.msra.mxu0 0
    %2299 = vmatprep.subr.bf16.mxu0 0
    %2300 = vmatpush1.bf16.msra.mxu0 0
    %2301 = vmatprep.subr.bf16.mxu0 0
    %2302 = vmatpush1.bf16.msra.mxu0 0
    %2303 = vmatprep.subr.bf16.mxu0 0
    %2304 = vmatpush1.bf16.msra.mxu0 0
    %2305 = vmatprep.subr.bf16.mxu0 0
    %2306 = vmatpush1.bf16.msra.mxu0 0
    %2307 = vmatprep.subr.bf16.mxu0 0
    %2308 = vmatpush1.bf16.msra.mxu0 0
    %2309 = vmatprep.subr.bf16.mxu0 0
    %2310 = vmatpush1.bf16.msra.mxu0 0
    %2311 = vmatprep.subr.bf16.mxu0 0
    %2312 = vmatpush1.bf16.msra.mxu0 0
    %2313 = vmatprep.mubr.bf16.mxu0 0
    %2314 = vmatmul.mubr.bf16.gmra.mrb[0].mxu0 %v2279
    %v2315 = vpop.f32.mrb[0].mxu0
    %v2316 = vadd.f32 0.0, %v2315
    %v2317 = vpop.f32.mrb[0].mxu0
    %v2318 = vpop.f32.mrb[0].mxu0
    %v2319 = vadd.f32 0.0, %v2318
    %v2320 = vpop.f32.mrb[0].mxu0
    %2321 = vdwg.mxu0
    %v2323 = vsel %vm849, %v1962, 0
    %2325 = vmatprep.subr.bf16.mxu0 0
    %2326 = vmatpush1.bf16.msra.mxu0 %v839
    %2327 = vmatprep.subr.bf16.mxu0 0
    %2328 = vmatpush1.bf16.msra.mxu0 0
    %2329 = vmatprep.subr.bf16.mxu0 0
    %2330 = vmatpush1.bf16.msra.mxu0 0
    %2331 = vmatprep.subr.bf16.mxu0 0
    %2332 = vmatpush1.bf16.msra.mxu0 0
    %2333 = vmatprep.subr.bf16.mxu0 0
    %2334 = vmatpush1.bf16.msra.mxu0 0
    %2335 = vmatprep.subr.bf16.mxu0 0
    %2336 = vmatpush1.bf16.msra.mxu0 0
    %2337 = vmatprep.subr.bf16.mxu0 0
    %2338 = vmatpush1.bf16.msra.mxu0 0
    %2339 = vmatprep.subr.bf16.mxu0 0
    %2340 = vmatpush1.bf16.msra.mxu0 0
    %2341 = vmatprep.subr.bf16.mxu0 0
    %2342 = vmatpush1.bf16.msra.mxu0 0
    %2343 = vmatprep.subr.bf16.mxu0 0
    %2344 = vmatpush1.bf16.msra.mxu0 0
    %2345 = vmatprep.subr.bf16.mxu0 0
    %2346 = vmatpush1.bf16.msra.mxu0 0
    %2347 = vmatprep.subr.bf16.mxu0 0
    %2348 = vmatpush1.bf16.msra.mxu0 0
    %2349 = vmatprep.subr.bf16.mxu0 0
    %2350 = vmatpush1.bf16.msra.mxu0 0
    %2351 = vmatprep.subr.bf16.mxu0 0
    %2352 = vmatpush1.bf16.msra.mxu0 0
    %2353 = vmatprep.subr.bf16.mxu0 0
    %2354 = vmatpush1.bf16.msra.mxu0 0
    %2355 = vmatprep.subr.bf16.mxu0 0
    %2356 = vmatpush1.bf16.msra.mxu0 0
    %2357 = vmatprep.mubr.bf16.mxu0 0
    %2358 = vmatmul.mubr.bf16.gmra.mrb[0].mxu0 %v2323
    %v2359 = vpop.f32.mrb[0].mxu0
    %v2360 = vadd.f32 0.0, %v2359
    %v2361 = vpop.f32.mrb[0].mxu0
    %v2362 = vpop.f32.mrb[0].mxu0
    %v2363 = vadd.f32 0.0, %v2362
    %v2364 = vpop.f32.mrb[0].mxu0
    %2365 = vdwg.mxu0
    %v2367 = vsel %vm849, %v1963, 0
    %2369 = vmatprep.subr.bf16.mxu0 0
    %2370 = vmatpush1.bf16.msra.mxu0 %v840
    %2371 = vmatprep.subr.bf16.mxu0 0
    %2372 = vmatpush1.bf16.msra.mxu0 0
    %2373 = vmatprep.subr.bf16.mxu0 0
    %2374 = vmatpush1.bf16.msra.mxu0 0
    %2375 = vmatprep.subr.bf16.mxu0 0
    %2376 = vmatpush1.bf16.msra.mxu0 0
    %2377 = vmatprep.subr.bf16.mxu0 0
    %2378 = vmatpush1.bf16.msra.mxu0 0
    %2379 = vmatprep.subr.bf16.mxu0 0
    %2380 = vmatpush1.bf16.msra.mxu0 0
    %2381 = vmatprep.subr.bf16.mxu0 0
    %2382 = vmatpush1.bf16.msra.mxu0 0
    %2383 = vmatprep.subr.bf16.mxu0 0
    %2384 = vmatpush1.bf16.msra.mxu0 0
    %2385 = vmatprep.subr.bf16.mxu0 0
    %2386 = vmatpush1.bf16.msra.mxu0 0
    %2387 = vmatprep.subr.bf16.mxu0 0
    %2388 = vmatpush1.bf16.msra.mxu0 0
    %2389 = vmatprep.subr.bf16.mxu0 0
    %2390 = vmatpush1.bf16.msra.mxu0 0
    %2391 = vmatprep.subr.bf16.mxu0 0
    %2392 = vmatpush1.bf16.msra.mxu0 0
    %2393 = vmatprep.subr.bf16.mxu0 0
    %2394 = vmatpush1.bf16.msra.mxu0 0
    %2395 = vmatprep.subr.bf16.mxu0 0
    %2396 = vmatpush1.bf16.msra.mxu0 0
    %2397 = vmatprep.subr.bf16.mxu0 0
    %2398 = vmatpush1.bf16.msra.mxu0 0
    %2399 = vmatprep.subr.bf16.mxu0 0
    %2400 = vmatpush1.bf16.msra.mxu0 0
    %2401 = vmatprep.mubr.bf16.mxu0 0
    %2402 = vmatmul.mubr.bf16.gmra.mrb[0].mxu0 %v2367
    %v2403 = vpop.f32.mrb[0].mxu0
    %v2404 = vadd.f32 0.0, %v2403
    %v2405 = vpop.f32.mrb[0].mxu0
    %v2406 = vpop.f32.mrb[0].mxu0
    %v2407 = vadd.f32 0.0, %v2406
    %v2408 = vpop.f32.mrb[0].mxu0
    %2409 = vdwg.mxu0
    %v2411 = vsel %vm849, %v1964, 0
    %2413 = vmatprep.subr.bf16.mxu0 0
    %2414 = vmatpush1.bf16.msra.mxu0 %v841
    %2415 = vmatprep.subr.bf16.mxu0 0
    %2416 = vmatpush1.bf16.msra.mxu0 0
    %2417 = vmatprep.subr.bf16.mxu0 0
    %2418 = vmatpush1.bf16.msra.mxu0 0
    %2419 = vmatprep.subr.bf16.mxu0 0
    %2420 = vmatpush1.bf16.msra.mxu0 0
    %2421 = vmatprep.subr.bf16.mxu0 0
    %2422 = vmatpush1.bf16.msra.mxu0 0
    %2423 = vmatprep.subr.bf16.mxu0 0
    %2424 = vmatpush1.bf16.msra.mxu0 0
    %2425 = vmatprep.subr.bf16.mxu0 0
    %2426 = vmatpush1.bf16.msra.mxu0 0
    %2427 = vmatprep.subr.bf16.mxu0 0
    %2428 = vmatpush1.bf16.msra.mxu0 0
    %2429 = vmatprep.subr.bf16.mxu0 0
    %2430 = vmatpush1.bf16.msra.mxu0 0
    %2431 = vmatprep.subr.bf16.mxu0 0
    %2432 = vmatpush1.bf16.msra.mxu0 0
    %2433 = vmatprep.subr.bf16.mxu0 0
    %2434 = vmatpush1.bf16.msra.mxu0 0
    %2435 = vmatprep.subr.bf16.mxu0 0
    %2436 = vmatpush1.bf16.msra.mxu0 0
    %2437 = vmatprep.subr.bf16.mxu0 0
    %2438 = vmatpush1.bf16.msra.mxu0 0
    %2439 = vmatprep.subr.bf16.mxu0 0
    %2440 = vmatpush1.bf16.msra.mxu0 0
    %2441 = vmatprep.subr.bf16.mxu0 0
    %2442 = vmatpush1.bf16.msra.mxu0 0
    %2443 = vmatprep.subr.bf16.mxu0 0
    %2444 = vmatpush1.bf16.msra.mxu0 0
    %2445 = vmatprep.mubr.bf16.mxu0 0
    %2446 = vmatmul.mubr.bf16.gmra.mrb[0].mxu0 %v2411
    %v2447 = vpop.f32.mrb[0].mxu0
    %v2448 = vadd.f32 0.0, %v2447
    %v2449 = vpop.f32.mrb[0].mxu0
    %v2450 = vpop.f32.mrb[0].mxu0
    %v2451 = vadd.f32 0.0, %v2450
    %v2452 = vpop.f32.mrb[0].mxu0
    %2453 = vdwg.mxu0
    %v2455 = vsel %vm849, %v1965, 0
    %2457 = vmatprep.subr.bf16.mxu0 0
    %2458 = vmatpush1.bf16.msra.mxu0 %v842
    %2459 = vmatprep.subr.bf16.mxu0 0
    %2460 = vmatpush1.bf16.msra.mxu0 0
    %2461 = vmatprep.subr.bf16.mxu0 0
    %2462 = vmatpush1.bf16.msra.mxu0 0
    %2463 = vmatprep.subr.bf16.mxu0 0
    %2464 = vmatpush1.bf16.msra.mxu0 0
    %2465 = vmatprep.subr.bf16.mxu0 0
    %2466 = vmatpush1.bf16.msra.mxu0 0
    %2467 = vmatprep.subr.bf16.mxu0 0
    %2468 = vmatpush1.bf16.msra.mxu0 0
    %2469 = vmatprep.subr.bf16.mxu0 0
    %2470 = vmatpush1.bf16.msra.mxu0 0
    %2471 = vmatprep.subr.bf16.mxu0 0
    %2472 = vmatpush1.bf16.msra.mxu0 0
    %2473 = vmatprep.subr.bf16.mxu0 0
    %2474 = vmatpush1.bf16.msra.mxu0 0
    %2475 = vmatprep.subr.bf16.mxu0 0
    %2476 = vmatpush1.bf16.msra.mxu0 0
    %2477 = vmatprep.subr.bf16.mxu0 0
    %2478 = vmatpush1.bf16.msra.mxu0 0
    %2479 = vmatprep.subr.bf16.mxu0 0
    %2480 = vmatpush1.bf16.msra.mxu0 0
    %2481 = vmatprep.subr.bf16.mxu0 0
    %2482 = vmatpush1.bf16.msra.mxu0 0
    %2483 = vmatprep.subr.bf16.mxu0 0
    %2484 = vmatpush1.bf16.msra.mxu0 0
    %2485 = vmatprep.subr.bf16.mxu0 0
    %2486 = vmatpush1.bf16.msra.mxu0 0
    %2487 = vmatprep.subr.bf16.mxu0 0
    %2488 = vmatpush1.bf16.msra.mxu0 0
    %2489 = vmatprep.mubr.bf16.mxu0 0
    %2490 = vmatmul.mubr.bf16.gmra.mrb[0].mxu0 %v2455
    %v2491 = vpop.f32.mrb[0].mxu0
    %v2492 = vadd.f32 0.0, %v2491
    %v2493 = vpop.f32.mrb[0].mxu0
    %v2494 = vpop.f32.mrb[0].mxu0
    %v2495 = vadd.f32 0.0, %v2494
    %v2496 = vpop.f32.mrb[0].mxu0
    %2497 = vdwg.mxu0
    %v2499 = vsel %vm849, %v1966, 0
    %2501 = vmatprep.subr.bf16.mxu0 0
    %2502 = vmatpush1.bf16.msra.mxu0 %v843
    %2503 = vmatprep.subr.bf16.mxu0 0
    %2504 = vmatpush1.bf16.msra.mxu0 0
    %2505 = vmatprep.subr.bf16.mxu0 0
    %2506 = vmatpush1.bf16.msra.mxu0 0
    %2507 = vmatprep.subr.bf16.mxu0 0
    %2508 = vmatpush1.bf16.msra.mxu0 0
    %2509 = vmatprep.subr.bf16.mxu0 0
    %2510 = vmatpush1.bf16.msra.mxu0 0
    %2511 = vmatprep.subr.bf16.mxu0 0
    %2512 = vmatpush1.bf16.msra.mxu0 0
    %2513 = vmatprep.subr.bf16.mxu0 0
    %2514 = vmatpush1.bf16.msra.mxu0 0
    %2515 = vmatprep.subr.bf16.mxu0 0
    %2516 = vmatpush1.bf16.msra.mxu0 0
    %2517 = vmatprep.subr.bf16.mxu0 0
    %2518 = vmatpush1.bf16.msra.mxu0 0
    %2519 = vmatprep.subr.bf16.mxu0 0
    %2520 = vmatpush1.bf16.msra.mxu0 0
    %2521 = vmatprep.subr.bf16.mxu0 0
    %2522 = vmatpush1.bf16.msra.mxu0 0
    %2523 = vmatprep.subr.bf16.mxu0 0
    %2524 = vmatpush1.bf16.msra.mxu0 0
    %2525 = vmatprep.subr.bf16.mxu0 0
    %2526 = vmatpush1.bf16.msra.mxu0 0
    %2527 = vmatprep.subr.bf16.mxu0 0
    %2528 = vmatpush1.bf16.msra.mxu0 0
    %2529 = vmatprep.subr.bf16.mxu0 0
    %2530 = vmatpush1.bf16.msra.mxu0 0
    %2531 = vmatprep.subr.bf16.mxu0 0
    %2532 = vmatpush1.bf16.msra.mxu0 0
    %2533 = vmatprep.mubr.bf16.mxu0 0
    %2534 = vmatmul.mubr.bf16.gmra.mrb[0].mxu0 %v2499
    %v2535 = vpop.f32.mrb[0].mxu0
    %v2536 = vadd.f32 0.0, %v2535
    %v2537 = vpop.f32.mrb[0].mxu0
    %v2538 = vpop.f32.mrb[0].mxu0
    %v2539 = vadd.f32 0.0, %v2538
    %v2540 = vpop.f32.mrb[0].mxu0
    %2541 = vdwg.mxu0
    %v2543 = vsel %vm849, %v1967, 0
    %2545 = vmatprep.subr.bf16.mxu0 0
    %2546 = vmatpush1.bf16.msra.mxu0 %v844
    %2547 = vmatprep.subr.bf16.mxu0 0
    %2548 = vmatpush1.bf16.msra.mxu0 0
    %2549 = vmatprep.subr.bf16.mxu0 0
    %2550 = vmatpush1.bf16.msra.mxu0 0
    %2551 = vmatprep.subr.bf16.mxu0 0
    %2552 = vmatpush1.bf16.msra.mxu0 0
    %2553 = vmatprep.subr.bf16.mxu0 0
    %2554 = vmatpush1.bf16.msra.mxu0 0
    %2555 = vmatprep.subr.bf16.mxu0 0
    %2556 = vmatpush1.bf16.msra.mxu0 0
    %2557 = vmatprep.subr.bf16.mxu0 0
    %2558 = vmatpush1.bf16.msra.mxu0 0
    %2559 = vmatprep.subr.bf16.mxu0 0
    %2560 = vmatpush1.bf16.msra.mxu0 0
    %2561 = vmatprep.subr.bf16.mxu0 0
    %2562 = vmatpush1.bf16.msra.mxu0 0
    %2563 = vmatprep.subr.bf16.mxu0 0
    %2564 = vmatpush1.bf16.msra.mxu0 0
    %2565 = vmatprep.subr.bf16.mxu0 0
    %2566 = vmatpush1.bf16.msra.mxu0 0
    %2567 = vmatprep.subr.bf16.mxu0 0
    %2568 = vmatpush1.bf16.msra.mxu0 0
    %2569 = vmatprep.subr.bf16.mxu0 0
    %2570 = vmatpush1.bf16.msra.mxu0 0
    %2571 = vmatprep.subr.bf16.mxu0 0
    %2572 = vmatpush1.bf16.msra.mxu0 0
    %2573 = vmatprep.subr.bf16.mxu0 0
    %2574 = vmatpush1.bf16.msra.mxu0 0
    %2575 = vmatprep.subr.bf16.mxu0 0
    %2576 = vmatpush1.bf16.msra.mxu0 0
    %2577 = vmatprep.mubr.bf16.mxu0 0
    %2578 = vmatmul.mubr.bf16.gmra.mrb[0].mxu0 %v2543
    %v2579 = vpop.f32.mrb[0].mxu0
    %v2580 = vadd.f32 0.0, %v2579
    %v2581 = vpop.f32.mrb[0].mxu0
    %v2582 = vpop.f32.mrb[0].mxu0
    %v2583 = vadd.f32 0.0, %v2582
    %v2584 = vpop.f32.mrb[0].mxu0
    %2585 = vdwg.mxu0
    %v2587 = vsel %vm849, %v1968, 0
    %2589 = vmatprep.subr.bf16.mxu0 0
    %2590 = vmatpush1.bf16.msra.mxu0 %v845
    %2591 = vmatprep.subr.bf16.mxu0 0
    %2592 = vmatpush1.bf16.msra.mxu0 0
    %2593 = vmatprep.subr.bf16.mxu0 0
    %2594 = vmatpush1.bf16.msra.mxu0 0
    %2595 = vmatprep.subr.bf16.mxu0 0
    %2596 = vmatpush1.bf16.msra.mxu0 0
    %2597 = vmatprep.subr.bf16.mxu0 0
    %2598 = vmatpush1.bf16.msra.mxu0 0
    %2599 = vmatprep.subr.bf16.mxu0 0
    %2600 = vmatpush1.bf16.msra.mxu0 0
    %2601 = vmatprep.subr.bf16.mxu0 0
    %2602 = vmatpush1.bf16.msra.mxu0 0
    %2603 = vmatprep.subr.bf16.mxu0 0
    %2604 = vmatpush1.bf16.msra.mxu0 0
    %2605 = vmatprep.subr.bf16.mxu0 0
    %2606 = vmatpush1.bf16.msra.mxu0 0
    %2607 = vmatprep.subr.bf16.mxu0 0
    %2608 = vmatpush1.bf16.msra.mxu0 0
    %2609 = vmatprep.subr.bf16.mxu0 0
    %2610 = vmatpush1.bf16.msra.mxu0 0
    %2611 = vmatprep.subr.bf16.mxu0 0
    %2612 = vmatpush1.bf16.msra.mxu0 0
    %2613 = vmatprep.subr.bf16.mxu0 0
    %2614 = vmatpush1.bf16.msra.mxu0 0
    %2615 = vmatprep.subr.bf16.mxu0 0
    %2616 = vmatpush1.bf16.msra.mxu0 0
    %2617 = vmatprep.subr.bf16.mxu0 0
    %2618 = vmatpush1.bf16.msra.mxu0 0
    %2619 = vmatprep.subr.bf16.mxu0 0
    %2620 = vmatpush1.bf16.msra.mxu0 0
    %2621 = vmatprep.mubr.bf16.mxu0 0
    %2622 = vmatmul.mubr.bf16.gmra.mrb[0].mxu0 %v2587
    %v2623 = vpop.f32.mrb[0].mxu0
    %v2624 = vadd.f32 0.0, %v2623
    %v2625 = vpop.f32.mrb[0].mxu0
    %v2626 = vpop.f32.mrb[0].mxu0
    %v2627 = vadd.f32 0.0, %v2626
    %v2628 = vpop.f32.mrb[0].mxu0
    %2629 = vdwg.mxu0
    %v2631 = vsel %vm849, %v1969, 0
    %2633 = vmatprep.subr.bf16.mxu0 0
    %2634 = vmatpush1.bf16.msra.mxu0 %v846
    %2635 = vmatprep.subr.bf16.mxu0 0
    %2636 = vmatpush1.bf16.msra.mxu0 0
    %2637 = vmatprep.subr.bf16.mxu0 0
    %2638 = vmatpush1.bf16.msra.mxu0 0
    %2639 = vmatprep.subr.bf16.mxu0 0
    %2640 = vmatpush1.bf16.msra.mxu0 0
    %2641 = vmatprep.subr.bf16.mxu0 0
    %2642 = vmatpush1.bf16.msra.mxu0 0
    %2643 = vmatprep.subr.bf16.mxu0 0
    %2644 = vmatpush1.bf16.msra.mxu0 0
    %2645 = vmatprep.subr.bf16.mxu0 0
    %2646 = vmatpush1.bf16.msra.mxu0 0
    %2647 = vmatprep.subr.bf16.mxu0 0
    %2648 = vmatpush1.bf16.msra.mxu0 0
    %2649 = vmatprep.subr.bf16.mxu0 0
    %2650 = vmatpush1.bf16.msra.mxu0 0
    %2651 = vmatprep.subr.bf16.mxu0 0
    %2652 = vmatpush1.bf16.msra.mxu0 0
    %2653 = vmatprep.subr.bf16.mxu0 0
    %2654 = vmatpush1.bf16.msra.mxu0 0
    %2655 = vmatprep.subr.bf16.mxu0 0
    %2656 = vmatpush1.bf16.msra.mxu0 0
    %2657 = vmatprep.subr.bf16.mxu0 0
    %2658 = vmatpush1.bf16.msra.mxu0 0
    %2659 = vmatprep.subr.bf16.mxu0 0
    %2660 = vmatpush1.bf16.msra.mxu0 0
    %2661 = vmatprep.subr.bf16.mxu0 0
    %2662 = vmatpush1.bf16.msra.mxu0 0
    %2663 = vmatprep.subr.bf16.mxu0 0
    %2664 = vmatpush1.bf16.msra.mxu0 0
    %2665 = vmatprep.mubr.bf16.mxu0 0
    %2666 = vmatmul.mubr.bf16.gmra.mrb[0].mxu0 %v2631
    %v2667 = vpop.f32.mrb[0].mxu0
    %v2668 = vadd.f32 0.0, %v2667
    %v2669 = vpop.f32.mrb[0].mxu0
    %v2670 = vpop.f32.mrb[0].mxu0
    %v2671 = vadd.f32 0.0, %v2670
    %v2672 = vpop.f32.mrb[0].mxu0
    %2673 = vdwg.mxu0
    %v2674 = vpack.c.bf16 %v2011, %v2008
    %v2675 = vpack.c.bf16 %v2055, %v2052
    %v2676 = vpack.c.bf16 %v2099, %v2096
    %v2677 = vpack.c.bf16 %v2143, %v2140
    %v2678 = vpack.c.bf16 %v2187, %v2184
    %v2679 = vpack.c.bf16 %v2231, %v2228
    %v2680 = vpack.c.bf16 %v2275, %v2272
    %v2681 = vpack.c.bf16 %v2319, %v2316
    %v2682 = vpack.c.bf16 %v2363, %v2360
    %v2683 = vpack.c.bf16 %v2407, %v2404
    %v2684 = vpack.c.bf16 %v2451, %v2448
    %v2685 = vpack.c.bf16 %v2495, %v2492
    %v2686 = vpack.c.bf16 %v2539, %v2536
    %v2687 = vpack.c.bf16 %v2583, %v2580
    %v2688 = vpack.c.bf16 %v2627, %v2624
    %v2689 = vpack.c.bf16 %v2671, %v2668
    %s2690 = scalar_lea.vmem [#allocation11], 16
    %v2691 = vld [vmem:[%s2690] sm:$0xff]
    %v2692 = vld [vmem:[%s2690 + $0x8] sm:$0xff]
    %2694 = vrot.lane.b32.xlu0 %v445, 112
    %v2695 = vpop.permute.xlu0 %2694
    %2697 = vrot.lane.b32.xlu0 %v638, 112
    %v2698 = vpop.permute.xlu0 %2697
    %v2700 = vsel %vm849, %v2695, 0
    %v2703 = vsel %vm849, %v2698, 0
    %2705 = vmatprep.subr.bf16.mxu0 0
    %2706 = vmatpush1.bf16.xpose.msra.mxu0 %v2703
    %2707 = vmatprep.subr.bf16.mxu0 0
    %2708 = vmatpush1.bf16.xpose.msra.mxu0 0
    %2709 = vmatprep.subr.bf16.mxu0 0
    %2710 = vmatpush1.bf16.xpose.msra.mxu0 0
    %2711 = vmatprep.subr.bf16.mxu0 0
    %2712 = vmatpush1.bf16.xpose.msra.mxu0 0
    %2713 = vmatprep.subr.bf16.mxu0 0
    %2714 = vmatpush1.bf16.xpose.msra.mxu0 0
    %2715 = vmatprep.subr.bf16.mxu0 0
    %2716 = vmatpush1.bf16.xpose.msra.mxu0 0
    %2717 = vmatprep.subr.bf16.mxu0 0
    %2718 = vmatpush1.bf16.xpose.msra.mxu0 0
    %2719 = vmatprep.subr.bf16.mxu0 0
    %2720 = vmatpush1.bf16.xpose.msra.mxu0 0
    %2721 = vmatprep.subr.bf16.mxu0 0
    %2722 = vmatpush1.bf16.xpose.msra.mxu0 0
    %2723 = vmatprep.subr.bf16.mxu0 0
    %2724 = vmatpush1.bf16.xpose.msra.mxu0 0
    %2725 = vmatprep.subr.bf16.mxu0 0
    %2726 = vmatpush1.bf16.xpose.msra.mxu0 0
    %2727 = vmatprep.subr.bf16.mxu0 0
    %2728 = vmatpush1.bf16.xpose.msra.mxu0 0
    %2729 = vmatprep.subr.bf16.mxu0 0
    %2730 = vmatpush1.bf16.xpose.msra.mxu0 0
    %2731 = vmatprep.subr.bf16.mxu0 0
    %2732 = vmatpush1.bf16.xpose.msra.mxu0 0
    %2733 = vmatprep.subr.bf16.mxu0 0
    %2734 = vmatpush1.bf16.xpose.msra.mxu0 0
    %2735 = vmatprep.subr.bf16.mxu0 0
    %2736 = vmatpush1.bf16.xpose.msra.mxu0 0
    %2737 = vmatprep.mubr.bf16.mxu0 0
    %2738 = vmatmul.mubr.bf16.gmra.mrb[0].mxu0 %v2700
    %v2739 = vpop.f32.mrb[0].mxu0
    %v2740 = vadd.f32 %v2691, %v2739
    %v2741 = vpop.f32.mrb[0].mxu0
    %v2742 = vpop.f32.mrb[0].mxu0
    %v2743 = vadd.f32 %v2692, %v2742
    %v2744 = vpop.f32.mrb[0].mxu0
    %2745 = vdwg.mxu0
    %2747 = vrot.lane.b32.xlu0 %v446, 112
    %v2748 = vpop.permute.xlu0 %2747
    %2750 = vrot.lane.b32.xlu0 %v639, 112
    %v2751 = vpop.permute.xlu0 %2750
    %v2753 = vsel %vm849, %v2748, 0
    %v2756 = vsel %vm849, %v2751, 0
    %2758 = vmatprep.subr.bf16.mxu0 0
    %2759 = vmatpush1.bf16.xpose.msra.mxu0 %v2756
    %2760 = vmatprep.subr.bf16.mxu0 0
    %2761 = vmatpush1.bf16.xpose.msra.mxu0 0
    %2762 = vmatprep.subr.bf16.mxu0 0
    %2763 = vmatpush1.bf16.xpose.msra.mxu0 0
    %2764 = vmatprep.subr.bf16.mxu0 0
    %2765 = vmatpush1.bf16.xpose.msra.mxu0 0
    %2766 = vmatprep.subr.bf16.mxu0 0
    %2767 = vmatpush1.bf16.xpose.msra.mxu0 0
    %2768 = vmatprep.subr.bf16.mxu0 0
    %2769 = vmatpush1.bf16.xpose.msra.mxu0 0
    %2770 = vmatprep.subr.bf16.mxu0 0
    %2771 = vmatpush1.bf16.xpose.msra.mxu0 0
    %2772 = vmatprep.subr.bf16.mxu0 0
    %2773 = vmatpush1.bf16.xpose.msra.mxu0 0
    %2774 = vmatprep.subr.bf16.mxu0 0
    %2775 = vmatpush1.bf16.xpose.msra.mxu0 0
    %2776 = vmatprep.subr.bf16.mxu0 0
    %2777 = vmatpush1.bf16.xpose.msra.mxu0 0
    %2778 = vmatprep.subr.bf16.mxu0 0
    %2779 = vmatpush1.bf16.xpose.msra.mxu0 0
    %2780 = vmatprep.subr.bf16.mxu0 0
    %2781 = vmatpush1.bf16.xpose.msra.mxu0 0
    %2782 = vmatprep.subr.bf16.mxu0 0
    %2783 = vmatpush1.bf16.xpose.msra.mxu0 0
    %2784 = vmatprep.subr.bf16.mxu0 0
    %2785 = vmatpush1.bf16.xpose.msra.mxu0 0
    %2786 = vmatprep.subr.bf16.mxu0 0
    %2787 = vmatpush1.bf16.xpose.msra.mxu0 0
    %2788 = vmatprep.subr.bf16.mxu0 0
    %2789 = vmatpush1.bf16.xpose.msra.mxu0 0
    %2790 = vmatprep.mubr.bf16.mxu0 0
    %2791 = vmatmul.mubr.bf16.gmra.mrb[0].mxu0 %v2753
    %v2792 = vpop.f32.mrb[0].mxu0
    %v2793 = vadd.f32 %v2691, %v2792
    %v2794 = vpop.f32.mrb[0].mxu0
    %v2795 = vpop.f32.mrb[0].mxu0
    %v2796 = vadd.f32 %v2692, %v2795
    %v2797 = vpop.f32.mrb[0].mxu0
    %2798 = vdwg.mxu0
    %2800 = vrot.lane.b32.xlu0 %v447, 112
    %v2801 = vpop.permute.xlu0 %2800
    %2803 = vrot.lane.b32.xlu0 %v640, 112
    %v2804 = vpop.permute.xlu0 %2803
    %v2806 = vsel %vm849, %v2801, 0
    %v2809 = vsel %vm849, %v2804, 0
    %2811 = vmatprep.subr.bf16.mxu0 0
    %2812 = vmatpush1.bf16.xpose.msra.mxu0 %v2809
    %2813 = vmatprep.subr.bf16.mxu0 0
    %2814 = vmatpush1.bf16.xpose.msra.mxu0 0
    %2815 = vmatprep.subr.bf16.mxu0 0
    %2816 = vmatpush1.bf16.xpose.msra.mxu0 0
    %2817 = vmatprep.subr.bf16.mxu0 0
    %2818 = vmatpush1.bf16.xpose.msra.mxu0 0
    %2819 = vmatprep.subr.bf16.mxu0 0
    %2820 = vmatpush1.bf16.xpose.msra.mxu0 0
    %2821 = vmatprep.subr.bf16.mxu0 0
    %2822 = vmatpush1.bf16.xpose.msra.mxu0 0
    %2823 = vmatprep.subr.bf16.mxu0 0
    %2824 = vmatpush1.bf16.xpose.msra.mxu0 0
    %2825 = vmatprep.subr.bf16.mxu0 0
    %2826 = vmatpush1.bf16.xpose.msra.mxu0 0
    %2827 = vmatprep.subr.bf16.mxu0 0
    %2828 = vmatpush1.bf16.xpose.msra.mxu0 0
    %2829 = vmatprep.subr.bf16.mxu0 0
    %2830 = vmatpush1.bf16.xpose.msra.mxu0 0
    %2831 = vmatprep.subr.bf16.mxu0 0
    %2832 = vmatpush1.bf16.xpose.msra.mxu0 0
    %2833 = vmatprep.subr.bf16.mxu0 0
    %2834 = vmatpush1.bf16.xpose.msra.mxu0 0
    %2835 = vmatprep.subr.bf16.mxu0 0
    %2836 = vmatpush1.bf16.xpose.msra.mxu0 0
    %2837 = vmatprep.subr.bf16.mxu0 0
    %2838 = vmatpush1.bf16.xpose.msra.mxu0 0
    %2839 = vmatprep.subr.bf16.mxu0 0
    %2840 = vmatpush1.bf16.xpose.msra.mxu0 0
    %2841 = vmatprep.subr.bf16.mxu0 0
    %2842 = vmatpush1.bf16.xpose.msra.mxu0 0
    %2843 = vmatprep.mubr.bf16.mxu0 0
    %2844 = vmatmul.mubr.bf16.gmra.mrb[0].mxu0 %v2806
    %v2845 = vpop.f32.mrb[0].mxu0
    %v2846 = vadd.f32 %v2691, %v2845
    %v2847 = vpop.f32.mrb[0].mxu0
    %v2848 = vpop.f32.mrb[0].mxu0
    %v2849 = vadd.f32 %v2692, %v2848
    %v2850 = vpop.f32.mrb[0].mxu0
    %2851 = vdwg.mxu0
    %2853 = vrot.lane.b32.xlu0 %v448, 112
    %v2854 = vpop.permute.xlu0 %2853
    %2856 = vrot.lane.b32.xlu0 %v641, 112
    %v2857 = vpop.permute.xlu0 %2856
    %v2859 = vsel %vm849, %v2854, 0
    %v2862 = vsel %vm849, %v2857, 0
    %2864 = vmatprep.subr.bf16.mxu0 0
    %2865 = vmatpush1.bf16.xpose.msra.mxu0 %v2862
    %2866 = vmatprep.subr.bf16.mxu0 0
    %2867 = vmatpush1.bf16.xpose.msra.mxu0 0
    %2868 = vmatprep.subr.bf16.mxu0 0
    %2869 = vmatpush1.bf16.xpose.msra.mxu0 0
    %2870 = vmatprep.subr.bf16.mxu0 0
    %2871 = vmatpush1.bf16.xpose.msra.mxu0 0
    %2872 = vmatprep.subr.bf16.mxu0 0
    %2873 = vmatpush1.bf16.xpose.msra.mxu0 0
    %2874 = vmatprep.subr.bf16.mxu0 0
    %2875 = vmatpush1.bf16.xpose.msra.mxu0 0
    %2876 = vmatprep.subr.bf16.mxu0 0
    %2877 = vmatpush1.bf16.xpose.msra.mxu0 0
    %2878 = vmatprep.subr.bf16.mxu0 0
    %2879 = vmatpush1.bf16.xpose.msra.mxu0 0
    %2880 = vmatprep.subr.bf16.mxu0 0
    %2881 = vmatpush1.bf16.xpose.msra.mxu0 0
    %2882 = vmatprep.subr.bf16.mxu0 0
    %2883 = vmatpush1.bf16.xpose.msra.mxu0 0
    %2884 = vmatprep.subr.bf16.mxu0 0
    %2885 = vmatpush1.bf16.xpose.msra.mxu0 0
    %2886 = vmatprep.subr.bf16.mxu0 0
    %2887 = vmatpush1.bf16.xpose.msra.mxu0 0
    %2888 = vmatprep.subr.bf16.mxu0 0
    %2889 = vmatpush1.bf16.xpose.msra.mxu0 0
    %2890 = vmatprep.subr.bf16.mxu0 0
    %2891 = vmatpush1.bf16.xpose.msra.mxu0 0
    %2892 = vmatprep.subr.bf16.mxu0 0
    %2893 = vmatpush1.bf16.xpose.msra.mxu0 0
    %2894 = vmatprep.subr.bf16.mxu0 0
    %2895 = vmatpush1.bf16.xpose.msra.mxu0 0
    %2896 = vmatprep.mubr.bf16.mxu0 0
    %2897 = vmatmul.mubr.bf16.gmra.mrb[0].mxu0 %v2859
    %v2898 = vpop.f32.mrb[0].mxu0
    %v2899 = vadd.f32 %v2691, %v2898
    %v2900 = vpop.f32.mrb[0].mxu0
    %v2901 = vpop.f32.mrb[0].mxu0
    %v2902 = vadd.f32 %v2692, %v2901
    %v2903 = vpop.f32.mrb[0].mxu0
    %2904 = vdwg.mxu0
    %2906 = vrot.lane.b32.xlu0 %v449, 112
    %v2907 = vpop.permute.xlu0 %2906
    %2909 = vrot.lane.b32.xlu0 %v642, 112
    %v2910 = vpop.permute.xlu0 %2909
    %v2912 = vsel %vm849, %v2907, 0
    %v2915 = vsel %vm849, %v2910, 0
    %2917 = vmatprep.subr.bf16.mxu0 0
    %2918 = vmatpush1.bf16.xpose.msra.mxu0 %v2915
    %2919 = vmatprep.subr.bf16.mxu0 0
    %2920 = vmatpush1.bf16.xpose.msra.mxu0 0
    %2921 = vmatprep.subr.bf16.mxu0 0
    %2922 = vmatpush1.bf16.xpose.msra.mxu0 0
    %2923 = vmatprep.subr.bf16.mxu0 0
    %2924 = vmatpush1.bf16.xpose.msra.mxu0 0
    %2925 = vmatprep.subr.bf16.mxu0 0
    %2926 = vmatpush1.bf16.xpose.msra.mxu0 0
    %2927 = vmatprep.subr.bf16.mxu0 0
    %2928 = vmatpush1.bf16.xpose.msra.mxu0 0
    %2929 = vmatprep.subr.bf16.mxu0 0
    %2930 = vmatpush1.bf16.xpose.msra.mxu0 0
    %2931 = vmatprep.subr.bf16.mxu0 0
    %2932 = vmatpush1.bf16.xpose.msra.mxu0 0
    %2933 = vmatprep.subr.bf16.mxu0 0
    %2934 = vmatpush1.bf16.xpose.msra.mxu0 0
    %2935 = vmatprep.subr.bf16.mxu0 0
    %2936 = vmatpush1.bf16.xpose.msra.mxu0 0
    %2937 = vmatprep.subr.bf16.mxu0 0
    %2938 = vmatpush1.bf16.xpose.msra.mxu0 0
    %2939 = vmatprep.subr.bf16.mxu0 0
    %2940 = vmatpush1.bf16.xpose.msra.mxu0 0
    %2941 = vmatprep.subr.bf16.mxu0 0
    %2942 = vmatpush1.bf16.xpose.msra.mxu0 0
    %2943 = vmatprep.subr.bf16.mxu0 0
    %2944 = vmatpush1.bf16.xpose.msra.mxu0 0
    %2945 = vmatprep.subr.bf16.mxu0 0
    %2946 = vmatpush1.bf16.xpose.msra.mxu0 0
    %2947 = vmatprep.subr.bf16.mxu0 0
    %2948 = vmatpush1.bf16.xpose.msra.mxu0 0
    %2949 = vmatprep.mubr.bf16.mxu0 0
    %2950 = vmatmul.mubr.bf16.gmra.mrb[0].mxu0 %v2912
    %v2951 = vpop.f32.mrb[0].mxu0
    %v2952 = vadd.f32 %v2691, %v2951
    %v2953 = vpop.f32.mrb[0].mxu0
    %v2954 = vpop.f32.mrb[0].mxu0
    %v2955 = vadd.f32 %v2692, %v2954
    %v2956 = vpop.f32.mrb[0].mxu0
    %2957 = vdwg.mxu0
    %2959 = vrot.lane.b32.xlu0 %v450, 112
    %v2960 = vpop.permute.xlu0 %2959
    %2962 = vrot.lane.b32.xlu0 %v643, 112
    %v2963 = vpop.permute.xlu0 %2962
    %v2965 = vsel %vm849, %v2960, 0
    %v2968 = vsel %vm849, %v2963, 0
    %2970 = vmatprep.subr.bf16.mxu0 0
    %2971 = vmatpush1.bf16.xpose.msra.mxu0 %v2968
    %2972 = vmatprep.subr.bf16.mxu0 0
    %2973 = vmatpush1.bf16.xpose.msra.mxu0 0
    %2974 = vmatprep.subr.bf16.mxu0 0
    %2975 = vmatpush1.bf16.xpose.msra.mxu0 0
    %2976 = vmatprep.subr.bf16.mxu0 0
    %2977 = vmatpush1.bf16.xpose.msra.mxu0 0
    %2978 = vmatprep.subr.bf16.mxu0 0
    %2979 = vmatpush1.bf16.xpose.msra.mxu0 0
    %2980 = vmatprep.subr.bf16.mxu0 0
    %2981 = vmatpush1.bf16.xpose.msra.mxu0 0
    %2982 = vmatprep.subr.bf16.mxu0 0
    %2983 = vmatpush1.bf16.xpose.msra.mxu0 0
    %2984 = vmatprep.subr.bf16.mxu0 0
    %2985 = vmatpush1.bf16.xpose.msra.mxu0 0
    %2986 = vmatprep.subr.bf16.mxu0 0
    %2987 = vmatpush1.bf16.xpose.msra.mxu0 0
    %2988 = vmatprep.subr.bf16.mxu0 0
    %2989 = vmatpush1.bf16.xpose.msra.mxu0 0
    %2990 = vmatprep.subr.bf16.mxu0 0
    %2991 = vmatpush1.bf16.xpose.msra.mxu0 0
    %2992 = vmatprep.subr.bf16.mxu0 0
    %2993 = vmatpush1.bf16.xpose.msra.mxu0 0
    %2994 = vmatprep.subr.bf16.mxu0 0
    %2995 = vmatpush1.bf16.xpose.msra.mxu0 0
    %2996 = vmatprep.subr.bf16.mxu0 0
    %2997 = vmatpush1.bf16.xpose.msra.mxu0 0
    %2998 = vmatprep.subr.bf16.mxu0 0
    %2999 = vmatpush1.bf16.xpose.msra.mxu0 0
    %3000 = vmatprep.subr.bf16.mxu0 0
    %3001 = vmatpush1.bf16.xpose.msra.mxu0 0
    %3002 = vmatprep.mubr.bf16.mxu0 0
    %3003 = vmatmul.mubr.bf16.gmra.mrb[0].mxu0 %v2965
    %v3004 = vpop.f32.mrb[0].mxu0
    %v3005 = vadd.f32 %v2691, %v3004
    %v3006 = vpop.f32.mrb[0].mxu0
    %v3007 = vpop.f32.mrb[0].mxu0
    %v3008 = vadd.f32 %v2692, %v3007
    %v3009 = vpop.f32.mrb[0].mxu0
    %3010 = vdwg.mxu0
    %3012 = vrot.lane.b32.xlu0 %v451, 112
    %v3013 = vpop.permute.xlu0 %3012
    %3015 = vrot.lane.b32.xlu0 %v644, 112
    %v3016 = vpop.permute.xlu0 %3015
    %v3018 = vsel %vm849, %v3013, 0
    %v3021 = vsel %vm849, %v3016, 0
    %3023 = vmatprep.subr.bf16.mxu0 0
    %3024 = vmatpush1.bf16.xpose.msra.mxu0 %v3021
    %3025 = vmatprep.subr.bf16.mxu0 0
    %3026 = vmatpush1.bf16.xpose.msra.mxu0 0
    %3027 = vmatprep.subr.bf16.mxu0 0
    %3028 = vmatpush1.bf16.xpose.msra.mxu0 0
    %3029 = vmatprep.subr.bf16.mxu0 0
    %3030 = vmatpush1.bf16.xpose.msra.mxu0 0
    %3031 = vmatprep.subr.bf16.mxu0 0
    %3032 = vmatpush1.bf16.xpose.msra.mxu0 0
    %3033 = vmatprep.subr.bf16.mxu0 0
    %3034 = vmatpush1.bf16.xpose.msra.mxu0 0
    %3035 = vmatprep.subr.bf16.mxu0 0
    %3036 = vmatpush1.bf16.xpose.msra.mxu0 0
    %3037 = vmatprep.subr.bf16.mxu0 0
    %3038 = vmatpush1.bf16.xpose.msra.mxu0 0
    %3039 = vmatprep.subr.bf16.mxu0 0
    %3040 = vmatpush1.bf16.xpose.msra.mxu0 0
    %3041 = vmatprep.subr.bf16.mxu0 0
    %3042 = vmatpush1.bf16.xpose.msra.mxu0 0
    %3043 = vmatprep.subr.bf16.mxu0 0
    %3044 = vmatpush1.bf16.xpose.msra.mxu0 0
    %3045 = vmatprep.subr.bf16.mxu0 0
    %3046 = vmatpush1.bf16.xpose.msra.mxu0 0
    %3047 = vmatprep.subr.bf16.mxu0 0
    %3048 = vmatpush1.bf16.xpose.msra.mxu0 0
    %3049 = vmatprep.subr.bf16.mxu0 0
    %3050 = vmatpush1.bf16.xpose.msra.mxu0 0
    %3051 = vmatprep.subr.bf16.mxu0 0
    %3052 = vmatpush1.bf16.xpose.msra.mxu0 0
    %3053 = vmatprep.subr.bf16.mxu0 0
    %3054 = vmatpush1.bf16.xpose.msra.mxu0 0
    %3055 = vmatprep.mubr.bf16.mxu0 0
    %3056 = vmatmul.mubr.bf16.gmra.mrb[0].mxu0 %v3018
    %v3057 = vpop.f32.mrb[0].mxu0
    %v3058 = vadd.f32 %v2691, %v3057
    %v3059 = vpop.f32.mrb[0].mxu0
    %v3060 = vpop.f32.mrb[0].mxu0
    %v3061 = vadd.f32 %v2692, %v3060
    %v3062 = vpop.f32.mrb[0].mxu0
    %3063 = vdwg.mxu0
    %3065 = vrot.lane.b32.xlu0 %v452, 112
    %v3066 = vpop.permute.xlu0 %3065
    %3068 = vrot.lane.b32.xlu0 %v645, 112
    %v3069 = vpop.permute.xlu0 %3068
    %v3071 = vsel %vm849, %v3066, 0
    %v3074 = vsel %vm849, %v3069, 0
    %3076 = vmatprep.subr.bf16.mxu0 0
    %3077 = vmatpush1.bf16.xpose.msra.mxu0 %v3074
    %3078 = vmatprep.subr.bf16.mxu0 0
    %3079 = vmatpush1.bf16.xpose.msra.mxu0 0
    %3080 = vmatprep.subr.bf16.mxu0 0
    %3081 = vmatpush1.bf16.xpose.msra.mxu0 0
    %3082 = vmatprep.subr.bf16.mxu0 0
    %3083 = vmatpush1.bf16.xpose.msra.mxu0 0
    %3084 = vmatprep.subr.bf16.mxu0 0
    %3085 = vmatpush1.bf16.xpose.msra.mxu0 0
    %3086 = vmatprep.subr.bf16.mxu0 0
    %3087 = vmatpush1.bf16.xpose.msra.mxu0 0
    %3088 = vmatprep.subr.bf16.mxu0 0
    %3089 = vmatpush1.bf16.xpose.msra.mxu0 0
    %3090 = vmatprep.subr.bf16.mxu0 0
    %3091 = vmatpush1.bf16.xpose.msra.mxu0 0
    %3092 = vmatprep.subr.bf16.mxu0 0
    %3093 = vmatpush1.bf16.xpose.msra.mxu0 0
    %3094 = vmatprep.subr.bf16.mxu0 0
    %3095 = vmatpush1.bf16.xpose.msra.mxu0 0
    %3096 = vmatprep.subr.bf16.mxu0 0
    %3097 = vmatpush1.bf16.xpose.msra.mxu0 0
    %3098 = vmatprep.subr.bf16.mxu0 0
    %3099 = vmatpush1.bf16.xpose.msra.mxu0 0
    %3100 = vmatprep.subr.bf16.mxu0 0
    %3101 = vmatpush1.bf16.xpose.msra.mxu0 0
    %3102 = vmatprep.subr.bf16.mxu0 0
    %3103 = vmatpush1.bf16.xpose.msra.mxu0 0
    %3104 = vmatprep.subr.bf16.mxu0 0
    %3105 = vmatpush1.bf16.xpose.msra.mxu0 0
    %3106 = vmatprep.subr.bf16.mxu0 0
    %3107 = vmatpush1.bf16.xpose.msra.mxu0 0
    %3108 = vmatprep.mubr.bf16.mxu0 0
    %3109 = vmatmul.mubr.bf16.gmra.mrb[0].mxu0 %v3071
    %v3110 = vpop.f32.mrb[0].mxu0
    %v3111 = vadd.f32 %v2691, %v3110
    %v3112 = vpop.f32.mrb[0].mxu0
    %v3113 = vpop.f32.mrb[0].mxu0
    %v3114 = vadd.f32 %v2692, %v3113
    %v3115 = vpop.f32.mrb[0].mxu0
    %3116 = vdwg.mxu0
    %3118 = vrot.lane.b32.xlu0 %v453, 112
    %v3119 = vpop.permute.xlu0 %3118
    %3121 = vrot.lane.b32.xlu0 %v646, 112
    %v3122 = vpop.permute.xlu0 %3121
    %v3124 = vsel %vm849, %v3119, 0
    %v3127 = vsel %vm849, %v3122, 0
    %3129 = vmatprep.subr.bf16.mxu0 0
    %3130 = vmatpush1.bf16.xpose.msra.mxu0 %v3127
    %3131 = vmatprep.subr.bf16.mxu0 0
    %3132 = vmatpush1.bf16.xpose.msra.mxu0 0
    %3133 = vmatprep.subr.bf16.mxu0 0
    %3134 = vmatpush1.bf16.xpose.msra.mxu0 0
    %3135 = vmatprep.subr.bf16.mxu0 0
    %3136 = vmatpush1.bf16.xpose.msra.mxu0 0
    %3137 = vmatprep.subr.bf16.mxu0 0
    %3138 = vmatpush1.bf16.xpose.msra.mxu0 0
    %3139 = vmatprep.subr.bf16.mxu0 0
    %3140 = vmatpush1.bf16.xpose.msra.mxu0 0
    %3141 = vmatprep.subr.bf16.mxu0 0
    %3142 = vmatpush1.bf16.xpose.msra.mxu0 0
    %3143 = vmatprep.subr.bf16.mxu0 0
    %3144 = vmatpush1.bf16.xpose.msra.mxu0 0
    %3145 = vmatprep.subr.bf16.mxu0 0
    %3146 = vmatpush1.bf16.xpose.msra.mxu0 0
    %3147 = vmatprep.subr.bf16.mxu0 0
    %3148 = vmatpush1.bf16.xpose.msra.mxu0 0
    %3149 = vmatprep.subr.bf16.mxu0 0
    %3150 = vmatpush1.bf16.xpose.msra.mxu0 0
    %3151 = vmatprep.subr.bf16.mxu0 0
    %3152 = vmatpush1.bf16.xpose.msra.mxu0 0
    %3153 = vmatprep.subr.bf16.mxu0 0
    %3154 = vmatpush1.bf16.xpose.msra.mxu0 0
    %3155 = vmatprep.subr.bf16.mxu0 0
    %3156 = vmatpush1.bf16.xpose.msra.mxu0 0
    %3157 = vmatprep.subr.bf16.mxu0 0
    %3158 = vmatpush1.bf16.xpose.msra.mxu0 0
    %3159 = vmatprep.subr.bf16.mxu0 0
    %3160 = vmatpush1.bf16.xpose.msra.mxu0 0
    %3161 = vmatprep.mubr.bf16.mxu0 0
    %3162 = vmatmul.mubr.bf16.gmra.mrb[0].mxu0 %v3124
    %v3163 = vpop.f32.mrb[0].mxu0
    %v3164 = vadd.f32 %v2691, %v3163
    %v3165 = vpop.f32.mrb[0].mxu0
    %v3166 = vpop.f32.mrb[0].mxu0
    %v3167 = vadd.f32 %v2692, %v3166
    %v3168 = vpop.f32.mrb[0].mxu0
    %3169 = vdwg.mxu0
    %3171 = vrot.lane.b32.xlu0 %v454, 112
    %v3172 = vpop.permute.xlu0 %3171
    %3174 = vrot.lane.b32.xlu0 %v647, 112
    %v3175 = vpop.permute.xlu0 %3174
    %v3177 = vsel %vm849, %v3172, 0
    %v3180 = vsel %vm849, %v3175, 0
    %3182 = vmatprep.subr.bf16.mxu0 0
    %3183 = vmatpush1.bf16.xpose.msra.mxu0 %v3180
    %3184 = vmatprep.subr.bf16.mxu0 0
    %3185 = vmatpush1.bf16.xpose.msra.mxu0 0
    %3186 = vmatprep.subr.bf16.mxu0 0
    %3187 = vmatpush1.bf16.xpose.msra.mxu0 0
    %3188 = vmatprep.subr.bf16.mxu0 0
    %3189 = vmatpush1.bf16.xpose.msra.mxu0 0
    %3190 = vmatprep.subr.bf16.mxu0 0
    %3191 = vmatpush1.bf16.xpose.msra.mxu0 0
    %3192 = vmatprep.subr.bf16.mxu0 0
    %3193 = vmatpush1.bf16.xpose.msra.mxu0 0
    %3194 = vmatprep.subr.bf16.mxu0 0
    %3195 = vmatpush1.bf16.xpose.msra.mxu0 0
    %3196 = vmatprep.subr.bf16.mxu0 0
    %3197 = vmatpush1.bf16.xpose.msra.mxu0 0
    %3198 = vmatprep.subr.bf16.mxu0 0
    %3199 = vmatpush1.bf16.xpose.msra.mxu0 0
    %3200 = vmatprep.subr.bf16.mxu0 0
    %3201 = vmatpush1.bf16.xpose.msra.mxu0 0
    %3202 = vmatprep.subr.bf16.mxu0 0
    %3203 = vmatpush1.bf16.xpose.msra.mxu0 0
    %3204 = vmatprep.subr.bf16.mxu0 0
    %3205 = vmatpush1.bf16.xpose.msra.mxu0 0
    %3206 = vmatprep.subr.bf16.mxu0 0
    %3207 = vmatpush1.bf16.xpose.msra.mxu0 0
    %3208 = vmatprep.subr.bf16.mxu0 0
    %3209 = vmatpush1.bf16.xpose.msra.mxu0 0
    %3210 = vmatprep.subr.bf16.mxu0 0
    %3211 = vmatpush1.bf16.xpose.msra.mxu0 0
    %3212 = vmatprep.subr.bf16.mxu0 0
    %3213 = vmatpush1.bf16.xpose.msra.mxu0 0
    %3214 = vmatprep.mubr.bf16.mxu0 0
    %3215 = vmatmul.mubr.bf16.gmra.mrb[0].mxu0 %v3177
    %v3216 = vpop.f32.mrb[0].mxu0
    %v3217 = vadd.f32 %v2691, %v3216
    %v3218 = vpop.f32.mrb[0].mxu0
    %v3219 = vpop.f32.mrb[0].mxu0
    %v3220 = vadd.f32 %v2692, %v3219
    %v3221 = vpop.f32.mrb[0].mxu0
    %3222 = vdwg.mxu0
    %3224 = vrot.lane.b32.xlu0 %v455, 112
    %v3225 = vpop.permute.xlu0 %3224
    %3227 = vrot.lane.b32.xlu0 %v648, 112
    %v3228 = vpop.permute.xlu0 %3227
    %v3230 = vsel %vm849, %v3225, 0
    %v3233 = vsel %vm849, %v3228, 0
    %3235 = vmatprep.subr.bf16.mxu0 0
    %3236 = vmatpush1.bf16.xpose.msra.mxu0 %v3233
    %3237 = vmatprep.subr.bf16.mxu0 0
    %3238 = vmatpush1.bf16.xpose.msra.mxu0 0
    %3239 = vmatprep.subr.bf16.mxu0 0
    %3240 = vmatpush1.bf16.xpose.msra.mxu0 0
    %3241 = vmatprep.subr.bf16.mxu0 0
    %3242 = vmatpush1.bf16.xpose.msra.mxu0 0
    %3243 = vmatprep.subr.bf16.mxu0 0
    %3244 = vmatpush1.bf16.xpose.msra.mxu0 0
    %3245 = vmatprep.subr.bf16.mxu0 0
    %3246 = vmatpush1.bf16.xpose.msra.mxu0 0
    %3247 = vmatprep.subr.bf16.mxu0 0
    %3248 = vmatpush1.bf16.xpose.msra.mxu0 0
    %3249 = vmatprep.subr.bf16.mxu0 0
    %3250 = vmatpush1.bf16.xpose.msra.mxu0 0
    %3251 = vmatprep.subr.bf16.mxu0 0
    %3252 = vmatpush1.bf16.xpose.msra.mxu0 0
    %3253 = vmatprep.subr.bf16.mxu0 0
    %3254 = vmatpush1.bf16.xpose.msra.mxu0 0
    %3255 = vmatprep.subr.bf16.mxu0 0
    %3256 = vmatpush1.bf16.xpose.msra.mxu0 0
    %3257 = vmatprep.subr.bf16.mxu0 0
    %3258 = vmatpush1.bf16.xpose.msra.mxu0 0
    %3259 = vmatprep.subr.bf16.mxu0 0
    %3260 = vmatpush1.bf16.xpose.msra.mxu0 0
    %3261 = vmatprep.subr.bf16.mxu0 0
    %3262 = vmatpush1.bf16.xpose.msra.mxu0 0
    %3263 = vmatprep.subr.bf16.mxu0 0
    %3264 = vmatpush1.bf16.xpose.msra.mxu0 0
    %3265 = vmatprep.subr.bf16.mxu0 0
    %3266 = vmatpush1.bf16.xpose.msra.mxu0 0
    %3267 = vmatprep.mubr.bf16.mxu0 0
    %3268 = vmatmul.mubr.bf16.gmra.mrb[0].mxu0 %v3230
    %v3269 = vpop.f32.mrb[0].mxu0
    %v3270 = vadd.f32 %v2691, %v3269
    %v3271 = vpop.f32.mrb[0].mxu0
    %v3272 = vpop.f32.mrb[0].mxu0
    %v3273 = vadd.f32 %v2692, %v3272
    %v3274 = vpop.f32.mrb[0].mxu0
    %3275 = vdwg.mxu0
    %3277 = vrot.lane.b32.xlu0 %v456, 112
    %v3278 = vpop.permute.xlu0 %3277
    %3280 = vrot.lane.b32.xlu0 %v649, 112
    %v3281 = vpop.permute.xlu0 %3280
    %v3283 = vsel %vm849, %v3278, 0
    %v3286 = vsel %vm849, %v3281, 0
    %3288 = vmatprep.subr.bf16.mxu0 0
    %3289 = vmatpush1.bf16.xpose.msra.mxu0 %v3286
    %3290 = vmatprep.subr.bf16.mxu0 0
    %3291 = vmatpush1.bf16.xpose.msra.mxu0 0
    %3292 = vmatprep.subr.bf16.mxu0 0
    %3293 = vmatpush1.bf16.xpose.msra.mxu0 0
    %3294 = vmatprep.subr.bf16.mxu0 0
    %3295 = vmatpush1.bf16.xpose.msra.mxu0 0
    %3296 = vmatprep.subr.bf16.mxu0 0
    %3297 = vmatpush1.bf16.xpose.msra.mxu0 0
    %3298 = vmatprep.subr.bf16.mxu0 0
    %3299 = vmatpush1.bf16.xpose.msra.mxu0 0
    %3300 = vmatprep.subr.bf16.mxu0 0
    %3301 = vmatpush1.bf16.xpose.msra.mxu0 0
    %3302 = vmatprep.subr.bf16.mxu0 0
    %3303 = vmatpush1.bf16.xpose.msra.mxu0 0
    %3304 = vmatprep.subr.bf16.mxu0 0
    %3305 = vmatpush1.bf16.xpose.msra.mxu0 0
    %3306 = vmatprep.subr.bf16.mxu0 0
    %3307 = vmatpush1.bf16.xpose.msra.mxu0 0
    %3308 = vmatprep.subr.bf16.mxu0 0
    %3309 = vmatpush1.bf16.xpose.msra.mxu0 0
    %3310 = vmatprep.subr.bf16.mxu0 0
    %3311 = vmatpush1.bf16.xpose.msra.mxu0 0
    %3312 = vmatprep.subr.bf16.mxu0 0
    %3313 = vmatpush1.bf16.xpose.msra.mxu0 0
    %3314 = vmatprep.subr.bf16.mxu0 0
    %3315 = vmatpush1.bf16.xpose.msra.mxu0 0
    %3316 = vmatprep.subr.bf16.mxu0 0
    %3317 = vmatpush1.bf16.xpose.msra.mxu0 0
    %3318 = vmatprep.subr.bf16.mxu0 0
    %3319 = vmatpush1.bf16.xpose.msra.mxu0 0
    %3320 = vmatprep.mubr.bf16.mxu0 0
    %3321 = vmatmul.mubr.bf16.gmra.mrb[0].mxu0 %v3283
    %v3322 = vpop.f32.mrb[0].mxu0
    %v3323 = vadd.f32 %v2691, %v3322
    %v3324 = vpop.f32.mrb[0].mxu0
    %v3325 = vpop.f32.mrb[0].mxu0
    %v3326 = vadd.f32 %v2692, %v3325
    %v3327 = vpop.f32.mrb[0].mxu0
    %3328 = vdwg.mxu0
    %3330 = vrot.lane.b32.xlu0 %v457, 112
    %v3331 = vpop.permute.xlu0 %3330
    %3333 = vrot.lane.b32.xlu0 %v650, 112
    %v3334 = vpop.permute.xlu0 %3333
    %v3336 = vsel %vm849, %v3331, 0
    %v3339 = vsel %vm849, %v3334, 0
    %3341 = vmatprep.subr.bf16.mxu0 0
    %3342 = vmatpush1.bf16.xpose.msra.mxu0 %v3339
    %3343 = vmatprep.subr.bf16.mxu0 0
    %3344 = vmatpush1.bf16.xpose.msra.mxu0 0
    %3345 = vmatprep.subr.bf16.mxu0 0
    %3346 = vmatpush1.bf16.xpose.msra.mxu0 0
    %3347 = vmatprep.subr.bf16.mxu0 0
    %3348 = vmatpush1.bf16.xpose.msra.mxu0 0
    %3349 = vmatprep.subr.bf16.mxu0 0
    %3350 = vmatpush1.bf16.xpose.msra.mxu0 0
    %3351 = vmatprep.subr.bf16.mxu0 0
    %3352 = vmatpush1.bf16.xpose.msra.mxu0 0
    %3353 = vmatprep.subr.bf16.mxu0 0
    %3354 = vmatpush1.bf16.xpose.msra.mxu0 0
    %3355 = vmatprep.subr.bf16.mxu0 0
    %3356 = vmatpush1.bf16.xpose.msra.mxu0 0
    %3357 = vmatprep.subr.bf16.mxu0 0
    %3358 = vmatpush1.bf16.xpose.msra.mxu0 0
    %3359 = vmatprep.subr.bf16.mxu0 0
    %3360 = vmatpush1.bf16.xpose.msra.mxu0 0
    %3361 = vmatprep.subr.bf16.mxu0 0
    %3362 = vmatpush1.bf16.xpose.msra.mxu0 0
    %3363 = vmatprep.subr.bf16.mxu0 0
    %3364 = vmatpush1.bf16.xpose.msra.mxu0 0
    %3365 = vmatprep.subr.bf16.mxu0 0
    %3366 = vmatpush1.bf16.xpose.msra.mxu0 0
    %3367 = vmatprep.subr.bf16.mxu0 0
    %3368 = vmatpush1.bf16.xpose.msra.mxu0 0
    %3369 = vmatprep.subr.bf16.mxu0 0
    %3370 = vmatpush1.bf16.xpose.msra.mxu0 0
    %3371 = vmatprep.subr.bf16.mxu0 0
    %3372 = vmatpush1.bf16.xpose.msra.mxu0 0
    %3373 = vmatprep.mubr.bf16.mxu0 0
    %3374 = vmatmul.mubr.bf16.gmra.mrb[0].mxu0 %v3336
    %v3375 = vpop.f32.mrb[0].mxu0
    %v3376 = vadd.f32 %v2691, %v3375
    %v3377 = vpop.f32.mrb[0].mxu0
    %v3378 = vpop.f32.mrb[0].mxu0
    %v3379 = vadd.f32 %v2692, %v3378
    %v3380 = vpop.f32.mrb[0].mxu0
    %3381 = vdwg.mxu0
    %3383 = vrot.lane.b32.xlu0 %v458, 112
    %v3384 = vpop.permute.xlu0 %3383
    %3386 = vrot.lane.b32.xlu0 %v651, 112
    %v3387 = vpop.permute.xlu0 %3386
    %v3389 = vsel %vm849, %v3384, 0
    %v3392 = vsel %vm849, %v3387, 0
    %3394 = vmatprep.subr.bf16.mxu0 0
    %3395 = vmatpush1.bf16.xpose.msra.mxu0 %v3392
    %3396 = vmatprep.subr.bf16.mxu0 0
    %3397 = vmatpush1.bf16.xpose.msra.mxu0 0
    %3398 = vmatprep.subr.bf16.mxu0 0
    %3399 = vmatpush1.bf16.xpose.msra.mxu0 0
    %3400 = vmatprep.subr.bf16.mxu0 0
    %3401 = vmatpush1.bf16.xpose.msra.mxu0 0
    %3402 = vmatprep.subr.bf16.mxu0 0
    %3403 = vmatpush1.bf16.xpose.msra.mxu0 0
    %3404 = vmatprep.subr.bf16.mxu0 0
    %3405 = vmatpush1.bf16.xpose.msra.mxu0 0
    %3406 = vmatprep.subr.bf16.mxu0 0
    %3407 = vmatpush1.bf16.xpose.msra.mxu0 0
    %3408 = vmatprep.subr.bf16.mxu0 0
    %3409 = vmatpush1.bf16.xpose.msra.mxu0 0
    %3410 = vmatprep.subr.bf16.mxu0 0
    %3411 = vmatpush1.bf16.xpose.msra.mxu0 0
    %3412 = vmatprep.subr.bf16.mxu0 0
    %3413 = vmatpush1.bf16.xpose.msra.mxu0 0
    %3414 = vmatprep.subr.bf16.mxu0 0
    %3415 = vmatpush1.bf16.xpose.msra.mxu0 0
    %3416 = vmatprep.subr.bf16.mxu0 0
    %3417 = vmatpush1.bf16.xpose.msra.mxu0 0
    %3418 = vmatprep.subr.bf16.mxu0 0
    %3419 = vmatpush1.bf16.xpose.msra.mxu0 0
    %3420 = vmatprep.subr.bf16.mxu0 0
    %3421 = vmatpush1.bf16.xpose.msra.mxu0 0
    %3422 = vmatprep.subr.bf16.mxu0 0
    %3423 = vmatpush1.bf16.xpose.msra.mxu0 0
    %3424 = vmatprep.subr.bf16.mxu0 0
    %3425 = vmatpush1.bf16.xpose.msra.mxu0 0
    %3426 = vmatprep.mubr.bf16.mxu0 0
    %3427 = vmatmul.mubr.bf16.gmra.mrb[0].mxu0 %v3389
    %v3428 = vpop.f32.mrb[0].mxu0
    %v3429 = vadd.f32 %v2691, %v3428
    %v3430 = vpop.f32.mrb[0].mxu0
    %v3431 = vpop.f32.mrb[0].mxu0
    %v3432 = vadd.f32 %v2692, %v3431
    %v3433 = vpop.f32.mrb[0].mxu0
    %3434 = vdwg.mxu0
    %3436 = vrot.lane.b32.xlu0 %v459, 112
    %v3437 = vpop.permute.xlu0 %3436
    %3439 = vrot.lane.b32.xlu0 %v652, 112
    %v3440 = vpop.permute.xlu0 %3439
    %v3442 = vsel %vm849, %v3437, 0
    %v3445 = vsel %vm849, %v3440, 0
    %3447 = vmatprep.subr.bf16.mxu0 0
    %3448 = vmatpush1.bf16.xpose.msra.mxu0 %v3445
    %3449 = vmatprep.subr.bf16.mxu0 0
    %3450 = vmatpush1.bf16.xpose.msra.mxu0 0
    %3451 = vmatprep.subr.bf16.mxu0 0
    %3452 = vmatpush1.bf16.xpose.msra.mxu0 0
    %3453 = vmatprep.subr.bf16.mxu0 0
    %3454 = vmatpush1.bf16.xpose.msra.mxu0 0
    %3455 = vmatprep.subr.bf16.mxu0 0
    %3456 = vmatpush1.bf16.xpose.msra.mxu0 0
    %3457 = vmatprep.subr.bf16.mxu0 0
    %3458 = vmatpush1.bf16.xpose.msra.mxu0 0
    %3459 = vmatprep.subr.bf16.mxu0 0
    %3460 = vmatpush1.bf16.xpose.msra.mxu0 0
    %3461 = vmatprep.subr.bf16.mxu0 0
    %3462 = vmatpush1.bf16.xpose.msra.mxu0 0
    %3463 = vmatprep.subr.bf16.mxu0 0
    %3464 = vmatpush1.bf16.xpose.msra.mxu0 0
    %3465 = vmatprep.subr.bf16.mxu0 0
    %3466 = vmatpush1.bf16.xpose.msra.mxu0 0
    %3467 = vmatprep.subr.bf16.mxu0 0
    %3468 = vmatpush1.bf16.xpose.msra.mxu0 0
    %3469 = vmatprep.subr.bf16.mxu0 0
    %3470 = vmatpush1.bf16.xpose.msra.mxu0 0
    %3471 = vmatprep.subr.bf16.mxu0 0
    %3472 = vmatpush1.bf16.xpose.msra.mxu0 0
    %3473 = vmatprep.subr.bf16.mxu0 0
    %3474 = vmatpush1.bf16.xpose.msra.mxu0 0
    %3475 = vmatprep.subr.bf16.mxu0 0
    %3476 = vmatpush1.bf16.xpose.msra.mxu0 0
    %3477 = vmatprep.subr.bf16.mxu0 0
    %3478 = vmatpush1.bf16.xpose.msra.mxu0 0
    %3479 = vmatprep.mubr.bf16.mxu0 0
    %3480 = vmatmul.mubr.bf16.gmra.mrb[0].mxu0 %v3442
    %v3481 = vpop.f32.mrb[0].mxu0
    %v3482 = vadd.f32 %v2691, %v3481
    %v3483 = vpop.f32.mrb[0].mxu0
    %v3484 = vpop.f32.mrb[0].mxu0
    %v3485 = vadd.f32 %v2692, %v3484
    %v3486 = vpop.f32.mrb[0].mxu0
    %3487 = vdwg.mxu0
    %3489 = vrot.lane.b32.xlu0 %v460, 112
    %v3490 = vpop.permute.xlu0 %3489
    %3492 = vrot.lane.b32.xlu0 %v653, 112
    %v3493 = vpop.permute.xlu0 %3492
    %v3495 = vsel %vm849, %v3490, 0
    %v3498 = vsel %vm849, %v3493, 0
    %3500 = vmatprep.subr.bf16.mxu0 0
    %3501 = vmatpush1.bf16.xpose.msra.mxu0 %v3498
    %3502 = vmatprep.subr.bf16.mxu0 0
    %3503 = vmatpush1.bf16.xpose.msra.mxu0 0
    %3504 = vmatprep.subr.bf16.mxu0 0
    %3505 = vmatpush1.bf16.xpose.msra.mxu0 0
    %3506 = vmatprep.subr.bf16.mxu0 0
    %3507 = vmatpush1.bf16.xpose.msra.mxu0 0
    %3508 = vmatprep.subr.bf16.mxu0 0
    %3509 = vmatpush1.bf16.xpose.msra.mxu0 0
    %3510 = vmatprep.subr.bf16.mxu0 0
    %3511 = vmatpush1.bf16.xpose.msra.mxu0 0
    %3512 = vmatprep.subr.bf16.mxu0 0
    %3513 = vmatpush1.bf16.xpose.msra.mxu0 0
    %3514 = vmatprep.subr.bf16.mxu0 0
    %3515 = vmatpush1.bf16.xpose.msra.mxu0 0
    %3516 = vmatprep.subr.bf16.mxu0 0
    %3517 = vmatpush1.bf16.xpose.msra.mxu0 0
    %3518 = vmatprep.subr.bf16.mxu0 0
    %3519 = vmatpush1.bf16.xpose.msra.mxu0 0
    %3520 = vmatprep.subr.bf16.mxu0 0
    %3521 = vmatpush1.bf16.xpose.msra.mxu0 0
    %3522 = vmatprep.subr.bf16.mxu0 0
    %3523 = vmatpush1.bf16.xpose.msra.mxu0 0
    %3524 = vmatprep.subr.bf16.mxu0 0
    %3525 = vmatpush1.bf16.xpose.msra.mxu0 0
    %3526 = vmatprep.subr.bf16.mxu0 0
    %3527 = vmatpush1.bf16.xpose.msra.mxu0 0
    %3528 = vmatprep.subr.bf16.mxu0 0
    %3529 = vmatpush1.bf16.xpose.msra.mxu0 0
    %3530 = vmatprep.subr.bf16.mxu0 0
    %3531 = vmatpush1.bf16.xpose.msra.mxu0 0
    %3532 = vmatprep.mubr.bf16.mxu0 0
    %3533 = vmatmul.mubr.bf16.gmra.mrb[0].mxu0 %v3495
    %v3534 = vpop.f32.mrb[0].mxu0
    %v3535 = vadd.f32 %v2691, %v3534
    %v3536 = vpop.f32.mrb[0].mxu0
    %v3537 = vpop.f32.mrb[0].mxu0
    %v3538 = vadd.f32 %v2692, %v3537
    %v3539 = vpop.f32.mrb[0].mxu0
    %3540 = vdwg.mxu0
    %v3541 = vsel %vm849, %v2740, -inf
    %3542 = vmax.xlane.f32.xlu0 %v3541
    %v3543 = vpop.xlane.xlu0 %3542
    %v3544 = vsel %vm849, %v2743, -inf
    %3545 = vmax.xlane.f32.xlu0 %v3544
    %v3546 = vpop.xlane.xlu0 %3545
    %v3547 = vsel %vm849, %v2793, -inf
    %3548 = vmax.xlane.f32.xlu0 %v3547
    %v3549 = vpop.xlane.xlu0 %3548
    %v3550 = vsel %vm849, %v2796, -inf
    %3551 = vmax.xlane.f32.xlu0 %v3550
    %v3552 = vpop.xlane.xlu0 %3551
    %v3553 = vsel %vm849, %v2846, -inf
    %3554 = vmax.xlane.f32.xlu0 %v3553
    %v3555 = vpop.xlane.xlu0 %3554
    %v3556 = vsel %vm849, %v2849, -inf
    %3557 = vmax.xlane.f32.xlu0 %v3556
    %v3558 = vpop.xlane.xlu0 %3557
    %v3559 = vsel %vm849, %v2899, -inf
    %3560 = vmax.xlane.f32.xlu0 %v3559
    %v3561 = vpop.xlane.xlu0 %3560
    %v3562 = vsel %vm849, %v2902, -inf
    %3563 = vmax.xlane.f32.xlu0 %v3562
    %v3564 = vpop.xlane.xlu0 %3563
    %v3565 = vsel %vm849, %v2952, -inf
    %3566 = vmax.xlane.f32.xlu0 %v3565
    %v3567 = vpop.xlane.xlu0 %3566
    %v3568 = vsel %vm849, %v2955, -inf
    %3569 = vmax.xlane.f32.xlu0 %v3568
    %v3570 = vpop.xlane.xlu0 %3569
    %v3571 = vsel %vm849, %v3005, -inf
    %3572 = vmax.xlane.f32.xlu0 %v3571
    %v3573 = vpop.xlane.xlu0 %3572
    %v3574 = vsel %vm849, %v3008, -inf
    %3575 = vmax.xlane.f32.xlu0 %v3574
    %v3576 = vpop.xlane.xlu0 %3575
    %v3577 = vsel %vm849, %v3058, -inf
    %3578 = vmax.xlane.f32.xlu0 %v3577
    %v3579 = vpop.xlane.xlu0 %3578
    %v3580 = vsel %vm849, %v3061, -inf
    %3581 = vmax.xlane.f32.xlu0 %v3580
    %v3582 = vpop.xlane.xlu0 %3581
    %v3583 = vsel %vm849, %v3111, -inf
    %3584 = vmax.xlane.f32.xlu0 %v3583
    %v3585 = vpop.xlane.xlu0 %3584
    %v3586 = vsel %vm849, %v3114, -inf
    %3587 = vmax.xlane.f32.xlu0 %v3586
    %v3588 = vpop.xlane.xlu0 %3587
    %v3589 = vsel %vm849, %v3164, -inf
    %3590 = vmax.xlane.f32.xlu0 %v3589
    %v3591 = vpop.xlane.xlu0 %3590
    %v3592 = vsel %vm849, %v3167, -inf
    %3593 = vmax.xlane.f32.xlu0 %v3592
    %v3594 = vpop.xlane.xlu0 %3593
    %v3595 = vsel %vm849, %v3217, -inf
    %3596 = vmax.xlane.f32.xlu0 %v3595
    %v3597 = vpop.xlane.xlu0 %3596
    %v3598 = vsel %vm849, %v3220, -inf
    %3599 = vmax.xlane.f32.xlu0 %v3598
    %v3600 = vpop.xlane.xlu0 %3599
    %v3601 = vsel %vm849, %v3270, -inf
    %3602 = vmax.xlane.f32.xlu0 %v3601
    %v3603 = vpop.xlane.xlu0 %3602
    %v3604 = vsel %vm849, %v3273, -inf
    %3605 = vmax.xlane.f32.xlu0 %v3604
    %v3606 = vpop.xlane.xlu0 %3605
    %v3607 = vsel %vm849, %v3323, -inf
    %3608 = vmax.xlane.f32.xlu0 %v3607
    %v3609 = vpop.xlane.xlu0 %3608
    %v3610 = vsel %vm849, %v3326, -inf
    %3611 = vmax.xlane.f32.xlu0 %v3610
    %v3612 = vpop.xlane.xlu0 %3611
    %v3613 = vsel %vm849, %v3376, -inf
    %3614 = vmax.xlane.f32.xlu0 %v3613
    %v3615 = vpop.xlane.xlu0 %3614
    %v3616 = vsel %vm849, %v3379, -inf
    %3617 = vmax.xlane.f32.xlu0 %v3616
    %v3618 = vpop.xlane.xlu0 %3617
    %v3619 = vsel %vm849, %v3429, -inf
    %3620 = vmax.xlane.f32.xlu0 %v3619
    %v3621 = vpop.xlane.xlu0 %3620
    %v3622 = vsel %vm849, %v3432, -inf
    %3623 = vmax.xlane.f32.xlu0 %v3622
    %v3624 = vpop.xlane.xlu0 %3623
    %v3625 = vsel %vm849, %v3482, -inf
    %3626 = vmax.xlane.f32.xlu0 %v3625
    %v3627 = vpop.xlane.xlu0 %3626
    %v3628 = vsel %vm849, %v3485, -inf
    %3629 = vmax.xlane.f32.xlu0 %v3628
    %v3630 = vpop.xlane.xlu0 %3629
    %v3631 = vsel %vm849, %v3535, -inf
    %3632 = vmax.xlane.f32.xlu0 %v3631
    %v3633 = vpop.xlane.xlu0 %3632
    %v3634 = vsel %vm849, %v3538, -inf
    %3635 = vmax.xlane.f32.xlu0 %v3634
    %v3636 = vpop.xlane.xlu0 %3635
    %v3637 = vsub.f32 %v2740, %v3543
    %v3638 = vsub.f32 %v2743, %v3546
    %v3639 = vsub.f32 %v2793, %v3549
    %v3640 = vsub.f32 %v2796, %v3552
    %v3641 = vsub.f32 %v2846, %v3555
    %v3642 = vsub.f32 %v2849, %v3558
    %v3643 = vsub.f32 %v2899, %v3561
    %v3644 = vsub.f32 %v2902, %v3564
    %v3645 = vsub.f32 %v2952, %v3567
    %v3646 = vsub.f32 %v2955, %v3570
    %v3647 = vsub.f32 %v3005, %v3573
    %v3648 = vsub.f32 %v3008, %v3576
    %v3649 = vsub.f32 %v3058, %v3579
    %v3650 = vsub.f32 %v3061, %v3582
    %v3651 = vsub.f32 %v3111, %v3585
    %v3652 = vsub.f32 %v3114, %v3588
    %v3653 = vsub.f32 %v3164, %v3591
    %v3654 = vsub.f32 %v3167, %v3594
    %v3655 = vsub.f32 %v3217, %v3597
    %v3656 = vsub.f32 %v3220, %v3600
    %v3657 = vsub.f32 %v3270, %v3603
    %v3658 = vsub.f32 %v3273, %v3606
    %v3659 = vsub.f32 %v3323, %v3609
    %v3660 = vsub.f32 %v3326, %v3612
    %v3661 = vsub.f32 %v3376, %v3615
    %v3662 = vsub.f32 %v3379, %v3618
    %v3663 = vsub.f32 %v3429, %v3621
    %v3664 = vsub.f32 %v3432, %v3624
    %v3665 = vsub.f32 %v3482, %v3627
    %v3666 = vsub.f32 %v3485, %v3630
    %v3667 = vsub.f32 %v3535, %v3633
    %v3668 = vsub.f32 %v3538, %v3636
    %v3669 = vmul.f32 %v3637, 1.442695
    %v3670 = vpow.pop %v3669
    %v3671 = vmul.f32 %v3638, 1.442695
    %v3672 = vpow.pop %v3671
    %v3673 = vmul.f32 %v3639, 1.442695
    %v3674 = vpow.pop %v3673
    %v3675 = vmul.f32 %v3640, 1.442695
    %v3676 = vpow.pop %v3675
    %v3677 = vmul.f32 %v3641, 1.442695
    %v3678 = vpow.pop %v3677
    %v3679 = vmul.f32 %v3642, 1.442695
    %v3680 = vpow.pop %v3679
    %v3681 = vmul.f32 %v3643, 1.442695
    %v3682 = vpow.pop %v3681
    %v3683 = vmul.f32 %v3644, 1.442695
    %v3684 = vpow.pop %v3683
    %v3685 = vmul.f32 %v3645, 1.442695
    %v3686 = vpow.pop %v3685
    %v3687 = vmul.f32 %v3646, 1.442695
    %v3688 = vpow.pop %v3687
    %v3689 = vmul.f32 %v3647, 1.442695
    %v3690 = vpow.pop %v3689
    %v3691 = vmul.f32 %v3648, 1.442695
    %v3692 = vpow.pop %v3691
    %v3693 = vmul.f32 %v3649, 1.442695
    %v3694 = vpow.pop %v3693
    %v3695 = vmul.f32 %v3650, 1.442695
    %v3696 = vpow.pop %v3695
    %v3697 = vmul.f32 %v3651, 1.442695
    %v3698 = vpow.pop %v3697
    %v3699 = vmul.f32 %v3652, 1.442695
    %v3700 = vpow.pop %v3699
    %v3701 = vmul.f32 %v3653, 1.442695
    %v3702 = vpow.pop %v3701
    %v3703 = vmul.f32 %v3654, 1.442695
    %v3704 = vpow.pop %v3703
    %v3705 = vmul.f32 %v3655, 1.442695
    %v3706 = vpow.pop %v3705
    %v3707 = vmul.f32 %v3656, 1.442695
    %v3708 = vpow.pop %v3707
    %v3709 = vmul.f32 %v3657, 1.442695
    %v3710 = vpow.pop %v3709
    %v3711 = vmul.f32 %v3658, 1.442695
    %v3712 = vpow.pop %v3711
    %v3713 = vmul.f32 %v3659, 1.442695
    %v3714 = vpow.pop %v3713
    %v3715 = vmul.f32 %v3660, 1.442695
    %v3716 = vpow.pop %v3715
    %v3717 = vmul.f32 %v3661, 1.442695
    %v3718 = vpow.pop %v3717
    %v3719 = vmul.f32 %v3662, 1.442695
    %v3720 = vpow.pop %v3719
    %v3721 = vmul.f32 %v3663, 1.442695
    %v3722 = vpow.pop %v3721
    %v3723 = vmul.f32 %v3664, 1.442695
    %v3724 = vpow.pop %v3723
    %v3725 = vmul.f32 %v3665, 1.442695
    %v3726 = vpow.pop %v3725
    %v3727 = vmul.f32 %v3666, 1.442695
    %v3728 = vpow.pop %v3727
    %v3729 = vmul.f32 %v3667, 1.442695
    %v3730 = vpow.pop %v3729
    %v3731 = vmul.f32 %v3668, 1.442695
    %v3732 = vpow.pop %v3731
    %v3733 = vsel %vm849, %v3670, 0.0
    %3734 = vadd.xlane.f32.xlu0 %v3733
    %v3735 = vpop.xlane.xlu0 %3734
    %v3736 = vsel %vm849, %v3672, 0.0
    %3737 = vadd.xlane.f32.xlu0 %v3736
    %v3738 = vpop.xlane.xlu0 %3737
    %v3739 = vsel %vm849, %v3674, 0.0
    %3740 = vadd.xlane.f32.xlu0 %v3739
    %v3741 = vpop.xlane.xlu0 %3740
    %v3742 = vsel %vm849, %v3676, 0.0
    %3743 = vadd.xlane.f32.xlu0 %v3742
    %v3744 = vpop.xlane.xlu0 %3743
    %v3745 = vsel %vm849, %v3678, 0.0
    %3746 = vadd.xlane.f32.xlu0 %v3745
    %v3747 = vpop.xlane.xlu0 %3746
    %v3748 = vsel %vm849, %v3680, 0.0
    %3749 = vadd.xlane.f32.xlu0 %v3748
    %v3750 = vpop.xlane.xlu0 %3749
    %v3751 = vsel %vm849, %v3682, 0.0
    %3752 = vadd.xlane.f32.xlu0 %v3751
    %v3753 = vpop.xlane.xlu0 %3752
    %v3754 = vsel %vm849, %v3684, 0.0
    %3755 = vadd.xlane.f32.xlu0 %v3754
    %v3756 = vpop.xlane.xlu0 %3755
    %v3757 = vsel %vm849, %v3686, 0.0
    %3758 = vadd.xlane.f32.xlu0 %v3757
    %v3759 = vpop.xlane.xlu0 %3758
    %v3760 = vsel %vm849, %v3688, 0.0
    %3761 = vadd.xlane.f32.xlu0 %v3760
    %v3762 = vpop.xlane.xlu0 %3761
    %v3763 = vsel %vm849, %v3690, 0.0
    %3764 = vadd.xlane.f32.xlu0 %v3763
    %v3765 = vpop.xlane.xlu0 %3764
    %v3766 = vsel %vm849, %v3692, 0.0
    %3767 = vadd.xlane.f32.xlu0 %v3766
    %v3768 = vpop.xlane.xlu0 %3767
    %v3769 = vsel %vm849, %v3694, 0.0
    %3770 = vadd.xlane.f32.xlu0 %v3769
    %v3771 = vpop.xlane.xlu0 %3770
    %v3772 = vsel %vm849, %v3696, 0.0
    %3773 = vadd.xlane.f32.xlu0 %v3772
    %v3774 = vpop.xlane.xlu0 %3773
    %v3775 = vsel %vm849, %v3698, 0.0
    %3776 = vadd.xlane.f32.xlu0 %v3775
    %v3777 = vpop.xlane.xlu0 %3776
    %v3778 = vsel %vm849, %v3700, 0.0
    %3779 = vadd.xlane.f32.xlu0 %v3778
    %v3780 = vpop.xlane.xlu0 %3779
    %v3781 = vsel %vm849, %v3702, 0.0
    %3782 = vadd.xlane.f32.xlu0 %v3781
    %v3783 = vpop.xlane.xlu0 %3782
    %v3784 = vsel %vm849, %v3704, 0.0
    %3785 = vadd.xlane.f32.xlu0 %v3784
    %v3786 = vpop.xlane.xlu0 %3785
    %v3787 = vsel %vm849, %v3706, 0.0
    %3788 = vadd.xlane.f32.xlu0 %v3787
    %v3789 = vpop.xlane.xlu0 %3788
    %v3790 = vsel %vm849, %v3708, 0.0
    %3791 = vadd.xlane.f32.xlu0 %v3790
    %v3792 = vpop.xlane.xlu0 %3791
    %v3793 = vsel %vm849, %v3710, 0.0
    %3794 = vadd.xlane.f32.xlu0 %v3793
    %v3795 = vpop.xlane.xlu0 %3794
    %v3796 = vsel %vm849, %v3712, 0.0
    %3797 = vadd.xlane.f32.xlu0 %v3796
    %v3798 = vpop.xlane.xlu0 %3797
    %v3799 = vsel %vm849, %v3714, 0.0
    %3800 = vadd.xlane.f32.xlu0 %v3799
    %v3801 = vpop.xlane.xlu0 %3800
    %v3802 = vsel %vm849, %v3716, 0.0
    %3803 = vadd.xlane.f32.xlu0 %v3802
    %v3804 = vpop.xlane.xlu0 %3803
    %v3805 = vsel %vm849, %v3718, 0.0
    %3806 = vadd.xlane.f32.xlu0 %v3805
    %v3807 = vpop.xlane.xlu0 %3806
    %v3808 = vsel %vm849, %v3720, 0.0
    %3809 = vadd.xlane.f32.xlu0 %v3808
    %v3810 = vpop.xlane.xlu0 %3809
    %v3811 = vsel %vm849, %v3722, 0.0
    %3812 = vadd.xlane.f32.xlu0 %v3811
    %v3813 = vpop.xlane.xlu0 %3812
    %v3814 = vsel %vm849, %v3724, 0.0
    %3815 = vadd.xlane.f32.xlu0 %v3814
    %v3816 = vpop.xlane.xlu0 %3815
    %v3817 = vsel %vm849, %v3726, 0.0
    %3818 = vadd.xlane.f32.xlu0 %v3817
    %v3819 = vpop.xlane.xlu0 %3818
    %v3820 = vsel %vm849, %v3728, 0.0
    %3821 = vadd.xlane.f32.xlu0 %v3820
    %v3822 = vpop.xlane.xlu0 %3821
    %v3823 = vsel %vm849, %v3730, 0.0
    %3824 = vadd.xlane.f32.xlu0 %v3823
    %v3825 = vpop.xlane.xlu0 %3824
    %v3826 = vsel %vm849, %v3732, 0.0
    %3827 = vadd.xlane.f32.xlu0 %v3826
    %v3828 = vpop.xlane.xlu0 %3827
    %v3829 = vrcp.pop %v3735
    %v3830 = vrcp.pop %v3738
    %v3831 = vrcp.pop %v3741
    %v3832 = vrcp.pop %v3744
    %v3833 = vrcp.pop %v3747
    %v3834 = vrcp.pop %v3750
    %v3835 = vrcp.pop %v3753
    %v3836 = vrcp.pop %v3756
    %v3837 = vrcp.pop %v3759
    %v3838 = vrcp.pop %v3762
    %v3839 = vrcp.pop %v3765
    %v3840 = vrcp.pop %v3768
    %v3841 = vrcp.pop %v3771
    %v3842 = vrcp.pop %v3774
    %v3843 = vrcp.pop %v3777
    %v3844 = vrcp.pop %v3780
    %v3845 = vrcp.pop %v3783
    %v3846 = vrcp.pop %v3786
    %v3847 = vrcp.pop %v3789
    %v3848 = vrcp.pop %v3792
    %v3849 = vrcp.pop %v3795
    %v3850 = vrcp.pop %v3798
    %v3851 = vrcp.pop %v3801
    %v3852 = vrcp.pop %v3804
    %v3853 = vrcp.pop %v3807
    %v3854 = vrcp.pop %v3810
    %v3855 = vrcp.pop %v3813
    %v3856 = vrcp.pop %v3816
    %v3857 = vrcp.pop %v3819
    %v3858 = vrcp.pop %v3822
    %v3859 = vrcp.pop %v3825
    %v3860 = vrcp.pop %v3828
    %v3861 = vmul.f32 %v3670, %v3829
    %v3862 = vmul.f32 %v3672, %v3830
    %v3863 = vmul.f32 %v3674, %v3831
    %v3864 = vmul.f32 %v3676, %v3832
    %v3865 = vmul.f32 %v3678, %v3833
    %v3866 = vmul.f32 %v3680, %v3834
    %v3867 = vmul.f32 %v3682, %v3835
    %v3868 = vmul.f32 %v3684, %v3836
    %v3869 = vmul.f32 %v3686, %v3837
    %v3870 = vmul.f32 %v3688, %v3838
    %v3871 = vmul.f32 %v3690, %v3839
    %v3872 = vmul.f32 %v3692, %v3840
    %v3873 = vmul.f32 %v3694, %v3841
    %v3874 = vmul.f32 %v3696, %v3842
    %v3875 = vmul.f32 %v3698, %v3843
    %v3876 = vmul.f32 %v3700, %v3844
    %v3877 = vmul.f32 %v3702, %v3845
    %v3878 = vmul.f32 %v3704, %v3846
    %v3879 = vmul.f32 %v3706, %v3847
    %v3880 = vmul.f32 %v3708, %v3848
    %v3881 = vmul.f32 %v3710, %v3849
    %v3882 = vmul.f32 %v3712, %v3850
    %v3883 = vmul.f32 %v3714, %v3851
    %v3884 = vmul.f32 %v3716, %v3852
    %v3885 = vmul.f32 %v3718, %v3853
    %v3886 = vmul.f32 %v3720, %v3854
    %v3887 = vmul.f32 %v3722, %v3855
    %v3888 = vmul.f32 %v3724, %v3856
    %v3889 = vmul.f32 %v3726, %v3857
    %v3890 = vmul.f32 %v3728, %v3858
    %v3891 = vmul.f32 %v3730, %v3859
    %v3892 = vmul.f32 %v3732, %v3860
    %v3893 = vpack.c.bf16 %v3862, %v3861
    %v3894 = vpack.c.bf16 %v3864, %v3863
    %v3895 = vpack.c.bf16 %v3866, %v3865
    %v3896 = vpack.c.bf16 %v3868, %v3867
    %v3897 = vpack.c.bf16 %v3870, %v3869
    %v3898 = vpack.c.bf16 %v3872, %v3871
    %v3899 = vpack.c.bf16 %v3874, %v3873
    %v3900 = vpack.c.bf16 %v3876, %v3875
    %v3901 = vpack.c.bf16 %v3878, %v3877
    %v3902 = vpack.c.bf16 %v3880, %v3879
    %v3903 = vpack.c.bf16 %v3882, %v3881
    %v3904 = vpack.c.bf16 %v3884, %v3883
    %v3905 = vpack.c.bf16 %v3886, %v3885
    %v3906 = vpack.c.bf16 %v3888, %v3887
    %v3907 = vpack.c.bf16 %v3890, %v3889
    %v3908 = vpack.c.bf16 %v3892, %v3891
    %3910 = vrot.lane.b32.xlu0 %v831, 112
    %v3911 = vpop.permute.xlu0 %3910
    %v3914 = vsel %vm849, %v3893, 0
    %3916 = vmatprep.subr.bf16.mxu0 0
    %3917 = vmatpush1.bf16.msra.mxu0 %v3911
    %3918 = vmatprep.subr.bf16.mxu0 0
    %3919 = vmatpush1.bf16.msra.mxu0 0
    %3920 = vmatprep.subr.bf16.mxu0 0
    %3921 = vmatpush1.bf16.msra.mxu0 0
    %3922 = vmatprep.subr.bf16.mxu0 0
    %3923 = vmatpush1.bf16.msra.mxu0 0
    %3924 = vmatprep.subr.bf16.mxu0 0
    %3925 = vmatpush1.bf16.msra.mxu0 0
    %3926 = vmatprep.subr.bf16.mxu0 0
    %3927 = vmatpush1.bf16.msra.mxu0 0
    %3928 = vmatprep.subr.bf16.mxu0 0
    %3929 = vmatpush1.bf16.msra.mxu0 0
    %3930 = vmatprep.subr.bf16.mxu0 0
    %3931 = vmatpush1.bf16.msra.mxu0 0
    %3932 = vmatprep.subr.bf16.mxu0 0
    %3933 = vmatpush1.bf16.msra.mxu0 0
    %3934 = vmatprep.subr.bf16.mxu0 0
    %3935 = vmatpush1.bf16.msra.mxu0 0
    %3936 = vmatprep.subr.bf16.mxu0 0
    %3937 = vmatpush1.bf16.msra.mxu0 0
    %3938 = vmatprep.subr.bf16.mxu0 0
    %3939 = vmatpush1.bf16.msra.mxu0 0
    %3940 = vmatprep.subr.bf16.mxu0 0
    %3941 = vmatpush1.bf16.msra.mxu0 0
    %3942 = vmatprep.subr.bf16.mxu0 0
    %3943 = vmatpush1.bf16.msra.mxu0 0
    %3944 = vmatprep.subr.bf16.mxu0 0
    %3945 = vmatpush1.bf16.msra.mxu0 0
    %3946 = vmatprep.subr.bf16.mxu0 0
    %3947 = vmatpush1.bf16.msra.mxu0 0
    %3948 = vmatprep.mubr.bf16.mxu0 0
    %3949 = vmatmul.mubr.bf16.gmra.mrb[0].mxu0 %v3914
    %v3950 = vpop.f32.mrb[0].mxu0
    %v3951 = vadd.f32 0.0, %v3950
    %v3952 = vpop.f32.mrb[0].mxu0
    %v3953 = vpop.f32.mrb[0].mxu0
    %v3954 = vadd.f32 0.0, %v3953
    %v3955 = vpop.f32.mrb[0].mxu0
    %3956 = vdwg.mxu0
    %3958 = vrot.lane.b32.xlu0 %v832, 112
    %v3959 = vpop.permute.xlu0 %3958
    %v3962 = vsel %vm849, %v3894, 0
    %3964 = vmatprep.subr.bf16.mxu0 0
    %3965 = vmatpush1.bf16.msra.mxu0 %v3959
    %3966 = vmatprep.subr.bf16.mxu0 0
    %3967 = vmatpush1.bf16.msra.mxu0 0
    %3968 = vmatprep.subr.bf16.mxu0 0
    %3969 = vmatpush1.bf16.msra.mxu0 0
    %3970 = vmatprep.subr.bf16.mxu0 0
    %3971 = vmatpush1.bf16.msra.mxu0 0
    %3972 = vmatprep.subr.bf16.mxu0 0
    %3973 = vmatpush1.bf16.msra.mxu0 0
    %3974 = vmatprep.subr.bf16.mxu0 0
    %3975 = vmatpush1.bf16.msra.mxu0 0
    %3976 = vmatprep.subr.bf16.mxu0 0
    %3977 = vmatpush1.bf16.msra.mxu0 0
    %3978 = vmatprep.subr.bf16.mxu0 0
    %3979 = vmatpush1.bf16.msra.mxu0 0
    %3980 = vmatprep.subr.bf16.mxu0 0
    %3981 = vmatpush1.bf16.msra.mxu0 0
    %3982 = vmatprep.subr.bf16.mxu0 0
    %3983 = vmatpush1.bf16.msra.mxu0 0
    %3984 = vmatprep.subr.bf16.mxu0 0
    %3985 = vmatpush1.bf16.msra.mxu0 0
    %3986 = vmatprep.subr.bf16.mxu0 0
    %3987 = vmatpush1.bf16.msra.mxu0 0
    %3988 = vmatprep.subr.bf16.mxu0 0
    %3989 = vmatpush1.bf16.msra.mxu0 0
    %3990 = vmatprep.subr.bf16.mxu0 0
    %3991 = vmatpush1.bf16.msra.mxu0 0
    %3992 = vmatprep.subr.bf16.mxu0 0
    %3993 = vmatpush1.bf16.msra.mxu0 0
    %3994 = vmatprep.subr.bf16.mxu0 0
    %3995 = vmatpush1.bf16.msra.mxu0 0
    %3996 = vmatprep.mubr.bf16.mxu0 0
    %3997 = vmatmul.mubr.bf16.gmra.mrb[0].mxu0 %v3962
    %v3998 = vpop.f32.mrb[0].mxu0
    %v3999 = vadd.f32 0.0, %v3998
    %v4000 = vpop.f32.mrb[0].mxu0
    %v4001 = vpop.f32.mrb[0].mxu0
    %v4002 = vadd.f32 0.0, %v4001
    %v4003 = vpop.f32.mrb[0].mxu0
    %4004 = vdwg.mxu0
    %4006 = vrot.lane.b32.xlu0 %v833, 112
    %v4007 = vpop.permute.xlu0 %4006
    %v4010 = vsel %vm849, %v3895, 0
    %4012 = vmatprep.subr.bf16.mxu0 0
    %4013 = vmatpush1.bf16.msra.mxu0 %v4007
    %4014 = vmatprep.subr.bf16.mxu0 0
    %4015 = vmatpush1.bf16.msra.mxu0 0
    %4016 = vmatprep.subr.bf16.mxu0 0
    %4017 = vmatpush1.bf16.msra.mxu0 0
    %4018 = vmatprep.subr.bf16.mxu0 0
    %4019 = vmatpush1.bf16.msra.mxu0 0
    %4020 = vmatprep.subr.bf16.mxu0 0
    %4021 = vmatpush1.bf16.msra.mxu0 0
    %4022 = vmatprep.subr.bf16.mxu0 0
    %4023 = vmatpush1.bf16.msra.mxu0 0
    %4024 = vmatprep.subr.bf16.mxu0 0
    %4025 = vmatpush1.bf16.msra.mxu0 0
    %4026 = vmatprep.subr.bf16.mxu0 0
    %4027 = vmatpush1.bf16.msra.mxu0 0
    %4028 = vmatprep.subr.bf16.mxu0 0
    %4029 = vmatpush1.bf16.msra.mxu0 0
    %4030 = vmatprep.subr.bf16.mxu0 0
    %4031 = vmatpush1.bf16.msra.mxu0 0
    %4032 = vmatprep.subr.bf16.mxu0 0
    %4033 = vmatpush1.bf16.msra.mxu0 0
    %4034 = vmatprep.subr.bf16.mxu0 0
    %4035 = vmatpush1.bf16.msra.mxu0 0
    %4036 = vmatprep.subr.bf16.mxu0 0
    %4037 = vmatpush1.bf16.msra.mxu0 0
    %4038 = vmatprep.subr.bf16.mxu0 0
    %4039 = vmatpush1.bf16.msra.mxu0 0
    %4040 = vmatprep.subr.bf16.mxu0 0
    %4041 = vmatpush1.bf16.msra.mxu0 0
    %4042 = vmatprep.subr.bf16.mxu0 0
    %4043 = vmatpush1.bf16.msra.mxu0 0
    %4044 = vmatprep.mubr.bf16.mxu0 0
    %4045 = vmatmul.mubr.bf16.gmra.mrb[0].mxu0 %v4010
    %v4046 = vpop.f32.mrb[0].mxu0
    %v4047 = vadd.f32 0.0, %v4046
    %v4048 = vpop.f32.mrb[0].mxu0
    %v4049 = vpop.f32.mrb[0].mxu0
    %v4050 = vadd.f32 0.0, %v4049
    %v4051 = vpop.f32.mrb[0].mxu0
    %4052 = vdwg.mxu0
    %4054 = vrot.lane.b32.xlu0 %v834, 112
    %v4055 = vpop.permute.xlu0 %4054
    %v4058 = vsel %vm849, %v3896, 0
    %4060 = vmatprep.subr.bf16.mxu0 0
    %4061 = vmatpush1.bf16.msra.mxu0 %v4055
    %4062 = vmatprep.subr.bf16.mxu0 0
    %4063 = vmatpush1.bf16.msra.mxu0 0
    %4064 = vmatprep.subr.bf16.mxu0 0
    %4065 = vmatpush1.bf16.msra.mxu0 0
    %4066 = vmatprep.subr.bf16.mxu0 0
    %4067 = vmatpush1.bf16.msra.mxu0 0
    %4068 = vmatprep.subr.bf16.mxu0 0
    %4069 = vmatpush1.bf16.msra.mxu0 0
    %4070 = vmatprep.subr.bf16.mxu0 0
    %4071 = vmatpush1.bf16.msra.mxu0 0
    %4072 = vmatprep.subr.bf16.mxu0 0
    %4073 = vmatpush1.bf16.msra.mxu0 0
    %4074 = vmatprep.subr.bf16.mxu0 0
    %4075 = vmatpush1.bf16.msra.mxu0 0
    %4076 = vmatprep.subr.bf16.mxu0 0
    %4077 = vmatpush1.bf16.msra.mxu0 0
    %4078 = vmatprep.subr.bf16.mxu0 0
    %4079 = vmatpush1.bf16.msra.mxu0 0
    %4080 = vmatprep.subr.bf16.mxu0 0
    %4081 = vmatpush1.bf16.msra.mxu0 0
    %4082 = vmatprep.subr.bf16.mxu0 0
    %4083 = vmatpush1.bf16.msra.mxu0 0
    %4084 = vmatprep.subr.bf16.mxu0 0
    %4085 = vmatpush1.bf16.msra.mxu0 0
    %4086 = vmatprep.subr.bf16.mxu0 0
    %4087 = vmatpush1.bf16.msra.mxu0 0
    %4088 = vmatprep.subr.bf16.mxu0 0
    %4089 = vmatpush1.bf16.msra.mxu0 0
    %4090 = vmatprep.subr.bf16.mxu0 0
    %4091 = vmatpush1.bf16.msra.mxu0 0
    %4092 = vmatprep.mubr.bf16.mxu0 0
    %4093 = vmatmul.mubr.bf16.gmra.mrb[0].mxu0 %v4058
    %v4094 = vpop.f32.mrb[0].mxu0
    %v4095 = vadd.f32 0.0, %v4094
    %v4096 = vpop.f32.mrb[0].mxu0
    %v4097 = vpop.f32.mrb[0].mxu0
    %v4098 = vadd.f32 0.0, %v4097
    %v4099 = vpop.f32.mrb[0].mxu0
    %4100 = vdwg.mxu0
    %4102 = vrot.lane.b32.xlu0 %v835, 112
    %v4103 = vpop.permute.xlu0 %4102
    %v4106 = vsel %vm849, %v3897, 0
    %4108 = vmatprep.subr.bf16.mxu0 0
    %4109 = vmatpush1.bf16.msra.mxu0 %v4103
    %4110 = vmatprep.subr.bf16.mxu0 0
    %4111 = vmatpush1.bf16.msra.mxu0 0
    %4112 = vmatprep.subr.bf16.mxu0 0
    %4113 = vmatpush1.bf16.msra.mxu0 0
    %4114 = vmatprep.subr.bf16.mxu0 0
    %4115 = vmatpush1.bf16.msra.mxu0 0
    %4116 = vmatprep.subr.bf16.mxu0 0
    %4117 = vmatpush1.bf16.msra.mxu0 0
    %4118 = vmatprep.subr.bf16.mxu0 0
    %4119 = vmatpush1.bf16.msra.mxu0 0
    %4120 = vmatprep.subr.bf16.mxu0 0
    %4121 = vmatpush1.bf16.msra.mxu0 0
    %4122 = vmatprep.subr.bf16.mxu0 0
    %4123 = vmatpush1.bf16.msra.mxu0 0
    %4124 = vmatprep.subr.bf16.mxu0 0
    %4125 = vmatpush1.bf16.msra.mxu0 0
    %4126 = vmatprep.subr.bf16.mxu0 0
    %4127 = vmatpush1.bf16.msra.mxu0 0
    %4128 = vmatprep.subr.bf16.mxu0 0
    %4129 = vmatpush1.bf16.msra.mxu0 0
    %4130 = vmatprep.subr.bf16.mxu0 0
    %4131 = vmatpush1.bf16.msra.mxu0 0
    %4132 = vmatprep.subr.bf16.mxu0 0
    %4133 = vmatpush1.bf16.msra.mxu0 0
    %4134 = vmatprep.subr.bf16.mxu0 0
    %4135 = vmatpush1.bf16.msra.mxu0 0
    %4136 = vmatprep.subr.bf16.mxu0 0
    %4137 = vmatpush1.bf16.msra.mxu0 0
    %4138 = vmatprep.subr.bf16.mxu0 0
    %4139 = vmatpush1.bf16.msra.mxu0 0
    %4140 = vmatprep.mubr.bf16.mxu0 0
    %4141 = vmatmul.mubr.bf16.gmra.mrb[0].mxu0 %v4106
    %v4142 = vpop.f32.mrb[0].mxu0
    %v4143 = vadd.f32 0.0, %v4142
    %v4144 = vpop.f32.mrb[0].mxu0
    %v4145 = vpop.f32.mrb[0].mxu0
    %v4146 = vadd.f32 0.0, %v4145
    %v4147 = vpop.f32.mrb[0].mxu0
    %4148 = vdwg.mxu0
    %4150 = vrot.lane.b32.xlu0 %v836, 112
    %v4151 = vpop.permute.xlu0 %4150
    %v4154 = vsel %vm849, %v3898, 0
    %4156 = vmatprep.subr.bf16.mxu0 0
    %4157 = vmatpush1.bf16.msra.mxu0 %v4151
    %4158 = vmatprep.subr.bf16.mxu0 0
    %4159 = vmatpush1.bf16.msra.mxu0 0
    %4160 = vmatprep.subr.bf16.mxu0 0
    %4161 = vmatpush1.bf16.msra.mxu0 0
    %4162 = vmatprep.subr.bf16.mxu0 0
    %4163 = vmatpush1.bf16.msra.mxu0 0
    %4164 = vmatprep.subr.bf16.mxu0 0
    %4165 = vmatpush1.bf16.msra.mxu0 0
    %4166 = vmatprep.subr.bf16.mxu0 0
    %4167 = vmatpush1.bf16.msra.mxu0 0
    %4168 = vmatprep.subr.bf16.mxu0 0
    %4169 = vmatpush1.bf16.msra.mxu0 0
    %4170 = vmatprep.subr.bf16.mxu0 0
    %4171 = vmatpush1.bf16.msra.mxu0 0
    %4172 = vmatprep.subr.bf16.mxu0 0
    %4173 = vmatpush1.bf16.msra.mxu0 0
    %4174 = vmatprep.subr.bf16.mxu0 0
    %4175 = vmatpush1.bf16.msra.mxu0 0
    %4176 = vmatprep.subr.bf16.mxu0 0
    %4177 = vmatpush1.bf16.msra.mxu0 0
    %4178 = vmatprep.subr.bf16.mxu0 0
    %4179 = vmatpush1.bf16.msra.mxu0 0
    %4180 = vmatprep.subr.bf16.mxu0 0
    %4181 = vmatpush1.bf16.msra.mxu0 0
    %4182 = vmatprep.subr.bf16.mxu0 0
    %4183 = vmatpush1.bf16.msra.mxu0 0
    %4184 = vmatprep.subr.bf16.mxu0 0
    %4185 = vmatpush1.bf16.msra.mxu0 0
    %4186 = vmatprep.subr.bf16.mxu0 0
    %4187 = vmatpush1.bf16.msra.mxu0 0
    %4188 = vmatprep.mubr.bf16.mxu0 0
    %4189 = vmatmul.mubr.bf16.gmra.mrb[0].mxu0 %v4154
    %v4190 = vpop.f32.mrb[0].mxu0
    %v4191 = vadd.f32 0.0, %v4190
    %v4192 = vpop.f32.mrb[0].mxu0
    %v4193 = vpop.f32.mrb[0].mxu0
    %v4194 = vadd.f32 0.0, %v4193
    %v4195 = vpop.f32.mrb[0].mxu0
    %4196 = vdwg.mxu0
    %4198 = vrot.lane.b32.xlu0 %v837, 112
    %v4199 = vpop.permute.xlu0 %4198
    %v4202 = vsel %vm849, %v3899, 0
    %4204 = vmatprep.subr.bf16.mxu0 0
    %4205 = vmatpush1.bf16.msra.mxu0 %v4199
    %4206 = vmatprep.subr.bf16.mxu0 0
    %4207 = vmatpush1.bf16.msra.mxu0 0
    %4208 = vmatprep.subr.bf16.mxu0 0
    %4209 = vmatpush1.bf16.msra.mxu0 0
    %4210 = vmatprep.subr.bf16.mxu0 0
    %4211 = vmatpush1.bf16.msra.mxu0 0
    %4212 = vmatprep.subr.bf16.mxu0 0
    %4213 = vmatpush1.bf16.msra.mxu0 0
    %4214 = vmatprep.subr.bf16.mxu0 0
    %4215 = vmatpush1.bf16.msra.mxu0 0
    %4216 = vmatprep.subr.bf16.mxu0 0
    %4217 = vmatpush1.bf16.msra.mxu0 0
    %4218 = vmatprep.subr.bf16.mxu0 0
    %4219 = vmatpush1.bf16.msra.mxu0 0
    %4220 = vmatprep.subr.bf16.mxu0 0
    %4221 = vmatpush1.bf16.msra.mxu0 0
    %4222 = vmatprep.subr.bf16.mxu0 0
    %4223 = vmatpush1.bf16.msra.mxu0 0
    %4224 = vmatprep.subr.bf16.mxu0 0
    %4225 = vmatpush1.bf16.msra.mxu0 0
    %4226 = vmatprep.subr.bf16.mxu0 0
    %4227 = vmatpush1.bf16.msra.mxu0 0
    %4228 = vmatprep.subr.bf16.mxu0 0
    %4229 = vmatpush1.bf16.msra.mxu0 0
    %4230 = vmatprep.subr.bf16.mxu0 0
    %4231 = vmatpush1.bf16.msra.mxu0 0
    %4232 = vmatprep.subr.bf16.mxu0 0
    %4233 = vmatpush1.bf16.msra.mxu0 0
    %4234 = vmatprep.subr.bf16.mxu0 0
    %4235 = vmatpush1.bf16.msra.mxu0 0
    %4236 = vmatprep.mubr.bf16.mxu0 0
    %4237 = vmatmul.mubr.bf16.gmra.mrb[0].mxu0 %v4202
    %v4238 = vpop.f32.mrb[0].mxu0
    %v4239 = vadd.f32 0.0, %v4238
    %v4240 = vpop.f32.mrb[0].mxu0
    %v4241 = vpop.f32.mrb[0].mxu0
    %v4242 = vadd.f32 0.0, %v4241
    %v4243 = vpop.f32.mrb[0].mxu0
    %4244 = vdwg.mxu0
    %4246 = vrot.lane.b32.xlu0 %v838, 112
    %v4247 = vpop.permute.xlu0 %4246
    %v4250 = vsel %vm849, %v3900, 0
    %4252 = vmatprep.subr.bf16.mxu0 0
    %4253 = vmatpush1.bf16.msra.mxu0 %v4247
    %4254 = vmatprep.subr.bf16.mxu0 0
    %4255 = vmatpush1.bf16.msra.mxu0 0
    %4256 = vmatprep.subr.bf16.mxu0 0
    %4257 = vmatpush1.bf16.msra.mxu0 0
    %4258 = vmatprep.subr.bf16.mxu0 0
    %4259 = vmatpush1.bf16.msra.mxu0 0
    %4260 = vmatprep.subr.bf16.mxu0 0
    %4261 = vmatpush1.bf16.msra.mxu0 0
    %4262 = vmatprep.subr.bf16.mxu0 0
    %4263 = vmatpush1.bf16.msra.mxu0 0
    %4264 = vmatprep.subr.bf16.mxu0 0
    %4265 = vmatpush1.bf16.msra.mxu0 0
    %4266 = vmatprep.subr.bf16.mxu0 0
    %4267 = vmatpush1.bf16.msra.mxu0 0
    %4268 = vmatprep.subr.bf16.mxu0 0
    %4269 = vmatpush1.bf16.msra.mxu0 0
    %4270 = vmatprep.subr.bf16.mxu0 0
    %4271 = vmatpush1.bf16.msra.mxu0 0
    %4272 = vmatprep.subr.bf16.mxu0 0
    %4273 = vmatpush1.bf16.msra.mxu0 0
    %4274 = vmatprep.subr.bf16.mxu0 0
    %4275 = vmatpush1.bf16.msra.mxu0 0
    %4276 = vmatprep.subr.bf16.mxu0 0
    %4277 = vmatpush1.bf16.msra.mxu0 0
    %4278 = vmatprep.subr.bf16.mxu0 0
    %4279 = vmatpush1.bf16.msra.mxu0 0
    %4280 = vmatprep.subr.bf16.mxu0 0
    %4281 = vmatpush1.bf16.msra.mxu0 0
    %4282 = vmatprep.subr.bf16.mxu0 0
    %4283 = vmatpush1.bf16.msra.mxu0 0
    %4284 = vmatprep.mubr.bf16.mxu0 0
    %4285 = vmatmul.mubr.bf16.gmra.mrb[0].mxu0 %v4250
    %v4286 = vpop.f32.mrb[0].mxu0
    %v4287 = vadd.f32 0.0, %v4286
    %v4288 = vpop.f32.mrb[0].mxu0
    %v4289 = vpop.f32.mrb[0].mxu0
    %v4290 = vadd.f32 0.0, %v4289
    %v4291 = vpop.f32.mrb[0].mxu0
    %4292 = vdwg.mxu0
    %4294 = vrot.lane.b32.xlu0 %v839, 112
    %v4295 = vpop.permute.xlu0 %4294
    %v4298 = vsel %vm849, %v3901, 0
    %4300 = vmatprep.subr.bf16.mxu0 0
    %4301 = vmatpush1.bf16.msra.mxu0 %v4295
    %4302 = vmatprep.subr.bf16.mxu0 0
    %4303 = vmatpush1.bf16.msra.mxu0 0
    %4304 = vmatprep.subr.bf16.mxu0 0
    %4305 = vmatpush1.bf16.msra.mxu0 0
    %4306 = vmatprep.subr.bf16.mxu0 0
    %4307 = vmatpush1.bf16.msra.mxu0 0
    %4308 = vmatprep.subr.bf16.mxu0 0
    %4309 = vmatpush1.bf16.msra.mxu0 0
    %4310 = vmatprep.subr.bf16.mxu0 0
    %4311 = vmatpush1.bf16.msra.mxu0 0
    %4312 = vmatprep.subr.bf16.mxu0 0
    %4313 = vmatpush1.bf16.msra.mxu0 0
    %4314 = vmatprep.subr.bf16.mxu0 0
    %4315 = vmatpush1.bf16.msra.mxu0 0
    %4316 = vmatprep.subr.bf16.mxu0 0
    %4317 = vmatpush1.bf16.msra.mxu0 0
    %4318 = vmatprep.subr.bf16.mxu0 0
    %4319 = vmatpush1.bf16.msra.mxu0 0
    %4320 = vmatprep.subr.bf16.mxu0 0
    %4321 = vmatpush1.bf16.msra.mxu0 0
    %4322 = vmatprep.subr.bf16.mxu0 0
    %4323 = vmatpush1.bf16.msra.mxu0 0
    %4324 = vmatprep.subr.bf16.mxu0 0
    %4325 = vmatpush1.bf16.msra.mxu0 0
    %4326 = vmatprep.subr.bf16.mxu0 0
    %4327 = vmatpush1.bf16.msra.mxu0 0
    %4328 = vmatprep.subr.bf16.mxu0 0
    %4329 = vmatpush1.bf16.msra.mxu0 0
    %4330 = vmatprep.subr.bf16.mxu0 0
    %4331 = vmatpush1.bf16.msra.mxu0 0
    %4332 = vmatprep.mubr.bf16.mxu0 0
    %4333 = vmatmul.mubr.bf16.gmra.mrb[0].mxu0 %v4298
    %v4334 = vpop.f32.mrb[0].mxu0
    %v4335 = vadd.f32 0.0, %v4334
    %v4336 = vpop.f32.mrb[0].mxu0
    %v4337 = vpop.f32.mrb[0].mxu0
    %v4338 = vadd.f32 0.0, %v4337
    %v4339 = vpop.f32.mrb[0].mxu0
    %4340 = vdwg.mxu0
    %4342 = vrot.lane.b32.xlu0 %v840, 112
    %v4343 = vpop.permute.xlu0 %4342
    %v4346 = vsel %vm849, %v3902, 0
    %4348 = vmatprep.subr.bf16.mxu0 0
    %4349 = vmatpush1.bf16.msra.mxu0 %v4343
    %4350 = vmatprep.subr.bf16.mxu0 0
    %4351 = vmatpush1.bf16.msra.mxu0 0
    %4352 = vmatprep.subr.bf16.mxu0 0
    %4353 = vmatpush1.bf16.msra.mxu0 0
    %4354 = vmatprep.subr.bf16.mxu0 0
    %4355 = vmatpush1.bf16.msra.mxu0 0
    %4356 = vmatprep.subr.bf16.mxu0 0
    %4357 = vmatpush1.bf16.msra.mxu0 0
    %4358 = vmatprep.subr.bf16.mxu0 0
    %4359 = vmatpush1.bf16.msra.mxu0 0
    %4360 = vmatprep.subr.bf16.mxu0 0
    %4361 = vmatpush1.bf16.msra.mxu0 0
    %4362 = vmatprep.subr.bf16.mxu0 0
    %4363 = vmatpush1.bf16.msra.mxu0 0
    %4364 = vmatprep.subr.bf16.mxu0 0
    %4365 = vmatpush1.bf16.msra.mxu0 0
    %4366 = vmatprep.subr.bf16.mxu0 0
    %4367 = vmatpush1.bf16.msra.mxu0 0
    %4368 = vmatprep.subr.bf16.mxu0 0
    %4369 = vmatpush1.bf16.msra.mxu0 0
    %4370 = vmatprep.subr.bf16.mxu0 0
    %4371 = vmatpush1.bf16.msra.mxu0 0
    %4372 = vmatprep.subr.bf16.mxu0 0
    %4373 = vmatpush1.bf16.msra.mxu0 0
    %4374 = vmatprep.subr.bf16.mxu0 0
    %4375 = vmatpush1.bf16.msra.mxu0 0
    %4376 = vmatprep.subr.bf16.mxu0 0
    %4377 = vmatpush1.bf16.msra.mxu0 0
    %4378 = vmatprep.subr.bf16.mxu0 0
    %4379 = vmatpush1.bf16.msra.mxu0 0
    %4380 = vmatprep.mubr.bf16.mxu0 0
    %4381 = vmatmul.mubr.bf16.gmra.mrb[0].mxu0 %v4346
    %v4382 = vpop.f32.mrb[0].mxu0
    %v4383 = vadd.f32 0.0, %v4382
    %v4384 = vpop.f32.mrb[0].mxu0
    %v4385 = vpop.f32.mrb[0].mxu0
    %v4386 = vadd.f32 0.0, %v4385
    %v4387 = vpop.f32.mrb[0].mxu0
    %4388 = vdwg.mxu0
    %4390 = vrot.lane.b32.xlu0 %v841, 112
    %v4391 = vpop.permute.xlu0 %4390
    %v4394 = vsel %vm849, %v3903, 0
    %4396 = vmatprep.subr.bf16.mxu0 0
    %4397 = vmatpush1.bf16.msra.mxu0 %v4391
    %4398 = vmatprep.subr.bf16.mxu0 0
    %4399 = vmatpush1.bf16.msra.mxu0 0
    %4400 = vmatprep.subr.bf16.mxu0 0
    %4401 = vmatpush1.bf16.msra.mxu0 0
    %4402 = vmatprep.subr.bf16.mxu0 0
    %4403 = vmatpush1.bf16.msra.mxu0 0
    %4404 = vmatprep.subr.bf16.mxu0 0
    %4405 = vmatpush1.bf16.msra.mxu0 0
    %4406 = vmatprep.subr.bf16.mxu0 0
    %4407 = vmatpush1.bf16.msra.mxu0 0
    %4408 = vmatprep.subr.bf16.mxu0 0
    %4409 = vmatpush1.bf16.msra.mxu0 0
    %4410 = vmatprep.subr.bf16.mxu0 0
    %4411 = vmatpush1.bf16.msra.mxu0 0
    %4412 = vmatprep.subr.bf16.mxu0 0
    %4413 = vmatpush1.bf16.msra.mxu0 0
    %4414 = vmatprep.subr.bf16.mxu0 0
    %4415 = vmatpush1.bf16.msra.mxu0 0
    %4416 = vmatprep.subr.bf16.mxu0 0
    %4417 = vmatpush1.bf16.msra.mxu0 0
    %4418 = vmatprep.subr.bf16.mxu0 0
    %4419 = vmatpush1.bf16.msra.mxu0 0
    %4420 = vmatprep.subr.bf16.mxu0 0
    %4421 = vmatpush1.bf16.msra.mxu0 0
    %4422 = vmatprep.subr.bf16.mxu0 0
    %4423 = vmatpush1.bf16.msra.mxu0 0
    %4424 = vmatprep.subr.bf16.mxu0 0
    %4425 = vmatpush1.bf16.msra.mxu0 0
    %4426 = vmatprep.subr.bf16.mxu0 0
    %4427 = vmatpush1.bf16.msra.mxu0 0
    %4428 = vmatprep.mubr.bf16.mxu0 0
    %4429 = vmatmul.mubr.bf16.gmra.mrb[0].mxu0 %v4394
    %v4430 = vpop.f32.mrb[0].mxu0
    %v4431 = vadd.f32 0.0, %v4430
    %v4432 = vpop.f32.mrb[0].mxu0
    %v4433 = vpop.f32.mrb[0].mxu0
    %v4434 = vadd.f32 0.0, %v4433
    %v4435 = vpop.f32.mrb[0].mxu0
    %4436 = vdwg.mxu0
    %4438 = vrot.lane.b32.xlu0 %v842, 112
    %v4439 = vpop.permute.xlu0 %4438
    %v4442 = vsel %vm849, %v3904, 0
    %4444 = vmatprep.subr.bf16.mxu0 0
    %4445 = vmatpush1.bf16.msra.mxu0 %v4439
    %4446 = vmatprep.subr.bf16.mxu0 0
    %4447 = vmatpush1.bf16.msra.mxu0 0
    %4448 = vmatprep.subr.bf16.mxu0 0
    %4449 = vmatpush1.bf16.msra.mxu0 0
    %4450 = vmatprep.subr.bf16.mxu0 0
    %4451 = vmatpush1.bf16.msra.mxu0 0
    %4452 = vmatprep.subr.bf16.mxu0 0
    %4453 = vmatpush1.bf16.msra.mxu0 0
    %4454 = vmatprep.subr.bf16.mxu0 0
    %4455 = vmatpush1.bf16.msra.mxu0 0
    %4456 = vmatprep.subr.bf16.mxu0 0
    %4457 = vmatpush1.bf16.msra.mxu0 0
    %4458 = vmatprep.subr.bf16.mxu0 0
    %4459 = vmatpush1.bf16.msra.mxu0 0
    %4460 = vmatprep.subr.bf16.mxu0 0
    %4461 = vmatpush1.bf16.msra.mxu0 0
    %4462 = vmatprep.subr.bf16.mxu0 0
    %4463 = vmatpush1.bf16.msra.mxu0 0
    %4464 = vmatprep.subr.bf16.mxu0 0
    %4465 = vmatpush1.bf16.msra.mxu0 0
    %4466 = vmatprep.subr.bf16.mxu0 0
    %4467 = vmatpush1.bf16.msra.mxu0 0
    %4468 = vmatprep.subr.bf16.mxu0 0
    %4469 = vmatpush1.bf16.msra.mxu0 0
    %4470 = vmatprep.subr.bf16.mxu0 0
    %4471 = vmatpush1.bf16.msra.mxu0 0
    %4472 = vmatprep.subr.bf16.mxu0 0
    %4473 = vmatpush1.bf16.msra.mxu0 0
    %4474 = vmatprep.subr.bf16.mxu0 0
    %4475 = vmatpush1.bf16.msra.mxu0 0
    %4476 = vmatprep.mubr.bf16.mxu0 0
    %4477 = vmatmul.mubr.bf16.gmra.mrb[0].mxu0 %v4442
    %v4478 = vpop.f32.mrb[0].mxu0
    %v4479 = vadd.f32 0.0, %v4478
    %v4480 = vpop.f32.mrb[0].mxu0
    %v4481 = vpop.f32.mrb[0].mxu0
    %v4482 = vadd.f32 0.0, %v4481
    %v4483 = vpop.f32.mrb[0].mxu0
    %4484 = vdwg.mxu0
    %4486 = vrot.lane.b32.xlu0 %v843, 112
    %v4487 = vpop.permute.xlu0 %4486
    %v4490 = vsel %vm849, %v3905, 0
    %4492 = vmatprep.subr.bf16.mxu0 0
    %4493 = vmatpush1.bf16.msra.mxu0 %v4487
    %4494 = vmatprep.subr.bf16.mxu0 0
    %4495 = vmatpush1.bf16.msra.mxu0 0
    %4496 = vmatprep.subr.bf16.mxu0 0
    %4497 = vmatpush1.bf16.msra.mxu0 0
    %4498 = vmatprep.subr.bf16.mxu0 0
    %4499 = vmatpush1.bf16.msra.mxu0 0
    %4500 = vmatprep.subr.bf16.mxu0 0
    %4501 = vmatpush1.bf16.msra.mxu0 0
    %4502 = vmatprep.subr.bf16.mxu0 0
    %4503 = vmatpush1.bf16.msra.mxu0 0
    %4504 = vmatprep.subr.bf16.mxu0 0
    %4505 = vmatpush1.bf16.msra.mxu0 0
    %4506 = vmatprep.subr.bf16.mxu0 0
    %4507 = vmatpush1.bf16.msra.mxu0 0
    %4508 = vmatprep.subr.bf16.mxu0 0
    %4509 = vmatpush1.bf16.msra.mxu0 0
    %4510 = vmatprep.subr.bf16.mxu0 0
    %4511 = vmatpush1.bf16.msra.mxu0 0
    %4512 = vmatprep.subr.bf16.mxu0 0
    %4513 = vmatpush1.bf16.msra.mxu0 0
    %4514 = vmatprep.subr.bf16.mxu0 0
    %4515 = vmatpush1.bf16.msra.mxu0 0
    %4516 = vmatprep.subr.bf16.mxu0 0
    %4517 = vmatpush1.bf16.msra.mxu0 0
    %4518 = vmatprep.subr.bf16.mxu0 0
    %4519 = vmatpush1.bf16.msra.mxu0 0
    %4520 = vmatprep.subr.bf16.mxu0 0
    %4521 = vmatpush1.bf16.msra.mxu0 0
    %4522 = vmatprep.subr.bf16.mxu0 0
    %4523 = vmatpush1.bf16.msra.mxu0 0
    %4524 = vmatprep.mubr.bf16.mxu0 0
    %4525 = vmatmul.mubr.bf16.gmra.mrb[0].mxu0 %v4490
    %v4526 = vpop.f32.mrb[0].mxu0
    %v4527 = vadd.f32 0.0, %v4526
    %v4528 = vpop.f32.mrb[0].mxu0
    %v4529 = vpop.f32.mrb[0].mxu0
    %v4530 = vadd.f32 0.0, %v4529
    %v4531 = vpop.f32.mrb[0].mxu0
    %4532 = vdwg.mxu0
    %4534 = vrot.lane.b32.xlu0 %v844, 112
    %v4535 = vpop.permute.xlu0 %4534
    %v4538 = vsel %vm849, %v3906, 0
    %4540 = vmatprep.subr.bf16.mxu0 0
    %4541 = vmatpush1.bf16.msra.mxu0 %v4535
    %4542 = vmatprep.subr.bf16.mxu0 0
    %4543 = vmatpush1.bf16.msra.mxu0 0
    %4544 = vmatprep.subr.bf16.mxu0 0
    %4545 = vmatpush1.bf16.msra.mxu0 0
    %4546 = vmatprep.subr.bf16.mxu0 0
    %4547 = vmatpush1.bf16.msra.mxu0 0
    %4548 = vmatprep.subr.bf16.mxu0 0
    %4549 = vmatpush1.bf16.msra.mxu0 0
    %4550 = vmatprep.subr.bf16.mxu0 0
    %4551 = vmatpush1.bf16.msra.mxu0 0
    %4552 = vmatprep.subr.bf16.mxu0 0
    %4553 = vmatpush1.bf16.msra.mxu0 0
    %4554 = vmatprep.subr.bf16.mxu0 0
    %4555 = vmatpush1.bf16.msra.mxu0 0
    %4556 = vmatprep.subr.bf16.mxu0 0
    %4557 = vmatpush1.bf16.msra.mxu0 0
    %4558 = vmatprep.subr.bf16.mxu0 0
    %4559 = vmatpush1.bf16.msra.mxu0 0
    %4560 = vmatprep.subr.bf16.mxu0 0
    %4561 = vmatpush1.bf16.msra.mxu0 0
    %4562 = vmatprep.subr.bf16.mxu0 0
    %4563 = vmatpush1.bf16.msra.mxu0 0
    %4564 = vmatprep.subr.bf16.mxu0 0
    %4565 = vmatpush1.bf16.msra.mxu0 0
    %4566 = vmatprep.subr.bf16.mxu0 0
    %4567 = vmatpush1.bf16.msra.mxu0 0
    %4568 = vmatprep.subr.bf16.mxu0 0
    %4569 = vmatpush1.bf16.msra.mxu0 0
    %4570 = vmatprep.subr.bf16.mxu0 0
    %4571 = vmatpush1.bf16.msra.mxu0 0
    %4572 = vmatprep.mubr.bf16.mxu0 0
    %4573 = vmatmul.mubr.bf16.gmra.mrb[0].mxu0 %v4538
    %v4574 = vpop.f32.mrb[0].mxu0
    %v4575 = vadd.f32 0.0, %v4574
    %v4576 = vpop.f32.mrb[0].mxu0
    %v4577 = vpop.f32.mrb[0].mxu0
    %v4578 = vadd.f32 0.0, %v4577
    %v4579 = vpop.f32.mrb[0].mxu0
    %4580 = vdwg.mxu0
    %4582 = vrot.lane.b32.xlu0 %v845, 112
    %v4583 = vpop.permute.xlu0 %4582
    %v4586 = vsel %vm849, %v3907, 0
    %4588 = vmatprep.subr.bf16.mxu0 0
    %4589 = vmatpush1.bf16.msra.mxu0 %v4583
    %4590 = vmatprep.subr.bf16.mxu0 0
    %4591 = vmatpush1.bf16.msra.mxu0 0
    %4592 = vmatprep.subr.bf16.mxu0 0
    %4593 = vmatpush1.bf16.msra.mxu0 0
    %4594 = vmatprep.subr.bf16.mxu0 0
    %4595 = vmatpush1.bf16.msra.mxu0 0
    %4596 = vmatprep.subr.bf16.mxu0 0
    %4597 = vmatpush1.bf16.msra.mxu0 0
    %4598 = vmatprep.subr.bf16.mxu0 0
    %4599 = vmatpush1.bf16.msra.mxu0 0
    %4600 = vmatprep.subr.bf16.mxu0 0
    %4601 = vmatpush1.bf16.msra.mxu0 0
    %4602 = vmatprep.subr.bf16.mxu0 0
    %4603 = vmatpush1.bf16.msra.mxu0 0
    %4604 = vmatprep.subr.bf16.mxu0 0
    %4605 = vmatpush1.bf16.msra.mxu0 0
    %4606 = vmatprep.subr.bf16.mxu0 0
    %4607 = vmatpush1.bf16.msra.mxu0 0
    %4608 = vmatprep.subr.bf16.mxu0 0
    %4609 = vmatpush1.bf16.msra.mxu0 0
    %4610 = vmatprep.subr.bf16.mxu0 0
    %4611 = vmatpush1.bf16.msra.mxu0 0
    %4612 = vmatprep.subr.bf16.mxu0 0
    %4613 = vmatpush1.bf16.msra.mxu0 0
    %4614 = vmatprep.subr.bf16.mxu0 0
    %4615 = vmatpush1.bf16.msra.mxu0 0
    %4616 = vmatprep.subr.bf16.mxu0 0
    %4617 = vmatpush1.bf16.msra.mxu0 0
    %4618 = vmatprep.subr.bf16.mxu0 0
    %4619 = vmatpush1.bf16.msra.mxu0 0
    %4620 = vmatprep.mubr.bf16.mxu0 0
    %4621 = vmatmul.mubr.bf16.gmra.mrb[0].mxu0 %v4586
    %v4622 = vpop.f32.mrb[0].mxu0
    %v4623 = vadd.f32 0.0, %v4622
    %v4624 = vpop.f32.mrb[0].mxu0
    %v4625 = vpop.f32.mrb[0].mxu0
    %v4626 = vadd.f32 0.0, %v4625
    %v4627 = vpop.f32.mrb[0].mxu0
    %4628 = vdwg.mxu0
    %4630 = vrot.lane.b32.xlu0 %v846, 112
    %v4631 = vpop.permute.xlu0 %4630
    %v4634 = vsel %vm849, %v3908, 0
    %4636 = vmatprep.subr.bf16.mxu0 0
    %4637 = vmatpush1.bf16.msra.mxu0 %v4631
    %4638 = vmatprep.subr.bf16.mxu0 0
    %4639 = vmatpush1.bf16.msra.mxu0 0
    %4640 = vmatprep.subr.bf16.mxu0 0
    %4641 = vmatpush1.bf16.msra.mxu0 0
    %4642 = vmatprep.subr.bf16.mxu0 0
    %4643 = vmatpush1.bf16.msra.mxu0 0
    %4644 = vmatprep.subr.bf16.mxu0 0
    %4645 = vmatpush1.bf16.msra.mxu0 0
    %4646 = vmatprep.subr.bf16.mxu0 0
    %4647 = vmatpush1.bf16.msra.mxu0 0
    %4648 = vmatprep.subr.bf16.mxu0 0
    %4649 = vmatpush1.bf16.msra.mxu0 0
    %4650 = vmatprep.subr.bf16.mxu0 0
    %4651 = vmatpush1.bf16.msra.mxu0 0
    %4652 = vmatprep.subr.bf16.mxu0 0
    %4653 = vmatpush1.bf16.msra.mxu0 0
    %4654 = vmatprep.subr.bf16.mxu0 0
    %4655 = vmatpush1.bf16.msra.mxu0 0
    %4656 = vmatprep.subr.bf16.mxu0 0
    %4657 = vmatpush1.bf16.msra.mxu0 0
    %4658 = vmatprep.subr.bf16.mxu0 0
    %4659 = vmatpush1.bf16.msra.mxu0 0
    %4660 = vmatprep.subr.bf16.mxu0 0
    %4661 = vmatpush1.bf16.msra.mxu0 0
    %4662 = vmatprep.subr.bf16.mxu0 0
    %4663 = vmatpush1.bf16.msra.mxu0 0
    %4664 = vmatprep.subr.bf16.mxu0 0
    %4665 = vmatpush1.bf16.msra.mxu0 0
    %4666 = vmatprep.subr.bf16.mxu0 0
    %4667 = vmatpush1.bf16.msra.mxu0 0
    %4668 = vmatprep.mubr.bf16.mxu0 0
    %4669 = vmatmul.mubr.bf16.gmra.mrb[0].mxu0 %v4634
    %v4670 = vpop.f32.mrb[0].mxu0
    %v4671 = vadd.f32 0.0, %v4670
    %v4672 = vpop.f32.mrb[0].mxu0
    %v4673 = vpop.f32.mrb[0].mxu0
    %v4674 = vadd.f32 0.0, %v4673
    %v4675 = vpop.f32.mrb[0].mxu0
    %4676 = vdwg.mxu0
    %v4677 = vpack.c.bf16 %v3954, %v3951
    %v4678 = vpack.c.bf16 %v4002, %v3999
    %v4679 = vpack.c.bf16 %v4050, %v4047
    %v4680 = vpack.c.bf16 %v4098, %v4095
    %v4681 = vpack.c.bf16 %v4146, %v4143
    %v4682 = vpack.c.bf16 %v4194, %v4191
    %v4683 = vpack.c.bf16 %v4242, %v4239
    %v4684 = vpack.c.bf16 %v4290, %v4287
    %v4685 = vpack.c.bf16 %v4338, %v4335
    %v4686 = vpack.c.bf16 %v4386, %v4383
    %v4687 = vpack.c.bf16 %v4434, %v4431
    %v4688 = vpack.c.bf16 %v4482, %v4479
    %v4689 = vpack.c.bf16 %v4530, %v4527
    %v4690 = vpack.c.bf16 %v4578, %v4575
    %v4691 = vpack.c.bf16 %v4626, %v4623
    %v4692 = vpack.c.bf16 %v4674, %v4671
    %4709 = vrot.lane.b32.xlu0 %v4677, 16
    %v4710 = vpop.permute.xlu0 %4709
    %4711 = vrot.lane.b32.xlu0 %v4678, 16
    %v4712 = vpop.permute.xlu0 %4711
    %4713 = vrot.lane.b32.xlu0 %v4679, 16
    %v4714 = vpop.permute.xlu0 %4713
    %4715 = vrot.lane.b32.xlu0 %v4680, 16
    %v4716 = vpop.permute.xlu0 %4715
    %4717 = vrot.lane.b32.xlu0 %v4681, 16
    %v4718 = vpop.permute.xlu0 %4717
    %4719 = vrot.lane.b32.xlu0 %v4682, 16
    %v4720 = vpop.permute.xlu0 %4719
    %4721 = vrot.lane.b32.xlu0 %v4683, 16
    %v4722 = vpop.permute.xlu0 %4721
    %4723 = vrot.lane.b32.xlu0 %v4684, 16
    %v4724 = vpop.permute.xlu0 %4723
    %4725 = vrot.lane.b32.xlu0 %v4685, 16
    %v4726 = vpop.permute.xlu0 %4725
    %4727 = vrot.lane.b32.xlu0 %v4686, 16
    %v4728 = vpop.permute.xlu0 %4727
    %4729 = vrot.lane.b32.xlu0 %v4687, 16
    %v4730 = vpop.permute.xlu0 %4729
    %4731 = vrot.lane.b32.xlu0 %v4688, 16
    %v4732 = vpop.permute.xlu0 %4731
    %4733 = vrot.lane.b32.xlu0 %v4689, 16
    %v4734 = vpop.permute.xlu0 %4733
    %4735 = vrot.lane.b32.xlu0 %v4690, 16
    %v4736 = vpop.permute.xlu0 %4735
    %4737 = vrot.lane.b32.xlu0 %v4691, 16
    %v4738 = vpop.permute.xlu0 %4737
    %4739 = vrot.lane.b32.xlu0 %v4692, 16
    %v4740 = vpop.permute.xlu0 %4739
    %v4743 = vsel %vm849, %v2674, %v4710
    %v4746 = vsel %vm849, %v2675, %v4712
    %v4749 = vsel %vm849, %v2676, %v4714
    %v4752 = vsel %vm849, %v2677, %v4716
    %v4755 = vsel %vm849, %v2678, %v4718
    %v4758 = vsel %vm849, %v2679, %v4720
    %v4761 = vsel %vm849, %v2680, %v4722
    %v4764 = vsel %vm849, %v2681, %v4724
    %v4767 = vsel %vm849, %v2682, %v4726
    %v4770 = vsel %vm849, %v2683, %v4728
    %v4773 = vsel %vm849, %v2684, %v4730
    %v4776 = vsel %vm849, %v2685, %v4732
    %v4779 = vsel %vm849, %v2686, %v4734
    %v4782 = vsel %vm849, %v2687, %v4736
    %v4785 = vsel %vm849, %v2688, %v4738
    %v4788 = vsel %vm849, %v2689, %v4740
    %v4789 = vld [vmem:[#allocation10] sm:$0xf]
    %v4790 = vld [vmem:[#allocation10 + $0x4] sm:$0xf]
    %v4791 = vld [vmem:[#allocation10 + $0x8] sm:$0xf]
    %v4792 = vld [vmem:[#allocation10 + $0xc] sm:$0xf]
    %v4797 = vunpack.c.l.b16 %v4789
    %v4798 = vunpack.c.l.b16 %v4790
    %v4799 = vunpack.c.l.b16 %v4791
    %v4800 = vunpack.c.l.b16 %v4792
    %v4801 = vpack.c.b16 %v4798, %v4797
    %v4802 = vpack.c.b16 %v4800, %v4799
    %v4805 = vsel %vm235, %v4743, 0
    %v4807 = vsel %vm235, %v4746, 0
    %v4809 = vsel %vm235, %v4749, 0
    %v4811 = vsel %vm235, %v4752, 0
    %v4813 = vsel %vm235, %v4755, 0
    %v4815 = vsel %vm235, %v4758, 0
    %v4817 = vsel %vm235, %v4761, 0
    %v4819 = vsel %vm235, %v4764, 0
    %v4821 = vsel %vm235, %v4767, 0
    %v4823 = vsel %vm235, %v4770, 0
    %v4825 = vsel %vm235, %v4773, 0
    %v4827 = vsel %vm235, %v4776, 0
    %v4829 = vsel %vm235, %v4779, 0
    %v4831 = vsel %vm235, %v4782, 0
    %v4833 = vsel %vm235, %v4785, 0
    %v4835 = vsel %vm235, %v4788, 0
    %4837 = vmatprep.subr.bf16.mxu0 0
    %4838 = vmatpush1.bf16.msra.mxu0 %v4801
    %4839 = vmatprep.subr.bf16.mxu0 0
    %4840 = vmatpush1.bf16.msra.mxu0 %v4802
    %4841 = vmatprep.subr.bf16.mxu0 0
    %4842 = vmatpush1.bf16.msra.mxu0 0
    %4843 = vmatprep.subr.bf16.mxu0 0
    %4844 = vmatpush1.bf16.msra.mxu0 0
    %4845 = vmatprep.subr.bf16.mxu0 0
    %4846 = vmatpush1.bf16.msra.mxu0 0
    %4847 = vmatprep.subr.bf16.mxu0 0
    %4848 = vmatpush1.bf16.msra.mxu0 0
    %4849 = vmatprep.subr.bf16.mxu0 0
    %4850 = vmatpush1.bf16.msra.mxu0 0
    %4851 = vmatprep.subr.bf16.mxu0 0
    %4852 = vmatpush1.bf16.msra.mxu0 0
    %4853 = vmatprep.subr.bf16.mxu0 0
    %4854 = vmatpush1.bf16.msra.mxu0 0
    %4855 = vmatprep.subr.bf16.mxu0 0
    %4856 = vmatpush1.bf16.msra.mxu0 0
    %4857 = vmatprep.subr.bf16.mxu0 0
    %4858 = vmatpush1.bf16.msra.mxu0 0
    %4859 = vmatprep.subr.bf16.mxu0 0
    %4860 = vmatpush1.bf16.msra.mxu0 0
    %4861 = vmatprep.subr.bf16.mxu0 0
    %4862 = vmatpush1.bf16.msra.mxu0 0
    %4863 = vmatprep.subr.bf16.mxu0 0
    %4864 = vmatpush1.bf16.msra.mxu0 0
    %4865 = vmatprep.subr.bf16.mxu0 0
    %4866 = vmatpush1.bf16.msra.mxu0 0
    %4867 = vmatprep.subr.bf16.mxu0 0
    %4868 = vmatpush1.bf16.msra.mxu0 0
    %4869 = vmatprep.mubr.bf16.mxu0 0
    %4870 = vmatmul.mubr.bf16.gmra.mrb[0].mxu0 %v4805
    %v4871 = vpop.f32.mrb[0].mxu0
    %v4872 = vadd.f32 0.0, %v4871
    %v4873 = vpop.f32.mrb[0].mxu0
    %v4874 = vpop.f32.mrb[0].mxu0
    %v4875 = vadd.f32 0.0, %v4874
    %v4876 = vpop.f32.mrb[0].mxu0
    %4877 = vmatprep.mubr.bf16.mxu0 0
    %4878 = vmatmul.mubr.bf16.gmra.mrb[0].mxu0 %v4807
    %v4879 = vpop.f32.mrb[0].mxu0
    %v4880 = vadd.f32 0.0, %v4879
    %v4881 = vpop.f32.mrb[0].mxu0
    %v4882 = vpop.f32.mrb[0].mxu0
    %v4883 = vadd.f32 0.0, %v4882
    %v4884 = vpop.f32.mrb[0].mxu0
    %4885 = vmatprep.mubr.bf16.mxu0 0
    %4886 = vmatmul.mubr.bf16.gmra.mrb[0].mxu0 %v4809
    %v4887 = vpop.f32.mrb[0].mxu0
    %v4888 = vadd.f32 0.0, %v4887
    %v4889 = vpop.f32.mrb[0].mxu0
    %v4890 = vpop.f32.mrb[0].mxu0
    %v4891 = vadd.f32 0.0, %v4890
    %v4892 = vpop.f32.mrb[0].mxu0
    %4893 = vmatprep.mubr.bf16.mxu0 0
    %4894 = vmatmul.mubr.bf16.gmra.mrb[0].mxu0 %v4811
    %v4895 = vpop.f32.mrb[0].mxu0
    %v4896 = vadd.f32 0.0, %v4895
    %v4897 = vpop.f32.mrb[0].mxu0
    %v4898 = vpop.f32.mrb[0].mxu0
    %v4899 = vadd.f32 0.0, %v4898
    %v4900 = vpop.f32.mrb[0].mxu0
    %4901 = vmatprep.mubr.bf16.mxu0 0
    %4902 = vmatmul.mubr.bf16.gmra.mrb[0].mxu0 %v4813
    %v4903 = vpop.f32.mrb[0].mxu0
    %v4904 = vadd.f32 0.0, %v4903
    %v4905 = vpop.f32.mrb[0].mxu0
    %v4906 = vpop.f32.mrb[0].mxu0
    %v4907 = vadd.f32 0.0, %v4906
    %v4908 = vpop.f32.mrb[0].mxu0
    %4909 = vmatprep.mubr.bf16.mxu0 0
    %4910 = vmatmul.mubr.bf16.gmra.mrb[0].mxu0 %v4815
    %v4911 = vpop.f32.mrb[0].mxu0
    %v4912 = vadd.f32 0.0, %v4911
    %v4913 = vpop.f32.mrb[0].mxu0
    %v4914 = vpop.f32.mrb[0].mxu0
    %v4915 = vadd.f32 0.0, %v4914
    %v4916 = vpop.f32.mrb[0].mxu0
    %4917 = vmatprep.mubr.bf16.mxu0 0
    %4918 = vmatmul.mubr.bf16.gmra.mrb[0].mxu0 %v4817
    %v4919 = vpop.f32.mrb[0].mxu0
    %v4920 = vadd.f32 0.0, %v4919
    %v4921 = vpop.f32.mrb[0].mxu0
    %v4922 = vpop.f32.mrb[0].mxu0
    %v4923 = vadd.f32 0.0, %v4922
    %v4924 = vpop.f32.mrb[0].mxu0
    %4925 = vmatprep.mubr.bf16.mxu0 0
    %4926 = vmatmul.mubr.bf16.gmra.mrb[0].mxu0 %v4819
    %v4927 = vpop.f32.mrb[0].mxu0
    %v4928 = vadd.f32 0.0, %v4927
    %v4929 = vpop.f32.mrb[0].mxu0
    %v4930 = vpop.f32.mrb[0].mxu0
    %v4931 = vadd.f32 0.0, %v4930
    %v4932 = vpop.f32.mrb[0].mxu0
    %4933 = vmatprep.mubr.bf16.mxu0 0
    %4934 = vmatmul.mubr.bf16.gmra.mrb[0].mxu0 %v4821
    %v4935 = vpop.f32.mrb[0].mxu0
    %v4936 = vadd.f32 0.0, %v4935
    %v4937 = vpop.f32.mrb[0].mxu0
    %v4938 = vpop.f32.mrb[0].mxu0
    %v4939 = vadd.f32 0.0, %v4938
    %v4940 = vpop.f32.mrb[0].mxu0
    %4941 = vmatprep.mubr.bf16.mxu0 0
    %4942 = vmatmul.mubr.bf16.gmra.mrb[0].mxu0 %v4823
    %v4943 = vpop.f32.mrb[0].mxu0
    %v4944 = vadd.f32 0.0, %v4943
    %v4945 = vpop.f32.mrb[0].mxu0
    %v4946 = vpop.f32.mrb[0].mxu0
    %v4947 = vadd.f32 0.0, %v4946
    %v4948 = vpop.f32.mrb[0].mxu0
    %4949 = vmatprep.mubr.bf16.mxu0 0
    %4950 = vmatmul.mubr.bf16.gmra.mrb[0].mxu0 %v4825
    %v4951 = vpop.f32.mrb[0].mxu0
    %v4952 = vadd.f32 0.0, %v4951
    %v4953 = vpop.f32.mrb[0].mxu0
    %v4954 = vpop.f32.mrb[0].mxu0
    %v4955 = vadd.f32 0.0, %v4954
    %v4956 = vpop.f32.mrb[0].mxu0
    %4957 = vmatprep.mubr.bf16.mxu0 0
    %4958 = vmatmul.mubr.bf16.gmra.mrb[0].mxu0 %v4827
    %v4959 = vpop.f32.mrb[0].mxu0
    %v4960 = vadd.f32 0.0, %v4959
    %v4961 = vpop.f32.mrb[0].mxu0
    %v4962 = vpop.f32.mrb[0].mxu0
    %v4963 = vadd.f32 0.0, %v4962
    %v4964 = vpop.f32.mrb[0].mxu0
    %4965 = vmatprep.mubr.bf16.mxu0 0
    %4966 = vmatmul.mubr.bf16.gmra.mrb[0].mxu0 %v4829
    %v4967 = vpop.f32.mrb[0].mxu0
    %v4968 = vadd.f32 0.0, %v4967
    %v4969 = vpop.f32.mrb[0].mxu0
    %v4970 = vpop.f32.mrb[0].mxu0
    %v4971 = vadd.f32 0.0, %v4970
    %v4972 = vpop.f32.mrb[0].mxu0
    %4973 = vmatprep.mubr.bf16.mxu0 0
    %4974 = vmatmul.mubr.bf16.gmra.mrb[0].mxu0 %v4831
    %v4975 = vpop.f32.mrb[0].mxu0
    %v4976 = vadd.f32 0.0, %v4975
    %v4977 = vpop.f32.mrb[0].mxu0
    %v4978 = vpop.f32.mrb[0].mxu0
    %v4979 = vadd.f32 0.0, %v4978
    %v4980 = vpop.f32.mrb[0].mxu0
    %4981 = vmatprep.mubr.bf16.mxu0 0
    %4982 = vmatmul.mubr.bf16.gmra.mrb[0].mxu0 %v4833
    %v4983 = vpop.f32.mrb[0].mxu0
    %v4984 = vadd.f32 0.0, %v4983
    %v4985 = vpop.f32.mrb[0].mxu0
    %v4986 = vpop.f32.mrb[0].mxu0
    %v4987 = vadd.f32 0.0, %v4986
    %v4988 = vpop.f32.mrb[0].mxu0
    %4989 = vmatprep.mubr.bf16.mxu0 0
    %4990 = vmatmul.mubr.bf16.gmra.mrb[0].mxu0 %v4835
    %v4991 = vpop.f32.mrb[0].mxu0
    %v4992 = vadd.f32 0.0, %v4991
    %v4993 = vpop.f32.mrb[0].mxu0
    %v4994 = vpop.f32.mrb[0].mxu0
    %v4995 = vadd.f32 0.0, %v4994
    %v4996 = vpop.f32.mrb[0].mxu0
    %4997 = vdwg.mxu0
    %4998 = vst.msk [vmem:[#allocation13] sm:$0xff] %vm235, %v4872
    %4999 = vst.msk [vmem:[#allocation13 + $0x8] sm:$0xff] %vm235, %v4875
    %5000 = vst.msk [vmem:[#allocation13 + $0x10] sm:$0xff] %vm235, %v4880
    %5001 = vst.msk [vmem:[#allocation13 + $0x18] sm:$0xff] %vm235, %v4883
    %5002 = vst.msk [vmem:[#allocation13 + $0x20] sm:$0xff] %vm235, %v4888
    %5003 = vst.msk [vmem:[#allocation13 + $0x28] sm:$0xff] %vm235, %v4891
    %5004 = vst.msk [vmem:[#allocation13 + $0x30] sm:$0xff] %vm235, %v4896
    %5005 = vst.msk [vmem:[#allocation13 + $0x38] sm:$0xff] %vm235, %v4899
    %5006 = vst.msk [vmem:[#allocation13 + $0x40] sm:$0xff] %vm235, %v4904
    %5007 = vst.msk [vmem:[#allocation13 + $0x48] sm:$0xff] %vm235, %v4907
    %5008 = vst.msk [vmem:[#allocation13 + $0x50] sm:$0xff] %vm235, %v4912
    %5009 = vst.msk [vmem:[#allocation13 + $0x58] sm:$0xff] %vm235, %v4915
    %5010 = vst.msk [vmem:[#allocation13 + $0x60] sm:$0xff] %vm235, %v4920
    %5011 = vst.msk [vmem:[#allocation13 + $0x68] sm:$0xff] %vm235, %v4923
    %5012 = vst.msk [vmem:[#allocation13 + $0x70] sm:$0xff] %vm235, %v4928
    %5013 = vst.msk [vmem:[#allocation13 + $0x78] sm:$0xff] %vm235, %v4931
    %5014 = vst.msk [vmem:[#allocation13 + $0x80] sm:$0xff] %vm235, %v4936
    %5015 = vst.msk [vmem:[#allocation13 + $0x88] sm:$0xff] %vm235, %v4939
    %5016 = vst.msk [vmem:[#allocation13 + $0x90] sm:$0xff] %vm235, %v4944
    %5017 = vst.msk [vmem:[#allocation13 + $0x98] sm:$0xff] %vm235, %v4947
    %5018 = vst.msk [vmem:[#allocation13 + $0xa0] sm:$0xff] %vm235, %v4952
    %5019 = vst.msk [vmem:[#allocation13 + $0xa8] sm:$0xff] %vm235, %v4955
    %5020 = vst.msk [vmem:[#allocation13 + $0xb0] sm:$0xff] %vm235, %v4960
    %5021 = vst.msk [vmem:[#allocation13 + $0xb8] sm:$0xff] %vm235, %v4963
    %5022 = vst.msk [vmem:[#allocation13 + $0xc0] sm:$0xff] %vm235, %v4968
    %5023 = vst.msk [vmem:[#allocation13 + $0xc8] sm:$0xff] %vm235, %v4971
    %5024 = vst.msk [vmem:[#allocation13 + $0xd0] sm:$0xff] %vm235, %v4976
    %5025 = vst.msk [vmem:[#allocation13 + $0xd8] sm:$0xff] %vm235, %v4979
    %5026 = vst.msk [vmem:[#allocation13 + $0xe0] sm:$0xff] %vm235, %v4984
    %5027 = vst.msk [vmem:[#allocation13 + $0xe8] sm:$0xff] %vm235, %v4987
    %5028 = vst.msk [vmem:[#allocation13 + $0xf0] sm:$0xff] %vm235, %v4992
    %5029 = vst.msk [vmem:[#allocation13 + $0xf8] sm:$0xff] %vm235, %v4995
    // Predicated region
    $region50: #{tpu_custom_call.1} parent=1 // pred_check
      _
    $region51: #{tpu_custom_call.1} parent=1 // pred_check_branch
      %5031 = sbr.rel (0) target = $region53
    $region52: #{tpu_custom_call.1} parent=1 // pred_region
      %s5033 = ssub.s32 4096, 4096
      %5034 = vsyncadd [#allocation4], %s5033
      %s5035 = sshll.u32 [#allocation13], 4
      %s5036 = int_to_ptr.vmem [resolvable:$true] %s5035
      %5041 = dma.vmem_to_hbm [thread:$0]  %s5036, 4096, %s6, [#allocation4], 128, 128, 8
    $region53: #{tpu_custom_call.1} parent=1 // pred_fallthru
      _
    // Predicated region
    $region54: #{tpu_custom_call.1} parent=1 // pred_check
      _
    $region55: #{tpu_custom_call.1} parent=1 // pred_check_branch
      %5043 = sbr.rel (0) target = $region57
    $region56: #{tpu_custom_call.1} parent=1 // pred_region
      %5044 = dma.done [#allocation4], 4096
    $region57: #{tpu_custom_call.1} parent=1 // pred_fallthru
      _
    %5045 = vsyncpa [#allocation3], 1
    %5046 = vsyncpa [#allocation6], 1
    %5047 = vsyncpa [#allocation9], 1
    %5048 = vsyncpa [#allocation12], 1
    %5049 = vsyncpa [#allocation4], 1

</llo_original>
